<compile_context>
chip_gen: v5e
topology: v5e:2x2
jax: 0.10.0
libtpu: 0.0.40
codegen_flags: <defaults>
</compile_context>

<pallas_src>
import numpy as np

import jax
import jax.numpy as jnp
from jax.experimental import pallas as pl
from jax.experimental.pallas import tpu as pltpu


# ----------------------------------------------------------------------------
# Fused decoder kernel
# ----------------------------------------------------------------------------
def _wdot(a, b):
    """MXU matmul: bf16 inputs, f32 accumulation."""
    return jnp.dot(a.astype(jnp.bfloat16), b.astype(jnp.bfloat16),
                   preferred_element_type=jnp.float32)


def _fdot(a, b):
    """Small f32 matmul (BatchNorm statistics path)."""
    return jnp.dot(a, b, preferred_element_type=jnp.float32)


def decoder_kernel(*refs):
    """Fused decoder forward.  Operand layout: see build_decoder_operands."""
    xT_ref, fcw_ref, fcb_ref, fcc_ref = refs[0:4]
    block_refs = [refs[4 + 5 * i: 9 + 5 * i] for i in range(4)]   # (A,S,V,U,G) x4
    l5_ref, k5_ref, b5_ref = refs[24:27]
    out_ref = refs[27]

    # ---- fc: Linear(latent -> 64) + ReLU (R permutation pre-folded into the
    # weights), then stride-2 column placement into (c*2+y, x*B+b) layout. ----
    xT = xT_ref[...]
    act = None
    for xx in range(2):
        h = jnp.maximum(_wdot(fcw_ref[xx], xT) + fcb_ref[xx], 0.0)    # (32, B)
        t = _wdot(h, fcc_ref[xx])                                     # (32, 2B)
        act = t if act is None else act + t

    # ---- 4 x [ConvTranspose2d(3,s2,p1,op1) + BatchNorm2d(train) + LeakyReLU] -
    for a_ref, s_ref, v_ref, u_ref, g_ref in block_refs:
        y = None
        for kx in range(3):
            # A[kx]: channel mix fused with stride-2 output-row scatter
            # S[kx]: stride-2 output-column scatter (batch kept on lanes)
            term = _wdot(_wdot(a_ref[kx], act), s_ref[kx])
            y = term if y is None else y + term
        # Conv bias dropped: it cancels exactly against the batch mean below.
        # Training-mode BatchNorm2d (biased stats over batch,H,W; eps=1e-5),
        # rank-Co factored averaging: mean = U @ (V @ rowsum).
        s1 = jnp.sum(y, axis=1, keepdims=True)                        # (Co*Ho, 1)
        mean = _fdot(u_ref[...], _fdot(v_ref[...], s1))
        yc = y - mean
        s2 = jnp.sum(yc * yc, axis=1, keepdims=True)                  # centered var
        var = _fdot(u_ref[...], _fdot(v_ref[...], s2))
        y = yc * jax.lax.rsqrt(var + 1e-5)
        y = y * g_ref[0] + g_ref[1]                                   # gamma, beta
        act = jnp.where(y >= 0.0, y, 0.01 * y)                        # LeakyReLU

    # ---- final Conv2d(8 -> 1, k=5, valid) + Sigmoid (lane/sublane padded) ----
    o = None
    for kx in range(5):
        term = _wdot(_wdot(l5_ref[kx], act), k5_ref[kx])
        o = term if o is None else o + term
    out_ref[...] = jax.nn.sigmoid(o + b5_ref[...])                    # (32, PADC)


# ----------------------------------------------------------------------------
# One-time host-side packing of torch-layout weights into kernel operands
# ----------------------------------------------------------------------------
def build_decoder_operands(params, batch):
    """Activation layout: rows = c*H + y, cols = x*B + b.  Called once per B."""
    B = batch
    # kron(., I_B) scatters grow as B^2; keep operands well inside VMEM.
    assert 1 <= B <= 32, "tile the batch (rebuild operands per tile) for large B"
    wdt = jnp.bfloat16                      # 0/1 scatters exact, taps lose <1e-3
    ops = []

    # fc ----------------------------------------------------------------------
    fc_wT = np.asarray(params["fc_w"], np.float32).T                  # (64, latent)
    fc_b = np.asarray(params["fc_b"], np.float32).reshape(-1)         # (64,)
    # placement: h[(c*4 + 2y + x), b] -> act[(c*2 + y), x*B + b]
    # (einops 'b (c w h) -> b c w h', c=16, w=2, h=2; torch-H = w, torch-W = h).
    # The row-selection R is folded directly into the fc weights/bias.
    sel = np.zeros((2, 32), np.int32)
    for xx in range(2):
        for c in range(16):
            for yy in range(2):
                sel[xx, c * 2 + yy] = c * 4 + 2 * yy + xx
    fcw = np.stack([fc_wT[sel[0]], fc_wT[sel[1]]], axis=0)            # (2,32,latent)
    fcb = np.stack([fc_b[sel[0]], fc_b[sel[1]]], axis=0)[:, :, None]  # (2,32,1)
    ops.append(jnp.asarray(fcw, wdt))
    ops.append(jnp.asarray(fcb, jnp.float32))
    C = np.zeros((2, B, 2 * B), np.float32)
    for xx in range(2):
        for b in range(B):
            C[xx, b, xx * B + b] = 1.0
    ops.append(jnp.asarray(C, wdt))                                   # (2, B, 2B)

    # conv-transpose blocks -----------------------------------------------------
    layer_dims = [(16, 16, 2), (16, 8, 4), (8, 8, 8), (8, 8, 16)]  # (Cin, Cout, Hin)
    for blk, (Ci, Co, H) in zip(params["blocks"], layer_dims):
        W = np.asarray(blk["w"], np.float32)     # torch layout (Cin, Cout, 3, 3)
        Ho = 2 * H
        # A[kx][(co*Ho+oy), (ci*H+iy)] = W[ci, co, ky, kx] where oy = 2*iy-1+ky
        a_taps = []
        for kx in range(3):
            acc = np.zeros((Co * Ho, Ci * H), np.float32)
            for ky in range(3):
                D = np.zeros((Ho, H), np.float32)
                for iy in range(H):
                    oy = 2 * iy - 1 + ky
                    if 0 <= oy < Ho:
                        D[oy, iy] = 1.0
                acc += np.kron(W[:, :, ky, kx].T, D)
            a_taps.append(acc)
        ops.append(jnp.asarray(np.stack(a_taps, 0), wdt))             # (3, Co*Ho, Ci*H)
        # S[kx][(ix*B+b), (ox*B+b)] = 1 where ox = 2*ix-1+kx
        s_taps = []
        for kx in range(3):
            Dx = np.zeros((H, Ho), np.float32)
            for ix in range(H):
                ox = 2 * ix - 1 + kx
                if 0 <= ox < Ho:
                    Dx[ix, ox] = 1.0
            s_taps.append(np.kron(Dx, np.eye(B, dtype=np.float32)))
        ops.append(jnp.asarray(np.stack(s_taps, 0), wdt))             # (3, H*B, Ho*B)
        # rank-Co factorization of the BN batch-stat averaging (f32 for stats)
        Vm = np.kron(np.eye(Co, dtype=np.float32),
                     np.ones((1, Ho), np.float32)) / float(Ho * Ho * B)
        Um = np.kron(np.eye(Co, dtype=np.float32),
                     np.ones((Ho, 1), np.float32))
        ops.append(jnp.asarray(Vm, jnp.float32))                      # (Co, Co*Ho)
        ops.append(jnp.asarray(Um, jnp.float32))                      # (Co*Ho, Co)
        # gamma / beta broadcast to the (c, y) row layout (conv bias dropped:
        # it cancels exactly in training-mode BatchNorm)
        rows = np.stack([np.repeat(np.asarray(blk["gamma"], np.float32), Ho),
                         np.repeat(np.asarray(blk["beta"], np.float32), Ho)],
                        axis=0)[:, :, None]
        ops.append(jnp.asarray(rows, jnp.float32))                    # (2, Co*Ho, 1)

    # final 5x5 valid conv, padded to 32 output rows / lane-multiple columns ----
    w5 = np.asarray(params["final_w"], np.float32)                    # (1, 8, 5, 5)
    OUT_ROWS = 32
    PADC = ((28 * B + 127) // 128) * 128
    l_taps = []
    for kx in range(5):
        acc = np.zeros((OUT_ROWS, 8 * 32), np.float32)
        for ky in range(5):
            E = np.zeros((OUT_ROWS, 32), np.float32)
            for oy in range(28):
                E[oy, oy + ky] = 1.0
            acc += np.kron(w5[0:1, :, ky, kx], E)
        l_taps.append(acc)
    ops.append(jnp.asarray(np.stack(l_taps, 0), wdt))                 # (5, 32, 256)
    k_taps = []
    for kx in range(5):
        Ek = np.zeros((32, 28), np.float32)
        for ox in range(28):
            Ek[ox + kx, ox] = 1.0
        kt = np.kron(Ek, np.eye(B, dtype=np.float32))                 # (32B, 28B)
        ktp = np.zeros((32 * B, PADC), np.float32)
        ktp[:, :28 * B] = kt
        k_taps.append(ktp)
    ops.append(jnp.asarray(np.stack(k_taps, 0), wdt))                 # (5, 32B, PADC)
    ops.append(jnp.asarray(
        np.asarray(params["final_b"], np.float32).reshape(1, 1), jnp.float32))
    return tuple(ops)


# ----------------------------------------------------------------------------
# Decoder forward (jitted): transpose latent -> one fused kernel -> NCHW
# ----------------------------------------------------------------------------
@jax.jit
def decoder_forward(x, operands):
    B = x.shape[0]
    # explicit coupling check: operands were packed for this exact batch
    assert operands[2].shape == (2, B, 2 * B), "operands packed for a different batch"
    padc = operands[24].shape[-1]                       # padded output columns
    inputs = (jnp.transpose(x),) + tuple(operands)

    def _full_spec(a):
        nd = a.ndim
        return pl.BlockSpec(a.shape, lambda i, _nd=nd: (0,) * _nd)

    bytes_accessed = (sum(int(np.prod(a.shape)) * a.dtype.itemsize for a in inputs)
                      + 32 * padc * 4)
    out2d = pl.pallas_call(
        decoder_kernel,
        out_shape=jax.ShapeDtypeStruct((32, padc), jnp.float32),
        grid=(1,),
        in_specs=[_full_spec(a) for a in inputs],
        out_specs=pl.BlockSpec((32, padc), lambda i: (0, 0)),
        compiler_params=pltpu.CompilerParams(
            dimension_semantics=("arbitrary",),
            vmem_limit_bytes=32 * 1024 * 1024),
        cost_estimate=pl.CostEstimate(
            flops=int(5_000_000 * B) * 2, transcendentals=32 * padc,
            bytes_accessed=int(bytes_accessed)),
    )(*inputs)
    # cols are (x, b) with x outer: slice padding, (28, 28*B) -> (B, 1, 28, 28)
    out = out2d[:28, :28 * B].reshape(28, 28, B)
    return jnp.transpose(out, (2, 0, 1))[:, None, :, :]


# ----------------------------------------------------------------------------
# Pure-XLA reference with exact torch-module semantics (for verification)
# ----------------------------------------------------------------------------
def reference_forward(x, params):
    hp = jax.lax.Precision.HIGHEST
    h = jnp.maximum(x @ params["fc_w"] + params["fc_b"], 0.0)
    B = x.shape[0]
    feat = h.reshape(B, 16, 2, 2)            # einops 'b (c w h) -> b c w h'
    for blk in params["blocks"]:
        w = blk["w"]                          # (Cin, Cout, 3, 3)
        wconv = jnp.transpose(jnp.flip(w, axis=(2, 3)), (1, 0, 2, 3))
        y = jax.lax.conv_general_dilated(
            feat, wconv, window_strides=(1, 1), padding=((1, 2), (1, 2)),
            lhs_dilation=(2, 2), dimension_numbers=("NCHW", "OIHW", "NCHW"),
            precision=hp)
        y = y + blk["b"].reshape(1, -1, 1, 1)
        mean = jnp.mean(y, axis=(0, 2, 3), keepdims=True)
        var = jnp.mean((y - mean) ** 2, axis=(0, 2, 3), keepdims=True)
        y = (y - mean) * jax.lax.rsqrt(var + 1e-5)
        y = y * blk["gamma"].reshape(1, -1, 1, 1) + blk["beta"].reshape(1, -1, 1, 1)
        feat = jnp.where(y >= 0.0, y, 0.01 * y)
    y = jax.lax.conv_general_dilated(
        feat, params["final_w"], window_strides=(1, 1), padding="VALID",
        dimension_numbers=("NCHW", "OIHW", "NCHW"), precision=hp)
    y = y + params["final_b"].reshape(1, -1, 1, 1)
    return jax.nn.sigmoid(y)


# ----------------------------------------------------------------------------
# Parameter init (torch-style layouts: convT weight (Cin,Cout,3,3), etc.)
# ----------------------------------------------------------------------------
def init_params(key, latent_width=64):
    params = {}
    k_fc_w, k_fc_b, key = jax.random.split(key, 3)
    params["fc_w"] = 0.08 * jax.random.normal(k_fc_w, (latent_width, 64), jnp.float32)
    params["fc_b"] = 0.08 * jax.random.normal(k_fc_b, (1, 64), jnp.float32)
    blocks = []
    for (cin, cout) in [(16, 16), (16, 8), (8, 8), (8, 8)]:
        kw, kb, kg, kbe, key = jax.random.split(key, 5)
        blocks.append(dict(
            w=0.1 * jax.random.normal(kw, (cin, cout, 3, 3), jnp.float32),
            b=0.1 * jax.random.normal(kb, (cout,), jnp.float32),
            gamma=1.0 + 0.1 * jax.random.normal(kg, (cout,), jnp.float32),
            beta=0.1 * jax.random.normal(kbe, (cout,), jnp.float32),
        ))
    params["blocks"] = blocks
    kw, kb = jax.random.split(key, 2)
    params["final_w"] = 0.1 * jax.random.normal(kw, (1, 8, 5, 5), jnp.float32)
    params["final_b"] = 0.1 * jax.random.normal(kb, (1,), jnp.float32)
    return params


if __name__ == "__main__":
    key = jax.random.PRNGKey(0)
    k_p, k_x = jax.random.split(key)
    latent_width = 64
    batch = 8          # batch lives on the lane axis: late layers reach 128-256 lanes
    params = init_params(k_p, latent_width)
    x = jax.random.normal(k_x, (batch, latent_width), jnp.float32)

    # one-time host-side packing of the weights into (bf16) kernel operands
    operands = build_decoder_operands(params, batch)
    assert operands[2].shape[1] == x.shape[0]      # operand/batch coupling

    out = jax.block_until_ready(decoder_forward(x, operands))

    assert out.shape == (batch, 1, 28, 28), out.shape
    assert out.dtype == jnp.float32
    assert bool(jnp.all(jnp.isfinite(out)))
    assert bool(jnp.all((out >= 0.0) & (out <= 1.0)))   # sigmoid range

    # verify against a pure-XLA reference of the torch module.  Tolerance is
    # set by the bf16 MXU inputs (per-matmul rel err ~2^-8, 6 chained matmul
    # stages); measured error is well below these bounds.
    ref = jax.block_until_ready(jax.jit(reference_forward)(x, params))
    np.testing.assert_allclose(np.asarray(out), np.asarray(ref), atol=3e-2, rtol=0)
    assert float(jnp.mean(jnp.abs(out - ref))) < 1e-2
    print("KERNEL_OK")
</pallas_src>

<mosaic_0001>
module attributes {stable_mosaic.version = 11 : i64} {
  func.func @decoder_kernel(%arg0: i32, %arg1: memref<64x8xf32, #tpu.memory_space<vmem>>, %arg2: memref<2x32x64xbf16, #tpu.memory_space<vmem>>, %arg3: memref<2x32x1xf32, #tpu.memory_space<vmem>>, %arg4: memref<2x8x16xbf16, #tpu.memory_space<vmem>>, %arg5: memref<3x64x32xbf16, #tpu.memory_space<vmem>>, %arg6: memref<3x16x32xbf16, #tpu.memory_space<vmem>>, %arg7: memref<16x64xf32, #tpu.memory_space<vmem>>, %arg8: memref<64x16xf32, #tpu.memory_space<vmem>>, %arg9: memref<2x64x1xf32, #tpu.memory_space<vmem>>, %arg10: memref<3x64x64xbf16, #tpu.memory_space<vmem>>, %arg11: memref<3x32x64xbf16, #tpu.memory_space<vmem>>, %arg12: memref<8x64xf32, #tpu.memory_space<vmem>>, %arg13: memref<64x8xf32, #tpu.memory_space<vmem>>, %arg14: memref<2x64x1xf32, #tpu.memory_space<vmem>>, %arg15: memref<3x128x64xbf16, #tpu.memory_space<vmem>>, %arg16: memref<3x64x128xbf16, #tpu.memory_space<vmem>>, %arg17: memref<8x128xf32, #tpu.memory_space<vmem>>, %arg18: memref<128x8xf32, #tpu.memory_space<vmem>>, %arg19: memref<2x128x1xf32, #tpu.memory_space<vmem>>, %arg20: memref<3x256x128xbf16, #tpu.memory_space<vmem>>, %arg21: memref<3x128x256xbf16, #tpu.memory_space<vmem>>, %arg22: memref<8x256xf32, #tpu.memory_space<vmem>>, %arg23: memref<256x8xf32, #tpu.memory_space<vmem>>, %arg24: memref<2x256x1xf32, #tpu.memory_space<vmem>>, %arg25: memref<5x32x256xbf16, #tpu.memory_space<vmem>>, %arg26: memref<5x256x256xbf16, #tpu.memory_space<vmem>>, %arg27: memref<1x1xf32, #tpu.memory_space<vmem>>, %arg28: memref<32x256xf32, #tpu.memory_space<vmem>>) attributes {dimension_semantics = [#tpu.dimension_semantics<arbitrary>], iteration_bounds = array<i64: 1>, scalar_prefetch = 0 : i64, scratch_operands = 0 : i64, tpu.core_type = #tpu.core_type<tc>, window_params = [{pipeline_mode = #tpu.pipeline_mode<synchronous>, transform_indices = @transform_0, window_bounds = array<i64: 64, 8>}, {pipeline_mode = #tpu.pipeline_mode<synchronous>, transform_indices = @transform_1, window_bounds = array<i64: 2, 32, 64>}, {pipeline_mode = #tpu.pipeline_mode<synchronous>, transform_indices = @transform_2, window_bounds = array<i64: 2, 32, 1>}, {pipeline_mode = #tpu.pipeline_mode<synchronous>, transform_indices = @transform_3, window_bounds = array<i64: 2, 8, 16>}, {pipeline_mode = #tpu.pipeline_mode<synchronous>, transform_indices = @transform_4, window_bounds = array<i64: 3, 64, 32>}, {pipeline_mode = #tpu.pipeline_mode<synchronous>, transform_indices = @transform_5, window_bounds = array<i64: 3, 16, 32>}, {pipeline_mode = #tpu.pipeline_mode<synchronous>, transform_indices = @transform_6, window_bounds = array<i64: 16, 64>}, {pipeline_mode = #tpu.pipeline_mode<synchronous>, transform_indices = @transform_7, window_bounds = array<i64: 64, 16>}, {pipeline_mode = #tpu.pipeline_mode<synchronous>, transform_indices = @transform_8, window_bounds = array<i64: 2, 64, 1>}, {pipeline_mode = #tpu.pipeline_mode<synchronous>, transform_indices = @transform_9, window_bounds = array<i64: 3, 64, 64>}, {pipeline_mode = #tpu.pipeline_mode<synchronous>, transform_indices = @transform_10, window_bounds = array<i64: 3, 32, 64>}, {pipeline_mode = #tpu.pipeline_mode<synchronous>, transform_indices = @transform_11, window_bounds = array<i64: 8, 64>}, {pipeline_mode = #tpu.pipeline_mode<synchronous>, transform_indices = @transform_12, window_bounds = array<i64: 64, 8>}, {pipeline_mode = #tpu.pipeline_mode<synchronous>, transform_indices = @transform_13, window_bounds = array<i64: 2, 64, 1>}, {pipeline_mode = #tpu.pipeline_mode<synchronous>, transform_indices = @transform_14, window_bounds = array<i64: 3, 128, 64>}, {pipeline_mode = #tpu.pipeline_mode<synchronous>, transform_indices = @transform_15, window_bounds = array<i64: 3, 64, 128>}, {pipeline_mode = #tpu.pipeline_mode<synchronous>, transform_indices = @transform_16, window_bounds = array<i64: 8, 128>}, {pipeline_mode = #tpu.pipeline_mode<synchronous>, transform_indices = @transform_17, window_bounds = array<i64: 128, 8>}, {pipeline_mode = #tpu.pipeline_mode<synchronous>, transform_indices = @transform_18, window_bounds = array<i64: 2, 128, 1>}, {pipeline_mode = #tpu.pipeline_mode<synchronous>, transform_indices = @transform_19, window_bounds = array<i64: 3, 256, 128>}, {pipeline_mode = #tpu.pipeline_mode<synchronous>, transform_indices = @transform_20, window_bounds = array<i64: 3, 128, 256>}, {pipeline_mode = #tpu.pipeline_mode<synchronous>, transform_indices = @transform_21, window_bounds = array<i64: 8, 256>}, {pipeline_mode = #tpu.pipeline_mode<synchronous>, transform_indices = @transform_22, window_bounds = array<i64: 256, 8>}, {pipeline_mode = #tpu.pipeline_mode<synchronous>, transform_indices = @transform_23, window_bounds = array<i64: 2, 256, 1>}, {pipeline_mode = #tpu.pipeline_mode<synchronous>, transform_indices = @transform_24, window_bounds = array<i64: 5, 32, 256>}, {pipeline_mode = #tpu.pipeline_mode<synchronous>, transform_indices = @transform_25, window_bounds = array<i64: 5, 256, 256>}, {pipeline_mode = #tpu.pipeline_mode<synchronous>, transform_indices = @transform_26, window_bounds = array<i64: 1, 1>}, {pipeline_mode = #tpu.pipeline_mode<synchronous>, transform_indices = @transform_27, window_bounds = array<i64: 32, 256>}]} {
    %c0 = arith.constant 0 : index
    %c0_0 = arith.constant 0 : index
    %0 = vector.load %arg1[%c0, %c0_0] : memref<64x8xf32, #tpu.memory_space<vmem>>, vector<64x8xf32>
    %c0_1 = arith.constant 0 : index
    %c0_2 = arith.constant 0 : index
    %c0_3 = arith.constant 0 : index
    %1 = vector.load %arg2[%c0_1, %c0_2, %c0_3] : memref<2x32x64xbf16, #tpu.memory_space<vmem>>, vector<1x32x64xbf16>
    %2 = vector.shape_cast %1 : vector<1x32x64xbf16> to vector<32x64xbf16>
    %3 = arith.truncf %0 : vector<64x8xf32> to vector<64x8xbf16>
    %cst = arith.constant dense<0.000000e+00> : vector<32x8xf32>
    %4 = tpu.matmul %2, %3, %cst {dimension_numbers = #tpu.dot_dimension_numbers<[1], [0], [0], [1], [0, 0, 1, 1], [], []>} : vector<32x64xbf16>, vector<64x8xbf16>, vector<32x8xf32> -> vector<32x8xf32>
    %c0_4 = arith.constant 0 : index
    %c0_5 = arith.constant 0 : index
    %c0_6 = arith.constant 0 : index
    %5 = vector.load %arg3[%c0_4, %c0_5, %c0_6] : memref<2x32x1xf32, #tpu.memory_space<vmem>>, vector<1x32x1xf32>
    %6 = vector.shape_cast %5 : vector<1x32x1xf32> to vector<32x1xf32>
    %7 = vector.broadcast %6 : vector<32x1xf32> to vector<32x8xf32>
    %8 = arith.addf %4, %7 : vector<32x8xf32>
    %cst_7 = arith.constant 0.000000e+00 : f32
    %9 = vector.broadcast %cst_7 : f32 to vector<32x8xf32>
    %10 = arith.maximumf %8, %9 : vector<32x8xf32>
    %c0_8 = arith.constant 0 : index
    %c0_9 = arith.constant 0 : index
    %c0_10 = arith.constant 0 : index
    %11 = vector.load %arg4[%c0_8, %c0_9, %c0_10] : memref<2x8x16xbf16, #tpu.memory_space<vmem>>, vector<1x8x16xbf16>
    %12 = vector.shape_cast %11 : vector<1x8x16xbf16> to vector<8x16xbf16>
    %13 = arith.truncf %10 : vector<32x8xf32> to vector<32x8xbf16>
    %cst_11 = arith.constant dense<0.000000e+00> : vector<32x16xf32>
    %14 = tpu.matmul %13, %12, %cst_11 {dimension_numbers = #tpu.dot_dimension_numbers<[1], [0], [0], [1], [0, 0, 1, 1], [], []>} : vector<32x8xbf16>, vector<8x16xbf16>, vector<32x16xf32> -> vector<32x16xf32>
    %c1 = arith.constant 1 : index
    %c0_12 = arith.constant 0 : index
    %c0_13 = arith.constant 0 : index
    %15 = vector.load %arg2[%c1, %c0_12, %c0_13] : memref<2x32x64xbf16, #tpu.memory_space<vmem>>, vector<1x32x64xbf16>
    %16 = vector.shape_cast %15 : vector<1x32x64xbf16> to vector<32x64xbf16>
    %17 = arith.truncf %0 : vector<64x8xf32> to vector<64x8xbf16>
    %cst_14 = arith.constant dense<0.000000e+00> : vector<32x8xf32>
    %18 = tpu.matmul %16, %17, %cst_14 {dimension_numbers = #tpu.dot_dimension_numbers<[1], [0], [0], [1], [0, 0, 1, 1], [], []>} : vector<32x64xbf16>, vector<64x8xbf16>, vector<32x8xf32> -> vector<32x8xf32>
    %c1_15 = arith.constant 1 : index
    %c0_16 = arith.constant 0 : index
    %c0_17 = arith.constant 0 : index
    %19 = vector.load %arg3[%c1_15, %c0_16, %c0_17] : memref<2x32x1xf32, #tpu.memory_space<vmem>>, vector<1x32x1xf32>
    %20 = vector.shape_cast %19 : vector<1x32x1xf32> to vector<32x1xf32>
    %21 = vector.broadcast %20 : vector<32x1xf32> to vector<32x8xf32>
    %22 = arith.addf %18, %21 : vector<32x8xf32>
    %cst_18 = arith.constant 0.000000e+00 : f32
    %23 = vector.broadcast %cst_18 : f32 to vector<32x8xf32>
    %24 = arith.maximumf %22, %23 : vector<32x8xf32>
    %c1_19 = arith.constant 1 : index
    %c0_20 = arith.constant 0 : index
    %c0_21 = arith.constant 0 : index
    %25 = vector.load %arg4[%c1_19, %c0_20, %c0_21] : memref<2x8x16xbf16, #tpu.memory_space<vmem>>, vector<1x8x16xbf16>
    %26 = vector.shape_cast %25 : vector<1x8x16xbf16> to vector<8x16xbf16>
    %27 = arith.truncf %24 : vector<32x8xf32> to vector<32x8xbf16>
    %cst_22 = arith.constant dense<0.000000e+00> : vector<32x16xf32>
    %28 = tpu.matmul %27, %26, %cst_22 {dimension_numbers = #tpu.dot_dimension_numbers<[1], [0], [0], [1], [0, 0, 1, 1], [], []>} : vector<32x8xbf16>, vector<8x16xbf16>, vector<32x16xf32> -> vector<32x16xf32>
    %29 = arith.addf %14, %28 : vector<32x16xf32>
    %c0_23 = arith.constant 0 : index
    %c0_24 = arith.constant 0 : index
    %c0_25 = arith.constant 0 : index
    %30 = vector.load %arg5[%c0_23, %c0_24, %c0_25] : memref<3x64x32xbf16, #tpu.memory_space<vmem>>, vector<1x64x32xbf16>
    %31 = vector.shape_cast %30 : vector<1x64x32xbf16> to vector<64x32xbf16>
    %32 = arith.truncf %29 : vector<32x16xf32> to vector<32x16xbf16>
    %cst_26 = arith.constant dense<0.000000e+00> : vector<64x16xf32>
    %33 = tpu.matmul %31, %32, %cst_26 {dimension_numbers = #tpu.dot_dimension_numbers<[1], [0], [0], [1], [0, 0, 1, 1], [], []>} : vector<64x32xbf16>, vector<32x16xbf16>, vector<64x16xf32> -> vector<64x16xf32>
    %c0_27 = arith.constant 0 : index
    %c0_28 = arith.constant 0 : index
    %c0_29 = arith.constant 0 : index
    %34 = vector.load %arg6[%c0_27, %c0_28, %c0_29] : memref<3x16x32xbf16, #tpu.memory_space<vmem>>, vector<1x16x32xbf16>
    %35 = vector.shape_cast %34 : vector<1x16x32xbf16> to vector<16x32xbf16>
    %36 = arith.truncf %33 : vector<64x16xf32> to vector<64x16xbf16>
    %cst_30 = arith.constant dense<0.000000e+00> : vector<64x32xf32>
    %37 = tpu.matmul %36, %35, %cst_30 {dimension_numbers = #tpu.dot_dimension_numbers<[1], [0], [0], [1], [0, 0, 1, 1], [], []>} : vector<64x16xbf16>, vector<16x32xbf16>, vector<64x32xf32> -> vector<64x32xf32>
    %c1_31 = arith.constant 1 : index
    %c0_32 = arith.constant 0 : index
    %c0_33 = arith.constant 0 : index
    %38 = vector.load %arg5[%c1_31, %c0_32, %c0_33] : memref<3x64x32xbf16, #tpu.memory_space<vmem>>, vector<1x64x32xbf16>
    %39 = vector.shape_cast %38 : vector<1x64x32xbf16> to vector<64x32xbf16>
    %40 = arith.truncf %29 : vector<32x16xf32> to vector<32x16xbf16>
    %cst_34 = arith.constant dense<0.000000e+00> : vector<64x16xf32>
    %41 = tpu.matmul %39, %40, %cst_34 {dimension_numbers = #tpu.dot_dimension_numbers<[1], [0], [0], [1], [0, 0, 1, 1], [], []>} : vector<64x32xbf16>, vector<32x16xbf16>, vector<64x16xf32> -> vector<64x16xf32>
    %c1_35 = arith.constant 1 : index
    %c0_36 = arith.constant 0 : index
    %c0_37 = arith.constant 0 : index
    %42 = vector.load %arg6[%c1_35, %c0_36, %c0_37] : memref<3x16x32xbf16, #tpu.memory_space<vmem>>, vector<1x16x32xbf16>
    %43 = vector.shape_cast %42 : vector<1x16x32xbf16> to vector<16x32xbf16>
    %44 = arith.truncf %41 : vector<64x16xf32> to vector<64x16xbf16>
    %cst_38 = arith.constant dense<0.000000e+00> : vector<64x32xf32>
    %45 = tpu.matmul %44, %43, %cst_38 {dimension_numbers = #tpu.dot_dimension_numbers<[1], [0], [0], [1], [0, 0, 1, 1], [], []>} : vector<64x16xbf16>, vector<16x32xbf16>, vector<64x32xf32> -> vector<64x32xf32>
    %46 = arith.addf %37, %45 : vector<64x32xf32>
    %c2 = arith.constant 2 : index
    %c0_39 = arith.constant 0 : index
    %c0_40 = arith.constant 0 : index
    %47 = vector.load %arg5[%c2, %c0_39, %c0_40] : memref<3x64x32xbf16, #tpu.memory_space<vmem>>, vector<1x64x32xbf16>
    %48 = vector.shape_cast %47 : vector<1x64x32xbf16> to vector<64x32xbf16>
    %49 = arith.truncf %29 : vector<32x16xf32> to vector<32x16xbf16>
    %cst_41 = arith.constant dense<0.000000e+00> : vector<64x16xf32>
    %50 = tpu.matmul %48, %49, %cst_41 {dimension_numbers = #tpu.dot_dimension_numbers<[1], [0], [0], [1], [0, 0, 1, 1], [], []>} : vector<64x32xbf16>, vector<32x16xbf16>, vector<64x16xf32> -> vector<64x16xf32>
    %c2_42 = arith.constant 2 : index
    %c0_43 = arith.constant 0 : index
    %c0_44 = arith.constant 0 : index
    %51 = vector.load %arg6[%c2_42, %c0_43, %c0_44] : memref<3x16x32xbf16, #tpu.memory_space<vmem>>, vector<1x16x32xbf16>
    %52 = vector.shape_cast %51 : vector<1x16x32xbf16> to vector<16x32xbf16>
    %53 = arith.truncf %50 : vector<64x16xf32> to vector<64x16xbf16>
    %cst_45 = arith.constant dense<0.000000e+00> : vector<64x32xf32>
    %54 = tpu.matmul %53, %52, %cst_45 {dimension_numbers = #tpu.dot_dimension_numbers<[1], [0], [0], [1], [0, 0, 1, 1], [], []>} : vector<64x16xbf16>, vector<16x32xbf16>, vector<64x32xf32> -> vector<64x32xf32>
    %55 = arith.addf %46, %54 : vector<64x32xf32>
    %cst_46 = arith.constant dense<0.000000e+00> : vector<64xf32>
    %56 = vector.multi_reduction <add>, %55, %cst_46 [1] : vector<64x32xf32> to vector<64xf32>
    %57 = vector.shape_cast %56 : vector<64xf32> to vector<64x1xf32>
    %c0_47 = arith.constant 0 : index
    %c0_48 = arith.constant 0 : index
    %58 = vector.load %arg8[%c0_47, %c0_48] : memref<64x16xf32, #tpu.memory_space<vmem>>, vector<64x16xf32>
    %c0_49 = arith.constant 0 : index
    %c0_50 = arith.constant 0 : index
    %59 = vector.load %arg7[%c0_49, %c0_50] : memref<16x64xf32, #tpu.memory_space<vmem>>, vector<16x64xf32>
    %cst_51 = arith.constant dense<0.000000e+00> : vector<16x1xf32>
    %60 = tpu.matmul %59, %57, %cst_51 {dimension_numbers = #tpu.dot_dimension_numbers<[1], [0], [0], [1], [0, 0, 1, 1], [], []>} : vector<16x64xf32>, vector<64x1xf32>, vector<16x1xf32> -> vector<16x1xf32>
    %cst_52 = arith.constant dense<0.000000e+00> : vector<64x1xf32>
    %61 = tpu.matmul %58, %60, %cst_52 {dimension_numbers = #tpu.dot_dimension_numbers<[1], [0], [0], [1], [0, 0, 1, 1], [], []>} : vector<64x16xf32>, vector<16x1xf32>, vector<64x1xf32> -> vector<64x1xf32>
    %62 = vector.broadcast %61 : vector<64x1xf32> to vector<64x32xf32>
    %63 = arith.subf %55, %62 : vector<64x32xf32>
    %64 = arith.mulf %63, %63 : vector<64x32xf32>
    %cst_53 = arith.constant dense<0.000000e+00> : vector<64xf32>
    %65 = vector.multi_reduction <add>, %64, %cst_53 [1] : vector<64x32xf32> to vector<64xf32>
    %66 = vector.shape_cast %65 : vector<64xf32> to vector<64x1xf32>
    %c0_54 = arith.constant 0 : index
    %c0_55 = arith.constant 0 : index
    %67 = vector.load %arg8[%c0_54, %c0_55] : memref<64x16xf32, #tpu.memory_space<vmem>>, vector<64x16xf32>
    %c0_56 = arith.constant 0 : index
    %c0_57 = arith.constant 0 : index
    %68 = vector.load %arg7[%c0_56, %c0_57] : memref<16x64xf32, #tpu.memory_space<vmem>>, vector<16x64xf32>
    %cst_58 = arith.constant dense<0.000000e+00> : vector<16x1xf32>
    %69 = tpu.matmul %68, %66, %cst_58 {dimension_numbers = #tpu.dot_dimension_numbers<[1], [0], [0], [1], [0, 0, 1, 1], [], []>} : vector<16x64xf32>, vector<64x1xf32>, vector<16x1xf32> -> vector<16x1xf32>
    %cst_59 = arith.constant dense<0.000000e+00> : vector<64x1xf32>
    %70 = tpu.matmul %67, %69, %cst_59 {dimension_numbers = #tpu.dot_dimension_numbers<[1], [0], [0], [1], [0, 0, 1, 1], [], []>} : vector<64x16xf32>, vector<16x1xf32>, vector<64x1xf32> -> vector<64x1xf32>
    %cst_60 = arith.constant 9.99999974E-6 : f32
    %71 = vector.broadcast %cst_60 : f32 to vector<64x1xf32>
    %72 = arith.addf %70, %71 : vector<64x1xf32>
    %73 = math.rsqrt %72 : vector<64x1xf32>
    %74 = vector.broadcast %73 : vector<64x1xf32> to vector<64x32xf32>
    %75 = arith.mulf %63, %74 : vector<64x32xf32>
    %c0_61 = arith.constant 0 : index
    %c0_62 = arith.constant 0 : index
    %c0_63 = arith.constant 0 : index
    %76 = vector.load %arg9[%c0_61, %c0_62, %c0_63] : memref<2x64x1xf32, #tpu.memory_space<vmem>>, vector<1x64x1xf32>
    %77 = vector.shape_cast %76 : vector<1x64x1xf32> to vector<64x1xf32>
    %78 = vector.broadcast %77 : vector<64x1xf32> to vector<64x32xf32>
    %79 = arith.mulf %75, %78 : vector<64x32xf32>
    %c1_64 = arith.constant 1 : index
    %c0_65 = arith.constant 0 : index
    %c0_66 = arith.constant 0 : index
    %80 = vector.load %arg9[%c1_64, %c0_65, %c0_66] : memref<2x64x1xf32, #tpu.memory_space<vmem>>, vector<1x64x1xf32>
    %81 = vector.shape_cast %80 : vector<1x64x1xf32> to vector<64x1xf32>
    %82 = vector.broadcast %81 : vector<64x1xf32> to vector<64x32xf32>
    %83 = arith.addf %79, %82 : vector<64x32xf32>
    %cst_67 = arith.constant 0.000000e+00 : f32
    %84 = vector.broadcast %cst_67 : f32 to vector<64x32xf32>
    %85 = arith.cmpf oge, %83, %84 : vector<64x32xf32>
    %cst_68 = arith.constant 0.00999999977 : f32
    %86 = vector.broadcast %cst_68 : f32 to vector<64x32xf32>
    %87 = arith.mulf %86, %83 : vector<64x32xf32>
    %88 = arith.select %85, %83, %87 : vector<64x32xi1>, vector<64x32xf32>
    %c0_69 = arith.constant 0 : index
    %c0_70 = arith.constant 0 : index
    %c0_71 = arith.constant 0 : index
    %89 = vector.load %arg10[%c0_69, %c0_70, %c0_71] : memref<3x64x64xbf16, #tpu.memory_space<vmem>>, vector<1x64x64xbf16>
    %90 = vector.shape_cast %89 : vector<1x64x64xbf16> to vector<64x64xbf16>
    %91 = arith.truncf %88 : vector<64x32xf32> to vector<64x32xbf16>
    %cst_72 = arith.constant dense<0.000000e+00> : vector<64x32xf32>
    %92 = tpu.matmul %90, %91, %cst_72 {dimension_numbers = #tpu.dot_dimension_numbers<[1], [0], [0], [1], [0, 0, 1, 1], [], []>} : vector<64x64xbf16>, vector<64x32xbf16>, vector<64x32xf32> -> vector<64x32xf32>
    %c0_73 = arith.constant 0 : index
    %c0_74 = arith.constant 0 : index
    %c0_75 = arith.constant 0 : index
    %93 = vector.load %arg11[%c0_73, %c0_74, %c0_75] : memref<3x32x64xbf16, #tpu.memory_space<vmem>>, vector<1x32x64xbf16>
    %94 = vector.shape_cast %93 : vector<1x32x64xbf16> to vector<32x64xbf16>
    %95 = arith.truncf %92 : vector<64x32xf32> to vector<64x32xbf16>
    %cst_76 = arith.constant dense<0.000000e+00> : vector<64x64xf32>
    %96 = tpu.matmul %95, %94, %cst_76 {dimension_numbers = #tpu.dot_dimension_numbers<[1], [0], [0], [1], [0, 0, 1, 1], [], []>} : vector<64x32xbf16>, vector<32x64xbf16>, vector<64x64xf32> -> vector<64x64xf32>
    %c1_77 = arith.constant 1 : index
    %c0_78 = arith.constant 0 : index
    %c0_79 = arith.constant 0 : index
    %97 = vector.load %arg10[%c1_77, %c0_78, %c0_79] : memref<3x64x64xbf16, #tpu.memory_space<vmem>>, vector<1x64x64xbf16>
    %98 = vector.shape_cast %97 : vector<1x64x64xbf16> to vector<64x64xbf16>
    %99 = arith.truncf %88 : vector<64x32xf32> to vector<64x32xbf16>
    %cst_80 = arith.constant dense<0.000000e+00> : vector<64x32xf32>
    %100 = tpu.matmul %98, %99, %cst_80 {dimension_numbers = #tpu.dot_dimension_numbers<[1], [0], [0], [1], [0, 0, 1, 1], [], []>} : vector<64x64xbf16>, vector<64x32xbf16>, vector<64x32xf32> -> vector<64x32xf32>
    %c1_81 = arith.constant 1 : index
    %c0_82 = arith.constant 0 : index
    %c0_83 = arith.constant 0 : index
    %101 = vector.load %arg11[%c1_81, %c0_82, %c0_83] : memref<3x32x64xbf16, #tpu.memory_space<vmem>>, vector<1x32x64xbf16>
    %102 = vector.shape_cast %101 : vector<1x32x64xbf16> to vector<32x64xbf16>
    %103 = arith.truncf %100 : vector<64x32xf32> to vector<64x32xbf16>
    %cst_84 = arith.constant dense<0.000000e+00> : vector<64x64xf32>
    %104 = tpu.matmul %103, %102, %cst_84 {dimension_numbers = #tpu.dot_dimension_numbers<[1], [0], [0], [1], [0, 0, 1, 1], [], []>} : vector<64x32xbf16>, vector<32x64xbf16>, vector<64x64xf32> -> vector<64x64xf32>
    %105 = arith.addf %96, %104 : vector<64x64xf32>
    %c2_85 = arith.constant 2 : index
    %c0_86 = arith.constant 0 : index
    %c0_87 = arith.constant 0 : index
    %106 = vector.load %arg10[%c2_85, %c0_86, %c0_87] : memref<3x64x64xbf16, #tpu.memory_space<vmem>>, vector<1x64x64xbf16>
    %107 = vector.shape_cast %106 : vector<1x64x64xbf16> to vector<64x64xbf16>
    %108 = arith.truncf %88 : vector<64x32xf32> to vector<64x32xbf16>
    %cst_88 = arith.constant dense<0.000000e+00> : vector<64x32xf32>
    %109 = tpu.matmul %107, %108, %cst_88 {dimension_numbers = #tpu.dot_dimension_numbers<[1], [0], [0], [1], [0, 0, 1, 1], [], []>} : vector<64x64xbf16>, vector<64x32xbf16>, vector<64x32xf32> -> vector<64x32xf32>
    %c2_89 = arith.constant 2 : index
    %c0_90 = arith.constant 0 : index
    %c0_91 = arith.constant 0 : index
    %110 = vector.load %arg11[%c2_89, %c0_90, %c0_91] : memref<3x32x64xbf16, #tpu.memory_space<vmem>>, vector<1x32x64xbf16>
    %111 = vector.shape_cast %110 : vector<1x32x64xbf16> to vector<32x64xbf16>
    %112 = arith.truncf %109 : vector<64x32xf32> to vector<64x32xbf16>
    %cst_92 = arith.constant dense<0.000000e+00> : vector<64x64xf32>
    %113 = tpu.matmul %112, %111, %cst_92 {dimension_numbers = #tpu.dot_dimension_numbers<[1], [0], [0], [1], [0, 0, 1, 1], [], []>} : vector<64x32xbf16>, vector<32x64xbf16>, vector<64x64xf32> -> vector<64x64xf32>
    %114 = arith.addf %105, %113 : vector<64x64xf32>
    %cst_93 = arith.constant dense<0.000000e+00> : vector<64xf32>
    %115 = vector.multi_reduction <add>, %114, %cst_93 [1] : vector<64x64xf32> to vector<64xf32>
    %116 = vector.shape_cast %115 : vector<64xf32> to vector<64x1xf32>
    %c0_94 = arith.constant 0 : index
    %c0_95 = arith.constant 0 : index
    %117 = vector.load %arg13[%c0_94, %c0_95] : memref<64x8xf32, #tpu.memory_space<vmem>>, vector<64x8xf32>
    %c0_96 = arith.constant 0 : index
    %c0_97 = arith.constant 0 : index
    %118 = vector.load %arg12[%c0_96, %c0_97] : memref<8x64xf32, #tpu.memory_space<vmem>>, vector<8x64xf32>
    %cst_98 = arith.constant dense<0.000000e+00> : vector<8x1xf32>
    %119 = tpu.matmul %118, %116, %cst_98 {dimension_numbers = #tpu.dot_dimension_numbers<[1], [0], [0], [1], [0, 0, 1, 1], [], []>} : vector<8x64xf32>, vector<64x1xf32>, vector<8x1xf32> -> vector<8x1xf32>
    %cst_99 = arith.constant dense<0.000000e+00> : vector<64x1xf32>
    %120 = tpu.matmul %117, %119, %cst_99 {dimension_numbers = #tpu.dot_dimension_numbers<[1], [0], [0], [1], [0, 0, 1, 1], [], []>} : vector<64x8xf32>, vector<8x1xf32>, vector<64x1xf32> -> vector<64x1xf32>
    %121 = vector.broadcast %120 : vector<64x1xf32> to vector<64x64xf32>
    %122 = arith.subf %114, %121 : vector<64x64xf32>
    %123 = arith.mulf %122, %122 : vector<64x64xf32>
    %cst_100 = arith.constant dense<0.000000e+00> : vector<64xf32>
    %124 = vector.multi_reduction <add>, %123, %cst_100 [1] : vector<64x64xf32> to vector<64xf32>
    %125 = vector.shape_cast %124 : vector<64xf32> to vector<64x1xf32>
    %c0_101 = arith.constant 0 : index
    %c0_102 = arith.constant 0 : index
    %126 = vector.load %arg13[%c0_101, %c0_102] : memref<64x8xf32, #tpu.memory_space<vmem>>, vector<64x8xf32>
    %c0_103 = arith.constant 0 : index
    %c0_104 = arith.constant 0 : index
    %127 = vector.load %arg12[%c0_103, %c0_104] : memref<8x64xf32, #tpu.memory_space<vmem>>, vector<8x64xf32>
    %cst_105 = arith.constant dense<0.000000e+00> : vector<8x1xf32>
    %128 = tpu.matmul %127, %125, %cst_105 {dimension_numbers = #tpu.dot_dimension_numbers<[1], [0], [0], [1], [0, 0, 1, 1], [], []>} : vector<8x64xf32>, vector<64x1xf32>, vector<8x1xf32> -> vector<8x1xf32>
    %cst_106 = arith.constant dense<0.000000e+00> : vector<64x1xf32>
    %129 = tpu.matmul %126, %128, %cst_106 {dimension_numbers = #tpu.dot_dimension_numbers<[1], [0], [0], [1], [0, 0, 1, 1], [], []>} : vector<64x8xf32>, vector<8x1xf32>, vector<64x1xf32> -> vector<64x1xf32>
    %cst_107 = arith.constant 9.99999974E-6 : f32
    %130 = vector.broadcast %cst_107 : f32 to vector<64x1xf32>
    %131 = arith.addf %129, %130 : vector<64x1xf32>
    %132 = math.rsqrt %131 : vector<64x1xf32>
    %133 = vector.broadcast %132 : vector<64x1xf32> to vector<64x64xf32>
    %134 = arith.mulf %122, %133 : vector<64x64xf32>
    %c0_108 = arith.constant 0 : index
    %c0_109 = arith.constant 0 : index
    %c0_110 = arith.constant 0 : index
    %135 = vector.load %arg14[%c0_108, %c0_109, %c0_110] : memref<2x64x1xf32, #tpu.memory_space<vmem>>, vector<1x64x1xf32>
    %136 = vector.shape_cast %135 : vector<1x64x1xf32> to vector<64x1xf32>
    %137 = vector.broadcast %136 : vector<64x1xf32> to vector<64x64xf32>
    %138 = arith.mulf %134, %137 : vector<64x64xf32>
    %c1_111 = arith.constant 1 : index
    %c0_112 = arith.constant 0 : index
    %c0_113 = arith.constant 0 : index
    %139 = vector.load %arg14[%c1_111, %c0_112, %c0_113] : memref<2x64x1xf32, #tpu.memory_space<vmem>>, vector<1x64x1xf32>
    %140 = vector.shape_cast %139 : vector<1x64x1xf32> to vector<64x1xf32>
    %141 = vector.broadcast %140 : vector<64x1xf32> to vector<64x64xf32>
    %142 = arith.addf %138, %141 : vector<64x64xf32>
    %cst_114 = arith.constant 0.000000e+00 : f32
    %143 = vector.broadcast %cst_114 : f32 to vector<64x64xf32>
    %144 = arith.cmpf oge, %142, %143 : vector<64x64xf32>
    %cst_115 = arith.constant 0.00999999977 : f32
    %145 = vector.broadcast %cst_115 : f32 to vector<64x64xf32>
    %146 = arith.mulf %145, %142 : vector<64x64xf32>
    %147 = arith.select %144, %142, %146 : vector<64x64xi1>, vector<64x64xf32>
    %c0_116 = arith.constant 0 : index
    %c0_117 = arith.constant 0 : index
    %c0_118 = arith.constant 0 : index
    %148 = vector.load %arg15[%c0_116, %c0_117, %c0_118] : memref<3x128x64xbf16, #tpu.memory_space<vmem>>, vector<1x128x64xbf16>
    %149 = vector.shape_cast %148 : vector<1x128x64xbf16> to vector<128x64xbf16>
    %150 = arith.truncf %147 : vector<64x64xf32> to vector<64x64xbf16>
    %cst_119 = arith.constant dense<0.000000e+00> : vector<128x64xf32>
    %151 = tpu.matmul %149, %150, %cst_119 {dimension_numbers = #tpu.dot_dimension_numbers<[1], [0], [0], [1], [0, 0, 1, 1], [], []>} : vector<128x64xbf16>, vector<64x64xbf16>, vector<128x64xf32> -> vector<128x64xf32>
    %c0_120 = arith.constant 0 : index
    %c0_121 = arith.constant 0 : index
    %c0_122 = arith.constant 0 : index
    %152 = vector.load %arg16[%c0_120, %c0_121, %c0_122] : memref<3x64x128xbf16, #tpu.memory_space<vmem>>, vector<1x64x128xbf16>
    %153 = vector.shape_cast %152 : vector<1x64x128xbf16> to vector<64x128xbf16>
    %154 = arith.truncf %151 : vector<128x64xf32> to vector<128x64xbf16>
    %cst_123 = arith.constant dense<0.000000e+00> : vector<128x128xf32>
    %155 = tpu.matmul %154, %153, %cst_123 {dimension_numbers = #tpu.dot_dimension_numbers<[1], [0], [0], [1], [0, 0, 1, 1], [], []>} : vector<128x64xbf16>, vector<64x128xbf16>, vector<128x128xf32> -> vector<128x128xf32>
    %c1_124 = arith.constant 1 : index
    %c0_125 = arith.constant 0 : index
    %c0_126 = arith.constant 0 : index
    %156 = vector.load %arg15[%c1_124, %c0_125, %c0_126] : memref<3x128x64xbf16, #tpu.memory_space<vmem>>, vector<1x128x64xbf16>
    %157 = vector.shape_cast %156 : vector<1x128x64xbf16> to vector<128x64xbf16>
    %158 = arith.truncf %147 : vector<64x64xf32> to vector<64x64xbf16>
    %cst_127 = arith.constant dense<0.000000e+00> : vector<128x64xf32>
    %159 = tpu.matmul %157, %158, %cst_127 {dimension_numbers = #tpu.dot_dimension_numbers<[1], [0], [0], [1], [0, 0, 1, 1], [], []>} : vector<128x64xbf16>, vector<64x64xbf16>, vector<128x64xf32> -> vector<128x64xf32>
    %c1_128 = arith.constant 1 : index
    %c0_129 = arith.constant 0 : index
    %c0_130 = arith.constant 0 : index
    %160 = vector.load %arg16[%c1_128, %c0_129, %c0_130] : memref<3x64x128xbf16, #tpu.memory_space<vmem>>, vector<1x64x128xbf16>
    %161 = vector.shape_cast %160 : vector<1x64x128xbf16> to vector<64x128xbf16>
    %162 = arith.truncf %159 : vector<128x64xf32> to vector<128x64xbf16>
    %cst_131 = arith.constant dense<0.000000e+00> : vector<128x128xf32>
    %163 = tpu.matmul %162, %161, %cst_131 {dimension_numbers = #tpu.dot_dimension_numbers<[1], [0], [0], [1], [0, 0, 1, 1], [], []>} : vector<128x64xbf16>, vector<64x128xbf16>, vector<128x128xf32> -> vector<128x128xf32>
    %164 = arith.addf %155, %163 : vector<128x128xf32>
    %c2_132 = arith.constant 2 : index
    %c0_133 = arith.constant 0 : index
    %c0_134 = arith.constant 0 : index
    %165 = vector.load %arg15[%c2_132, %c0_133, %c0_134] : memref<3x128x64xbf16, #tpu.memory_space<vmem>>, vector<1x128x64xbf16>
    %166 = vector.shape_cast %165 : vector<1x128x64xbf16> to vector<128x64xbf16>
    %167 = arith.truncf %147 : vector<64x64xf32> to vector<64x64xbf16>
    %cst_135 = arith.constant dense<0.000000e+00> : vector<128x64xf32>
    %168 = tpu.matmul %166, %167, %cst_135 {dimension_numbers = #tpu.dot_dimension_numbers<[1], [0], [0], [1], [0, 0, 1, 1], [], []>} : vector<128x64xbf16>, vector<64x64xbf16>, vector<128x64xf32> -> vector<128x64xf32>
    %c2_136 = arith.constant 2 : index
    %c0_137 = arith.constant 0 : index
    %c0_138 = arith.constant 0 : index
    %169 = vector.load %arg16[%c2_136, %c0_137, %c0_138] : memref<3x64x128xbf16, #tpu.memory_space<vmem>>, vector<1x64x128xbf16>
    %170 = vector.shape_cast %169 : vector<1x64x128xbf16> to vector<64x128xbf16>
    %171 = arith.truncf %168 : vector<128x64xf32> to vector<128x64xbf16>
    %cst_139 = arith.constant dense<0.000000e+00> : vector<128x128xf32>
    %172 = tpu.matmul %171, %170, %cst_139 {dimension_numbers = #tpu.dot_dimension_numbers<[1], [0], [0], [1], [0, 0, 1, 1], [], []>} : vector<128x64xbf16>, vector<64x128xbf16>, vector<128x128xf32> -> vector<128x128xf32>
    %173 = arith.addf %164, %172 : vector<128x128xf32>
    %cst_140 = arith.constant dense<0.000000e+00> : vector<128xf32>
    %174 = vector.multi_reduction <add>, %173, %cst_140 [1] : vector<128x128xf32> to vector<128xf32>
    %175 = vector.shape_cast %174 : vector<128xf32> to vector<128x1xf32>
    %c0_141 = arith.constant 0 : index
    %c0_142 = arith.constant 0 : index
    %176 = vector.load %arg18[%c0_141, %c0_142] : memref<128x8xf32, #tpu.memory_space<vmem>>, vector<128x8xf32>
    %c0_143 = arith.constant 0 : index
    %c0_144 = arith.constant 0 : index
    %177 = vector.load %arg17[%c0_143, %c0_144] : memref<8x128xf32, #tpu.memory_space<vmem>>, vector<8x128xf32>
    %cst_145 = arith.constant dense<0.000000e+00> : vector<8x1xf32>
    %178 = tpu.matmul %177, %175, %cst_145 {dimension_numbers = #tpu.dot_dimension_numbers<[1], [0], [0], [1], [0, 0, 1, 1], [], []>} : vector<8x128xf32>, vector<128x1xf32>, vector<8x1xf32> -> vector<8x1xf32>
    %cst_146 = arith.constant dense<0.000000e+00> : vector<128x1xf32>
    %179 = tpu.matmul %176, %178, %cst_146 {dimension_numbers = #tpu.dot_dimension_numbers<[1], [0], [0], [1], [0, 0, 1, 1], [], []>} : vector<128x8xf32>, vector<8x1xf32>, vector<128x1xf32> -> vector<128x1xf32>
    %180 = vector.broadcast %179 : vector<128x1xf32> to vector<128x128xf32>
    %181 = arith.subf %173, %180 : vector<128x128xf32>
    %182 = arith.mulf %181, %181 : vector<128x128xf32>
    %cst_147 = arith.constant dense<0.000000e+00> : vector<128xf32>
    %183 = vector.multi_reduction <add>, %182, %cst_147 [1] : vector<128x128xf32> to vector<128xf32>
    %184 = vector.shape_cast %183 : vector<128xf32> to vector<128x1xf32>
    %c0_148 = arith.constant 0 : index
    %c0_149 = arith.constant 0 : index
    %185 = vector.load %arg18[%c0_148, %c0_149] : memref<128x8xf32, #tpu.memory_space<vmem>>, vector<128x8xf32>
    %c0_150 = arith.constant 0 : index
    %c0_151 = arith.constant 0 : index
    %186 = vector.load %arg17[%c0_150, %c0_151] : memref<8x128xf32, #tpu.memory_space<vmem>>, vector<8x128xf32>
    %cst_152 = arith.constant dense<0.000000e+00> : vector<8x1xf32>
    %187 = tpu.matmul %186, %184, %cst_152 {dimension_numbers = #tpu.dot_dimension_numbers<[1], [0], [0], [1], [0, 0, 1, 1], [], []>} : vector<8x128xf32>, vector<128x1xf32>, vector<8x1xf32> -> vector<8x1xf32>
    %cst_153 = arith.constant dense<0.000000e+00> : vector<128x1xf32>
    %188 = tpu.matmul %185, %187, %cst_153 {dimension_numbers = #tpu.dot_dimension_numbers<[1], [0], [0], [1], [0, 0, 1, 1], [], []>} : vector<128x8xf32>, vector<8x1xf32>, vector<128x1xf32> -> vector<128x1xf32>
    %cst_154 = arith.constant 9.99999974E-6 : f32
    %189 = vector.broadcast %cst_154 : f32 to vector<128x1xf32>
    %190 = arith.addf %188, %189 : vector<128x1xf32>
    %191 = math.rsqrt %190 : vector<128x1xf32>
    %192 = vector.broadcast %191 : vector<128x1xf32> to vector<128x128xf32>
    %193 = arith.mulf %181, %192 : vector<128x128xf32>
    %c0_155 = arith.constant 0 : index
    %c0_156 = arith.constant 0 : index
    %c0_157 = arith.constant 0 : index
    %194 = vector.load %arg19[%c0_155, %c0_156, %c0_157] : memref<2x128x1xf32, #tpu.memory_space<vmem>>, vector<1x128x1xf32>
    %195 = vector.shape_cast %194 : vector<1x128x1xf32> to vector<128x1xf32>
    %196 = vector.broadcast %195 : vector<128x1xf32> to vector<128x128xf32>
    %197 = arith.mulf %193, %196 : vector<128x128xf32>
    %c1_158 = arith.constant 1 : index
    %c0_159 = arith.constant 0 : index
    %c0_160 = arith.constant 0 : index
    %198 = vector.load %arg19[%c1_158, %c0_159, %c0_160] : memref<2x128x1xf32, #tpu.memory_space<vmem>>, vector<1x128x1xf32>
    %199 = vector.shape_cast %198 : vector<1x128x1xf32> to vector<128x1xf32>
    %200 = vector.broadcast %199 : vector<128x1xf32> to vector<128x128xf32>
    %201 = arith.addf %197, %200 : vector<128x128xf32>
    %cst_161 = arith.constant 0.000000e+00 : f32
    %202 = vector.broadcast %cst_161 : f32 to vector<128x128xf32>
    %203 = arith.cmpf oge, %201, %202 : vector<128x128xf32>
    %cst_162 = arith.constant 0.00999999977 : f32
    %204 = vector.broadcast %cst_162 : f32 to vector<128x128xf32>
    %205 = arith.mulf %204, %201 : vector<128x128xf32>
    %206 = arith.select %203, %201, %205 : vector<128x128xi1>, vector<128x128xf32>
    %c0_163 = arith.constant 0 : index
    %c0_164 = arith.constant 0 : index
    %c0_165 = arith.constant 0 : index
    %207 = vector.load %arg20[%c0_163, %c0_164, %c0_165] : memref<3x256x128xbf16, #tpu.memory_space<vmem>>, vector<1x256x128xbf16>
    %208 = vector.shape_cast %207 : vector<1x256x128xbf16> to vector<256x128xbf16>
    %209 = arith.truncf %206 : vector<128x128xf32> to vector<128x128xbf16>
    %cst_166 = arith.constant dense<0.000000e+00> : vector<256x128xf32>
    %210 = tpu.matmul %208, %209, %cst_166 {dimension_numbers = #tpu.dot_dimension_numbers<[1], [0], [0], [1], [0, 0, 1, 1], [], []>} : vector<256x128xbf16>, vector<128x128xbf16>, vector<256x128xf32> -> vector<256x128xf32>
    %c0_167 = arith.constant 0 : index
    %c0_168 = arith.constant 0 : index
    %c0_169 = arith.constant 0 : index
    %211 = vector.load %arg21[%c0_167, %c0_168, %c0_169] : memref<3x128x256xbf16, #tpu.memory_space<vmem>>, vector<1x128x256xbf16>
    %212 = vector.shape_cast %211 : vector<1x128x256xbf16> to vector<128x256xbf16>
    %213 = arith.truncf %210 : vector<256x128xf32> to vector<256x128xbf16>
    %cst_170 = arith.constant dense<0.000000e+00> : vector<256x256xf32>
    %214 = tpu.matmul %213, %212, %cst_170 {dimension_numbers = #tpu.dot_dimension_numbers<[1], [0], [0], [1], [0, 0, 1, 1], [], []>} : vector<256x128xbf16>, vector<128x256xbf16>, vector<256x256xf32> -> vector<256x256xf32>
    %c1_171 = arith.constant 1 : index
    %c0_172 = arith.constant 0 : index
    %c0_173 = arith.constant 0 : index
    %215 = vector.load %arg20[%c1_171, %c0_172, %c0_173] : memref<3x256x128xbf16, #tpu.memory_space<vmem>>, vector<1x256x128xbf16>
    %216 = vector.shape_cast %215 : vector<1x256x128xbf16> to vector<256x128xbf16>
    %217 = arith.truncf %206 : vector<128x128xf32> to vector<128x128xbf16>
    %cst_174 = arith.constant dense<0.000000e+00> : vector<256x128xf32>
    %218 = tpu.matmul %216, %217, %cst_174 {dimension_numbers = #tpu.dot_dimension_numbers<[1], [0], [0], [1], [0, 0, 1, 1], [], []>} : vector<256x128xbf16>, vector<128x128xbf16>, vector<256x128xf32> -> vector<256x128xf32>
    %c1_175 = arith.constant 1 : index
    %c0_176 = arith.constant 0 : index
    %c0_177 = arith.constant 0 : index
    %219 = vector.load %arg21[%c1_175, %c0_176, %c0_177] : memref<3x128x256xbf16, #tpu.memory_space<vmem>>, vector<1x128x256xbf16>
    %220 = vector.shape_cast %219 : vector<1x128x256xbf16> to vector<128x256xbf16>
    %221 = arith.truncf %218 : vector<256x128xf32> to vector<256x128xbf16>
    %cst_178 = arith.constant dense<0.000000e+00> : vector<256x256xf32>
    %222 = tpu.matmul %221, %220, %cst_178 {dimension_numbers = #tpu.dot_dimension_numbers<[1], [0], [0], [1], [0, 0, 1, 1], [], []>} : vector<256x128xbf16>, vector<128x256xbf16>, vector<256x256xf32> -> vector<256x256xf32>
    %223 = arith.addf %214, %222 : vector<256x256xf32>
    %c2_179 = arith.constant 2 : index
    %c0_180 = arith.constant 0 : index
    %c0_181 = arith.constant 0 : index
    %224 = vector.load %arg20[%c2_179, %c0_180, %c0_181] : memref<3x256x128xbf16, #tpu.memory_space<vmem>>, vector<1x256x128xbf16>
    %225 = vector.shape_cast %224 : vector<1x256x128xbf16> to vector<256x128xbf16>
    %226 = arith.truncf %206 : vector<128x128xf32> to vector<128x128xbf16>
    %cst_182 = arith.constant dense<0.000000e+00> : vector<256x128xf32>
    %227 = tpu.matmul %225, %226, %cst_182 {dimension_numbers = #tpu.dot_dimension_numbers<[1], [0], [0], [1], [0, 0, 1, 1], [], []>} : vector<256x128xbf16>, vector<128x128xbf16>, vector<256x128xf32> -> vector<256x128xf32>
    %c2_183 = arith.constant 2 : index
    %c0_184 = arith.constant 0 : index
    %c0_185 = arith.constant 0 : index
    %228 = vector.load %arg21[%c2_183, %c0_184, %c0_185] : memref<3x128x256xbf16, #tpu.memory_space<vmem>>, vector<1x128x256xbf16>
    %229 = vector.shape_cast %228 : vector<1x128x256xbf16> to vector<128x256xbf16>
    %230 = arith.truncf %227 : vector<256x128xf32> to vector<256x128xbf16>
    %cst_186 = arith.constant dense<0.000000e+00> : vector<256x256xf32>
    %231 = tpu.matmul %230, %229, %cst_186 {dimension_numbers = #tpu.dot_dimension_numbers<[1], [0], [0], [1], [0, 0, 1, 1], [], []>} : vector<256x128xbf16>, vector<128x256xbf16>, vector<256x256xf32> -> vector<256x256xf32>
    %232 = arith.addf %223, %231 : vector<256x256xf32>
    %cst_187 = arith.constant dense<0.000000e+00> : vector<256xf32>
    %233 = vector.multi_reduction <add>, %232, %cst_187 [1] : vector<256x256xf32> to vector<256xf32>
    %234 = vector.shape_cast %233 : vector<256xf32> to vector<256x1xf32>
    %c0_188 = arith.constant 0 : index
    %c0_189 = arith.constant 0 : index
    %235 = vector.load %arg23[%c0_188, %c0_189] : memref<256x8xf32, #tpu.memory_space<vmem>>, vector<256x8xf32>
    %c0_190 = arith.constant 0 : index
    %c0_191 = arith.constant 0 : index
    %236 = vector.load %arg22[%c0_190, %c0_191] : memref<8x256xf32, #tpu.memory_space<vmem>>, vector<8x256xf32>
    %cst_192 = arith.constant dense<0.000000e+00> : vector<8x1xf32>
    %237 = tpu.matmul %236, %234, %cst_192 {dimension_numbers = #tpu.dot_dimension_numbers<[1], [0], [0], [1], [0, 0, 1, 1], [], []>} : vector<8x256xf32>, vector<256x1xf32>, vector<8x1xf32> -> vector<8x1xf32>
    %cst_193 = arith.constant dense<0.000000e+00> : vector<256x1xf32>
    %238 = tpu.matmul %235, %237, %cst_193 {dimension_numbers = #tpu.dot_dimension_numbers<[1], [0], [0], [1], [0, 0, 1, 1], [], []>} : vector<256x8xf32>, vector<8x1xf32>, vector<256x1xf32> -> vector<256x1xf32>
    %239 = vector.broadcast %238 : vector<256x1xf32> to vector<256x256xf32>
    %240 = arith.subf %232, %239 : vector<256x256xf32>
    %241 = arith.mulf %240, %240 : vector<256x256xf32>
    %cst_194 = arith.constant dense<0.000000e+00> : vector<256xf32>
    %242 = vector.multi_reduction <add>, %241, %cst_194 [1] : vector<256x256xf32> to vector<256xf32>
    %243 = vector.shape_cast %242 : vector<256xf32> to vector<256x1xf32>
    %c0_195 = arith.constant 0 : index
    %c0_196 = arith.constant 0 : index
    %244 = vector.load %arg23[%c0_195, %c0_196] : memref<256x8xf32, #tpu.memory_space<vmem>>, vector<256x8xf32>
    %c0_197 = arith.constant 0 : index
    %c0_198 = arith.constant 0 : index
    %245 = vector.load %arg22[%c0_197, %c0_198] : memref<8x256xf32, #tpu.memory_space<vmem>>, vector<8x256xf32>
    %cst_199 = arith.constant dense<0.000000e+00> : vector<8x1xf32>
    %246 = tpu.matmul %245, %243, %cst_199 {dimension_numbers = #tpu.dot_dimension_numbers<[1], [0], [0], [1], [0, 0, 1, 1], [], []>} : vector<8x256xf32>, vector<256x1xf32>, vector<8x1xf32> -> vector<8x1xf32>
    %cst_200 = arith.constant dense<0.000000e+00> : vector<256x1xf32>
    %247 = tpu.matmul %244, %246, %cst_200 {dimension_numbers = #tpu.dot_dimension_numbers<[1], [0], [0], [1], [0, 0, 1, 1], [], []>} : vector<256x8xf32>, vector<8x1xf32>, vector<256x1xf32> -> vector<256x1xf32>
    %cst_201 = arith.constant 9.99999974E-6 : f32
    %248 = vector.broadcast %cst_201 : f32 to vector<256x1xf32>
    %249 = arith.addf %247, %248 : vector<256x1xf32>
    %250 = math.rsqrt %249 : vector<256x1xf32>
    %251 = vector.broadcast %250 : vector<256x1xf32> to vector<256x256xf32>
    %252 = arith.mulf %240, %251 : vector<256x256xf32>
    %c0_202 = arith.constant 0 : index
    %c0_203 = arith.constant 0 : index
    %c0_204 = arith.constant 0 : index
    %253 = vector.load %arg24[%c0_202, %c0_203, %c0_204] : memref<2x256x1xf32, #tpu.memory_space<vmem>>, vector<1x256x1xf32>
    %254 = vector.shape_cast %253 : vector<1x256x1xf32> to vector<256x1xf32>
    %255 = vector.broadcast %254 : vector<256x1xf32> to vector<256x256xf32>
    %256 = arith.mulf %252, %255 : vector<256x256xf32>
    %c1_205 = arith.constant 1 : index
    %c0_206 = arith.constant 0 : index
    %c0_207 = arith.constant 0 : index
    %257 = vector.load %arg24[%c1_205, %c0_206, %c0_207] : memref<2x256x1xf32, #tpu.memory_space<vmem>>, vector<1x256x1xf32>
    %258 = vector.shape_cast %257 : vector<1x256x1xf32> to vector<256x1xf32>
    %259 = vector.broadcast %258 : vector<256x1xf32> to vector<256x256xf32>
    %260 = arith.addf %256, %259 : vector<256x256xf32>
    %cst_208 = arith.constant 0.000000e+00 : f32
    %261 = vector.broadcast %cst_208 : f32 to vector<256x256xf32>
    %262 = arith.cmpf oge, %260, %261 : vector<256x256xf32>
    %cst_209 = arith.constant 0.00999999977 : f32
    %263 = vector.broadcast %cst_209 : f32 to vector<256x256xf32>
    %264 = arith.mulf %263, %260 : vector<256x256xf32>
    %265 = arith.select %262, %260, %264 : vector<256x256xi1>, vector<256x256xf32>
    %c0_210 = arith.constant 0 : index
    %c0_211 = arith.constant 0 : index
    %c0_212 = arith.constant 0 : index
    %266 = vector.load %arg25[%c0_210, %c0_211, %c0_212] : memref<5x32x256xbf16, #tpu.memory_space<vmem>>, vector<1x32x256xbf16>
    %267 = vector.shape_cast %266 : vector<1x32x256xbf16> to vector<32x256xbf16>
    %268 = arith.truncf %265 : vector<256x256xf32> to vector<256x256xbf16>
    %cst_213 = arith.constant dense<0.000000e+00> : vector<32x256xf32>
    %269 = tpu.matmul %267, %268, %cst_213 {dimension_numbers = #tpu.dot_dimension_numbers<[1], [0], [0], [1], [0, 0, 1, 1], [], []>} : vector<32x256xbf16>, vector<256x256xbf16>, vector<32x256xf32> -> vector<32x256xf32>
    %c0_214 = arith.constant 0 : index
    %c0_215 = arith.constant 0 : index
    %c0_216 = arith.constant 0 : index
    %270 = vector.load %arg26[%c0_214, %c0_215, %c0_216] : memref<5x256x256xbf16, #tpu.memory_space<vmem>>, vector<1x256x256xbf16>
    %271 = vector.shape_cast %270 : vector<1x256x256xbf16> to vector<256x256xbf16>
    %272 = arith.truncf %269 : vector<32x256xf32> to vector<32x256xbf16>
    %cst_217 = arith.constant dense<0.000000e+00> : vector<32x256xf32>
    %273 = tpu.matmul %272, %271, %cst_217 {dimension_numbers = #tpu.dot_dimension_numbers<[1], [0], [0], [1], [0, 0, 1, 1], [], []>} : vector<32x256xbf16>, vector<256x256xbf16>, vector<32x256xf32> -> vector<32x256xf32>
    %c1_218 = arith.constant 1 : index
    %c0_219 = arith.constant 0 : index
    %c0_220 = arith.constant 0 : index
    %274 = vector.load %arg25[%c1_218, %c0_219, %c0_220] : memref<5x32x256xbf16, #tpu.memory_space<vmem>>, vector<1x32x256xbf16>
    %275 = vector.shape_cast %274 : vector<1x32x256xbf16> to vector<32x256xbf16>
    %276 = arith.truncf %265 : vector<256x256xf32> to vector<256x256xbf16>
    %cst_221 = arith.constant dense<0.000000e+00> : vector<32x256xf32>
    %277 = tpu.matmul %275, %276, %cst_221 {dimension_numbers = #tpu.dot_dimension_numbers<[1], [0], [0], [1], [0, 0, 1, 1], [], []>} : vector<32x256xbf16>, vector<256x256xbf16>, vector<32x256xf32> -> vector<32x256xf32>
    %c1_222 = arith.constant 1 : index
    %c0_223 = arith.constant 0 : index
    %c0_224 = arith.constant 0 : index
    %278 = vector.load %arg26[%c1_222, %c0_223, %c0_224] : memref<5x256x256xbf16, #tpu.memory_space<vmem>>, vector<1x256x256xbf16>
    %279 = vector.shape_cast %278 : vector<1x256x256xbf16> to vector<256x256xbf16>
    %280 = arith.truncf %277 : vector<32x256xf32> to vector<32x256xbf16>
    %cst_225 = arith.constant dense<0.000000e+00> : vector<32x256xf32>
    %281 = tpu.matmul %280, %279, %cst_225 {dimension_numbers = #tpu.dot_dimension_numbers<[1], [0], [0], [1], [0, 0, 1, 1], [], []>} : vector<32x256xbf16>, vector<256x256xbf16>, vector<32x256xf32> -> vector<32x256xf32>
    %282 = arith.addf %273, %281 : vector<32x256xf32>
    %c2_226 = arith.constant 2 : index
    %c0_227 = arith.constant 0 : index
    %c0_228 = arith.constant 0 : index
    %283 = vector.load %arg25[%c2_226, %c0_227, %c0_228] : memref<5x32x256xbf16, #tpu.memory_space<vmem>>, vector<1x32x256xbf16>
    %284 = vector.shape_cast %283 : vector<1x32x256xbf16> to vector<32x256xbf16>
    %285 = arith.truncf %265 : vector<256x256xf32> to vector<256x256xbf16>
    %cst_229 = arith.constant dense<0.000000e+00> : vector<32x256xf32>
    %286 = tpu.matmul %284, %285, %cst_229 {dimension_numbers = #tpu.dot_dimension_numbers<[1], [0], [0], [1], [0, 0, 1, 1], [], []>} : vector<32x256xbf16>, vector<256x256xbf16>, vector<32x256xf32> -> vector<32x256xf32>
    %c2_230 = arith.constant 2 : index
    %c0_231 = arith.constant 0 : index
    %c0_232 = arith.constant 0 : index
    %287 = vector.load %arg26[%c2_230, %c0_231, %c0_232] : memref<5x256x256xbf16, #tpu.memory_space<vmem>>, vector<1x256x256xbf16>
    %288 = vector.shape_cast %287 : vector<1x256x256xbf16> to vector<256x256xbf16>
    %289 = arith.truncf %286 : vector<32x256xf32> to vector<32x256xbf16>
    %cst_233 = arith.constant dense<0.000000e+00> : vector<32x256xf32>
    %290 = tpu.matmul %289, %288, %cst_233 {dimension_numbers = #tpu.dot_dimension_numbers<[1], [0], [0], [1], [0, 0, 1, 1], [], []>} : vector<32x256xbf16>, vector<256x256xbf16>, vector<32x256xf32> -> vector<32x256xf32>
    %291 = arith.addf %282, %290 : vector<32x256xf32>
    %c3 = arith.constant 3 : index
    %c0_234 = arith.constant 0 : index
    %c0_235 = arith.constant 0 : index
    %292 = vector.load %arg25[%c3, %c0_234, %c0_235] : memref<5x32x256xbf16, #tpu.memory_space<vmem>>, vector<1x32x256xbf16>
    %293 = vector.shape_cast %292 : vector<1x32x256xbf16> to vector<32x256xbf16>
    %294 = arith.truncf %265 : vector<256x256xf32> to vector<256x256xbf16>
    %cst_236 = arith.constant dense<0.000000e+00> : vector<32x256xf32>
    %295 = tpu.matmul %293, %294, %cst_236 {dimension_numbers = #tpu.dot_dimension_numbers<[1], [0], [0], [1], [0, 0, 1, 1], [], []>} : vector<32x256xbf16>, vector<256x256xbf16>, vector<32x256xf32> -> vector<32x256xf32>
    %c3_237 = arith.constant 3 : index
    %c0_238 = arith.constant 0 : index
    %c0_239 = arith.constant 0 : index
    %296 = vector.load %arg26[%c3_237, %c0_238, %c0_239] : memref<5x256x256xbf16, #tpu.memory_space<vmem>>, vector<1x256x256xbf16>
    %297 = vector.shape_cast %296 : vector<1x256x256xbf16> to vector<256x256xbf16>
    %298 = arith.truncf %295 : vector<32x256xf32> to vector<32x256xbf16>
    %cst_240 = arith.constant dense<0.000000e+00> : vector<32x256xf32>
    %299 = tpu.matmul %298, %297, %cst_240 {dimension_numbers = #tpu.dot_dimension_numbers<[1], [0], [0], [1], [0, 0, 1, 1], [], []>} : vector<32x256xbf16>, vector<256x256xbf16>, vector<32x256xf32> -> vector<32x256xf32>
    %300 = arith.addf %291, %299 : vector<32x256xf32>
    %c4 = arith.constant 4 : index
    %c0_241 = arith.constant 0 : index
    %c0_242 = arith.constant 0 : index
    %301 = vector.load %arg25[%c4, %c0_241, %c0_242] : memref<5x32x256xbf16, #tpu.memory_space<vmem>>, vector<1x32x256xbf16>
    %302 = vector.shape_cast %301 : vector<1x32x256xbf16> to vector<32x256xbf16>
    %303 = arith.truncf %265 : vector<256x256xf32> to vector<256x256xbf16>
    %cst_243 = arith.constant dense<0.000000e+00> : vector<32x256xf32>
    %304 = tpu.matmul %302, %303, %cst_243 {dimension_numbers = #tpu.dot_dimension_numbers<[1], [0], [0], [1], [0, 0, 1, 1], [], []>} : vector<32x256xbf16>, vector<256x256xbf16>, vector<32x256xf32> -> vector<32x256xf32>
    %c4_244 = arith.constant 4 : index
    %c0_245 = arith.constant 0 : index
    %c0_246 = arith.constant 0 : index
    %305 = vector.load %arg26[%c4_244, %c0_245, %c0_246] : memref<5x256x256xbf16, #tpu.memory_space<vmem>>, vector<1x256x256xbf16>
    %306 = vector.shape_cast %305 : vector<1x256x256xbf16> to vector<256x256xbf16>
    %307 = arith.truncf %304 : vector<32x256xf32> to vector<32x256xbf16>
    %cst_247 = arith.constant dense<0.000000e+00> : vector<32x256xf32>
    %308 = tpu.matmul %307, %306, %cst_247 {dimension_numbers = #tpu.dot_dimension_numbers<[1], [0], [0], [1], [0, 0, 1, 1], [], []>} : vector<32x256xbf16>, vector<256x256xbf16>, vector<32x256xf32> -> vector<32x256xf32>
    %309 = arith.addf %300, %308 : vector<32x256xf32>
    %c0_248 = arith.constant 0 : index
    %c0_249 = arith.constant 0 : index
    %310 = vector.load %arg27[%c0_248, %c0_249] : memref<1x1xf32, #tpu.memory_space<vmem>>, vector<1x1xf32>
    %311 = vector.broadcast %310 : vector<1x1xf32> to vector<32x256xf32>
    %312 = arith.addf %309, %311 : vector<32x256xf32>
    %313 = arith.negf %312 : vector<32x256xf32>
    %314 = math.exp %313 : vector<32x256xf32>
    %cst_250 = arith.constant 1.000000e+00 : f32
    %315 = vector.broadcast %cst_250 : f32 to vector<32x256xf32>
    %316 = arith.addf %315, %314 : vector<32x256xf32>
    %317 = arith.divf %315, %316 : vector<32x256xf32>
    %c0_251 = arith.constant 0 : index
    %c0_252 = arith.constant 0 : index
    %318 = vector.load %arg28[%c0_251, %c0_252] : memref<32x256xf32, #tpu.memory_space<vmem>>, vector<32x256xf32>
    tpu.vector_store %arg28[%c0_251, %c0_252], %317 {strides = array<i32>} : memref<32x256xf32, #tpu.memory_space<vmem>>, vector<32x256xf32>,
    return
  }
  func.func @transform_0(%arg0: i32) -> (i32, i32) {
    %c0_i32 = arith.constant 0 : i32
    %c0_i32_0 = arith.constant 0 : i32
    %c0_i32_1 = arith.constant 0 : i32
    return %c0_i32, %c0_i32_0 : i32, i32
  }
  func.func @transform_1(%arg0: i32) -> (i32, i32, i32) {
    %c0_i32 = arith.constant 0 : i32
    %c0_i32_0 = arith.constant 0 : i32
    %c0_i32_1 = arith.constant 0 : i32
    %c0_i32_2 = arith.constant 0 : i32
    return %c0_i32, %c0_i32_0, %c0_i32_1 : i32, i32, i32
  }
  func.func @transform_2(%arg0: i32) -> (i32, i32, i32) {
    %c0_i32 = arith.constant 0 : i32
    %c0_i32_0 = arith.constant 0 : i32
    %c0_i32_1 = arith.constant 0 : i32
    %c0_i32_2 = arith.constant 0 : i32
    return %c0_i32, %c0_i32_0, %c0_i32_1 : i32, i32, i32
  }
  func.func @transform_3(%arg0: i32) -> (i32, i32, i32) {
    %c0_i32 = arith.constant 0 : i32
    %c0_i32_0 = arith.constant 0 : i32
    %c0_i32_1 = arith.constant 0 : i32
    %c0_i32_2 = arith.constant 0 : i32
    return %c0_i32, %c0_i32_0, %c0_i32_1 : i32, i32, i32
  }
  func.func @transform_4(%arg0: i32) -> (i32, i32, i32) {
    %c0_i32 = arith.constant 0 : i32
    %c0_i32_0 = arith.constant 0 : i32
    %c0_i32_1 = arith.constant 0 : i32
    %c0_i32_2 = arith.constant 0 : i32
    return %c0_i32, %c0_i32_0, %c0_i32_1 : i32, i32, i32
  }
  func.func @transform_5(%arg0: i32) -> (i32, i32, i32) {
    %c0_i32 = arith.constant 0 : i32
    %c0_i32_0 = arith.constant 0 : i32
    %c0_i32_1 = arith.constant 0 : i32
    %c0_i32_2 = arith.constant 0 : i32
    return %c0_i32, %c0_i32_0, %c0_i32_1 : i32, i32, i32
  }
  func.func @transform_6(%arg0: i32) -> (i32, i32) {
    %c0_i32 = arith.constant 0 : i32
    %c0_i32_0 = arith.constant 0 : i32
    %c0_i32_1 = arith.constant 0 : i32
    return %c0_i32, %c0_i32_0 : i32, i32
  }
  func.func @transform_7(%arg0: i32) -> (i32, i32) {
    %c0_i32 = arith.constant 0 : i32
    %c0_i32_0 = arith.constant 0 : i32
    %c0_i32_1 = arith.constant 0 : i32
    return %c0_i32, %c0_i32_0 : i32, i32
  }
  func.func @transform_8(%arg0: i32) -> (i32, i32, i32) {
    %c0_i32 = arith.constant 0 : i32
    %c0_i32_0 = arith.constant 0 : i32
    %c0_i32_1 = arith.constant 0 : i32
    %c0_i32_2 = arith.constant 0 : i32
    return %c0_i32, %c0_i32_0, %c0_i32_1 : i32, i32, i32
  }
  func.func @transform_9(%arg0: i32) -> (i32, i32, i32) {
    %c0_i32 = arith.constant 0 : i32
    %c0_i32_0 = arith.constant 0 : i32
    %c0_i32_1 = arith.constant 0 : i32
    %c0_i32_2 = arith.constant 0 : i32
    return %c0_i32, %c0_i32_0, %c0_i32_1 : i32, i32, i32
  }
  func.func @transform_10(%arg0: i32) -> (i32, i32, i32) {
    %c0_i32 = arith.constant 0 : i32
    %c0_i32_0 = arith.constant 0 : i32
    %c0_i32_1 = arith.constant 0 : i32
    %c0_i32_2 = arith.constant 0 : i32
    return %c0_i32, %c0_i32_0, %c0_i32_1 : i32, i32, i32
  }
  func.func @transform_11(%arg0: i32) -> (i32, i32) {
    %c0_i32 = arith.constant 0 : i32
    %c0_i32_0 = arith.constant 0 : i32
    %c0_i32_1 = arith.constant 0 : i32
    return %c0_i32, %c0_i32_0 : i32, i32
  }
  func.func @transform_12(%arg0: i32) -> (i32, i32) {
    %c0_i32 = arith.constant 0 : i32
    %c0_i32_0 = arith.constant 0 : i32
    %c0_i32_1 = arith.constant 0 : i32
    return %c0_i32, %c0_i32_0 : i32, i32
  }
  func.func @transform_13(%arg0: i32) -> (i32, i32, i32) {
    %c0_i32 = arith.constant 0 : i32
    %c0_i32_0 = arith.constant 0 : i32
    %c0_i32_1 = arith.constant 0 : i32
    %c0_i32_2 = arith.constant 0 : i32
    return %c0_i32, %c0_i32_0, %c0_i32_1 : i32, i32, i32
  }
  func.func @transform_14(%arg0: i32) -> (i32, i32, i32) {
    %c0_i32 = arith.constant 0 : i32
    %c0_i32_0 = arith.constant 0 : i32
    %c0_i32_1 = arith.constant 0 : i32
    %c0_i32_2 = arith.constant 0 : i32
    return %c0_i32, %c0_i32_0, %c0_i32_1 : i32, i32, i32
  }
  func.func @transform_15(%arg0: i32) -> (i32, i32, i32) {
    %c0_i32 = arith.constant 0 : i32
    %c0_i32_0 = arith.constant 0 : i32
    %c0_i32_1 = arith.constant 0 : i32
    %c0_i32_2 = arith.constant 0 : i32
    return %c0_i32, %c0_i32_0, %c0_i32_1 : i32, i32, i32
  }
  func.func @transform_16(%arg0: i32) -> (i32, i32) {
    %c0_i32 = arith.constant 0 : i32
    %c0_i32_0 = arith.constant 0 : i32
    %c0_i32_1 = arith.constant 0 : i32
    return %c0_i32, %c0_i32_0 : i32, i32
  }
  func.func @transform_17(%arg0: i32) -> (i32, i32) {
    %c0_i32 = arith.constant 0 : i32
    %c0_i32_0 = arith.constant 0 : i32
    %c0_i32_1 = arith.constant 0 : i32
    return %c0_i32, %c0_i32_0 : i32, i32
  }
  func.func @transform_18(%arg0: i32) -> (i32, i32, i32) {
    %c0_i32 = arith.constant 0 : i32
    %c0_i32_0 = arith.constant 0 : i32
    %c0_i32_1 = arith.constant 0 : i32
    %c0_i32_2 = arith.constant 0 : i32
    return %c0_i32, %c0_i32_0, %c0_i32_1 : i32, i32, i32
  }
  func.func @transform_19(%arg0: i32) -> (i32, i32, i32) {
    %c0_i32 = arith.constant 0 : i32
    %c0_i32_0 = arith.constant 0 : i32
    %c0_i32_1 = arith.constant 0 : i32
    %c0_i32_2 = arith.constant 0 : i32
    return %c0_i32, %c0_i32_0, %c0_i32_1 : i32, i32, i32
  }
  func.func @transform_20(%arg0: i32) -> (i32, i32, i32) {
    %c0_i32 = arith.constant 0 : i32
    %c0_i32_0 = arith.constant 0 : i32
    %c0_i32_1 = arith.constant 0 : i32
    %c0_i32_2 = arith.constant 0 : i32
    return %c0_i32, %c0_i32_0, %c0_i32_1 : i32, i32, i32
  }
  func.func @transform_21(%arg0: i32) -> (i32, i32) {
    %c0_i32 = arith.constant 0 : i32
    %c0_i32_0 = arith.constant 0 : i32
    %c0_i32_1 = arith.constant 0 : i32
    return %c0_i32, %c0_i32_0 : i32, i32
  }
  func.func @transform_22(%arg0: i32) -> (i32, i32) {
    %c0_i32 = arith.constant 0 : i32
    %c0_i32_0 = arith.constant 0 : i32
    %c0_i32_1 = arith.constant 0 : i32
    return %c0_i32, %c0_i32_0 : i32, i32
  }
  func.func @transform_23(%arg0: i32) -> (i32, i32, i32) {
    %c0_i32 = arith.constant 0 : i32
    %c0_i32_0 = arith.constant 0 : i32
    %c0_i32_1 = arith.constant 0 : i32
    %c0_i32_2 = arith.constant 0 : i32
    return %c0_i32, %c0_i32_0, %c0_i32_1 : i32, i32, i32
  }
  func.func @transform_24(%arg0: i32) -> (i32, i32, i32) {
    %c0_i32 = arith.constant 0 : i32
    %c0_i32_0 = arith.constant 0 : i32
    %c0_i32_1 = arith.constant 0 : i32
    %c0_i32_2 = arith.constant 0 : i32
    return %c0_i32, %c0_i32_0, %c0_i32_1 : i32, i32, i32
  }
  func.func @transform_25(%arg0: i32) -> (i32, i32, i32) {
    %c0_i32 = arith.constant 0 : i32
    %c0_i32_0 = arith.constant 0 : i32
    %c0_i32_1 = arith.constant 0 : i32
    %c0_i32_2 = arith.constant 0 : i32
    return %c0_i32, %c0_i32_0, %c0_i32_1 : i32, i32, i32
  }
  func.func @transform_26(%arg0: i32) -> (i32, i32) {
    %c0_i32 = arith.constant 0 : i32
    %c0_i32_0 = arith.constant 0 : i32
    %c0_i32_1 = arith.constant 0 : i32
    return %c0_i32, %c0_i32_0 : i32, i32
  }
  func.func @transform_27(%arg0: i32) -> (i32, i32) {
    %c0_i32 = arith.constant 0 : i32
    %c0_i32_0 = arith.constant 0 : i32
    %c0_i32_1 = arith.constant 0 : i32
    return %c0_i32, %c0_i32_0 : i32, i32
  }
}

</mosaic_0001>

<llo_original>
// kernel: decoder_forward.1
$region0: #{decoder_forward.1}
  #allocation0 [shape = 'u32[]', space=smem, size = 0x4, offset = 0x4, fixed_abs, tag = 'smem constant byte address 0x4 - core index']
  #allocation1 [shape = 'u32[72,128]{1,0:T(1,128)}', space=vmem, size = 0x9000, scoped, tag = 'internal scratch']
  #allocation2 [shape = 'f32[1,1]{1,0:T(1,128)S(1)}', space=vmem, size = 0x200, scoped, tag = 'scoped memory for decoder_forward.1']
  %s0 = inlined_call_operand.vmem [shape: f32[64,8], index: 0, kind: input, shape index: {}]
  %s1 = inlined_call_operand.vmem [shape: bf16[2,32,64], index: 1, kind: input, shape index: {}]
  %s2 = inlined_call_operand.vmem [shape: f32[2,32,1], index: 2, kind: input, shape index: {}]
  %s3 = inlined_call_operand.vmem [shape: bf16[2,8,16], index: 3, kind: input, shape index: {}]
  %s4 = inlined_call_operand.vmem [shape: bf16[3,64,32], index: 4, kind: input, shape index: {}]
  %s5 = inlined_call_operand.hbm [shape: bf16[3,16,32], index: 5, kind: input, shape index: {}]
  %s6 = inlined_call_operand.hbm [shape: f32[16,64], index: 6, kind: input, shape index: {}]
  %s7 = inlined_call_operand.vmem [shape: f32[64,16], index: 7, kind: input, shape index: {}]
  %s8 = inlined_call_operand.vmem [shape: f32[2,64,1], index: 8, kind: input, shape index: {}]
  %s9 = inlined_call_operand.vmem [shape: bf16[3,64,64], index: 9, kind: input, shape index: {}]
  %s10 = inlined_call_operand.hbm [shape: bf16[3,32,64], index: 10, kind: input, shape index: {}]
  %s11 = inlined_call_operand.hbm [shape: f32[8,64], index: 11, kind: input, shape index: {}]
  %s12 = inlined_call_operand.vmem [shape: f32[64,8], index: 12, kind: input, shape index: {}]
  %s13 = inlined_call_operand.vmem [shape: f32[2,64,1], index: 13, kind: input, shape index: {}]
  %s14 = inlined_call_operand.vmem [shape: bf16[3,128,64], index: 14, kind: input, shape index: {}]
  %s15 = inlined_call_operand.hbm [shape: bf16[3,64,128], index: 15, kind: input, shape index: {}]
  %s16 = inlined_call_operand.hbm [shape: f32[8,128], index: 16, kind: input, shape index: {}]
  %s17 = inlined_call_operand.vmem [shape: f32[128,8], index: 17, kind: input, shape index: {}]
  %s18 = inlined_call_operand.vmem [shape: f32[2,128,1], index: 18, kind: input, shape index: {}]
  %s19 = inlined_call_operand.vmem [shape: bf16[3,256,128], index: 19, kind: input, shape index: {}]
  %s20 = inlined_call_operand.vmem [shape: bf16[3,128,256], index: 20, kind: input, shape index: {}]
  %s21 = inlined_call_operand.hbm [shape: f32[8,256], index: 21, kind: input, shape index: {}]
  %s22 = inlined_call_operand.vmem [shape: f32[256,8], index: 22, kind: input, shape index: {}]
  %s23 = inlined_call_operand.vmem [shape: f32[2,256,1], index: 23, kind: input, shape index: {}]
  %s24 = inlined_call_operand.hbm [shape: bf16[5,32,256], index: 24, kind: input, shape index: {}]
  %s25 = inlined_call_operand.vmem [shape: bf16[5,256,256], index: 25, kind: input, shape index: {}]
  %s26 = inlined_call_operand.<no memory space> [shape: f32[1,1], index: 26, kind: input, shape index: {}]
  %s27 = inlined_call_operand.vmem [shape: f32[32,256], index: 27, kind: output, shape index: {}]
  %s28 = sld [smem:[#allocation0]]
  $region150: #{decoder_forward.1} parent=0
    _
  %s30 = ssub.s32 1, %s28
  %s31 = scalar_select 0, %s30, %s28
  %v32 = vstv %s26
  %33 = vst [vmem:[#allocation2] sm:$0x1] %v32
  $region1: #{decoder_forward.1} parent=0
    #allocation3 [shape = 'u8[12288]{0}', space=vmem, size = 0x3000, scoped, tag = 'input window, operand 5, single buffered']
    #allocation4 [shape = 's32[1]{0}', space=sflag, size = 0x4, scoped, tag = 'scoped memory for decoder_forward.1']
    #allocation5 [shape = 'u8[8192]{0}', space=vmem, size = 0x2000, scoped, tag = 'input window, operand 6, single buffered']
    #allocation6 [shape = 's32[1]{0}', space=sflag, size = 0x4, scoped, tag = 'scoped memory for decoder_forward.1']
    #allocation7 [shape = 'u8[24576]{0}', space=vmem, size = 0x6000, scoped, tag = 'input window, operand 10, single buffered']
    #allocation8 [shape = 'u8[4096]{0}', space=vmem, size = 0x1000, scoped, tag = 'input window, operand 11, single buffered']
    #allocation9 [shape = 's32[1]{0}', space=sflag, size = 0x4, scoped, tag = 'scoped memory for decoder_forward.1']
    #allocation10 [shape = 'u8[49152]{0}', space=vmem, size = 0xc000, scoped, tag = 'input window, operand 15, single buffered']
    #allocation11 [shape = 'u8[4096]{0}', space=vmem, size = 0x1000, scoped, tag = 'input window, operand 16, single buffered']
    #allocation12 [shape = 's32[1]{0}', space=sflag, size = 0x4, scoped, tag = 'scoped memory for decoder_forward.1']
    #allocation13 [shape = 'u8[8192]{0}', space=vmem, size = 0x2000, scoped, tag = 'input window, operand 21, single buffered']
    #allocation14 [shape = 'u8[81920]{0}', space=vmem, size = 0x14000, scoped, tag = 'input window, operand 24, single buffered']
    #allocation15 [shape = 's32[1]{0}', space=sflag, size = 0x4, scoped, tag = 'scoped memory for decoder_forward.1']
    %34 = vsyncpa [#allocation4], 0
    %35 = vsyncpa [#allocation6], 0
    %36 = vsyncpa [#allocation9], 0
    %37 = vsyncpa [#allocation12], 0
    %38 = vsyncpa [#allocation15], 0
    // Predicated region
    $region2: #{decoder_forward.1} parent=1 // pred_check
      _
    $region3: #{decoder_forward.1} parent=1 // pred_check_branch
      %40 = sbr.rel (0) target = $region5
    $region4: #{decoder_forward.1} parent=1 // pred_region
      _
    $region5: #{decoder_forward.1} parent=1 // pred_fallthru
      _
    // Predicated region
    $region6: #{decoder_forward.1} parent=1 // pred_check
      _
    $region7: #{decoder_forward.1} parent=1 // pred_check_branch
      %42 = sbr.rel (0) target = $region9
    $region8: #{decoder_forward.1} parent=1 // pred_region
      _
    $region9: #{decoder_forward.1} parent=1 // pred_fallthru
      _
    // Predicated region
    $region10: #{decoder_forward.1} parent=1 // pred_check
      _
    $region11: #{decoder_forward.1} parent=1 // pred_check_branch
      %44 = sbr.rel (0) target = $region13
    $region12: #{decoder_forward.1} parent=1 // pred_region
      _
    $region13: #{decoder_forward.1} parent=1 // pred_fallthru
      _
    // Predicated region
    $region14: #{decoder_forward.1} parent=1 // pred_check
      _
    $region15: #{decoder_forward.1} parent=1 // pred_check_branch
      %46 = sbr.rel (0) target = $region17
    $region16: #{decoder_forward.1} parent=1 // pred_region
      _
    $region17: #{decoder_forward.1} parent=1 // pred_fallthru
      _
    // Predicated region
    $region18: #{decoder_forward.1} parent=1 // pred_check
      _
    $region19: #{decoder_forward.1} parent=1 // pred_check_branch
      %48 = sbr.rel (0) target = $region21
    $region20: #{decoder_forward.1} parent=1 // pred_region
      _
    $region21: #{decoder_forward.1} parent=1 // pred_fallthru
      _
    // Predicated region
    $region22: #{decoder_forward.1} parent=1 // pred_check
      _
    $region23: #{decoder_forward.1} parent=1 // pred_check_branch
      %50 = sbr.rel (0) target = $region25
    $region24: #{decoder_forward.1} parent=1 // pred_region
      %52 = vsyncadd [#allocation4], 0
      %s53 = sshll.u32 %s5, 4
      %s54 = int_to_ptr.hbm [resolvable:$true] %s53
      %s55 = sshll.u32 [#allocation3], 4
      %s56 = int_to_ptr.vmem [resolvable:$true] %s55
      %61 = dma.hbm_to_vmem [thread:$0]  %s54, 384, %s56, [#allocation4], 64, 64, 4
    $region25: #{decoder_forward.1} parent=1 // pred_fallthru
      _
    // Predicated region
    $region26: #{decoder_forward.1} parent=1 // pred_check
      _
    $region27: #{decoder_forward.1} parent=1 // pred_check_branch
      %63 = sbr.rel (0) target = $region29
    $region28: #{decoder_forward.1} parent=1 // pred_region
      %65 = vsyncadd [#allocation6], 0
      %s66 = sshll.u32 %s6, 4
      %s67 = int_to_ptr.hbm [resolvable:$true] %s66
      %s68 = sshll.u32 [#allocation5], 4
      %s69 = int_to_ptr.vmem [resolvable:$true] %s68
      %74 = dma.hbm_to_vmem [thread:$0]  %s67, 256, %s69, [#allocation6], 128, 128, 8
    $region29: #{decoder_forward.1} parent=1 // pred_fallthru
      _
    // Predicated region
    $region30: #{decoder_forward.1} parent=1 // pred_check
      _
    $region31: #{decoder_forward.1} parent=1 // pred_check_branch
      %76 = sbr.rel (0) target = $region33
    $region32: #{decoder_forward.1} parent=1 // pred_region
      _
    $region33: #{decoder_forward.1} parent=1 // pred_fallthru
      _
    // Predicated region
    $region34: #{decoder_forward.1} parent=1 // pred_check
      _
    $region35: #{decoder_forward.1} parent=1 // pred_check_branch
      %78 = sbr.rel (0) target = $region37
    $region36: #{decoder_forward.1} parent=1 // pred_region
      _
    $region37: #{decoder_forward.1} parent=1 // pred_fallthru
      _
    // Predicated region
    $region38: #{decoder_forward.1} parent=1 // pred_check
      _
    $region39: #{decoder_forward.1} parent=1 // pred_check_branch
      %80 = sbr.rel (0) target = $region41
    $region40: #{decoder_forward.1} parent=1 // pred_region
      _
    $region41: #{decoder_forward.1} parent=1 // pred_fallthru
      _
    // Predicated region
    $region42: #{decoder_forward.1} parent=1 // pred_check
      _
    $region43: #{decoder_forward.1} parent=1 // pred_check_branch
      %82 = sbr.rel (0) target = $region45
    $region44: #{decoder_forward.1} parent=1 // pred_region
      %84 = vsyncadd [#allocation6], 0
      %s85 = sshll.u32 %s10, 4
      %s86 = int_to_ptr.hbm [resolvable:$true] %s85
      %s87 = sshll.u32 [#allocation7], 4
      %s88 = int_to_ptr.vmem [resolvable:$true] %s87
      %93 = dma.hbm_to_vmem [thread:$0]  %s86, 768, %s88, [#allocation6], 64, 64, 4
    $region45: #{decoder_forward.1} parent=1 // pred_fallthru
      _
    // Predicated region
    $region46: #{decoder_forward.1} parent=1 // pred_check
      _
    $region47: #{decoder_forward.1} parent=1 // pred_check_branch
      %95 = sbr.rel (0) target = $region49
    $region48: #{decoder_forward.1} parent=1 // pred_region
      %97 = vsyncadd [#allocation9], 0
      %s99 = sshll.u32 %s11, 4
      %s100 = int_to_ptr.hbm [resolvable:$true] %s99
      %s101 = sshll.u32 [#allocation8], 4
      %s102 = int_to_ptr.vmem [resolvable:$true] %s101
      %104 = dma.hbm_to_vmem [thread:$0]  %s100, 128, %s102, [#allocation9]
    $region49: #{decoder_forward.1} parent=1 // pred_fallthru
      _
    // Predicated region
    $region50: #{decoder_forward.1} parent=1 // pred_check
      _
    $region51: #{decoder_forward.1} parent=1 // pred_check_branch
      %106 = sbr.rel (0) target = $region53
    $region52: #{decoder_forward.1} parent=1 // pred_region
      _
    $region53: #{decoder_forward.1} parent=1 // pred_fallthru
      _
    // Predicated region
    $region54: #{decoder_forward.1} parent=1 // pred_check
      _
    $region55: #{decoder_forward.1} parent=1 // pred_check_branch
      %108 = sbr.rel (0) target = $region57
    $region56: #{decoder_forward.1} parent=1 // pred_region
      _
    $region57: #{decoder_forward.1} parent=1 // pred_fallthru
      _
    // Predicated region
    $region58: #{decoder_forward.1} parent=1 // pred_check
      _
    $region59: #{decoder_forward.1} parent=1 // pred_check_branch
      %110 = sbr.rel (0) target = $region61
    $region60: #{decoder_forward.1} parent=1 // pred_region
      _
    $region61: #{decoder_forward.1} parent=1 // pred_fallthru
      _
    // Predicated region
    $region62: #{decoder_forward.1} parent=1 // pred_check
      _
    $region63: #{decoder_forward.1} parent=1 // pred_check_branch
      %112 = sbr.rel (0) target = $region65
    $region64: #{decoder_forward.1} parent=1 // pred_region
      %114 = vsyncadd [#allocation9], 0
      %s115 = sshll.u32 %s15, 4
      %s116 = int_to_ptr.hbm [resolvable:$true] %s115
      %s117 = sshll.u32 [#allocation10], 4
      %s118 = int_to_ptr.vmem [resolvable:$true] %s117
      %123 = dma.hbm_to_vmem [thread:$0]  %s116, 1536, %s118, [#allocation9], 64, 64, 4
    $region65: #{decoder_forward.1} parent=1 // pred_fallthru
      _
    // Predicated region
    $region66: #{decoder_forward.1} parent=1 // pred_check
      _
    $region67: #{decoder_forward.1} parent=1 // pred_check_branch
      %125 = sbr.rel (0) target = $region69
    $region68: #{decoder_forward.1} parent=1 // pred_region
      %127 = vsyncadd [#allocation12], 0
      %s129 = sshll.u32 %s16, 4
      %s130 = int_to_ptr.hbm [resolvable:$true] %s129
      %s131 = sshll.u32 [#allocation11], 4
      %s132 = int_to_ptr.vmem [resolvable:$true] %s131
      %134 = dma.hbm_to_vmem [thread:$0]  %s130, 128, %s132, [#allocation12]
    $region69: #{decoder_forward.1} parent=1 // pred_fallthru
      _
    // Predicated region
    $region70: #{decoder_forward.1} parent=1 // pred_check
      _
    $region71: #{decoder_forward.1} parent=1 // pred_check_branch
      %136 = sbr.rel (0) target = $region73
    $region72: #{decoder_forward.1} parent=1 // pred_region
      _
    $region73: #{decoder_forward.1} parent=1 // pred_fallthru
      _
    // Predicated region
    $region74: #{decoder_forward.1} parent=1 // pred_check
      _
    $region75: #{decoder_forward.1} parent=1 // pred_check_branch
      %138 = sbr.rel (0) target = $region77
    $region76: #{decoder_forward.1} parent=1 // pred_region
      _
    $region77: #{decoder_forward.1} parent=1 // pred_fallthru
      _
    // Predicated region
    $region78: #{decoder_forward.1} parent=1 // pred_check
      _
    $region79: #{decoder_forward.1} parent=1 // pred_check_branch
      %140 = sbr.rel (0) target = $region81
    $region80: #{decoder_forward.1} parent=1 // pred_region
      _
    $region81: #{decoder_forward.1} parent=1 // pred_fallthru
      _
    // Predicated region
    $region82: #{decoder_forward.1} parent=1 // pred_check
      _
    $region83: #{decoder_forward.1} parent=1 // pred_check_branch
      %142 = sbr.rel (0) target = $region85
    $region84: #{decoder_forward.1} parent=1 // pred_region
      _
    $region85: #{decoder_forward.1} parent=1 // pred_fallthru
      _
    // Predicated region
    $region86: #{decoder_forward.1} parent=1 // pred_check
      _
    $region87: #{decoder_forward.1} parent=1 // pred_check_branch
      %144 = sbr.rel (0) target = $region89
    $region88: #{decoder_forward.1} parent=1 // pred_region
      %146 = vsyncadd [#allocation12], 0
      %s148 = sshll.u32 %s21, 4
      %s149 = int_to_ptr.hbm [resolvable:$true] %s148
      %s150 = sshll.u32 [#allocation13], 4
      %s151 = int_to_ptr.vmem [resolvable:$true] %s150
      %153 = dma.hbm_to_vmem [thread:$0]  %s149, 256, %s151, [#allocation12]
    $region89: #{decoder_forward.1} parent=1 // pred_fallthru
      _
    // Predicated region
    $region90: #{decoder_forward.1} parent=1 // pred_check
      _
    $region91: #{decoder_forward.1} parent=1 // pred_check_branch
      %155 = sbr.rel (0) target = $region93
    $region92: #{decoder_forward.1} parent=1 // pred_region
      _
    $region93: #{decoder_forward.1} parent=1 // pred_fallthru
      _
    // Predicated region
    $region94: #{decoder_forward.1} parent=1 // pred_check
      _
    $region95: #{decoder_forward.1} parent=1 // pred_check_branch
      %157 = sbr.rel (0) target = $region97
    $region96: #{decoder_forward.1} parent=1 // pred_region
      _
    $region97: #{decoder_forward.1} parent=1 // pred_fallthru
      _
    // Predicated region
    $region98: #{decoder_forward.1} parent=1 // pred_check
      _
    $region99: #{decoder_forward.1} parent=1 // pred_check_branch
      %159 = sbr.rel (0) target = $region101
    $region100: #{decoder_forward.1} parent=1 // pred_region
      %161 = vsyncadd [#allocation15], 0
      %s162 = sshll.u32 %s24, 4
      %s163 = int_to_ptr.hbm [resolvable:$true] %s162
      %s164 = sshll.u32 [#allocation14], 4
      %s165 = int_to_ptr.vmem [resolvable:$true] %s164
      %170 = dma.hbm_to_vmem [thread:$0]  %s163, 2560, %s165, [#allocation15], 128, 128, 8
    $region101: #{decoder_forward.1} parent=1 // pred_fallthru
      _
    // Predicated region
    $region102: #{decoder_forward.1} parent=1 // pred_check
      _
    $region103: #{decoder_forward.1} parent=1 // pred_check_branch
      %172 = sbr.rel (0) target = $region105
    $region104: #{decoder_forward.1} parent=1 // pred_region
      _
    $region105: #{decoder_forward.1} parent=1 // pred_fallthru
      _
    // Predicated region
    $region106: #{decoder_forward.1} parent=1 // pred_check
      _
    $region107: #{decoder_forward.1} parent=1 // pred_check_branch
      %174 = sbr.rel (0) target = $region109
    $region108: #{decoder_forward.1} parent=1 // pred_region
      _
    $region109: #{decoder_forward.1} parent=1 // pred_fallthru
      _
    // Predicated region
    $region110: #{decoder_forward.1} parent=1 // pred_check
      _
    $region111: #{decoder_forward.1} parent=1 // pred_check_branch
      %176 = sbr.rel (0) target = $region113
    $region112: #{decoder_forward.1} parent=1 // pred_region
      %178 = dma.done [#allocation4], 384
    $region113: #{decoder_forward.1} parent=1 // pred_fallthru
      _
    // Predicated region
    $region114: #{decoder_forward.1} parent=1 // pred_check
      _
    $region115: #{decoder_forward.1} parent=1 // pred_check_branch
      %180 = sbr.rel (0) target = $region117
    $region116: #{decoder_forward.1} parent=1 // pred_region
      %182 = dma.done [#allocation6], 256
    $region117: #{decoder_forward.1} parent=1 // pred_fallthru
      _
    // Predicated region
    $region118: #{decoder_forward.1} parent=1 // pred_check
      _
    $region119: #{decoder_forward.1} parent=1 // pred_check_branch
      %184 = sbr.rel (0) target = $region121
    $region120: #{decoder_forward.1} parent=1 // pred_region
      %186 = dma.done [#allocation6], 768
    $region121: #{decoder_forward.1} parent=1 // pred_fallthru
      _
    // Predicated region
    $region122: #{decoder_forward.1} parent=1 // pred_check
      _
    $region123: #{decoder_forward.1} parent=1 // pred_check_branch
      %188 = sbr.rel (0) target = $region125
    $region124: #{decoder_forward.1} parent=1 // pred_region
      %190 = dma.done [#allocation9], 128
    $region125: #{decoder_forward.1} parent=1 // pred_fallthru
      _
    // Predicated region
    $region126: #{decoder_forward.1} parent=1 // pred_check
      _
    $region127: #{decoder_forward.1} parent=1 // pred_check_branch
      %192 = sbr.rel (0) target = $region129
    $region128: #{decoder_forward.1} parent=1 // pred_region
      %194 = dma.done [#allocation9], 1536
    $region129: #{decoder_forward.1} parent=1 // pred_fallthru
      _
    // Predicated region
    $region130: #{decoder_forward.1} parent=1 // pred_check
      _
    $region131: #{decoder_forward.1} parent=1 // pred_check_branch
      %196 = sbr.rel (0) target = $region133
    $region132: #{decoder_forward.1} parent=1 // pred_region
      %198 = dma.done [#allocation12], 128
    $region133: #{decoder_forward.1} parent=1 // pred_fallthru
      _
    // Predicated region
    $region134: #{decoder_forward.1} parent=1 // pred_check
      _
    $region135: #{decoder_forward.1} parent=1 // pred_check_branch
      %200 = sbr.rel (0) target = $region137
    $region136: #{decoder_forward.1} parent=1 // pred_region
      %202 = dma.done [#allocation12], 256
    $region137: #{decoder_forward.1} parent=1 // pred_fallthru
      _
    // Predicated region
    $region138: #{decoder_forward.1} parent=1 // pred_check
      _
    $region139: #{decoder_forward.1} parent=1 // pred_check_branch
      %204 = sbr.rel (0) target = $region141
    $region140: #{decoder_forward.1} parent=1 // pred_region
      %206 = dma.done [#allocation15], 2560
    $region141: #{decoder_forward.1} parent=1 // pred_fallthru
      _
    %v208 = vld [vmem:[%s0] sm:$0xff]
    %v209 = vld [vmem:[%s0 + $0x8] sm:$0xff]
    %v210 = vld [vmem:[%s0 + $0x10] sm:$0xff]
    %v211 = vld [vmem:[%s0 + $0x18] sm:$0xff]
    %v212 = vld [vmem:[%s0 + $0x20] sm:$0xff]
    %v213 = vld [vmem:[%s0 + $0x28] sm:$0xff]
    %v214 = vld [vmem:[%s0 + $0x30] sm:$0xff]
    %v215 = vld [vmem:[%s0 + $0x38] sm:$0xff]
    %v216 = vld [vmem:[%s1] sm:$0xf]
    %v217 = vld [vmem:[%s1 + $0x4] sm:$0xf]
    %v218 = vld [vmem:[%s1 + $0x8] sm:$0xf]
    %v219 = vld [vmem:[%s1 + $0xc] sm:$0xf]
    %v220 = vpack.c.bf16 %v209, %v208
    %v221 = vpack.c.bf16 %v211, %v210
    %v222 = vpack.c.bf16 %v213, %v212
    %v223 = vpack.c.bf16 %v215, %v214
    %v224 = vld [vmem:[%s2] sm:$0xff]
    %v225 = vld [vmem:[%s2 + $0x8] sm:$0xff]
    %v226 = vld [vmem:[%s2 + $0x10] sm:$0xff]
    %v227 = vld [vmem:[%s2 + $0x18] sm:$0xff]
    %229 = vset.pattern.permute.xlu0 0
    %230 = vperm.xlu0 %229, %v224
    %v231 = vpop.permute.xlu0 %230
    %234 = vset.pattern.permute.xlu0 0
    %235 = vperm.xlu0 %234, %v225
    %v236 = vpop.permute.xlu0 %235
    %239 = vset.pattern.permute.xlu0 0
    %240 = vperm.xlu0 %239, %v226
    %v241 = vpop.permute.xlu0 %240
    %244 = vset.pattern.permute.xlu0 0
    %245 = vperm.xlu0 %244, %v227
    %v246 = vpop.permute.xlu0 %245
    %v252 = vunpack.c.l.b16 %v216
    %v253 = vunpack.c.l.b16 %v217
    %v254 = vunpack.c.l.b16 %v218
    %v255 = vunpack.c.l.b16 %v219
    %v256 = vpack.c.b16 %v253, %v252
    %v257 = vpack.c.b16 %v255, %v254
    %vm258 = vcmask 523264
    %v260 = vsel %vm258, %v256, 0
    %v263 = vsel %vm258, %v257, 0
    %265 = vmatpush.bf16.msra.mxu0 0
    %266 = vmatpush.bf16.msra.mxu0 0
    %267 = vmatpush.bf16.msra.mxu0 0
    %268 = vmatpush.bf16.msra.mxu0 0
    %269 = vmatpush.bf16.msra.mxu0 %v223
    %270 = vmatpush.bf16.msra.mxu0 %v222
    %271 = vmatpush.bf16.msra.mxu0 %v221
    %272 = vmatpush.bf16.msra.mxu0 %v220
    %273 = vmatmul.bf16.gmra.mxu0 %v260
    %v274 = vpop.f32.mrf.mxu0
    %v275 = vadd.f32 %v231, %v274
    %v276 = vpop.f32.mrf.mxu0
    %v277 = vadd.f32 %v236, %v276
    %278 = vmatmul.bf16.gmra.mxu0 %v263
    %v279 = vpop.f32.mrf.mxu0
    %v280 = vadd.f32 %v241, %v279
    %v281 = vpop.f32.mrf.mxu0
    %v282 = vadd.f32 %v246, %v281
    %283 = vdwg.mxu0
    %v284 = vmax.f32 %v275, 0.0
    %v285 = vmax.f32 %v277, 0.0
    %v286 = vmax.f32 %v280, 0.0
    %v287 = vmax.f32 %v282, 0.0
    %v288 = vld [vmem:[%s3] sm:$0xf]
    %v289 = vpack.c.bf16 %v285, %v284
    %v290 = vpack.c.bf16 %v287, %v286
    %s291 = scalar_lea.vmem %s1, 16
    %v292 = vld [vmem:[%s291] sm:$0xf]
    %v293 = vld [vmem:[%s291 + $0x4] sm:$0xf]
    %v294 = vld [vmem:[%s291 + $0x8] sm:$0xf]
    %v295 = vld [vmem:[%s291 + $0xc] sm:$0xf]
    %s296 = scalar_lea.vmem %s2, 32
    %v297 = vld [vmem:[%s296] sm:$0xff]
    %v298 = vld [vmem:[%s296 + $0x8] sm:$0xff]
    %v299 = vld [vmem:[%s296 + $0x10] sm:$0xff]
    %v300 = vld [vmem:[%s296 + $0x18] sm:$0xff]
    %302 = vset.pattern.permute.xlu0 0
    %303 = vperm.xlu0 %302, %v297
    %v304 = vpop.permute.xlu0 %303
    %307 = vset.pattern.permute.xlu0 0
    %308 = vperm.xlu0 %307, %v298
    %v309 = vpop.permute.xlu0 %308
    %312 = vset.pattern.permute.xlu0 0
    %313 = vperm.xlu0 %312, %v299
    %v314 = vpop.permute.xlu0 %313
    %317 = vset.pattern.permute.xlu0 0
    %318 = vperm.xlu0 %317, %v300
    %v319 = vpop.permute.xlu0 %318
    %v325 = vunpack.c.l.b16 %v292
    %v326 = vunpack.c.l.b16 %v293
    %v327 = vunpack.c.l.b16 %v294
    %v328 = vunpack.c.l.b16 %v295
    %v329 = vpack.c.b16 %v326, %v325
    %v330 = vpack.c.b16 %v328, %v327
    %v332 = vsel %vm258, %v329, 0
    %v335 = vsel %vm258, %v330, 0
    %337 = vmatpush.bf16.msra.mxu0 0
    %338 = vmatpush.bf16.msra.mxu0 0
    %339 = vmatpush.bf16.msra.mxu0 0
    %340 = vmatpush.bf16.msra.mxu0 0
    %341 = vmatpush.bf16.msra.mxu0 %v223
    %342 = vmatpush.bf16.msra.mxu0 %v222
    %343 = vmatpush.bf16.msra.mxu0 %v221
    %344 = vmatpush.bf16.msra.mxu0 %v220
    %345 = vmatmul.bf16.gmra.mxu0 %v332
    %v346 = vpop.f32.mrf.mxu0
    %v347 = vadd.f32 %v304, %v346
    %v348 = vpop.f32.mrf.mxu0
    %v349 = vadd.f32 %v309, %v348
    %350 = vmatmul.bf16.gmra.mxu0 %v335
    %v351 = vpop.f32.mrf.mxu0
    %v352 = vadd.f32 %v314, %v351
    %v353 = vpop.f32.mrf.mxu0
    %v354 = vadd.f32 %v319, %v353
    %355 = vdwg.mxu0
    %v356 = vmax.f32 %v347, 0.0
    %v357 = vmax.f32 %v349, 0.0
    %v358 = vmax.f32 %v352, 0.0
    %v359 = vmax.f32 %v354, 0.0
    %s360 = scalar_lea.vmem %s3, 4
    %v361 = vld [vmem:[%s360] sm:$0xf]
    %v362 = vpack.c.bf16 %v357, %v356
    %v363 = vpack.c.bf16 %v359, %v358
    %vm364 = vcmask 64512
    %v366 = vsel %vm364, %v362, 0
    %v369 = vsel %vm364, %v363, 0
    %vm371 = vcmask 1043456
    %v373 = vsel %vm371, %v361, 0
    %375 = vmatpush.bf16.msra.mxu0 0
    %376 = vmatpush.bf16.msra.mxu0 0
    %377 = vmatpush.bf16.msra.mxu0 0
    %378 = vmatpush.bf16.msra.mxu0 0
    %379 = vmatpush.bf16.msra.mxu0 0
    %380 = vmatpush.bf16.msra.mxu0 0
    %381 = vmatpush.bf16.msra.mxu0 0
    %382 = vmatpush.bf16.msra.mxu0 %v373
    %383 = vmatmul.bf16.gmra.mxu0 %v366
    %v384 = vpop.f32.mrf.mxu0
    %v385 = vadd.f32 0.0, %v384
    %v386 = vpop.f32.mrf.mxu0
    %v387 = vadd.f32 0.0, %v386
    %388 = vmatmul.bf16.gmra.mxu0 %v369
    %v389 = vpop.f32.mrf.mxu0
    %v390 = vadd.f32 0.0, %v389
    %v391 = vpop.f32.mrf.mxu0
    %v392 = vadd.f32 0.0, %v391
    %393 = vdwg.mxu0
    %v395 = vsel %vm364, %v289, 0
    %v398 = vsel %vm364, %v290, 0
    %v401 = vsel %vm371, %v288, 0
    %403 = vmatpush.bf16.msra.mxu0 0
    %404 = vmatpush.bf16.msra.mxu0 0
    %405 = vmatpush.bf16.msra.mxu0 0
    %406 = vmatpush.bf16.msra.mxu0 0
    %407 = vmatpush.bf16.msra.mxu0 0
    %408 = vmatpush.bf16.msra.mxu0 0
    %409 = vmatpush.bf16.msra.mxu0 0
    %410 = vmatpush.bf16.msra.mxu0 %v401
    %411 = vmatmul.bf16.gmra.mxu0 %v395
    %v412 = vpop.f32.mrf.mxu0
    %v413 = vadd.f32 %v385, %v412
    %v414 = vpop.f32.mrf.mxu0
    %v415 = vadd.f32 %v387, %v414
    %416 = vmatmul.bf16.gmra.mxu0 %v398
    %v417 = vpop.f32.mrf.mxu0
    %v418 = vadd.f32 %v390, %v417
    %v419 = vpop.f32.mrf.mxu0
    %v420 = vadd.f32 %v392, %v419
    %421 = vdwg.mxu0
    %v422 = vld [vmem:[%s4] sm:$0xf]
    %v423 = vld [vmem:[%s4 + $0x4] sm:$0xf]
    %v424 = vld [vmem:[%s4 + $0x8] sm:$0xf]
    %v425 = vld [vmem:[%s4 + $0xc] sm:$0xf]
    %v426 = vld [vmem:[%s4 + $0x10] sm:$0xf]
    %v427 = vld [vmem:[%s4 + $0x14] sm:$0xf]
    %v428 = vld [vmem:[%s4 + $0x18] sm:$0xf]
    %v429 = vld [vmem:[%s4 + $0x1c] sm:$0xf]
    %v430 = vpack.c.bf16 %v415, %v413
    %v431 = vpack.c.bf16 %v420, %v418
    %v440 = vunpack.c.l.b16 %v422
    %v441 = vunpack.c.l.b16 %v423
    %v442 = vunpack.c.l.b16 %v424
    %v443 = vunpack.c.l.b16 %v425
    %v444 = vunpack.c.l.b16 %v426
    %v445 = vunpack.c.l.b16 %v427
    %v446 = vunpack.c.l.b16 %v428
    %v447 = vunpack.c.l.b16 %v429
    %v448 = vpack.c.b16 %v441, %v440
    %v449 = vpack.c.b16 %v443, %v442
    %v450 = vpack.c.b16 %v445, %v444
    %v451 = vpack.c.b16 %v447, %v446
    %vm452 = vcmask 261120
    %v454 = vsel %vm452, %v448, 0
    %v457 = vsel %vm452, %v449, 0
    %v460 = vsel %vm452, %v450, 0
    %v463 = vsel %vm452, %v451, 0
    %465 = vmatpush.bf16.msra.mxu0 0
    %466 = vmatpush.bf16.msra.mxu0 0
    %467 = vmatpush.bf16.msra.mxu0 0
    %468 = vmatpush.bf16.msra.mxu0 0
    %469 = vmatpush.bf16.msra.mxu0 0
    %470 = vmatpush.bf16.msra.mxu0 0
    %471 = vmatpush.bf16.msra.mxu0 %v431
    %472 = vmatpush.bf16.msra.mxu0 %v430
    %473 = vmatmul.bf16.gmra.mxu0 %v454
    %v474 = vpop.f32.mrf.mxu0
    %v475 = vadd.f32 0.0, %v474
    %v476 = vpop.f32.mrf.mxu0
    %v477 = vadd.f32 0.0, %v476
    %478 = vmatmul.bf16.gmra.mxu0 %v457
    %v479 = vpop.f32.mrf.mxu0
    %v480 = vadd.f32 0.0, %v479
    %v481 = vpop.f32.mrf.mxu0
    %v482 = vadd.f32 0.0, %v481
    %483 = vmatmul.bf16.gmra.mxu0 %v460
    %v484 = vpop.f32.mrf.mxu0
    %v485 = vadd.f32 0.0, %v484
    %v486 = vpop.f32.mrf.mxu0
    %v487 = vadd.f32 0.0, %v486
    %488 = vmatmul.bf16.gmra.mxu0 %v463
    %v489 = vpop.f32.mrf.mxu0
    %v490 = vadd.f32 0.0, %v489
    %v491 = vpop.f32.mrf.mxu0
    %v492 = vadd.f32 0.0, %v491
    %493 = vdwg.mxu0
    %v494 = vld [vmem:[#allocation3] sm:$0xf]
    %v495 = vld [vmem:[#allocation3 + $0x4] sm:$0xf]
    %v496 = vpack.c.bf16 %v477, %v475
    %v497 = vpack.c.bf16 %v482, %v480
    %v498 = vpack.c.bf16 %v487, %v485
    %v499 = vpack.c.bf16 %v492, %v490
    %s500 = scalar_lea.vmem %s4, 32
    %v501 = vld [vmem:[%s500] sm:$0xf]
    %v502 = vld [vmem:[%s500 + $0x4] sm:$0xf]
    %v503 = vld [vmem:[%s500 + $0x8] sm:$0xf]
    %v504 = vld [vmem:[%s500 + $0xc] sm:$0xf]
    %v505 = vld [vmem:[%s500 + $0x10] sm:$0xf]
    %v506 = vld [vmem:[%s500 + $0x14] sm:$0xf]
    %v507 = vld [vmem:[%s500 + $0x18] sm:$0xf]
    %v508 = vld [vmem:[%s500 + $0x1c] sm:$0xf]
    %v517 = vunpack.c.l.b16 %v501
    %v518 = vunpack.c.l.b16 %v502
    %v519 = vunpack.c.l.b16 %v503
    %v520 = vunpack.c.l.b16 %v504
    %v521 = vunpack.c.l.b16 %v505
    %v522 = vunpack.c.l.b16 %v506
    %v523 = vunpack.c.l.b16 %v507
    %v524 = vunpack.c.l.b16 %v508
    %v525 = vpack.c.b16 %v518, %v517
    %v526 = vpack.c.b16 %v520, %v519
    %v527 = vpack.c.b16 %v522, %v521
    %v528 = vpack.c.b16 %v524, %v523
    %v530 = vsel %vm452, %v525, 0
    %v533 = vsel %vm452, %v526, 0
    %v536 = vsel %vm452, %v527, 0
    %v539 = vsel %vm452, %v528, 0
    %541 = vmatpush.bf16.msra.mxu0 0
    %542 = vmatpush.bf16.msra.mxu0 0
    %543 = vmatpush.bf16.msra.mxu0 0
    %544 = vmatpush.bf16.msra.mxu0 0
    %545 = vmatpush.bf16.msra.mxu0 0
    %546 = vmatpush.bf16.msra.mxu0 0
    %547 = vmatpush.bf16.msra.mxu0 %v431
    %548 = vmatpush.bf16.msra.mxu0 %v430
    %549 = vmatmul.bf16.gmra.mxu0 %v530
    %v550 = vpop.f32.mrf.mxu0
    %v551 = vadd.f32 0.0, %v550
    %v552 = vpop.f32.mrf.mxu0
    %v553 = vadd.f32 0.0, %v552
    %554 = vmatmul.bf16.gmra.mxu0 %v533
    %v555 = vpop.f32.mrf.mxu0
    %v556 = vadd.f32 0.0, %v555
    %v557 = vpop.f32.mrf.mxu0
    %v558 = vadd.f32 0.0, %v557
    %559 = vmatmul.bf16.gmra.mxu0 %v536
    %v560 = vpop.f32.mrf.mxu0
    %v561 = vadd.f32 0.0, %v560
    %v562 = vpop.f32.mrf.mxu0
    %v563 = vadd.f32 0.0, %v562
    %564 = vmatmul.bf16.gmra.mxu0 %v539
    %v565 = vpop.f32.mrf.mxu0
    %v566 = vadd.f32 0.0, %v565
    %v567 = vpop.f32.mrf.mxu0
    %v568 = vadd.f32 0.0, %v567
    %569 = vdwg.mxu0
    %s570 = scalar_lea.vmem [#allocation3], 8
    %v571 = vld [vmem:[%s570] sm:$0xf]
    %v572 = vld [vmem:[%s570 + $0x4] sm:$0xf]
    %v573 = vpack.c.bf16 %v553, %v551
    %v574 = vpack.c.bf16 %v558, %v556
    %v575 = vpack.c.bf16 %v563, %v561
    %v576 = vpack.c.bf16 %v568, %v566
    %v579 = vunpack.c.l.b16 %v571
    %v580 = vunpack.c.l.b16 %v572
    %v581 = vpack.c.b16 %v580, %v579
    %vm583 = vcmask 130048
    %v585 = vsel %vm583, %v573, 0
    %v588 = vsel %vm583, %v574, 0
    %v591 = vsel %vm583, %v575, 0
    %v594 = vsel %vm583, %v576, 0
    %596 = vmatpush.bf16.msra.mxu0 0
    %597 = vmatpush.bf16.msra.mxu0 0
    %598 = vmatpush.bf16.msra.mxu0 0
    %599 = vmatpush.bf16.msra.mxu0 0
    %600 = vmatpush.bf16.msra.mxu0 0
    %601 = vmatpush.bf16.msra.mxu0 0
    %602 = vmatpush.bf16.msra.mxu0 0
    %603 = vmatpush.bf16.msra.mxu0 %v581
    %604 = vmatmul.bf16.gmra.mxu0 %v585
    %v605 = vpop.f32.mrf.mxu0
    %v606 = vadd.f32 0.0, %v605
    %v607 = vpop.f32.mrf.mxu0
    %v608 = vadd.f32 0.0, %v607
    %609 = vmatmul.bf16.gmra.mxu0 %v588
    %v610 = vpop.f32.mrf.mxu0
    %v611 = vadd.f32 0.0, %v610
    %v612 = vpop.f32.mrf.mxu0
    %v613 = vadd.f32 0.0, %v612
    %614 = vmatmul.bf16.gmra.mxu0 %v591
    %v615 = vpop.f32.mrf.mxu0
    %v616 = vadd.f32 0.0, %v615
    %v617 = vpop.f32.mrf.mxu0
    %v618 = vadd.f32 0.0, %v617
    %619 = vmatmul.bf16.gmra.mxu0 %v594
    %v620 = vpop.f32.mrf.mxu0
    %v621 = vadd.f32 0.0, %v620
    %v622 = vpop.f32.mrf.mxu0
    %v623 = vadd.f32 0.0, %v622
    %624 = vdwg.mxu0
    %v627 = vunpack.c.l.b16 %v494
    %v628 = vunpack.c.l.b16 %v495
    %v629 = vpack.c.b16 %v628, %v627
    %v632 = vsel %vm583, %v496, 0
    %v635 = vsel %vm583, %v497, 0
    %v638 = vsel %vm583, %v498, 0
    %v641 = vsel %vm583, %v499, 0
    %643 = vmatpush.bf16.msra.mxu0 0
    %644 = vmatpush.bf16.msra.mxu0 0
    %645 = vmatpush.bf16.msra.mxu0 0
    %646 = vmatpush.bf16.msra.mxu0 0
    %647 = vmatpush.bf16.msra.mxu0 0
    %648 = vmatpush.bf16.msra.mxu0 0
    %649 = vmatpush.bf16.msra.mxu0 0
    %650 = vmatpush.bf16.msra.mxu0 %v629
    %651 = vmatmul.bf16.gmra.mxu0 %v632
    %v652 = vpop.f32.mrf.mxu0
    %v653 = vadd.f32 %v606, %v652
    %v654 = vpop.f32.mrf.mxu0
    %v655 = vadd.f32 %v608, %v654
    %656 = vmatmul.bf16.gmra.mxu0 %v635
    %v657 = vpop.f32.mrf.mxu0
    %v658 = vadd.f32 %v611, %v657
    %v659 = vpop.f32.mrf.mxu0
    %v660 = vadd.f32 %v613, %v659
    %661 = vmatmul.bf16.gmra.mxu0 %v638
    %v662 = vpop.f32.mrf.mxu0
    %v663 = vadd.f32 %v616, %v662
    %v664 = vpop.f32.mrf.mxu0
    %v665 = vadd.f32 %v618, %v664
    %666 = vmatmul.bf16.gmra.mxu0 %v641
    %v667 = vpop.f32.mrf.mxu0
    %v668 = vadd.f32 %v621, %v667
    %v669 = vpop.f32.mrf.mxu0
    %v670 = vadd.f32 %v623, %v669
    %671 = vdwg.mxu0
    %s672 = scalar_lea.vmem %s4, 64
    %v673 = vld [vmem:[%s672] sm:$0xf]
    %v674 = vld [vmem:[%s672 + $0x4] sm:$0xf]
    %v675 = vld [vmem:[%s672 + $0x8] sm:$0xf]
    %v676 = vld [vmem:[%s672 + $0xc] sm:$0xf]
    %v677 = vld [vmem:[%s672 + $0x10] sm:$0xf]
    %v678 = vld [vmem:[%s672 + $0x14] sm:$0xf]
    %v679 = vld [vmem:[%s672 + $0x18] sm:$0xf]
    %v680 = vld [vmem:[%s672 + $0x1c] sm:$0xf]
    %v689 = vunpack.c.l.b16 %v673
    %v690 = vunpack.c.l.b16 %v674
    %v691 = vunpack.c.l.b16 %v675
    %v692 = vunpack.c.l.b16 %v676
    %v693 = vunpack.c.l.b16 %v677
    %v694 = vunpack.c.l.b16 %v678
    %v695 = vunpack.c.l.b16 %v679
    %v696 = vunpack.c.l.b16 %v680
    %v697 = vpack.c.b16 %v690, %v689
    %v698 = vpack.c.b16 %v692, %v691
    %v699 = vpack.c.b16 %v694, %v693
    %v700 = vpack.c.b16 %v696, %v695
    %v702 = vsel %vm452, %v697, 0
    %v705 = vsel %vm452, %v698, 0
    %v708 = vsel %vm452, %v699, 0
    %v711 = vsel %vm452, %v700, 0
    %713 = vmatpush.bf16.msra.mxu0 0
    %714 = vmatpush.bf16.msra.mxu0 0
    %715 = vmatpush.bf16.msra.mxu0 0
    %716 = vmatpush.bf16.msra.mxu0 0
    %717 = vmatpush.bf16.msra.mxu0 0
    %718 = vmatpush.bf16.msra.mxu0 0
    %719 = vmatpush.bf16.msra.mxu0 %v431
    %720 = vmatpush.bf16.msra.mxu0 %v430
    %721 = vmatmul.bf16.gmra.mxu0 %v702
    %v722 = vpop.f32.mrf.mxu0
    %v723 = vadd.f32 0.0, %v722
    %v724 = vpop.f32.mrf.mxu0
    %v725 = vadd.f32 0.0, %v724
    %726 = vmatmul.bf16.gmra.mxu0 %v705
    %v727 = vpop.f32.mrf.mxu0
    %v728 = vadd.f32 0.0, %v727
    %v729 = vpop.f32.mrf.mxu0
    %v730 = vadd.f32 0.0, %v729
    %731 = vmatmul.bf16.gmra.mxu0 %v708
    %v732 = vpop.f32.mrf.mxu0
    %v733 = vadd.f32 0.0, %v732
    %v734 = vpop.f32.mrf.mxu0
    %v735 = vadd.f32 0.0, %v734
    %736 = vmatmul.bf16.gmra.mxu0 %v711
    %v737 = vpop.f32.mrf.mxu0
    %v738 = vadd.f32 0.0, %v737
    %v739 = vpop.f32.mrf.mxu0
    %v740 = vadd.f32 0.0, %v739
    %741 = vdwg.mxu0
    %s742 = scalar_lea.vmem [#allocation3], 16
    %v743 = vld [vmem:[%s742] sm:$0xf]
    %v744 = vld [vmem:[%s742 + $0x4] sm:$0xf]
    %v745 = vpack.c.bf16 %v725, %v723
    %v746 = vpack.c.bf16 %v730, %v728
    %v747 = vpack.c.bf16 %v735, %v733
    %v748 = vpack.c.bf16 %v740, %v738
    %v751 = vunpack.c.l.b16 %v743
    %v752 = vunpack.c.l.b16 %v744
    %v753 = vpack.c.b16 %v752, %v751
    %v756 = vsel %vm583, %v745, 0
    %v759 = vsel %vm583, %v746, 0
    %v762 = vsel %vm583, %v747, 0
    %v765 = vsel %vm583, %v748, 0
    %767 = vmatpush.bf16.msra.mxu0 0
    %768 = vmatpush.bf16.msra.mxu0 0
    %769 = vmatpush.bf16.msra.mxu0 0
    %770 = vmatpush.bf16.msra.mxu0 0
    %771 = vmatpush.bf16.msra.mxu0 0
    %772 = vmatpush.bf16.msra.mxu0 0
    %773 = vmatpush.bf16.msra.mxu0 0
    %774 = vmatpush.bf16.msra.mxu0 %v753
    %775 = vmatmul.bf16.gmra.mxu0 %v756
    %v776 = vpop.f32.mrf.mxu0
    %v777 = vadd.f32 0.0, %v776
    %v778 = vpop.f32.mrf.mxu0
    %v779 = vadd.f32 0.0, %v778
    %780 = vmatmul.bf16.gmra.mxu0 %v759
    %v781 = vpop.f32.mrf.mxu0
    %v782 = vadd.f32 0.0, %v781
    %v783 = vpop.f32.mrf.mxu0
    %v784 = vadd.f32 0.0, %v783
    %785 = vmatmul.bf16.gmra.mxu0 %v762
    %v786 = vpop.f32.mrf.mxu0
    %v787 = vadd.f32 0.0, %v786
    %v788 = vpop.f32.mrf.mxu0
    %v789 = vadd.f32 0.0, %v788
    %790 = vmatmul.bf16.gmra.mxu0 %v765
    %v791 = vpop.f32.mrf.mxu0
    %v792 = vadd.f32 0.0, %v791
    %v793 = vpop.f32.mrf.mxu0
    %v794 = vadd.f32 0.0, %v793
    %795 = vdwg.mxu0
    %v796 = vadd.f32 %v653, %v777
    %v797 = vadd.f32 %v655, %v779
    %v798 = vadd.f32 %v658, %v782
    %v799 = vadd.f32 %v660, %v784
    %v800 = vadd.f32 %v663, %v787
    %v801 = vadd.f32 %v665, %v789
    %v802 = vadd.f32 %v668, %v792
    %v803 = vadd.f32 %v670, %v794
    %v804 = vsel %vm452, %v796, 0.0
    %805 = vadd.xlane.f32.xlu0 %v804
    %v806 = vpop.xlane.xlu0 %805
    %v807 = vsel %vm452, %v797, 0.0
    %808 = vadd.xlane.f32.xlu0 %v807
    %v809 = vpop.xlane.xlu0 %808
    %v810 = vsel %vm452, %v798, 0.0
    %811 = vadd.xlane.f32.xlu0 %v810
    %v812 = vpop.xlane.xlu0 %811
    %v813 = vsel %vm452, %v799, 0.0
    %814 = vadd.xlane.f32.xlu0 %v813
    %v815 = vpop.xlane.xlu0 %814
    %v816 = vsel %vm452, %v800, 0.0
    %817 = vadd.xlane.f32.xlu0 %v816
    %v818 = vpop.xlane.xlu0 %817
    %v819 = vsel %vm452, %v801, 0.0
    %820 = vadd.xlane.f32.xlu0 %v819
    %v821 = vpop.xlane.xlu0 %820
    %v822 = vsel %vm452, %v802, 0.0
    %823 = vadd.xlane.f32.xlu0 %v822
    %v824 = vpop.xlane.xlu0 %823
    %v825 = vsel %vm452, %v803, 0.0
    %826 = vadd.xlane.f32.xlu0 %v825
    %v827 = vpop.xlane.xlu0 %826
    %v828 = vld [vmem:[%s7] sm:$0xff]
    %v829 = vld [vmem:[%s7 + $0x8] sm:$0xff]
    %v830 = vld [vmem:[%s7 + $0x10] sm:$0xff]
    %v831 = vld [vmem:[%s7 + $0x18] sm:$0xff]
    %v832 = vld [vmem:[%s7 + $0x20] sm:$0xff]
    %v833 = vld [vmem:[%s7 + $0x28] sm:$0xff]
    %v834 = vld [vmem:[%s7 + $0x30] sm:$0xff]
    %v835 = vld [vmem:[%s7 + $0x38] sm:$0xff]
    %v836 = vld [vmem:[#allocation5] sm:$0xff]
    %v837 = vld [vmem:[#allocation5 + $0x8] sm:$0xff]
    %v839 = vsel %vm258, %v836, 0
    %v842 = vsel %vm258, %v837, 0
    %844 = vmatpush.msra.mxu0 0.0
    %845 = vmatpush.msra.mxu0 0.0
    %846 = vmatpush.msra.mxu0 0.0
    %847 = vmatpush.msra.mxu0 0.0
    %848 = vmatpush.msra.mxu0 0.0
    %849 = vmatpush.msra.mxu0 0.0
    %850 = vmatpush.msra.mxu0 0.0
    %851 = vmatpush.msra.mxu0 0.0
    %852 = vmatpush.msra.mxu0 %v827
    %853 = vmatpush.msra.mxu0 %v824
    %854 = vmatpush.msra.mxu0 %v821
    %855 = vmatpush.msra.mxu0 %v818
    %856 = vmatpush.msra.mxu0 %v815
    %857 = vmatpush.msra.mxu0 %v812
    %858 = vmatpush.msra.mxu0 %v809
    %859 = vmatpush.msra.mxu0 %v806
    %860 = vmatmul.f32.gmra.mxu0 %v839
    %v861 = vpop.f32.mrf.mxu0
    %v862 = vadd.f32 0.0, %v861
    %863 = vmatmul.f32.gmra.mxu0 %v842
    %v864 = vpop.f32.mrf.mxu0
    %v865 = vadd.f32 0.0, %v864
    %866 = vdwg.mxu0
    %v868 = vsel %vm583, %v828, 0
    %v871 = vsel %vm583, %v829, 0
    %v874 = vsel %vm583, %v830, 0
    %v877 = vsel %vm583, %v831, 0
    %v880 = vsel %vm583, %v832, 0
    %v883 = vsel %vm583, %v833, 0
    %v886 = vsel %vm583, %v834, 0
    %v889 = vsel %vm583, %v835, 0
    %891 = vmatpush.msra.mxu0 0.0
    %892 = vmatpush.msra.mxu0 0.0
    %893 = vmatpush.msra.mxu0 0.0
    %894 = vmatpush.msra.mxu0 0.0
    %895 = vmatpush.msra.mxu0 0.0
    %896 = vmatpush.msra.mxu0 0.0
    %897 = vmatpush.msra.mxu0 0.0
    %898 = vmatpush.msra.mxu0 0.0
    %899 = vmatpush.msra.mxu0 0.0
    %900 = vmatpush.msra.mxu0 0.0
    %901 = vmatpush.msra.mxu0 0.0
    %902 = vmatpush.msra.mxu0 0.0
    %903 = vmatpush.msra.mxu0 0.0
    %904 = vmatpush.msra.mxu0 0.0
    %905 = vmatpush.msra.mxu0 %v865
    %906 = vmatpush.msra.mxu0 %v862
    %907 = vmatmul.f32.gmra.mxu0 %v868
    %v908 = vpop.f32.mrf.mxu0
    %v909 = vadd.f32 0.0, %v908
    %910 = vmatmul.f32.gmra.mxu0 %v871
    %v911 = vpop.f32.mrf.mxu0
    %v912 = vadd.f32 0.0, %v911
    %913 = vmatmul.f32.gmra.mxu0 %v874
    %v914 = vpop.f32.mrf.mxu0
    %v915 = vadd.f32 0.0, %v914
    %916 = vmatmul.f32.gmra.mxu0 %v877
    %v917 = vpop.f32.mrf.mxu0
    %v918 = vadd.f32 0.0, %v917
    %919 = vmatmul.f32.gmra.mxu0 %v880
    %v920 = vpop.f32.mrf.mxu0
    %v921 = vadd.f32 0.0, %v920
    %922 = vmatmul.f32.gmra.mxu0 %v883
    %v923 = vpop.f32.mrf.mxu0
    %v924 = vadd.f32 0.0, %v923
    %925 = vmatmul.f32.gmra.mxu0 %v886
    %v926 = vpop.f32.mrf.mxu0
    %v927 = vadd.f32 0.0, %v926
    %928 = vmatmul.f32.gmra.mxu0 %v889
    %v929 = vpop.f32.mrf.mxu0
    %v930 = vadd.f32 0.0, %v929
    %931 = vdwg.mxu0
    %933 = vset.pattern.permute.xlu0 0
    %934 = vperm.xlu0 %933, %v909
    %v935 = vpop.permute.xlu0 %934
    %938 = vset.pattern.permute.xlu0 0
    %939 = vperm.xlu0 %938, %v912
    %v940 = vpop.permute.xlu0 %939
    %943 = vset.pattern.permute.xlu0 0
    %944 = vperm.xlu0 %943, %v915
    %v945 = vpop.permute.xlu0 %944
    %948 = vset.pattern.permute.xlu0 0
    %949 = vperm.xlu0 %948, %v918
    %v950 = vpop.permute.xlu0 %949
    %953 = vset.pattern.permute.xlu0 0
    %954 = vperm.xlu0 %953, %v921
    %v955 = vpop.permute.xlu0 %954
    %958 = vset.pattern.permute.xlu0 0
    %959 = vperm.xlu0 %958, %v924
    %v960 = vpop.permute.xlu0 %959
    %963 = vset.pattern.permute.xlu0 0
    %964 = vperm.xlu0 %963, %v927
    %v965 = vpop.permute.xlu0 %964
    %968 = vset.pattern.permute.xlu0 0
    %969 = vperm.xlu0 %968, %v930
    %v970 = vpop.permute.xlu0 %969
    %v972 = vsub.f32 %v796, %v935
    %v973 = vsub.f32 %v797, %v940
    %v974 = vsub.f32 %v798, %v945
    %v975 = vsub.f32 %v799, %v950
    %v976 = vsub.f32 %v800, %v955
    %v977 = vsub.f32 %v801, %v960
    %v978 = vsub.f32 %v802, %v965
    %v979 = vsub.f32 %v803, %v970
    %v980 = vmul.f32 %v972, %v972
    %v981 = vmul.f32 %v973, %v973
    %v982 = vmul.f32 %v974, %v974
    %v983 = vmul.f32 %v975, %v975
    %v984 = vmul.f32 %v976, %v976
    %v985 = vmul.f32 %v977, %v977
    %v986 = vmul.f32 %v978, %v978
    %v987 = vmul.f32 %v979, %v979
    %v988 = vsel %vm452, %v980, 0.0
    %989 = vadd.xlane.f32.xlu0 %v988
    %v990 = vpop.xlane.xlu0 %989
    %v991 = vsel %vm452, %v981, 0.0
    %992 = vadd.xlane.f32.xlu0 %v991
    %v993 = vpop.xlane.xlu0 %992
    %v994 = vsel %vm452, %v982, 0.0
    %995 = vadd.xlane.f32.xlu0 %v994
    %v996 = vpop.xlane.xlu0 %995
    %v997 = vsel %vm452, %v983, 0.0
    %998 = vadd.xlane.f32.xlu0 %v997
    %v999 = vpop.xlane.xlu0 %998
    %v1000 = vsel %vm452, %v984, 0.0
    %1001 = vadd.xlane.f32.xlu0 %v1000
    %v1002 = vpop.xlane.xlu0 %1001
    %v1003 = vsel %vm452, %v985, 0.0
    %1004 = vadd.xlane.f32.xlu0 %v1003
    %v1005 = vpop.xlane.xlu0 %1004
    %v1006 = vsel %vm452, %v986, 0.0
    %1007 = vadd.xlane.f32.xlu0 %v1006
    %v1008 = vpop.xlane.xlu0 %1007
    %v1009 = vsel %vm452, %v987, 0.0
    %1010 = vadd.xlane.f32.xlu0 %v1009
    %v1011 = vpop.xlane.xlu0 %1010
    %1012 = vmatpush.msra.mxu0 0.0
    %1013 = vmatpush.msra.mxu0 0.0
    %1014 = vmatpush.msra.mxu0 0.0
    %1015 = vmatpush.msra.mxu0 0.0
    %1016 = vmatpush.msra.mxu0 0.0
    %1017 = vmatpush.msra.mxu0 0.0
    %1018 = vmatpush.msra.mxu0 0.0
    %1019 = vmatpush.msra.mxu0 0.0
    %1020 = vmatpush.msra.mxu0 %v1011
    %1021 = vmatpush.msra.mxu0 %v1008
    %1022 = vmatpush.msra.mxu0 %v1005
    %1023 = vmatpush.msra.mxu0 %v1002
    %1024 = vmatpush.msra.mxu0 %v999
    %1025 = vmatpush.msra.mxu0 %v996
    %1026 = vmatpush.msra.mxu0 %v993
    %1027 = vmatpush.msra.mxu0 %v990
    %1028 = vmatmul.f32.gmra.mxu0 %v839
    %v1029 = vpop.f32.mrf.mxu0
    %v1030 = vadd.f32 0.0, %v1029
    %1031 = vmatmul.f32.gmra.mxu0 %v842
    %v1032 = vpop.f32.mrf.mxu0
    %v1033 = vadd.f32 0.0, %v1032
    %1034 = vdwg.mxu0
    %1035 = vmatpush.msra.mxu0 0.0
    %1036 = vmatpush.msra.mxu0 0.0
    %1037 = vmatpush.msra.mxu0 0.0
    %1038 = vmatpush.msra.mxu0 0.0
    %1039 = vmatpush.msra.mxu0 0.0
    %1040 = vmatpush.msra.mxu0 0.0
    %1041 = vmatpush.msra.mxu0 0.0
    %1042 = vmatpush.msra.mxu0 0.0
    %1043 = vmatpush.msra.mxu0 0.0
    %1044 = vmatpush.msra.mxu0 0.0
    %1045 = vmatpush.msra.mxu0 0.0
    %1046 = vmatpush.msra.mxu0 0.0
    %1047 = vmatpush.msra.mxu0 0.0
    %1048 = vmatpush.msra.mxu0 0.0
    %1049 = vmatpush.msra.mxu0 %v1033
    %1050 = vmatpush.msra.mxu0 %v1030
    %1051 = vmatmul.f32.gmra.mxu0 %v868
    %v1052 = vpop.f32.mrf.mxu0
    %v1053 = vadd.f32 1e-05, %v1052
    %1054 = vmatmul.f32.gmra.mxu0 %v871
    %v1055 = vpop.f32.mrf.mxu0
    %v1056 = vadd.f32 1e-05, %v1055
    %1057 = vmatmul.f32.gmra.mxu0 %v874
    %v1058 = vpop.f32.mrf.mxu0
    %v1059 = vadd.f32 1e-05, %v1058
    %1060 = vmatmul.f32.gmra.mxu0 %v877
    %v1061 = vpop.f32.mrf.mxu0
    %v1062 = vadd.f32 1e-05, %v1061
    %1063 = vmatmul.f32.gmra.mxu0 %v880
    %v1064 = vpop.f32.mrf.mxu0
    %v1065 = vadd.f32 1e-05, %v1064
    %1066 = vmatmul.f32.gmra.mxu0 %v883
    %v1067 = vpop.f32.mrf.mxu0
    %v1068 = vadd.f32 1e-05, %v1067
    %1069 = vmatmul.f32.gmra.mxu0 %v886
    %v1070 = vpop.f32.mrf.mxu0
    %v1071 = vadd.f32 1e-05, %v1070
    %1072 = vmatmul.f32.gmra.mxu0 %v889
    %v1073 = vpop.f32.mrf.mxu0
    %v1074 = vadd.f32 1e-05, %v1073
    %1075 = vdwg.mxu0
    %v1076 = vrsqrt.pop %v1053
    %v1077 = vmul.f32 %v1076, %v1053
    %v1078 = vmul.f32 %v1077, %v1076
    %v1079 = vmul.f32 0.5, %v1078
    %v1080 = vsub.f32 1.5, %v1079
    %v1081 = vmul.f32 %v1076, %v1080
    %vm1082 = vweird.f32 %v1053
    %vm1083 = vweird.f32 %v1076
    %vm1084 = vmor %vm1082, %vm1083
    %v1085 = vsel %vm1084, %v1076, %v1081
    %v1086 = vrsqrt.pop %v1056
    %v1087 = vmul.f32 %v1086, %v1056
    %v1088 = vmul.f32 %v1087, %v1086
    %v1089 = vmul.f32 0.5, %v1088
    %v1090 = vsub.f32 1.5, %v1089
    %v1091 = vmul.f32 %v1086, %v1090
    %vm1092 = vweird.f32 %v1056
    %vm1093 = vweird.f32 %v1086
    %vm1094 = vmor %vm1092, %vm1093
    %v1095 = vsel %vm1094, %v1086, %v1091
    %v1096 = vrsqrt.pop %v1059
    %v1097 = vmul.f32 %v1096, %v1059
    %v1098 = vmul.f32 %v1097, %v1096
    %v1099 = vmul.f32 0.5, %v1098
    %v1100 = vsub.f32 1.5, %v1099
    %v1101 = vmul.f32 %v1096, %v1100
    %vm1102 = vweird.f32 %v1059
    %vm1103 = vweird.f32 %v1096
    %vm1104 = vmor %vm1102, %vm1103
    %v1105 = vsel %vm1104, %v1096, %v1101
    %v1106 = vrsqrt.pop %v1062
    %v1107 = vmul.f32 %v1106, %v1062
    %v1108 = vmul.f32 %v1107, %v1106
    %v1109 = vmul.f32 0.5, %v1108
    %v1110 = vsub.f32 1.5, %v1109
    %v1111 = vmul.f32 %v1106, %v1110
    %vm1112 = vweird.f32 %v1062
    %vm1113 = vweird.f32 %v1106
    %vm1114 = vmor %vm1112, %vm1113
    %v1115 = vsel %vm1114, %v1106, %v1111
    %v1116 = vrsqrt.pop %v1065
    %v1117 = vmul.f32 %v1116, %v1065
    %v1118 = vmul.f32 %v1117, %v1116
    %v1119 = vmul.f32 0.5, %v1118
    %v1120 = vsub.f32 1.5, %v1119
    %v1121 = vmul.f32 %v1116, %v1120
    %vm1122 = vweird.f32 %v1065
    %vm1123 = vweird.f32 %v1116
    %vm1124 = vmor %vm1122, %vm1123
    %v1125 = vsel %vm1124, %v1116, %v1121
    %v1126 = vrsqrt.pop %v1068
    %v1127 = vmul.f32 %v1126, %v1068
    %v1128 = vmul.f32 %v1127, %v1126
    %v1129 = vmul.f32 0.5, %v1128
    %v1130 = vsub.f32 1.5, %v1129
    %v1131 = vmul.f32 %v1126, %v1130
    %vm1132 = vweird.f32 %v1068
    %vm1133 = vweird.f32 %v1126
    %vm1134 = vmor %vm1132, %vm1133
    %v1135 = vsel %vm1134, %v1126, %v1131
    %v1136 = vrsqrt.pop %v1071
    %v1137 = vmul.f32 %v1136, %v1071
    %v1138 = vmul.f32 %v1137, %v1136
    %v1139 = vmul.f32 0.5, %v1138
    %v1140 = vsub.f32 1.5, %v1139
    %v1141 = vmul.f32 %v1136, %v1140
    %vm1142 = vweird.f32 %v1071
    %vm1143 = vweird.f32 %v1136
    %vm1144 = vmor %vm1142, %vm1143
    %v1145 = vsel %vm1144, %v1136, %v1141
    %v1146 = vrsqrt.pop %v1074
    %v1147 = vmul.f32 %v1146, %v1074
    %v1148 = vmul.f32 %v1147, %v1146
    %v1149 = vmul.f32 0.5, %v1148
    %v1150 = vsub.f32 1.5, %v1149
    %v1151 = vmul.f32 %v1146, %v1150
    %vm1152 = vweird.f32 %v1074
    %vm1153 = vweird.f32 %v1146
    %vm1154 = vmor %vm1152, %vm1153
    %v1155 = vsel %vm1154, %v1146, %v1151
    %1157 = vset.pattern.permute.xlu0 0
    %1158 = vperm.xlu0 %1157, %v1085
    %v1159 = vpop.permute.xlu0 %1158
    %1162 = vset.pattern.permute.xlu0 0
    %1163 = vperm.xlu0 %1162, %v1095
    %v1164 = vpop.permute.xlu0 %1163
    %1167 = vset.pattern.permute.xlu0 0
    %1168 = vperm.xlu0 %1167, %v1105
    %v1169 = vpop.permute.xlu0 %1168
    %1172 = vset.pattern.permute.xlu0 0
    %1173 = vperm.xlu0 %1172, %v1115
    %v1174 = vpop.permute.xlu0 %1173
    %1177 = vset.pattern.permute.xlu0 0
    %1178 = vperm.xlu0 %1177, %v1125
    %v1179 = vpop.permute.xlu0 %1178
    %1182 = vset.pattern.permute.xlu0 0
    %1183 = vperm.xlu0 %1182, %v1135
    %v1184 = vpop.permute.xlu0 %1183
    %1187 = vset.pattern.permute.xlu0 0
    %1188 = vperm.xlu0 %1187, %v1145
    %v1189 = vpop.permute.xlu0 %1188
    %1192 = vset.pattern.permute.xlu0 0
    %1193 = vperm.xlu0 %1192, %v1155
    %v1194 = vpop.permute.xlu0 %1193
    %v1196 = vmul.f32 %v972, %v1159
    %v1197 = vmul.f32 %v973, %v1164
    %v1198 = vmul.f32 %v974, %v1169
    %v1199 = vmul.f32 %v975, %v1174
    %v1200 = vmul.f32 %v976, %v1179
    %v1201 = vmul.f32 %v977, %v1184
    %v1202 = vmul.f32 %v978, %v1189
    %v1203 = vmul.f32 %v979, %v1194
    %v1204 = vld [vmem:[%s8] sm:$0xff]
    %v1205 = vld [vmem:[%s8 + $0x8] sm:$0xff]
    %v1206 = vld [vmem:[%s8 + $0x10] sm:$0xff]
    %v1207 = vld [vmem:[%s8 + $0x18] sm:$0xff]
    %v1208 = vld [vmem:[%s8 + $0x20] sm:$0xff]
    %v1209 = vld [vmem:[%s8 + $0x28] sm:$0xff]
    %v1210 = vld [vmem:[%s8 + $0x30] sm:$0xff]
    %v1211 = vld [vmem:[%s8 + $0x38] sm:$0xff]
    %1213 = vset.pattern.permute.xlu0 0
    %1214 = vperm.xlu0 %1213, %v1204
    %v1215 = vpop.permute.xlu0 %1214
    %1218 = vset.pattern.permute.xlu0 0
    %1219 = vperm.xlu0 %1218, %v1205
    %v1220 = vpop.permute.xlu0 %1219
    %1223 = vset.pattern.permute.xlu0 0
    %1224 = vperm.xlu0 %1223, %v1206
    %v1225 = vpop.permute.xlu0 %1224
    %1228 = vset.pattern.permute.xlu0 0
    %1229 = vperm.xlu0 %1228, %v1207
    %v1230 = vpop.permute.xlu0 %1229
    %1233 = vset.pattern.permute.xlu0 0
    %1234 = vperm.xlu0 %1233, %v1208
    %v1235 = vpop.permute.xlu0 %1234
    %1238 = vset.pattern.permute.xlu0 0
    %1239 = vperm.xlu0 %1238, %v1209
    %v1240 = vpop.permute.xlu0 %1239
    %1243 = vset.pattern.permute.xlu0 0
    %1244 = vperm.xlu0 %1243, %v1210
    %v1245 = vpop.permute.xlu0 %1244
    %1248 = vset.pattern.permute.xlu0 0
    %1249 = vperm.xlu0 %1248, %v1211
    %v1250 = vpop.permute.xlu0 %1249
    %v1252 = vmul.f32 %v1196, %v1215
    %v1253 = vmul.f32 %v1197, %v1220
    %v1254 = vmul.f32 %v1198, %v1225
    %v1255 = vmul.f32 %v1199, %v1230
    %v1256 = vmul.f32 %v1200, %v1235
    %v1257 = vmul.f32 %v1201, %v1240
    %v1258 = vmul.f32 %v1202, %v1245
    %v1259 = vmul.f32 %v1203, %v1250
    %s1260 = scalar_lea.vmem %s8, 64
    %v1261 = vld [vmem:[%s1260] sm:$0xff]
    %v1262 = vld [vmem:[%s1260 + $0x8] sm:$0xff]
    %v1263 = vld [vmem:[%s1260 + $0x10] sm:$0xff]
    %v1264 = vld [vmem:[%s1260 + $0x18] sm:$0xff]
    %v1265 = vld [vmem:[%s1260 + $0x20] sm:$0xff]
    %v1266 = vld [vmem:[%s1260 + $0x28] sm:$0xff]
    %v1267 = vld [vmem:[%s1260 + $0x30] sm:$0xff]
    %v1268 = vld [vmem:[%s1260 + $0x38] sm:$0xff]
    %1270 = vset.pattern.permute.xlu0 0
    %1271 = vperm.xlu0 %1270, %v1261
    %v1272 = vpop.permute.xlu0 %1271
    %1275 = vset.pattern.permute.xlu0 0
    %1276 = vperm.xlu0 %1275, %v1262
    %v1277 = vpop.permute.xlu0 %1276
    %1280 = vset.pattern.permute.xlu0 0
    %1281 = vperm.xlu0 %1280, %v1263
    %v1282 = vpop.permute.xlu0 %1281
    %1285 = vset.pattern.permute.xlu0 0
    %1286 = vperm.xlu0 %1285, %v1264
    %v1287 = vpop.permute.xlu0 %1286
    %1290 = vset.pattern.permute.xlu0 0
    %1291 = vperm.xlu0 %1290, %v1265
    %v1292 = vpop.permute.xlu0 %1291
    %1295 = vset.pattern.permute.xlu0 0
    %1296 = vperm.xlu0 %1295, %v1266
    %v1297 = vpop.permute.xlu0 %1296
    %1300 = vset.pattern.permute.xlu0 0
    %1301 = vperm.xlu0 %1300, %v1267
    %v1302 = vpop.permute.xlu0 %1301
    %1305 = vset.pattern.permute.xlu0 0
    %1306 = vperm.xlu0 %1305, %v1268
    %v1307 = vpop.permute.xlu0 %1306
    %v1309 = vadd.f32 %v1252, %v1272
    %v1310 = vadd.f32 %v1253, %v1277
    %v1311 = vadd.f32 %v1254, %v1282
    %v1312 = vadd.f32 %v1255, %v1287
    %v1313 = vadd.f32 %v1256, %v1292
    %v1314 = vadd.f32 %v1257, %v1297
    %v1315 = vadd.f32 %v1258, %v1302
    %v1316 = vadd.f32 %v1259, %v1307
    %vm1317 = vcmp.ge.f32.partialorder %v1309, 0.0
    %vm1318 = vcmp.ge.f32.partialorder %v1310, 0.0
    %vm1319 = vcmp.ge.f32.partialorder %v1311, 0.0
    %vm1320 = vcmp.ge.f32.partialorder %v1312, 0.0
    %vm1321 = vcmp.ge.f32.partialorder %v1313, 0.0
    %vm1322 = vcmp.ge.f32.partialorder %v1314, 0.0
    %vm1323 = vcmp.ge.f32.partialorder %v1315, 0.0
    %vm1324 = vcmp.ge.f32.partialorder %v1316, 0.0
    %v1325 = vmul.f32 %v1309, 0.01
    %v1326 = vmul.f32 %v1310, 0.01
    %v1327 = vmul.f32 %v1311, 0.01
    %v1328 = vmul.f32 %v1312, 0.01
    %v1329 = vmul.f32 %v1313, 0.01
    %v1330 = vmul.f32 %v1314, 0.01
    %v1331 = vmul.f32 %v1315, 0.01
    %v1332 = vmul.f32 %v1316, 0.01
    %v1333 = vsel %vm1317, %v1309, %v1325
    %v1334 = vsel %vm1318, %v1310, %v1326
    %v1335 = vsel %vm1319, %v1311, %v1327
    %v1336 = vsel %vm1320, %v1312, %v1328
    %v1337 = vsel %vm1321, %v1313, %v1329
    %v1338 = vsel %vm1322, %v1314, %v1330
    %v1339 = vsel %vm1323, %v1315, %v1331
    %v1340 = vsel %vm1324, %v1316, %v1332
    %v1341 = vld [vmem:[%s9] sm:$0xf]
    %v1342 = vld [vmem:[%s9 + $0x4] sm:$0xf]
    %v1343 = vld [vmem:[%s9 + $0x8] sm:$0xf]
    %v1344 = vld [vmem:[%s9 + $0xc] sm:$0xf]
    %v1345 = vld [vmem:[%s9 + $0x10] sm:$0xf]
    %v1346 = vld [vmem:[%s9 + $0x14] sm:$0xf]
    %v1347 = vld [vmem:[%s9 + $0x18] sm:$0xf]
    %v1348 = vld [vmem:[%s9 + $0x1c] sm:$0xf]
    %v1349 = vpack.c.bf16 %v1334, %v1333
    %v1350 = vpack.c.bf16 %v1336, %v1335
    %v1351 = vpack.c.bf16 %v1338, %v1337
    %v1352 = vpack.c.bf16 %v1340, %v1339
    %v1361 = vunpack.c.l.b16 %v1341
    %v1362 = vunpack.c.l.b16 %v1342
    %v1363 = vunpack.c.l.b16 %v1343
    %v1364 = vunpack.c.l.b16 %v1344
    %v1365 = vunpack.c.l.b16 %v1345
    %v1366 = vunpack.c.l.b16 %v1346
    %v1367 = vunpack.c.l.b16 %v1347
    %v1368 = vunpack.c.l.b16 %v1348
    %v1369 = vpack.c.b16 %v1362, %v1361
    %v1370 = vpack.c.b16 %v1364, %v1363
    %v1371 = vpack.c.b16 %v1366, %v1365
    %v1372 = vpack.c.b16 %v1368, %v1367
    %v1374 = vsel %vm258, %v1369, 0
    %v1377 = vsel %vm258, %v1370, 0
    %v1380 = vsel %vm258, %v1371, 0
    %v1383 = vsel %vm258, %v1372, 0
    %1385 = vmatpush.bf16.msra.mxu0 0
    %1386 = vmatpush.bf16.msra.mxu0 0
    %1387 = vmatpush.bf16.msra.mxu0 0
    %1388 = vmatpush.bf16.msra.mxu0 0
    %1389 = vmatpush.bf16.msra.mxu0 %v1352
    %1390 = vmatpush.bf16.msra.mxu0 %v1351
    %1391 = vmatpush.bf16.msra.mxu0 %v1350
    %1392 = vmatpush.bf16.msra.mxu0 %v1349
    %1393 = vmatmul.bf16.gmra.mxu0 %v1374
    %v1394 = vpop.f32.mrf.mxu0
    %v1395 = vadd.f32 0.0, %v1394
    %v1396 = vpop.f32.mrf.mxu0
    %v1397 = vadd.f32 0.0, %v1396
    %1398 = vmatmul.bf16.gmra.mxu0 %v1377
    %v1399 = vpop.f32.mrf.mxu0
    %v1400 = vadd.f32 0.0, %v1399
    %v1401 = vpop.f32.mrf.mxu0
    %v1402 = vadd.f32 0.0, %v1401
    %1403 = vmatmul.bf16.gmra.mxu0 %v1380
    %v1404 = vpop.f32.mrf.mxu0
    %v1405 = vadd.f32 0.0, %v1404
    %v1406 = vpop.f32.mrf.mxu0
    %v1407 = vadd.f32 0.0, %v1406
    %1408 = vmatmul.bf16.gmra.mxu0 %v1383
    %v1409 = vpop.f32.mrf.mxu0
    %v1410 = vadd.f32 0.0, %v1409
    %v1411 = vpop.f32.mrf.mxu0
    %v1412 = vadd.f32 0.0, %v1411
    %1413 = vdwg.mxu0
    %v1414 = vld [vmem:[#allocation7] sm:$0xf]
    %v1415 = vld [vmem:[#allocation7 + $0x4] sm:$0xf]
    %v1416 = vld [vmem:[#allocation7 + $0x8] sm:$0xf]
    %v1417 = vld [vmem:[#allocation7 + $0xc] sm:$0xf]
    %v1418 = vpack.c.bf16 %v1397, %v1395
    %v1419 = vpack.c.bf16 %v1402, %v1400
    %v1420 = vpack.c.bf16 %v1407, %v1405
    %v1421 = vpack.c.bf16 %v1412, %v1410
    %s1422 = scalar_lea.vmem %s9, 32
    %v1423 = vld [vmem:[%s1422] sm:$0xf]
    %v1424 = vld [vmem:[%s1422 + $0x4] sm:$0xf]
    %v1425 = vld [vmem:[%s1422 + $0x8] sm:$0xf]
    %v1426 = vld [vmem:[%s1422 + $0xc] sm:$0xf]
    %v1427 = vld [vmem:[%s1422 + $0x10] sm:$0xf]
    %v1428 = vld [vmem:[%s1422 + $0x14] sm:$0xf]
    %v1429 = vld [vmem:[%s1422 + $0x18] sm:$0xf]
    %v1430 = vld [vmem:[%s1422 + $0x1c] sm:$0xf]
    %v1439 = vunpack.c.l.b16 %v1423
    %v1440 = vunpack.c.l.b16 %v1424
    %v1441 = vunpack.c.l.b16 %v1425
    %v1442 = vunpack.c.l.b16 %v1426
    %v1443 = vunpack.c.l.b16 %v1427
    %v1444 = vunpack.c.l.b16 %v1428
    %v1445 = vunpack.c.l.b16 %v1429
    %v1446 = vunpack.c.l.b16 %v1430
    %v1447 = vpack.c.b16 %v1440, %v1439
    %v1448 = vpack.c.b16 %v1442, %v1441
    %v1449 = vpack.c.b16 %v1444, %v1443
    %v1450 = vpack.c.b16 %v1446, %v1445
    %v1452 = vsel %vm258, %v1447, 0
    %v1455 = vsel %vm258, %v1448, 0
    %v1458 = vsel %vm258, %v1449, 0
    %v1461 = vsel %vm258, %v1450, 0
    %1463 = vmatpush.bf16.msra.mxu0 0
    %1464 = vmatpush.bf16.msra.mxu0 0
    %1465 = vmatpush.bf16.msra.mxu0 0
    %1466 = vmatpush.bf16.msra.mxu0 0
    %1467 = vmatpush.bf16.msra.mxu0 %v1352
    %1468 = vmatpush.bf16.msra.mxu0 %v1351
    %1469 = vmatpush.bf16.msra.mxu0 %v1350
    %1470 = vmatpush.bf16.msra.mxu0 %v1349
    %1471 = vmatmul.bf16.gmra.mxu0 %v1452
    %v1472 = vpop.f32.mrf.mxu0
    %v1473 = vadd.f32 0.0, %v1472
    %v1474 = vpop.f32.mrf.mxu0
    %v1475 = vadd.f32 0.0, %v1474
    %1476 = vmatmul.bf16.gmra.mxu0 %v1455
    %v1477 = vpop.f32.mrf.mxu0
    %v1478 = vadd.f32 0.0, %v1477
    %v1479 = vpop.f32.mrf.mxu0
    %v1480 = vadd.f32 0.0, %v1479
    %1481 = vmatmul.bf16.gmra.mxu0 %v1458
    %v1482 = vpop.f32.mrf.mxu0
    %v1483 = vadd.f32 0.0, %v1482
    %v1484 = vpop.f32.mrf.mxu0
    %v1485 = vadd.f32 0.0, %v1484
    %1486 = vmatmul.bf16.gmra.mxu0 %v1461
    %v1487 = vpop.f32.mrf.mxu0
    %v1488 = vadd.f32 0.0, %v1487
    %v1489 = vpop.f32.mrf.mxu0
    %v1490 = vadd.f32 0.0, %v1489
    %1491 = vdwg.mxu0
    %s1492 = scalar_lea.vmem [#allocation7], 16
    %v1493 = vld [vmem:[%s1492] sm:$0xf]
    %v1494 = vld [vmem:[%s1492 + $0x4] sm:$0xf]
    %v1495 = vld [vmem:[%s1492 + $0x8] sm:$0xf]
    %v1496 = vld [vmem:[%s1492 + $0xc] sm:$0xf]
    %v1497 = vpack.c.bf16 %v1475, %v1473
    %v1498 = vpack.c.bf16 %v1480, %v1478
    %v1499 = vpack.c.bf16 %v1485, %v1483
    %v1500 = vpack.c.bf16 %v1490, %v1488
    %v1505 = vunpack.c.l.b16 %v1493
    %v1506 = vunpack.c.l.b16 %v1494
    %v1507 = vunpack.c.l.b16 %v1495
    %v1508 = vunpack.c.l.b16 %v1496
    %v1509 = vpack.c.b16 %v1506, %v1505
    %v1510 = vpack.c.b16 %v1508, %v1507
    %v1514 = vsel %vm452, %v1497, 0
    %v1517 = vsel %vm452, %v1498, 0
    %v1520 = vsel %vm452, %v1499, 0
    %v1523 = vsel %vm452, %v1500, 0
    %1525 = vmatpush.bf16.msra.mxu0 0
    %1526 = vmatpush.bf16.msra.mxu0 0
    %1527 = vmatpush.bf16.msra.mxu0 0
    %1528 = vmatpush.bf16.msra.mxu0 0
    %1529 = vmatpush.bf16.msra.mxu0 0
    %1530 = vmatpush.bf16.msra.mxu0 0
    %1531 = vmatpush.bf16.msra.mxu0 %v1510
    %1532 = vmatpush.bf16.msra.mxu0 %v1509
    %1533 = vmatmul.bf16.gmra.mxu0 %v1514
    %v1534 = vpop.f32.mrf.mxu0
    %v1535 = vadd.f32 0.0, %v1534
    %v1536 = vpop.f32.mrf.mxu0
    %v1537 = vadd.f32 0.0, %v1536
    %1538 = vmatmul.bf16.gmra.mxu0 %v1517
    %v1539 = vpop.f32.mrf.mxu0
    %v1540 = vadd.f32 0.0, %v1539
    %v1541 = vpop.f32.mrf.mxu0
    %v1542 = vadd.f32 0.0, %v1541
    %1543 = vmatmul.bf16.gmra.mxu0 %v1520
    %v1544 = vpop.f32.mrf.mxu0
    %v1545 = vadd.f32 0.0, %v1544
    %v1546 = vpop.f32.mrf.mxu0
    %v1547 = vadd.f32 0.0, %v1546
    %1548 = vmatmul.bf16.gmra.mxu0 %v1523
    %v1549 = vpop.f32.mrf.mxu0
    %v1550 = vadd.f32 0.0, %v1549
    %v1551 = vpop.f32.mrf.mxu0
    %v1552 = vadd.f32 0.0, %v1551
    %1553 = vdwg.mxu0
    %v1558 = vunpack.c.l.b16 %v1414
    %v1559 = vunpack.c.l.b16 %v1415
    %v1560 = vunpack.c.l.b16 %v1416
    %v1561 = vunpack.c.l.b16 %v1417
    %v1562 = vpack.c.b16 %v1559, %v1558
    %v1563 = vpack.c.b16 %v1561, %v1560
    %v1567 = vsel %vm452, %v1418, 0
    %v1570 = vsel %vm452, %v1419, 0
    %v1573 = vsel %vm452, %v1420, 0
    %v1576 = vsel %vm452, %v1421, 0
    %1578 = vmatpush.bf16.msra.mxu0 0
    %1579 = vmatpush.bf16.msra.mxu0 0
    %1580 = vmatpush.bf16.msra.mxu0 0
    %1581 = vmatpush.bf16.msra.mxu0 0
    %1582 = vmatpush.bf16.msra.mxu0 0
    %1583 = vmatpush.bf16.msra.mxu0 0
    %1584 = vmatpush.bf16.msra.mxu0 %v1563
    %1585 = vmatpush.bf16.msra.mxu0 %v1562
    %1586 = vmatmul.bf16.gmra.mxu0 %v1567
    %v1587 = vpop.f32.mrf.mxu0
    %v1588 = vadd.f32 %v1535, %v1587
    %v1589 = vpop.f32.mrf.mxu0
    %v1590 = vadd.f32 %v1537, %v1589
    %1591 = vmatmul.bf16.gmra.mxu0 %v1570
    %v1592 = vpop.f32.mrf.mxu0
    %v1593 = vadd.f32 %v1540, %v1592
    %v1594 = vpop.f32.mrf.mxu0
    %v1595 = vadd.f32 %v1542, %v1594
    %1596 = vmatmul.bf16.gmra.mxu0 %v1573
    %v1597 = vpop.f32.mrf.mxu0
    %v1598 = vadd.f32 %v1545, %v1597
    %v1599 = vpop.f32.mrf.mxu0
    %v1600 = vadd.f32 %v1547, %v1599
    %1601 = vmatmul.bf16.gmra.mxu0 %v1576
    %v1602 = vpop.f32.mrf.mxu0
    %v1603 = vadd.f32 %v1550, %v1602
    %v1604 = vpop.f32.mrf.mxu0
    %v1605 = vadd.f32 %v1552, %v1604
    %1606 = vdwg.mxu0
    %s1607 = scalar_lea.vmem %s9, 64
    %v1608 = vld [vmem:[%s1607] sm:$0xf]
    %v1609 = vld [vmem:[%s1607 + $0x4] sm:$0xf]
    %v1610 = vld [vmem:[%s1607 + $0x8] sm:$0xf]
    %v1611 = vld [vmem:[%s1607 + $0xc] sm:$0xf]
    %v1612 = vld [vmem:[%s1607 + $0x10] sm:$0xf]
    %v1613 = vld [vmem:[%s1607 + $0x14] sm:$0xf]
    %v1614 = vld [vmem:[%s1607 + $0x18] sm:$0xf]
    %v1615 = vld [vmem:[%s1607 + $0x1c] sm:$0xf]
    %v1624 = vunpack.c.l.b16 %v1608
    %v1625 = vunpack.c.l.b16 %v1609
    %v1626 = vunpack.c.l.b16 %v1610
    %v1627 = vunpack.c.l.b16 %v1611
    %v1628 = vunpack.c.l.b16 %v1612
    %v1629 = vunpack.c.l.b16 %v1613
    %v1630 = vunpack.c.l.b16 %v1614
    %v1631 = vunpack.c.l.b16 %v1615
    %v1632 = vpack.c.b16 %v1625, %v1624
    %v1633 = vpack.c.b16 %v1627, %v1626
    %v1634 = vpack.c.b16 %v1629, %v1628
    %v1635 = vpack.c.b16 %v1631, %v1630
    %v1637 = vsel %vm258, %v1632, 0
    %v1640 = vsel %vm258, %v1633, 0
    %v1643 = vsel %vm258, %v1634, 0
    %v1646 = vsel %vm258, %v1635, 0
    %1648 = vmatpush.bf16.msra.mxu0 0
    %1649 = vmatpush.bf16.msra.mxu0 0
    %1650 = vmatpush.bf16.msra.mxu0 0
    %1651 = vmatpush.bf16.msra.mxu0 0
    %1652 = vmatpush.bf16.msra.mxu0 %v1352
    %1653 = vmatpush.bf16.msra.mxu0 %v1351
    %1654 = vmatpush.bf16.msra.mxu0 %v1350
    %1655 = vmatpush.bf16.msra.mxu0 %v1349
    %1656 = vmatmul.bf16.gmra.mxu0 %v1637
    %v1657 = vpop.f32.mrf.mxu0
    %v1658 = vadd.f32 0.0, %v1657
    %v1659 = vpop.f32.mrf.mxu0
    %v1660 = vadd.f32 0.0, %v1659
    %1661 = vmatmul.bf16.gmra.mxu0 %v1640
    %v1662 = vpop.f32.mrf.mxu0
    %v1663 = vadd.f32 0.0, %v1662
    %v1664 = vpop.f32.mrf.mxu0
    %v1665 = vadd.f32 0.0, %v1664
    %1666 = vmatmul.bf16.gmra.mxu0 %v1643
    %v1667 = vpop.f32.mrf.mxu0
    %v1668 = vadd.f32 0.0, %v1667
    %v1669 = vpop.f32.mrf.mxu0
    %v1670 = vadd.f32 0.0, %v1669
    %1671 = vmatmul.bf16.gmra.mxu0 %v1646
    %v1672 = vpop.f32.mrf.mxu0
    %v1673 = vadd.f32 0.0, %v1672
    %v1674 = vpop.f32.mrf.mxu0
    %v1675 = vadd.f32 0.0, %v1674
    %1676 = vdwg.mxu0
    %s1677 = scalar_lea.vmem [#allocation7], 32
    %v1678 = vld [vmem:[%s1677] sm:$0xf]
    %v1679 = vld [vmem:[%s1677 + $0x4] sm:$0xf]
    %v1680 = vld [vmem:[%s1677 + $0x8] sm:$0xf]
    %v1681 = vld [vmem:[%s1677 + $0xc] sm:$0xf]
    %v1682 = vpack.c.bf16 %v1660, %v1658
    %v1683 = vpack.c.bf16 %v1665, %v1663
    %v1684 = vpack.c.bf16 %v1670, %v1668
    %v1685 = vpack.c.bf16 %v1675, %v1673
    %v1690 = vunpack.c.l.b16 %v1678
    %v1691 = vunpack.c.l.b16 %v1679
    %v1692 = vunpack.c.l.b16 %v1680
    %v1693 = vunpack.c.l.b16 %v1681
    %v1694 = vpack.c.b16 %v1691, %v1690
    %v1695 = vpack.c.b16 %v1693, %v1692
    %v1699 = vsel %vm452, %v1682, 0
    %v1702 = vsel %vm452, %v1683, 0
    %v1705 = vsel %vm452, %v1684, 0
    %v1708 = vsel %vm452, %v1685, 0
    %1710 = vmatpush.bf16.msra.mxu0 0
    %1711 = vmatpush.bf16.msra.mxu0 0
    %1712 = vmatpush.bf16.msra.mxu0 0
    %1713 = vmatpush.bf16.msra.mxu0 0
    %1714 = vmatpush.bf16.msra.mxu0 0
    %1715 = vmatpush.bf16.msra.mxu0 0
    %1716 = vmatpush.bf16.msra.mxu0 %v1695
    %1717 = vmatpush.bf16.msra.mxu0 %v1694
    %1718 = vmatmul.bf16.gmra.mxu0 %v1699
    %v1719 = vpop.f32.mrf.mxu0
    %v1720 = vadd.f32 0.0, %v1719
    %v1721 = vpop.f32.mrf.mxu0
    %v1722 = vadd.f32 0.0, %v1721
    %1723 = vmatmul.bf16.gmra.mxu0 %v1702
    %v1724 = vpop.f32.mrf.mxu0
    %v1725 = vadd.f32 0.0, %v1724
    %v1726 = vpop.f32.mrf.mxu0
    %v1727 = vadd.f32 0.0, %v1726
    %1728 = vmatmul.bf16.gmra.mxu0 %v1705
    %v1729 = vpop.f32.mrf.mxu0
    %v1730 = vadd.f32 0.0, %v1729
    %v1731 = vpop.f32.mrf.mxu0
    %v1732 = vadd.f32 0.0, %v1731
    %1733 = vmatmul.bf16.gmra.mxu0 %v1708
    %v1734 = vpop.f32.mrf.mxu0
    %v1735 = vadd.f32 0.0, %v1734
    %v1736 = vpop.f32.mrf.mxu0
    %v1737 = vadd.f32 0.0, %v1736
    %1738 = vdwg.mxu0
    %v1739 = vadd.f32 %v1588, %v1720
    %v1740 = vadd.f32 %v1590, %v1722
    %v1741 = vadd.f32 %v1593, %v1725
    %v1742 = vadd.f32 %v1595, %v1727
    %v1743 = vadd.f32 %v1598, %v1730
    %v1744 = vadd.f32 %v1600, %v1732
    %v1745 = vadd.f32 %v1603, %v1735
    %v1746 = vadd.f32 %v1605, %v1737
    %v1747 = vsel %vm258, %v1739, 0.0
    %1748 = vadd.xlane.f32.xlu0 %v1747
    %v1749 = vpop.xlane.xlu0 %1748
    %v1750 = vsel %vm258, %v1740, 0.0
    %1751 = vadd.xlane.f32.xlu0 %v1750
    %v1752 = vpop.xlane.xlu0 %1751
    %v1753 = vsel %vm258, %v1741, 0.0
    %1754 = vadd.xlane.f32.xlu0 %v1753
    %v1755 = vpop.xlane.xlu0 %1754
    %v1756 = vsel %vm258, %v1742, 0.0
    %1757 = vadd.xlane.f32.xlu0 %v1756
    %v1758 = vpop.xlane.xlu0 %1757
    %v1759 = vsel %vm258, %v1743, 0.0
    %1760 = vadd.xlane.f32.xlu0 %v1759
    %v1761 = vpop.xlane.xlu0 %1760
    %v1762 = vsel %vm258, %v1744, 0.0
    %1763 = vadd.xlane.f32.xlu0 %v1762
    %v1764 = vpop.xlane.xlu0 %1763
    %v1765 = vsel %vm258, %v1745, 0.0
    %1766 = vadd.xlane.f32.xlu0 %v1765
    %v1767 = vpop.xlane.xlu0 %1766
    %v1768 = vsel %vm258, %v1746, 0.0
    %1769 = vadd.xlane.f32.xlu0 %v1768
    %v1770 = vpop.xlane.xlu0 %1769
    %v1771 = vld [vmem:[%s12] sm:$0xff]
    %v1772 = vld [vmem:[%s12 + $0x8] sm:$0xff]
    %v1773 = vld [vmem:[%s12 + $0x10] sm:$0xff]
    %v1774 = vld [vmem:[%s12 + $0x18] sm:$0xff]
    %v1775 = vld [vmem:[%s12 + $0x20] sm:$0xff]
    %v1776 = vld [vmem:[%s12 + $0x28] sm:$0xff]
    %v1777 = vld [vmem:[%s12 + $0x30] sm:$0xff]
    %v1778 = vld [vmem:[%s12 + $0x38] sm:$0xff]
    %v1779 = vld [vmem:[#allocation8] sm:$0xff]
    %v1781 = vsel %vm258, %v1779, 0
    %1783 = vmatpush.msra.mxu0 0.0
    %1784 = vmatpush.msra.mxu0 0.0
    %1785 = vmatpush.msra.mxu0 0.0
    %1786 = vmatpush.msra.mxu0 0.0
    %1787 = vmatpush.msra.mxu0 0.0
    %1788 = vmatpush.msra.mxu0 0.0
    %1789 = vmatpush.msra.mxu0 0.0
    %1790 = vmatpush.msra.mxu0 0.0
    %1791 = vmatpush.msra.mxu0 %v1770
    %1792 = vmatpush.msra.mxu0 %v1767
    %1793 = vmatpush.msra.mxu0 %v1764
    %1794 = vmatpush.msra.mxu0 %v1761
    %1795 = vmatpush.msra.mxu0 %v1758
    %1796 = vmatpush.msra.mxu0 %v1755
    %1797 = vmatpush.msra.mxu0 %v1752
    %1798 = vmatpush.msra.mxu0 %v1749
    %1799 = vmatmul.f32.gmra.mxu0 %v1781
    %v1800 = vpop.f32.mrf.mxu0
    %v1801 = vadd.f32 0.0, %v1800
    %1802 = vdwg.mxu0
    %v1804 = vsel %vm364, %v1771, 0
    %v1807 = vsel %vm364, %v1772, 0
    %v1810 = vsel %vm364, %v1773, 0
    %v1813 = vsel %vm364, %v1774, 0
    %v1816 = vsel %vm364, %v1775, 0
    %v1819 = vsel %vm364, %v1776, 0
    %v1822 = vsel %vm364, %v1777, 0
    %v1825 = vsel %vm364, %v1778, 0
    %1827 = vmatpush.msra.mxu0 0.0
    %1828 = vmatpush.msra.mxu0 0.0
    %1829 = vmatpush.msra.mxu0 0.0
    %1830 = vmatpush.msra.mxu0 0.0
    %1831 = vmatpush.msra.mxu0 0.0
    %1832 = vmatpush.msra.mxu0 0.0
    %1833 = vmatpush.msra.mxu0 0.0
    %1834 = vmatpush.msra.mxu0 0.0
    %1835 = vmatpush.msra.mxu0 0.0
    %1836 = vmatpush.msra.mxu0 0.0
    %1837 = vmatpush.msra.mxu0 0.0
    %1838 = vmatpush.msra.mxu0 0.0
    %1839 = vmatpush.msra.mxu0 0.0
    %1840 = vmatpush.msra.mxu0 0.0
    %1841 = vmatpush.msra.mxu0 0.0
    %1842 = vmatpush.msra.mxu0 %v1801
    %1843 = vmatmul.f32.gmra.mxu0 %v1804
    %v1844 = vpop.f32.mrf.mxu0
    %v1845 = vadd.f32 0.0, %v1844
    %1846 = vmatmul.f32.gmra.mxu0 %v1807
    %v1847 = vpop.f32.mrf.mxu0
    %v1848 = vadd.f32 0.0, %v1847
    %1849 = vmatmul.f32.gmra.mxu0 %v1810
    %v1850 = vpop.f32.mrf.mxu0
    %v1851 = vadd.f32 0.0, %v1850
    %1852 = vmatmul.f32.gmra.mxu0 %v1813
    %v1853 = vpop.f32.mrf.mxu0
    %v1854 = vadd.f32 0.0, %v1853
    %1855 = vmatmul.f32.gmra.mxu0 %v1816
    %v1856 = vpop.f32.mrf.mxu0
    %v1857 = vadd.f32 0.0, %v1856
    %1858 = vmatmul.f32.gmra.mxu0 %v1819
    %v1859 = vpop.f32.mrf.mxu0
    %v1860 = vadd.f32 0.0, %v1859
    %1861 = vmatmul.f32.gmra.mxu0 %v1822
    %v1862 = vpop.f32.mrf.mxu0
    %v1863 = vadd.f32 0.0, %v1862
    %1864 = vmatmul.f32.gmra.mxu0 %v1825
    %v1865 = vpop.f32.mrf.mxu0
    %v1866 = vadd.f32 0.0, %v1865
    %1867 = vdwg.mxu0
    %1869 = vset.pattern.permute.xlu0 0
    %1870 = vperm.xlu0 %1869, %v1845
    %v1871 = vpop.permute.xlu0 %1870
    %1874 = vset.pattern.permute.xlu0 0
    %1875 = vperm.xlu0 %1874, %v1848
    %v1876 = vpop.permute.xlu0 %1875
    %1879 = vset.pattern.permute.xlu0 0
    %1880 = vperm.xlu0 %1879, %v1851
    %v1881 = vpop.permute.xlu0 %1880
    %1884 = vset.pattern.permute.xlu0 0
    %1885 = vperm.xlu0 %1884, %v1854
    %v1886 = vpop.permute.xlu0 %1885
    %1889 = vset.pattern.permute.xlu0 0
    %1890 = vperm.xlu0 %1889, %v1857
    %v1891 = vpop.permute.xlu0 %1890
    %1894 = vset.pattern.permute.xlu0 0
    %1895 = vperm.xlu0 %1894, %v1860
    %v1896 = vpop.permute.xlu0 %1895
    %1899 = vset.pattern.permute.xlu0 0
    %1900 = vperm.xlu0 %1899, %v1863
    %v1901 = vpop.permute.xlu0 %1900
    %1904 = vset.pattern.permute.xlu0 0
    %1905 = vperm.xlu0 %1904, %v1866
    %v1906 = vpop.permute.xlu0 %1905
    %v1908 = vsub.f32 %v1739, %v1871
    %v1909 = vsub.f32 %v1740, %v1876
    %v1910 = vsub.f32 %v1741, %v1881
    %v1911 = vsub.f32 %v1742, %v1886
    %v1912 = vsub.f32 %v1743, %v1891
    %v1913 = vsub.f32 %v1744, %v1896
    %v1914 = vsub.f32 %v1745, %v1901
    %v1915 = vsub.f32 %v1746, %v1906
    %v1916 = vmul.f32 %v1908, %v1908
    %v1917 = vmul.f32 %v1909, %v1909
    %v1918 = vmul.f32 %v1910, %v1910
    %v1919 = vmul.f32 %v1911, %v1911
    %v1920 = vmul.f32 %v1912, %v1912
    %v1921 = vmul.f32 %v1913, %v1913
    %v1922 = vmul.f32 %v1914, %v1914
    %v1923 = vmul.f32 %v1915, %v1915
    %v1924 = vsel %vm258, %v1916, 0.0
    %1925 = vadd.xlane.f32.xlu0 %v1924
    %v1926 = vpop.xlane.xlu0 %1925
    %v1927 = vsel %vm258, %v1917, 0.0
    %1928 = vadd.xlane.f32.xlu0 %v1927
    %v1929 = vpop.xlane.xlu0 %1928
    %v1930 = vsel %vm258, %v1918, 0.0
    %1931 = vadd.xlane.f32.xlu0 %v1930
    %v1932 = vpop.xlane.xlu0 %1931
    %v1933 = vsel %vm258, %v1919, 0.0
    %1934 = vadd.xlane.f32.xlu0 %v1933
    %v1935 = vpop.xlane.xlu0 %1934
    %v1936 = vsel %vm258, %v1920, 0.0
    %1937 = vadd.xlane.f32.xlu0 %v1936
    %v1938 = vpop.xlane.xlu0 %1937
    %v1939 = vsel %vm258, %v1921, 0.0
    %1940 = vadd.xlane.f32.xlu0 %v1939
    %v1941 = vpop.xlane.xlu0 %1940
    %v1942 = vsel %vm258, %v1922, 0.0
    %1943 = vadd.xlane.f32.xlu0 %v1942
    %v1944 = vpop.xlane.xlu0 %1943
    %v1945 = vsel %vm258, %v1923, 0.0
    %1946 = vadd.xlane.f32.xlu0 %v1945
    %v1947 = vpop.xlane.xlu0 %1946
    %1948 = vmatpush.msra.mxu0 0.0
    %1949 = vmatpush.msra.mxu0 0.0
    %1950 = vmatpush.msra.mxu0 0.0
    %1951 = vmatpush.msra.mxu0 0.0
    %1952 = vmatpush.msra.mxu0 0.0
    %1953 = vmatpush.msra.mxu0 0.0
    %1954 = vmatpush.msra.mxu0 0.0
    %1955 = vmatpush.msra.mxu0 0.0
    %1956 = vmatpush.msra.mxu0 %v1947
    %1957 = vmatpush.msra.mxu0 %v1944
    %1958 = vmatpush.msra.mxu0 %v1941
    %1959 = vmatpush.msra.mxu0 %v1938
    %1960 = vmatpush.msra.mxu0 %v1935
    %1961 = vmatpush.msra.mxu0 %v1932
    %1962 = vmatpush.msra.mxu0 %v1929
    %1963 = vmatpush.msra.mxu0 %v1926
    %1964 = vmatmul.f32.gmra.mxu0 %v1781
    %v1965 = vpop.f32.mrf.mxu0
    %v1966 = vadd.f32 0.0, %v1965
    %1967 = vdwg.mxu0
    %1968 = vmatpush.msra.mxu0 0.0
    %1969 = vmatpush.msra.mxu0 0.0
    %1970 = vmatpush.msra.mxu0 0.0
    %1971 = vmatpush.msra.mxu0 0.0
    %1972 = vmatpush.msra.mxu0 0.0
    %1973 = vmatpush.msra.mxu0 0.0
    %1974 = vmatpush.msra.mxu0 0.0
    %1975 = vmatpush.msra.mxu0 0.0
    %1976 = vmatpush.msra.mxu0 0.0
    %1977 = vmatpush.msra.mxu0 0.0
    %1978 = vmatpush.msra.mxu0 0.0
    %1979 = vmatpush.msra.mxu0 0.0
    %1980 = vmatpush.msra.mxu0 0.0
    %1981 = vmatpush.msra.mxu0 0.0
    %1982 = vmatpush.msra.mxu0 0.0
    %1983 = vmatpush.msra.mxu0 %v1966
    %1984 = vmatmul.f32.gmra.mxu0 %v1804
    %v1985 = vpop.f32.mrf.mxu0
    %v1986 = vadd.f32 1e-05, %v1985
    %1987 = vmatmul.f32.gmra.mxu0 %v1807
    %v1988 = vpop.f32.mrf.mxu0
    %v1989 = vadd.f32 1e-05, %v1988
    %1990 = vmatmul.f32.gmra.mxu0 %v1810
    %v1991 = vpop.f32.mrf.mxu0
    %v1992 = vadd.f32 1e-05, %v1991
    %1993 = vmatmul.f32.gmra.mxu0 %v1813
    %v1994 = vpop.f32.mrf.mxu0
    %v1995 = vadd.f32 1e-05, %v1994
    %1996 = vmatmul.f32.gmra.mxu0 %v1816
    %v1997 = vpop.f32.mrf.mxu0
    %v1998 = vadd.f32 1e-05, %v1997
    %1999 = vmatmul.f32.gmra.mxu0 %v1819
    %v2000 = vpop.f32.mrf.mxu0
    %v2001 = vadd.f32 1e-05, %v2000
    %2002 = vmatmul.f32.gmra.mxu0 %v1822
    %v2003 = vpop.f32.mrf.mxu0
    %v2004 = vadd.f32 1e-05, %v2003
    %2005 = vmatmul.f32.gmra.mxu0 %v1825
    %v2006 = vpop.f32.mrf.mxu0
    %v2007 = vadd.f32 1e-05, %v2006
    %2008 = vdwg.mxu0
    %v2009 = vrsqrt.pop %v1986
    %v2010 = vmul.f32 %v2009, %v1986
    %v2011 = vmul.f32 %v2010, %v2009
    %v2012 = vmul.f32 0.5, %v2011
    %v2013 = vsub.f32 1.5, %v2012
    %v2014 = vmul.f32 %v2009, %v2013
    %vm2015 = vweird.f32 %v1986
    %vm2016 = vweird.f32 %v2009
    %vm2017 = vmor %vm2015, %vm2016
    %v2018 = vsel %vm2017, %v2009, %v2014
    %v2019 = vrsqrt.pop %v1989
    %v2020 = vmul.f32 %v2019, %v1989
    %v2021 = vmul.f32 %v2020, %v2019
    %v2022 = vmul.f32 0.5, %v2021
    %v2023 = vsub.f32 1.5, %v2022
    %v2024 = vmul.f32 %v2019, %v2023
    %vm2025 = vweird.f32 %v1989
    %vm2026 = vweird.f32 %v2019
    %vm2027 = vmor %vm2025, %vm2026
    %v2028 = vsel %vm2027, %v2019, %v2024
    %v2029 = vrsqrt.pop %v1992
    %v2030 = vmul.f32 %v2029, %v1992
    %v2031 = vmul.f32 %v2030, %v2029
    %v2032 = vmul.f32 0.5, %v2031
    %v2033 = vsub.f32 1.5, %v2032
    %v2034 = vmul.f32 %v2029, %v2033
    %vm2035 = vweird.f32 %v1992
    %vm2036 = vweird.f32 %v2029
    %vm2037 = vmor %vm2035, %vm2036
    %v2038 = vsel %vm2037, %v2029, %v2034
    %v2039 = vrsqrt.pop %v1995
    %v2040 = vmul.f32 %v2039, %v1995
    %v2041 = vmul.f32 %v2040, %v2039
    %v2042 = vmul.f32 0.5, %v2041
    %v2043 = vsub.f32 1.5, %v2042
    %v2044 = vmul.f32 %v2039, %v2043
    %vm2045 = vweird.f32 %v1995
    %vm2046 = vweird.f32 %v2039
    %vm2047 = vmor %vm2045, %vm2046
    %v2048 = vsel %vm2047, %v2039, %v2044
    %v2049 = vrsqrt.pop %v1998
    %v2050 = vmul.f32 %v2049, %v1998
    %v2051 = vmul.f32 %v2050, %v2049
    %v2052 = vmul.f32 0.5, %v2051
    %v2053 = vsub.f32 1.5, %v2052
    %v2054 = vmul.f32 %v2049, %v2053
    %vm2055 = vweird.f32 %v1998
    %vm2056 = vweird.f32 %v2049
    %vm2057 = vmor %vm2055, %vm2056
    %v2058 = vsel %vm2057, %v2049, %v2054
    %v2059 = vrsqrt.pop %v2001
    %v2060 = vmul.f32 %v2059, %v2001
    %v2061 = vmul.f32 %v2060, %v2059
    %v2062 = vmul.f32 0.5, %v2061
    %v2063 = vsub.f32 1.5, %v2062
    %v2064 = vmul.f32 %v2059, %v2063
    %vm2065 = vweird.f32 %v2001
    %vm2066 = vweird.f32 %v2059
    %vm2067 = vmor %vm2065, %vm2066
    %v2068 = vsel %vm2067, %v2059, %v2064
    %v2069 = vrsqrt.pop %v2004
    %v2070 = vmul.f32 %v2069, %v2004
    %v2071 = vmul.f32 %v2070, %v2069
    %v2072 = vmul.f32 0.5, %v2071
    %v2073 = vsub.f32 1.5, %v2072
    %v2074 = vmul.f32 %v2069, %v2073
    %vm2075 = vweird.f32 %v2004
    %vm2076 = vweird.f32 %v2069
    %vm2077 = vmor %vm2075, %vm2076
    %v2078 = vsel %vm2077, %v2069, %v2074
    %v2079 = vrsqrt.pop %v2007
    %v2080 = vmul.f32 %v2079, %v2007
    %v2081 = vmul.f32 %v2080, %v2079
    %v2082 = vmul.f32 0.5, %v2081
    %v2083 = vsub.f32 1.5, %v2082
    %v2084 = vmul.f32 %v2079, %v2083
    %vm2085 = vweird.f32 %v2007
    %vm2086 = vweird.f32 %v2079
    %vm2087 = vmor %vm2085, %vm2086
    %v2088 = vsel %vm2087, %v2079, %v2084
    %2090 = vset.pattern.permute.xlu0 0
    %2091 = vperm.xlu0 %2090, %v2018
    %v2092 = vpop.permute.xlu0 %2091
    %2095 = vset.pattern.permute.xlu0 0
    %2096 = vperm.xlu0 %2095, %v2028
    %v2097 = vpop.permute.xlu0 %2096
    %2100 = vset.pattern.permute.xlu0 0
    %2101 = vperm.xlu0 %2100, %v2038
    %v2102 = vpop.permute.xlu0 %2101
    %2105 = vset.pattern.permute.xlu0 0
    %2106 = vperm.xlu0 %2105, %v2048
    %v2107 = vpop.permute.xlu0 %2106
    %2110 = vset.pattern.permute.xlu0 0
    %2111 = vperm.xlu0 %2110, %v2058
    %v2112 = vpop.permute.xlu0 %2111
    %2115 = vset.pattern.permute.xlu0 0
    %2116 = vperm.xlu0 %2115, %v2068
    %v2117 = vpop.permute.xlu0 %2116
    %2120 = vset.pattern.permute.xlu0 0
    %2121 = vperm.xlu0 %2120, %v2078
    %v2122 = vpop.permute.xlu0 %2121
    %2125 = vset.pattern.permute.xlu0 0
    %2126 = vperm.xlu0 %2125, %v2088
    %v2127 = vpop.permute.xlu0 %2126
    %v2129 = vmul.f32 %v1908, %v2092
    %v2130 = vmul.f32 %v1909, %v2097
    %v2131 = vmul.f32 %v1910, %v2102
    %v2132 = vmul.f32 %v1911, %v2107
    %v2133 = vmul.f32 %v1912, %v2112
    %v2134 = vmul.f32 %v1913, %v2117
    %v2135 = vmul.f32 %v1914, %v2122
    %v2136 = vmul.f32 %v1915, %v2127
    %v2137 = vld [vmem:[%s13] sm:$0xff]
    %v2138 = vld [vmem:[%s13 + $0x8] sm:$0xff]
    %v2139 = vld [vmem:[%s13 + $0x10] sm:$0xff]
    %v2140 = vld [vmem:[%s13 + $0x18] sm:$0xff]
    %v2141 = vld [vmem:[%s13 + $0x20] sm:$0xff]
    %v2142 = vld [vmem:[%s13 + $0x28] sm:$0xff]
    %v2143 = vld [vmem:[%s13 + $0x30] sm:$0xff]
    %v2144 = vld [vmem:[%s13 + $0x38] sm:$0xff]
    %2146 = vset.pattern.permute.xlu0 0
    %2147 = vperm.xlu0 %2146, %v2137
    %v2148 = vpop.permute.xlu0 %2147
    %2151 = vset.pattern.permute.xlu0 0
    %2152 = vperm.xlu0 %2151, %v2138
    %v2153 = vpop.permute.xlu0 %2152
    %2156 = vset.pattern.permute.xlu0 0
    %2157 = vperm.xlu0 %2156, %v2139
    %v2158 = vpop.permute.xlu0 %2157
    %2161 = vset.pattern.permute.xlu0 0
    %2162 = vperm.xlu0 %2161, %v2140
    %v2163 = vpop.permute.xlu0 %2162
    %2166 = vset.pattern.permute.xlu0 0
    %2167 = vperm.xlu0 %2166, %v2141
    %v2168 = vpop.permute.xlu0 %2167
    %2171 = vset.pattern.permute.xlu0 0
    %2172 = vperm.xlu0 %2171, %v2142
    %v2173 = vpop.permute.xlu0 %2172
    %2176 = vset.pattern.permute.xlu0 0
    %2177 = vperm.xlu0 %2176, %v2143
    %v2178 = vpop.permute.xlu0 %2177
    %2181 = vset.pattern.permute.xlu0 0
    %2182 = vperm.xlu0 %2181, %v2144
    %v2183 = vpop.permute.xlu0 %2182
    %v2185 = vmul.f32 %v2129, %v2148
    %v2186 = vmul.f32 %v2130, %v2153
    %v2187 = vmul.f32 %v2131, %v2158
    %v2188 = vmul.f32 %v2132, %v2163
    %v2189 = vmul.f32 %v2133, %v2168
    %v2190 = vmul.f32 %v2134, %v2173
    %v2191 = vmul.f32 %v2135, %v2178
    %v2192 = vmul.f32 %v2136, %v2183
    %s2193 = scalar_lea.vmem %s13, 64
    %v2194 = vld [vmem:[%s2193] sm:$0xff]
    %v2195 = vld [vmem:[%s2193 + $0x8] sm:$0xff]
    %v2196 = vld [vmem:[%s2193 + $0x10] sm:$0xff]
    %v2197 = vld [vmem:[%s2193 + $0x18] sm:$0xff]
    %v2198 = vld [vmem:[%s2193 + $0x20] sm:$0xff]
    %v2199 = vld [vmem:[%s2193 + $0x28] sm:$0xff]
    %v2200 = vld [vmem:[%s2193 + $0x30] sm:$0xff]
    %v2201 = vld [vmem:[%s2193 + $0x38] sm:$0xff]
    %2203 = vset.pattern.permute.xlu0 0
    %2204 = vperm.xlu0 %2203, %v2194
    %v2205 = vpop.permute.xlu0 %2204
    %2208 = vset.pattern.permute.xlu0 0
    %2209 = vperm.xlu0 %2208, %v2195
    %v2210 = vpop.permute.xlu0 %2209
    %2213 = vset.pattern.permute.xlu0 0
    %2214 = vperm.xlu0 %2213, %v2196
    %v2215 = vpop.permute.xlu0 %2214
    %2218 = vset.pattern.permute.xlu0 0
    %2219 = vperm.xlu0 %2218, %v2197
    %v2220 = vpop.permute.xlu0 %2219
    %2223 = vset.pattern.permute.xlu0 0
    %2224 = vperm.xlu0 %2223, %v2198
    %v2225 = vpop.permute.xlu0 %2224
    %2228 = vset.pattern.permute.xlu0 0
    %2229 = vperm.xlu0 %2228, %v2199
    %v2230 = vpop.permute.xlu0 %2229
    %2233 = vset.pattern.permute.xlu0 0
    %2234 = vperm.xlu0 %2233, %v2200
    %v2235 = vpop.permute.xlu0 %2234
    %2238 = vset.pattern.permute.xlu0 0
    %2239 = vperm.xlu0 %2238, %v2201
    %v2240 = vpop.permute.xlu0 %2239
    %v2242 = vadd.f32 %v2185, %v2205
    %v2243 = vadd.f32 %v2186, %v2210
    %v2244 = vadd.f32 %v2187, %v2215
    %v2245 = vadd.f32 %v2188, %v2220
    %v2246 = vadd.f32 %v2189, %v2225
    %v2247 = vadd.f32 %v2190, %v2230
    %v2248 = vadd.f32 %v2191, %v2235
    %v2249 = vadd.f32 %v2192, %v2240
    %vm2250 = vcmp.ge.f32.partialorder %v2242, 0.0
    %vm2251 = vcmp.ge.f32.partialorder %v2243, 0.0
    %vm2252 = vcmp.ge.f32.partialorder %v2244, 0.0
    %vm2253 = vcmp.ge.f32.partialorder %v2245, 0.0
    %vm2254 = vcmp.ge.f32.partialorder %v2246, 0.0
    %vm2255 = vcmp.ge.f32.partialorder %v2247, 0.0
    %vm2256 = vcmp.ge.f32.partialorder %v2248, 0.0
    %vm2257 = vcmp.ge.f32.partialorder %v2249, 0.0
    %v2258 = vmul.f32 %v2242, 0.01
    %v2259 = vmul.f32 %v2243, 0.01
    %v2260 = vmul.f32 %v2244, 0.01
    %v2261 = vmul.f32 %v2245, 0.01
    %v2262 = vmul.f32 %v2246, 0.01
    %v2263 = vmul.f32 %v2247, 0.01
    %v2264 = vmul.f32 %v2248, 0.01
    %v2265 = vmul.f32 %v2249, 0.01
    %v2266 = vsel %vm2250, %v2242, %v2258
    %v2267 = vsel %vm2251, %v2243, %v2259
    %v2268 = vsel %vm2252, %v2244, %v2260
    %v2269 = vsel %vm2253, %v2245, %v2261
    %v2270 = vsel %vm2254, %v2246, %v2262
    %v2271 = vsel %vm2255, %v2247, %v2263
    %v2272 = vsel %vm2256, %v2248, %v2264
    %v2273 = vsel %vm2257, %v2249, %v2265
    %v2274 = vld [vmem:[%s14] sm:$0xf]
    %v2275 = vld [vmem:[%s14 + $0x4] sm:$0xf]
    %v2276 = vld [vmem:[%s14 + $0x8] sm:$0xf]
    %v2277 = vld [vmem:[%s14 + $0xc] sm:$0xf]
    %v2278 = vld [vmem:[%s14 + $0x10] sm:$0xf]
    %v2279 = vld [vmem:[%s14 + $0x14] sm:$0xf]
    %v2280 = vld [vmem:[%s14 + $0x18] sm:$0xf]
    %v2281 = vld [vmem:[%s14 + $0x1c] sm:$0xf]
    %v2282 = vld [vmem:[%s14 + $0x20] sm:$0xf]
    %v2283 = vld [vmem:[%s14 + $0x24] sm:$0xf]
    %v2284 = vld [vmem:[%s14 + $0x28] sm:$0xf]
    %v2285 = vld [vmem:[%s14 + $0x2c] sm:$0xf]
    %v2286 = vld [vmem:[%s14 + $0x30] sm:$0xf]
    %v2287 = vld [vmem:[%s14 + $0x34] sm:$0xf]
    %v2288 = vld [vmem:[%s14 + $0x38] sm:$0xf]
    %v2289 = vld [vmem:[%s14 + $0x3c] sm:$0xf]
    %v2290 = vpack.c.bf16 %v2267, %v2266
    %v2291 = vpack.c.bf16 %v2269, %v2268
    %v2292 = vpack.c.bf16 %v2271, %v2270
    %v2293 = vpack.c.bf16 %v2273, %v2272
    %v2310 = vunpack.c.l.b16 %v2274
    %v2311 = vunpack.c.l.b16 %v2275
    %v2312 = vunpack.c.l.b16 %v2276
    %v2313 = vunpack.c.l.b16 %v2277
    %v2314 = vunpack.c.l.b16 %v2278
    %v2315 = vunpack.c.l.b16 %v2279
    %v2316 = vunpack.c.l.b16 %v2280
    %v2317 = vunpack.c.l.b16 %v2281
    %v2318 = vunpack.c.l.b16 %v2282
    %v2319 = vunpack.c.l.b16 %v2283
    %v2320 = vunpack.c.l.b16 %v2284
    %v2321 = vunpack.c.l.b16 %v2285
    %v2322 = vunpack.c.l.b16 %v2286
    %v2323 = vunpack.c.l.b16 %v2287
    %v2324 = vunpack.c.l.b16 %v2288
    %v2325 = vunpack.c.l.b16 %v2289
    %v2326 = vpack.c.b16 %v2311, %v2310
    %v2327 = vpack.c.b16 %v2313, %v2312
    %v2328 = vpack.c.b16 %v2315, %v2314
    %v2329 = vpack.c.b16 %v2317, %v2316
    %v2330 = vpack.c.b16 %v2319, %v2318
    %v2331 = vpack.c.b16 %v2321, %v2320
    %v2332 = vpack.c.b16 %v2323, %v2322
    %v2333 = vpack.c.b16 %v2325, %v2324
    %v2335 = vsel %vm258, %v2326, 0
    %v2338 = vsel %vm258, %v2327, 0
    %v2341 = vsel %vm258, %v2328, 0
    %v2344 = vsel %vm258, %v2329, 0
    %v2347 = vsel %vm258, %v2330, 0
    %v2350 = vsel %vm258, %v2331, 0
    %v2353 = vsel %vm258, %v2332, 0
    %v2356 = vsel %vm258, %v2333, 0
    %2358 = vmatpush.bf16.msra.mxu0 0
    %2359 = vmatpush.bf16.msra.mxu0 0
    %2360 = vmatpush.bf16.msra.mxu0 0
    %2361 = vmatpush.bf16.msra.mxu0 0
    %2362 = vmatpush.bf16.msra.mxu0 %v2293
    %2363 = vmatpush.bf16.msra.mxu0 %v2292
    %2364 = vmatpush.bf16.msra.mxu0 %v2291
    %2365 = vmatpush.bf16.msra.mxu0 %v2290
    %2366 = vmatmul.bf16.gmra.mxu0 %v2335
    %v2367 = vpop.f32.mrf.mxu0
    %v2368 = vadd.f32 0.0, %v2367
    %v2369 = vpop.f32.mrf.mxu0
    %v2370 = vadd.f32 0.0, %v2369
    %2371 = vmatmul.bf16.gmra.mxu0 %v2338
    %v2372 = vpop.f32.mrf.mxu0
    %v2373 = vadd.f32 0.0, %v2372
    %v2374 = vpop.f32.mrf.mxu0
    %v2375 = vadd.f32 0.0, %v2374
    %2376 = vmatmul.bf16.gmra.mxu0 %v2341
    %v2377 = vpop.f32.mrf.mxu0
    %v2378 = vadd.f32 0.0, %v2377
    %v2379 = vpop.f32.mrf.mxu0
    %v2380 = vadd.f32 0.0, %v2379
    %2381 = vmatmul.bf16.gmra.mxu0 %v2344
    %v2382 = vpop.f32.mrf.mxu0
    %v2383 = vadd.f32 0.0, %v2382
    %v2384 = vpop.f32.mrf.mxu0
    %v2385 = vadd.f32 0.0, %v2384
    %2386 = vmatmul.bf16.gmra.mxu0 %v2347
    %v2387 = vpop.f32.mrf.mxu0
    %v2388 = vadd.f32 0.0, %v2387
    %v2389 = vpop.f32.mrf.mxu0
    %v2390 = vadd.f32 0.0, %v2389
    %2391 = vmatmul.bf16.gmra.mxu0 %v2350
    %v2392 = vpop.f32.mrf.mxu0
    %v2393 = vadd.f32 0.0, %v2392
    %v2394 = vpop.f32.mrf.mxu0
    %v2395 = vadd.f32 0.0, %v2394
    %2396 = vmatmul.bf16.gmra.mxu0 %v2353
    %v2397 = vpop.f32.mrf.mxu0
    %v2398 = vadd.f32 0.0, %v2397
    %v2399 = vpop.f32.mrf.mxu0
    %v2400 = vadd.f32 0.0, %v2399
    %2401 = vmatmul.bf16.gmra.mxu0 %v2356
    %v2402 = vpop.f32.mrf.mxu0
    %v2403 = vadd.f32 0.0, %v2402
    %v2404 = vpop.f32.mrf.mxu0
    %v2405 = vadd.f32 0.0, %v2404
    %2406 = vdwg.mxu0
    %v2407 = vld [vmem:[#allocation10] sm:$0xf]
    %v2408 = vld [vmem:[#allocation10 + $0x4] sm:$0xf]
    %v2409 = vld [vmem:[#allocation10 + $0x8] sm:$0xf]
    %v2410 = vld [vmem:[#allocation10 + $0xc] sm:$0xf]
    %v2411 = vld [vmem:[#allocation10 + $0x10] sm:$0xf]
    %v2412 = vld [vmem:[#allocation10 + $0x14] sm:$0xf]
    %v2413 = vld [vmem:[#allocation10 + $0x18] sm:$0xf]
    %v2414 = vld [vmem:[#allocation10 + $0x1c] sm:$0xf]
    %v2415 = vpack.c.bf16 %v2370, %v2368
    %v2416 = vpack.c.bf16 %v2375, %v2373
    %v2417 = vpack.c.bf16 %v2380, %v2378
    %v2418 = vpack.c.bf16 %v2385, %v2383
    %v2419 = vpack.c.bf16 %v2390, %v2388
    %v2420 = vpack.c.bf16 %v2395, %v2393
    %v2421 = vpack.c.bf16 %v2400, %v2398
    %v2422 = vpack.c.bf16 %v2405, %v2403
    %s2423 = scalar_lea.vmem %s14, 64
    %v2424 = vld [vmem:[%s2423] sm:$0xf]
    %v2425 = vld [vmem:[%s2423 + $0x4] sm:$0xf]
    %v2426 = vld [vmem:[%s2423 + $0x8] sm:$0xf]
    %v2427 = vld [vmem:[%s2423 + $0xc] sm:$0xf]
    %v2428 = vld [vmem:[%s2423 + $0x10] sm:$0xf]
    %v2429 = vld [vmem:[%s2423 + $0x14] sm:$0xf]
    %v2430 = vld [vmem:[%s2423 + $0x18] sm:$0xf]
    %v2431 = vld [vmem:[%s2423 + $0x1c] sm:$0xf]
    %v2432 = vld [vmem:[%s2423 + $0x20] sm:$0xf]
    %v2433 = vld [vmem:[%s2423 + $0x24] sm:$0xf]
    %v2434 = vld [vmem:[%s2423 + $0x28] sm:$0xf]
    %v2435 = vld [vmem:[%s2423 + $0x2c] sm:$0xf]
    %v2436 = vld [vmem:[%s2423 + $0x30] sm:$0xf]
    %v2437 = vld [vmem:[%s2423 + $0x34] sm:$0xf]
    %v2438 = vld [vmem:[%s2423 + $0x38] sm:$0xf]
    %v2439 = vld [vmem:[%s2423 + $0x3c] sm:$0xf]
    %v2456 = vunpack.c.l.b16 %v2424
    %v2457 = vunpack.c.l.b16 %v2425
    %v2458 = vunpack.c.l.b16 %v2426
    %v2459 = vunpack.c.l.b16 %v2427
    %v2460 = vunpack.c.l.b16 %v2428
    %v2461 = vunpack.c.l.b16 %v2429
    %v2462 = vunpack.c.l.b16 %v2430
    %v2463 = vunpack.c.l.b16 %v2431
    %v2464 = vunpack.c.l.b16 %v2432
    %v2465 = vunpack.c.l.b16 %v2433
    %v2466 = vunpack.c.l.b16 %v2434
    %v2467 = vunpack.c.l.b16 %v2435
    %v2468 = vunpack.c.l.b16 %v2436
    %v2469 = vunpack.c.l.b16 %v2437
    %v2470 = vunpack.c.l.b16 %v2438
    %v2471 = vunpack.c.l.b16 %v2439
    %v2472 = vpack.c.b16 %v2457, %v2456
    %v2473 = vpack.c.b16 %v2459, %v2458
    %v2474 = vpack.c.b16 %v2461, %v2460
    %v2475 = vpack.c.b16 %v2463, %v2462
    %v2476 = vpack.c.b16 %v2465, %v2464
    %v2477 = vpack.c.b16 %v2467, %v2466
    %v2478 = vpack.c.b16 %v2469, %v2468
    %v2479 = vpack.c.b16 %v2471, %v2470
    %v2481 = vsel %vm258, %v2472, 0
    %v2484 = vsel %vm258, %v2473, 0
    %v2487 = vsel %vm258, %v2474, 0
    %v2490 = vsel %vm258, %v2475, 0
    %v2493 = vsel %vm258, %v2476, 0
    %v2496 = vsel %vm258, %v2477, 0
    %v2499 = vsel %vm258, %v2478, 0
    %v2502 = vsel %vm258, %v2479, 0
    %2504 = vmatpush.bf16.msra.mxu0 0
    %2505 = vmatpush.bf16.msra.mxu0 0
    %2506 = vmatpush.bf16.msra.mxu0 0
    %2507 = vmatpush.bf16.msra.mxu0 0
    %2508 = vmatpush.bf16.msra.mxu0 %v2293
    %2509 = vmatpush.bf16.msra.mxu0 %v2292
    %2510 = vmatpush.bf16.msra.mxu0 %v2291
    %2511 = vmatpush.bf16.msra.mxu0 %v2290
    %2512 = vmatmul.bf16.gmra.mxu0 %v2481
    %v2513 = vpop.f32.mrf.mxu0
    %v2514 = vadd.f32 0.0, %v2513
    %v2515 = vpop.f32.mrf.mxu0
    %v2516 = vadd.f32 0.0, %v2515
    %2517 = vmatmul.bf16.gmra.mxu0 %v2484
    %v2518 = vpop.f32.mrf.mxu0
    %v2519 = vadd.f32 0.0, %v2518
    %v2520 = vpop.f32.mrf.mxu0
    %v2521 = vadd.f32 0.0, %v2520
    %2522 = vmatmul.bf16.gmra.mxu0 %v2487
    %v2523 = vpop.f32.mrf.mxu0
    %v2524 = vadd.f32 0.0, %v2523
    %v2525 = vpop.f32.mrf.mxu0
    %v2526 = vadd.f32 0.0, %v2525
    %2527 = vmatmul.bf16.gmra.mxu0 %v2490
    %v2528 = vpop.f32.mrf.mxu0
    %v2529 = vadd.f32 0.0, %v2528
    %v2530 = vpop.f32.mrf.mxu0
    %v2531 = vadd.f32 0.0, %v2530
    %2532 = vmatmul.bf16.gmra.mxu0 %v2493
    %v2533 = vpop.f32.mrf.mxu0
    %v2534 = vadd.f32 0.0, %v2533
    %v2535 = vpop.f32.mrf.mxu0
    %v2536 = vadd.f32 0.0, %v2535
    %2537 = vmatmul.bf16.gmra.mxu0 %v2496
    %v2538 = vpop.f32.mrf.mxu0
    %v2539 = vadd.f32 0.0, %v2538
    %v2540 = vpop.f32.mrf.mxu0
    %v2541 = vadd.f32 0.0, %v2540
    %2542 = vmatmul.bf16.gmra.mxu0 %v2499
    %v2543 = vpop.f32.mrf.mxu0
    %v2544 = vadd.f32 0.0, %v2543
    %v2545 = vpop.f32.mrf.mxu0
    %v2546 = vadd.f32 0.0, %v2545
    %2547 = vmatmul.bf16.gmra.mxu0 %v2502
    %v2548 = vpop.f32.mrf.mxu0
    %v2549 = vadd.f32 0.0, %v2548
    %v2550 = vpop.f32.mrf.mxu0
    %v2551 = vadd.f32 0.0, %v2550
    %2552 = vdwg.mxu0
    %s2553 = scalar_lea.vmem [#allocation10], 32
    %v2554 = vld [vmem:[%s2553] sm:$0xf]
    %v2555 = vld [vmem:[%s2553 + $0x4] sm:$0xf]
    %v2556 = vld [vmem:[%s2553 + $0x8] sm:$0xf]
    %v2557 = vld [vmem:[%s2553 + $0xc] sm:$0xf]
    %v2558 = vld [vmem:[%s2553 + $0x10] sm:$0xf]
    %v2559 = vld [vmem:[%s2553 + $0x14] sm:$0xf]
    %v2560 = vld [vmem:[%s2553 + $0x18] sm:$0xf]
    %v2561 = vld [vmem:[%s2553 + $0x1c] sm:$0xf]
    %v2562 = vpack.c.bf16 %v2516, %v2514
    %v2563 = vpack.c.bf16 %v2521, %v2519
    %v2564 = vpack.c.bf16 %v2526, %v2524
    %v2565 = vpack.c.bf16 %v2531, %v2529
    %v2566 = vpack.c.bf16 %v2536, %v2534
    %v2567 = vpack.c.bf16 %v2541, %v2539
    %v2568 = vpack.c.bf16 %v2546, %v2544
    %v2569 = vpack.c.bf16 %v2551, %v2549
    %v2578 = vunpack.c.l.b16 %v2554
    %v2579 = vunpack.c.l.b16 %v2555
    %v2580 = vunpack.c.l.b16 %v2556
    %v2581 = vunpack.c.l.b16 %v2557
    %v2582 = vunpack.c.l.b16 %v2558
    %v2583 = vunpack.c.l.b16 %v2559
    %v2584 = vunpack.c.l.b16 %v2560
    %v2585 = vunpack.c.l.b16 %v2561
    %v2586 = vpack.c.b16 %v2579, %v2578
    %v2587 = vpack.c.b16 %v2581, %v2580
    %v2588 = vpack.c.b16 %v2583, %v2582
    %v2589 = vpack.c.b16 %v2585, %v2584
    %v2595 = vsel %vm258, %v2562, 0
    %v2598 = vsel %vm258, %v2563, 0
    %v2601 = vsel %vm258, %v2564, 0
    %v2604 = vsel %vm258, %v2565, 0
    %v2607 = vsel %vm258, %v2566, 0
    %v2610 = vsel %vm258, %v2567, 0
    %v2613 = vsel %vm258, %v2568, 0
    %v2616 = vsel %vm258, %v2569, 0
    %2618 = vmatpush.bf16.msra.mxu0 0
    %2619 = vmatpush.bf16.msra.mxu0 0
    %2620 = vmatpush.bf16.msra.mxu0 0
    %2621 = vmatpush.bf16.msra.mxu0 0
    %2622 = vmatpush.bf16.msra.mxu0 %v2589
    %2623 = vmatpush.bf16.msra.mxu0 %v2588
    %2624 = vmatpush.bf16.msra.mxu0 %v2587
    %2625 = vmatpush.bf16.msra.mxu0 %v2586
    %2626 = vmatmul.bf16.gmra.mxu0 %v2595
    %v2627 = vpop.f32.mrf.mxu0
    %v2628 = vadd.f32 0.0, %v2627
    %v2629 = vpop.f32.mrf.mxu0
    %v2630 = vadd.f32 0.0, %v2629
    %2631 = vmatmul.bf16.gmra.mxu0 %v2598
    %v2632 = vpop.f32.mrf.mxu0
    %v2633 = vadd.f32 0.0, %v2632
    %v2634 = vpop.f32.mrf.mxu0
    %v2635 = vadd.f32 0.0, %v2634
    %2636 = vmatmul.bf16.gmra.mxu0 %v2601
    %v2637 = vpop.f32.mrf.mxu0
    %v2638 = vadd.f32 0.0, %v2637
    %v2639 = vpop.f32.mrf.mxu0
    %v2640 = vadd.f32 0.0, %v2639
    %2641 = vmatmul.bf16.gmra.mxu0 %v2604
    %v2642 = vpop.f32.mrf.mxu0
    %v2643 = vadd.f32 0.0, %v2642
    %v2644 = vpop.f32.mrf.mxu0
    %v2645 = vadd.f32 0.0, %v2644
    %2646 = vmatmul.bf16.gmra.mxu0 %v2607
    %v2647 = vpop.f32.mrf.mxu0
    %v2648 = vadd.f32 0.0, %v2647
    %v2649 = vpop.f32.mrf.mxu0
    %v2650 = vadd.f32 0.0, %v2649
    %2651 = vmatmul.bf16.gmra.mxu0 %v2610
    %v2652 = vpop.f32.mrf.mxu0
    %v2653 = vadd.f32 0.0, %v2652
    %v2654 = vpop.f32.mrf.mxu0
    %v2655 = vadd.f32 0.0, %v2654
    %2656 = vmatmul.bf16.gmra.mxu0 %v2613
    %v2657 = vpop.f32.mrf.mxu0
    %v2658 = vadd.f32 0.0, %v2657
    %v2659 = vpop.f32.mrf.mxu0
    %v2660 = vadd.f32 0.0, %v2659
    %2661 = vmatmul.bf16.gmra.mxu0 %v2616
    %v2662 = vpop.f32.mrf.mxu0
    %v2663 = vadd.f32 0.0, %v2662
    %v2664 = vpop.f32.mrf.mxu0
    %v2665 = vadd.f32 0.0, %v2664
    %2666 = vdwg.mxu0
    %v2675 = vunpack.c.l.b16 %v2407
    %v2676 = vunpack.c.l.b16 %v2408
    %v2677 = vunpack.c.l.b16 %v2409
    %v2678 = vunpack.c.l.b16 %v2410
    %v2679 = vunpack.c.l.b16 %v2411
    %v2680 = vunpack.c.l.b16 %v2412
    %v2681 = vunpack.c.l.b16 %v2413
    %v2682 = vunpack.c.l.b16 %v2414
    %v2683 = vpack.c.b16 %v2676, %v2675
    %v2684 = vpack.c.b16 %v2678, %v2677
    %v2685 = vpack.c.b16 %v2680, %v2679
    %v2686 = vpack.c.b16 %v2682, %v2681
    %v2692 = vsel %vm258, %v2415, 0
    %v2695 = vsel %vm258, %v2416, 0
    %v2698 = vsel %vm258, %v2417, 0
    %v2701 = vsel %vm258, %v2418, 0
    %v2704 = vsel %vm258, %v2419, 0
    %v2707 = vsel %vm258, %v2420, 0
    %v2710 = vsel %vm258, %v2421, 0
    %v2713 = vsel %vm258, %v2422, 0
    %2715 = vmatpush.bf16.msra.mxu0 0
    %2716 = vmatpush.bf16.msra.mxu0 0
    %2717 = vmatpush.bf16.msra.mxu0 0
    %2718 = vmatpush.bf16.msra.mxu0 0
    %2719 = vmatpush.bf16.msra.mxu0 %v2686
    %2720 = vmatpush.bf16.msra.mxu0 %v2685
    %2721 = vmatpush.bf16.msra.mxu0 %v2684
    %2722 = vmatpush.bf16.msra.mxu0 %v2683
    %2723 = vmatmul.bf16.gmra.mxu0 %v2692
    %v2724 = vpop.f32.mrf.mxu0
    %v2725 = vadd.f32 %v2628, %v2724
    %v2726 = vpop.f32.mrf.mxu0
    %v2727 = vadd.f32 %v2630, %v2726
    %2728 = vmatmul.bf16.gmra.mxu0 %v2695
    %v2729 = vpop.f32.mrf.mxu0
    %v2730 = vadd.f32 %v2633, %v2729
    %v2731 = vpop.f32.mrf.mxu0
    %v2732 = vadd.f32 %v2635, %v2731
    %2733 = vmatmul.bf16.gmra.mxu0 %v2698
    %v2734 = vpop.f32.mrf.mxu0
    %v2735 = vadd.f32 %v2638, %v2734
    %v2736 = vpop.f32.mrf.mxu0
    %v2737 = vadd.f32 %v2640, %v2736
    %2738 = vmatmul.bf16.gmra.mxu0 %v2701
    %v2739 = vpop.f32.mrf.mxu0
    %v2740 = vadd.f32 %v2643, %v2739
    %v2741 = vpop.f32.mrf.mxu0
    %v2742 = vadd.f32 %v2645, %v2741
    %2743 = vmatmul.bf16.gmra.mxu0 %v2704
    %v2744 = vpop.f32.mrf.mxu0
    %v2745 = vadd.f32 %v2648, %v2744
    %v2746 = vpop.f32.mrf.mxu0
    %v2747 = vadd.f32 %v2650, %v2746
    %2748 = vmatmul.bf16.gmra.mxu0 %v2707
    %v2749 = vpop.f32.mrf.mxu0
    %v2750 = vadd.f32 %v2653, %v2749
    %v2751 = vpop.f32.mrf.mxu0
    %v2752 = vadd.f32 %v2655, %v2751
    %2753 = vmatmul.bf16.gmra.mxu0 %v2710
    %v2754 = vpop.f32.mrf.mxu0
    %v2755 = vadd.f32 %v2658, %v2754
    %v2756 = vpop.f32.mrf.mxu0
    %v2757 = vadd.f32 %v2660, %v2756
    %2758 = vmatmul.bf16.gmra.mxu0 %v2713
    %v2759 = vpop.f32.mrf.mxu0
    %v2760 = vadd.f32 %v2663, %v2759
    %v2761 = vpop.f32.mrf.mxu0
    %v2762 = vadd.f32 %v2665, %v2761
    %2763 = vdwg.mxu0
    %s2764 = scalar_lea.vmem %s14, 128
    %v2765 = vld [vmem:[%s2764] sm:$0xf]
    %v2766 = vld [vmem:[%s2764 + $0x4] sm:$0xf]
    %v2767 = vld [vmem:[%s2764 + $0x8] sm:$0xf]
    %v2768 = vld [vmem:[%s2764 + $0xc] sm:$0xf]
    %v2769 = vld [vmem:[%s2764 + $0x10] sm:$0xf]
    %v2770 = vld [vmem:[%s2764 + $0x14] sm:$0xf]
    %v2771 = vld [vmem:[%s2764 + $0x18] sm:$0xf]
    %v2772 = vld [vmem:[%s2764 + $0x1c] sm:$0xf]
    %v2773 = vld [vmem:[%s2764 + $0x20] sm:$0xf]
    %v2774 = vld [vmem:[%s2764 + $0x24] sm:$0xf]
    %v2775 = vld [vmem:[%s2764 + $0x28] sm:$0xf]
    %v2776 = vld [vmem:[%s2764 + $0x2c] sm:$0xf]
    %v2777 = vld [vmem:[%s2764 + $0x30] sm:$0xf]
    %v2778 = vld [vmem:[%s2764 + $0x34] sm:$0xf]
    %v2779 = vld [vmem:[%s2764 + $0x38] sm:$0xf]
    %v2780 = vld [vmem:[%s2764 + $0x3c] sm:$0xf]
    %v2797 = vunpack.c.l.b16 %v2765
    %v2798 = vunpack.c.l.b16 %v2766
    %v2799 = vunpack.c.l.b16 %v2767
    %v2800 = vunpack.c.l.b16 %v2768
    %v2801 = vunpack.c.l.b16 %v2769
    %v2802 = vunpack.c.l.b16 %v2770
    %v2803 = vunpack.c.l.b16 %v2771
    %v2804 = vunpack.c.l.b16 %v2772
    %v2805 = vunpack.c.l.b16 %v2773
    %v2806 = vunpack.c.l.b16 %v2774
    %v2807 = vunpack.c.l.b16 %v2775
    %v2808 = vunpack.c.l.b16 %v2776
    %v2809 = vunpack.c.l.b16 %v2777
    %v2810 = vunpack.c.l.b16 %v2778
    %v2811 = vunpack.c.l.b16 %v2779
    %v2812 = vunpack.c.l.b16 %v2780
    %v2813 = vpack.c.b16 %v2798, %v2797
    %v2814 = vpack.c.b16 %v2800, %v2799
    %v2815 = vpack.c.b16 %v2802, %v2801
    %v2816 = vpack.c.b16 %v2804, %v2803
    %v2817 = vpack.c.b16 %v2806, %v2805
    %v2818 = vpack.c.b16 %v2808, %v2807
    %v2819 = vpack.c.b16 %v2810, %v2809
    %v2820 = vpack.c.b16 %v2812, %v2811
    %v2822 = vsel %vm258, %v2813, 0
    %v2825 = vsel %vm258, %v2814, 0
    %v2828 = vsel %vm258, %v2815, 0
    %v2831 = vsel %vm258, %v2816, 0
    %v2834 = vsel %vm258, %v2817, 0
    %v2837 = vsel %vm258, %v2818, 0
    %v2840 = vsel %vm258, %v2819, 0
    %v2843 = vsel %vm258, %v2820, 0
    %2845 = vmatpush.bf16.msra.mxu0 0
    %2846 = vmatpush.bf16.msra.mxu0 0
    %2847 = vmatpush.bf16.msra.mxu0 0
    %2848 = vmatpush.bf16.msra.mxu0 0
    %2849 = vmatpush.bf16.msra.mxu0 %v2293
    %2850 = vmatpush.bf16.msra.mxu0 %v2292
    %2851 = vmatpush.bf16.msra.mxu0 %v2291
    %2852 = vmatpush.bf16.msra.mxu0 %v2290
    %2853 = vmatmul.bf16.gmra.mxu0 %v2822
    %v2854 = vpop.f32.mrf.mxu0
    %v2855 = vadd.f32 0.0, %v2854
    %v2856 = vpop.f32.mrf.mxu0
    %v2857 = vadd.f32 0.0, %v2856
    %2858 = vmatmul.bf16.gmra.mxu0 %v2825
    %v2859 = vpop.f32.mrf.mxu0
    %v2860 = vadd.f32 0.0, %v2859
    %v2861 = vpop.f32.mrf.mxu0
    %v2862 = vadd.f32 0.0, %v2861
    %2863 = vmatmul.bf16.gmra.mxu0 %v2828
    %v2864 = vpop.f32.mrf.mxu0
    %v2865 = vadd.f32 0.0, %v2864
    %v2866 = vpop.f32.mrf.mxu0
    %v2867 = vadd.f32 0.0, %v2866
    %2868 = vmatmul.bf16.gmra.mxu0 %v2831
    %v2869 = vpop.f32.mrf.mxu0
    %v2870 = vadd.f32 0.0, %v2869
    %v2871 = vpop.f32.mrf.mxu0
    %v2872 = vadd.f32 0.0, %v2871
    %2873 = vmatmul.bf16.gmra.mxu0 %v2834
    %v2874 = vpop.f32.mrf.mxu0
    %v2875 = vadd.f32 0.0, %v2874
    %v2876 = vpop.f32.mrf.mxu0
    %v2877 = vadd.f32 0.0, %v2876
    %2878 = vmatmul.bf16.gmra.mxu0 %v2837
    %v2879 = vpop.f32.mrf.mxu0
    %v2880 = vadd.f32 0.0, %v2879
    %v2881 = vpop.f32.mrf.mxu0
    %v2882 = vadd.f32 0.0, %v2881
    %2883 = vmatmul.bf16.gmra.mxu0 %v2840
    %v2884 = vpop.f32.mrf.mxu0
    %v2885 = vadd.f32 0.0, %v2884
    %v2886 = vpop.f32.mrf.mxu0
    %v2887 = vadd.f32 0.0, %v2886
    %2888 = vmatmul.bf16.gmra.mxu0 %v2843
    %v2889 = vpop.f32.mrf.mxu0
    %v2890 = vadd.f32 0.0, %v2889
    %v2891 = vpop.f32.mrf.mxu0
    %v2892 = vadd.f32 0.0, %v2891
    %2893 = vdwg.mxu0
    %s2894 = scalar_lea.vmem [#allocation10], 64
    %v2895 = vld [vmem:[%s2894] sm:$0xf]
    %v2896 = vld [vmem:[%s2894 + $0x4] sm:$0xf]
    %v2897 = vld [vmem:[%s2894 + $0x8] sm:$0xf]
    %v2898 = vld [vmem:[%s2894 + $0xc] sm:$0xf]
    %v2899 = vld [vmem:[%s2894 + $0x10] sm:$0xf]
    %v2900 = vld [vmem:[%s2894 + $0x14] sm:$0xf]
    %v2901 = vld [vmem:[%s2894 + $0x18] sm:$0xf]
    %v2902 = vld [vmem:[%s2894 + $0x1c] sm:$0xf]
    %v2903 = vpack.c.bf16 %v2857, %v2855
    %v2904 = vpack.c.bf16 %v2862, %v2860
    %v2905 = vpack.c.bf16 %v2867, %v2865
    %v2906 = vpack.c.bf16 %v2872, %v2870
    %v2907 = vpack.c.bf16 %v2877, %v2875
    %v2908 = vpack.c.bf16 %v2882, %v2880
    %v2909 = vpack.c.bf16 %v2887, %v2885
    %v2910 = vpack.c.bf16 %v2892, %v2890
    %v2919 = vunpack.c.l.b16 %v2895
    %v2920 = vunpack.c.l.b16 %v2896
    %v2921 = vunpack.c.l.b16 %v2897
    %v2922 = vunpack.c.l.b16 %v2898
    %v2923 = vunpack.c.l.b16 %v2899
    %v2924 = vunpack.c.l.b16 %v2900
    %v2925 = vunpack.c.l.b16 %v2901
    %v2926 = vunpack.c.l.b16 %v2902
    %v2927 = vpack.c.b16 %v2920, %v2919
    %v2928 = vpack.c.b16 %v2922, %v2921
    %v2929 = vpack.c.b16 %v2924, %v2923
    %v2930 = vpack.c.b16 %v2926, %v2925
    %v2936 = vsel %vm258, %v2903, 0
    %v2939 = vsel %vm258, %v2904, 0
    %v2942 = vsel %vm258, %v2905, 0
    %v2945 = vsel %vm258, %v2906, 0
    %v2948 = vsel %vm258, %v2907, 0
    %v2951 = vsel %vm258, %v2908, 0
    %v2954 = vsel %vm258, %v2909, 0
    %v2957 = vsel %vm258, %v2910, 0
    %2959 = vmatpush.bf16.msra.mxu0 0
    %2960 = vmatpush.bf16.msra.mxu0 0
    %2961 = vmatpush.bf16.msra.mxu0 0
    %2962 = vmatpush.bf16.msra.mxu0 0
    %2963 = vmatpush.bf16.msra.mxu0 %v2930
    %2964 = vmatpush.bf16.msra.mxu0 %v2929
    %2965 = vmatpush.bf16.msra.mxu0 %v2928
    %2966 = vmatpush.bf16.msra.mxu0 %v2927
    %2967 = vmatmul.bf16.gmra.mxu0 %v2936
    %v2968 = vpop.f32.mrf.mxu0
    %v2969 = vadd.f32 0.0, %v2968
    %v2970 = vpop.f32.mrf.mxu0
    %v2971 = vadd.f32 0.0, %v2970
    %2972 = vmatmul.bf16.gmra.mxu0 %v2939
    %v2973 = vpop.f32.mrf.mxu0
    %v2974 = vadd.f32 0.0, %v2973
    %v2975 = vpop.f32.mrf.mxu0
    %v2976 = vadd.f32 0.0, %v2975
    %2977 = vmatmul.bf16.gmra.mxu0 %v2942
    %v2978 = vpop.f32.mrf.mxu0
    %v2979 = vadd.f32 0.0, %v2978
    %v2980 = vpop.f32.mrf.mxu0
    %v2981 = vadd.f32 0.0, %v2980
    %2982 = vmatmul.bf16.gmra.mxu0 %v2945
    %v2983 = vpop.f32.mrf.mxu0
    %v2984 = vadd.f32 0.0, %v2983
    %v2985 = vpop.f32.mrf.mxu0
    %v2986 = vadd.f32 0.0, %v2985
    %2987 = vmatmul.bf16.gmra.mxu0 %v2948
    %v2988 = vpop.f32.mrf.mxu0
    %v2989 = vadd.f32 0.0, %v2988
    %v2990 = vpop.f32.mrf.mxu0
    %v2991 = vadd.f32 0.0, %v2990
    %2992 = vmatmul.bf16.gmra.mxu0 %v2951
    %v2993 = vpop.f32.mrf.mxu0
    %v2994 = vadd.f32 0.0, %v2993
    %v2995 = vpop.f32.mrf.mxu0
    %v2996 = vadd.f32 0.0, %v2995
    %2997 = vmatmul.bf16.gmra.mxu0 %v2954
    %v2998 = vpop.f32.mrf.mxu0
    %v2999 = vadd.f32 0.0, %v2998
    %v3000 = vpop.f32.mrf.mxu0
    %v3001 = vadd.f32 0.0, %v3000
    %3002 = vmatmul.bf16.gmra.mxu0 %v2957
    %v3003 = vpop.f32.mrf.mxu0
    %v3004 = vadd.f32 0.0, %v3003
    %v3005 = vpop.f32.mrf.mxu0
    %v3006 = vadd.f32 0.0, %v3005
    %3007 = vdwg.mxu0
    %v3008 = vadd.f32 %v2725, %v2969
    %v3009 = vadd.f32 %v2727, %v2971
    %v3010 = vadd.f32 %v2730, %v2974
    %v3011 = vadd.f32 %v2732, %v2976
    %v3012 = vadd.f32 %v2735, %v2979
    %v3013 = vadd.f32 %v2737, %v2981
    %v3014 = vadd.f32 %v2740, %v2984
    %v3015 = vadd.f32 %v2742, %v2986
    %v3016 = vadd.f32 %v2745, %v2989
    %v3017 = vadd.f32 %v2747, %v2991
    %v3018 = vadd.f32 %v2750, %v2994
    %v3019 = vadd.f32 %v2752, %v2996
    %v3020 = vadd.f32 %v2755, %v2999
    %v3021 = vadd.f32 %v2757, %v3001
    %v3022 = vadd.f32 %v2760, %v3004
    %v3023 = vadd.f32 %v2762, %v3006
    %3024 = vadd.xlane.f32.xlu0 %v3008
    %v3025 = vpop.xlane.xlu0 %3024
    %3026 = vadd.xlane.f32.xlu0 %v3009
    %v3027 = vpop.xlane.xlu0 %3026
    %3028 = vadd.xlane.f32.xlu0 %v3010
    %v3029 = vpop.xlane.xlu0 %3028
    %3030 = vadd.xlane.f32.xlu0 %v3011
    %v3031 = vpop.xlane.xlu0 %3030
    %3032 = vadd.xlane.f32.xlu0 %v3012
    %v3033 = vpop.xlane.xlu0 %3032
    %3034 = vadd.xlane.f32.xlu0 %v3013
    %v3035 = vpop.xlane.xlu0 %3034
    %3036 = vadd.xlane.f32.xlu0 %v3014
    %v3037 = vpop.xlane.xlu0 %3036
    %3038 = vadd.xlane.f32.xlu0 %v3015
    %v3039 = vpop.xlane.xlu0 %3038
    %3040 = vadd.xlane.f32.xlu0 %v3016
    %v3041 = vpop.xlane.xlu0 %3040
    %3042 = vadd.xlane.f32.xlu0 %v3017
    %v3043 = vpop.xlane.xlu0 %3042
    %3044 = vadd.xlane.f32.xlu0 %v3018
    %v3045 = vpop.xlane.xlu0 %3044
    %3046 = vadd.xlane.f32.xlu0 %v3019
    %v3047 = vpop.xlane.xlu0 %3046
    %3048 = vadd.xlane.f32.xlu0 %v3020
    %v3049 = vpop.xlane.xlu0 %3048
    %3050 = vadd.xlane.f32.xlu0 %v3021
    %v3051 = vpop.xlane.xlu0 %3050
    %3052 = vadd.xlane.f32.xlu0 %v3022
    %v3053 = vpop.xlane.xlu0 %3052
    %3054 = vadd.xlane.f32.xlu0 %v3023
    %v3055 = vpop.xlane.xlu0 %3054
    %v3056 = vld [vmem:[%s17] sm:$0xff]
    %v3057 = vld [vmem:[%s17 + $0x8] sm:$0xff]
    %v3058 = vld [vmem:[%s17 + $0x10] sm:$0xff]
    %v3059 = vld [vmem:[%s17 + $0x18] sm:$0xff]
    %v3060 = vld [vmem:[%s17 + $0x20] sm:$0xff]
    %v3061 = vld [vmem:[%s17 + $0x28] sm:$0xff]
    %v3062 = vld [vmem:[%s17 + $0x30] sm:$0xff]
    %v3063 = vld [vmem:[%s17 + $0x38] sm:$0xff]
    %v3064 = vld [vmem:[%s17 + $0x40] sm:$0xff]
    %v3065 = vld [vmem:[%s17 + $0x48] sm:$0xff]
    %v3066 = vld [vmem:[%s17 + $0x50] sm:$0xff]
    %v3067 = vld [vmem:[%s17 + $0x58] sm:$0xff]
    %v3068 = vld [vmem:[%s17 + $0x60] sm:$0xff]
    %v3069 = vld [vmem:[%s17 + $0x68] sm:$0xff]
    %v3070 = vld [vmem:[%s17 + $0x70] sm:$0xff]
    %v3071 = vld [vmem:[%s17 + $0x78] sm:$0xff]
    %v3072 = vld [vmem:[#allocation11] sm:$0xff]
    %3073 = vmatpush.msra.mxu0 %v3055
    %3074 = vmatpush.msra.mxu0 %v3053
    %3075 = vmatpush.msra.mxu0 %v3051
    %3076 = vmatpush.msra.mxu0 %v3049
    %3077 = vmatpush.msra.mxu0 %v3047
    %3078 = vmatpush.msra.mxu0 %v3045
    %3079 = vmatpush.msra.mxu0 %v3043
    %3080 = vmatpush.msra.mxu0 %v3041
    %3081 = vmatpush.msra.mxu0 %v3039
    %3082 = vmatpush.msra.mxu0 %v3037
    %3083 = vmatpush.msra.mxu0 %v3035
    %3084 = vmatpush.msra.mxu0 %v3033
    %3085 = vmatpush.msra.mxu0 %v3031
    %3086 = vmatpush.msra.mxu0 %v3029
    %3087 = vmatpush.msra.mxu0 %v3027
    %3088 = vmatpush.msra.mxu0 %v3025
    %3089 = vmatmul.f32.gmra.mxu0 %v3072
    %v3090 = vpop.f32.mrf.mxu0
    %v3091 = vadd.f32 0.0, %v3090
    %3092 = vdwg.mxu0
    %v3094 = vsel %vm364, %v3056, 0
    %v3097 = vsel %vm364, %v3057, 0
    %v3100 = vsel %vm364, %v3058, 0
    %v3103 = vsel %vm364, %v3059, 0
    %v3106 = vsel %vm364, %v3060, 0
    %v3109 = vsel %vm364, %v3061, 0
    %v3112 = vsel %vm364, %v3062, 0
    %v3115 = vsel %vm364, %v3063, 0
    %v3118 = vsel %vm364, %v3064, 0
    %v3121 = vsel %vm364, %v3065, 0
    %v3124 = vsel %vm364, %v3066, 0
    %v3127 = vsel %vm364, %v3067, 0
    %v3130 = vsel %vm364, %v3068, 0
    %v3133 = vsel %vm364, %v3069, 0
    %v3136 = vsel %vm364, %v3070, 0
    %v3139 = vsel %vm364, %v3071, 0
    %3141 = vmatpush.msra.mxu0 0.0
    %3142 = vmatpush.msra.mxu0 0.0
    %3143 = vmatpush.msra.mxu0 0.0
    %3144 = vmatpush.msra.mxu0 0.0
    %3145 = vmatpush.msra.mxu0 0.0
    %3146 = vmatpush.msra.mxu0 0.0
    %3147 = vmatpush.msra.mxu0 0.0
    %3148 = vmatpush.msra.mxu0 0.0
    %3149 = vmatpush.msra.mxu0 0.0
    %3150 = vmatpush.msra.mxu0 0.0
    %3151 = vmatpush.msra.mxu0 0.0
    %3152 = vmatpush.msra.mxu0 0.0
    %3153 = vmatpush.msra.mxu0 0.0
    %3154 = vmatpush.msra.mxu0 0.0
    %3155 = vmatpush.msra.mxu0 0.0
    %3156 = vmatpush.msra.mxu0 %v3091
    %3157 = vmatmul.f32.gmra.mxu0 %v3094
    %v3158 = vpop.f32.mrf.mxu0
    %v3159 = vadd.f32 0.0, %v3158
    %3160 = vmatmul.f32.gmra.mxu0 %v3097
    %v3161 = vpop.f32.mrf.mxu0
    %v3162 = vadd.f32 0.0, %v3161
    %3163 = vmatmul.f32.gmra.mxu0 %v3100
    %v3164 = vpop.f32.mrf.mxu0
    %v3165 = vadd.f32 0.0, %v3164
    %3166 = vmatmul.f32.gmra.mxu0 %v3103
    %v3167 = vpop.f32.mrf.mxu0
    %v3168 = vadd.f32 0.0, %v3167
    %3169 = vmatmul.f32.gmra.mxu0 %v3106
    %v3170 = vpop.f32.mrf.mxu0
    %v3171 = vadd.f32 0.0, %v3170
    %3172 = vmatmul.f32.gmra.mxu0 %v3109
    %v3173 = vpop.f32.mrf.mxu0
    %v3174 = vadd.f32 0.0, %v3173
    %3175 = vmatmul.f32.gmra.mxu0 %v3112
    %v3176 = vpop.f32.mrf.mxu0
    %v3177 = vadd.f32 0.0, %v3176
    %3178 = vmatmul.f32.gmra.mxu0 %v3115
    %v3179 = vpop.f32.mrf.mxu0
    %v3180 = vadd.f32 0.0, %v3179
    %3181 = vmatmul.f32.gmra.mxu0 %v3118
    %v3182 = vpop.f32.mrf.mxu0
    %v3183 = vadd.f32 0.0, %v3182
    %3184 = vmatmul.f32.gmra.mxu0 %v3121
    %v3185 = vpop.f32.mrf.mxu0
    %v3186 = vadd.f32 0.0, %v3185
    %3187 = vmatmul.f32.gmra.mxu0 %v3124
    %v3188 = vpop.f32.mrf.mxu0
    %v3189 = vadd.f32 0.0, %v3188
    %3190 = vmatmul.f32.gmra.mxu0 %v3127
    %v3191 = vpop.f32.mrf.mxu0
    %v3192 = vadd.f32 0.0, %v3191
    %3193 = vmatmul.f32.gmra.mxu0 %v3130
    %v3194 = vpop.f32.mrf.mxu0
    %v3195 = vadd.f32 0.0, %v3194
    %3196 = vmatmul.f32.gmra.mxu0 %v3133
    %v3197 = vpop.f32.mrf.mxu0
    %v3198 = vadd.f32 0.0, %v3197
    %3199 = vmatmul.f32.gmra.mxu0 %v3136
    %v3200 = vpop.f32.mrf.mxu0
    %v3201 = vadd.f32 0.0, %v3200
    %3202 = vmatmul.f32.gmra.mxu0 %v3139
    %v3203 = vpop.f32.mrf.mxu0
    %v3204 = vadd.f32 0.0, %v3203
    %3205 = vdwg.mxu0
    %3207 = vset.pattern.permute.xlu0 0
    %3208 = vperm.xlu0 %3207, %v3159
    %v3209 = vpop.permute.xlu0 %3208
    %3212 = vset.pattern.permute.xlu0 0
    %3213 = vperm.xlu0 %3212, %v3162
    %v3214 = vpop.permute.xlu0 %3213
    %3217 = vset.pattern.permute.xlu0 0
    %3218 = vperm.xlu0 %3217, %v3165
    %v3219 = vpop.permute.xlu0 %3218
    %3222 = vset.pattern.permute.xlu0 0
    %3223 = vperm.xlu0 %3222, %v3168
    %v3224 = vpop.permute.xlu0 %3223
    %3227 = vset.pattern.permute.xlu0 0
    %3228 = vperm.xlu0 %3227, %v3171
    %v3229 = vpop.permute.xlu0 %3228
    %3232 = vset.pattern.permute.xlu0 0
    %3233 = vperm.xlu0 %3232, %v3174
    %v3234 = vpop.permute.xlu0 %3233
    %3237 = vset.pattern.permute.xlu0 0
    %3238 = vperm.xlu0 %3237, %v3177
    %v3239 = vpop.permute.xlu0 %3238
    %3242 = vset.pattern.permute.xlu0 0
    %3243 = vperm.xlu0 %3242, %v3180
    %v3244 = vpop.permute.xlu0 %3243
    %3247 = vset.pattern.permute.xlu0 0
    %3248 = vperm.xlu0 %3247, %v3183
    %v3249 = vpop.permute.xlu0 %3248
    %3252 = vset.pattern.permute.xlu0 0
    %3253 = vperm.xlu0 %3252, %v3186
    %v3254 = vpop.permute.xlu0 %3253
    %3257 = vset.pattern.permute.xlu0 0
    %3258 = vperm.xlu0 %3257, %v3189
    %v3259 = vpop.permute.xlu0 %3258
    %3262 = vset.pattern.permute.xlu0 0
    %3263 = vperm.xlu0 %3262, %v3192
    %v3264 = vpop.permute.xlu0 %3263
    %3267 = vset.pattern.permute.xlu0 0
    %3268 = vperm.xlu0 %3267, %v3195
    %v3269 = vpop.permute.xlu0 %3268
    %3272 = vset.pattern.permute.xlu0 0
    %3273 = vperm.xlu0 %3272, %v3198
    %v3274 = vpop.permute.xlu0 %3273
    %3277 = vset.pattern.permute.xlu0 0
    %3278 = vperm.xlu0 %3277, %v3201
    %v3279 = vpop.permute.xlu0 %3278
    %3282 = vset.pattern.permute.xlu0 0
    %3283 = vperm.xlu0 %3282, %v3204
    %v3284 = vpop.permute.xlu0 %3283
    %v3286 = vsub.f32 %v3008, %v3209
    %v3287 = vsub.f32 %v3009, %v3214
    %v3288 = vsub.f32 %v3010, %v3219
    %v3289 = vsub.f32 %v3011, %v3224
    %v3290 = vsub.f32 %v3012, %v3229
    %v3291 = vsub.f32 %v3013, %v3234
    %v3292 = vsub.f32 %v3014, %v3239
    %v3293 = vsub.f32 %v3015, %v3244
    %v3294 = vsub.f32 %v3016, %v3249
    %v3295 = vsub.f32 %v3017, %v3254
    %v3296 = vsub.f32 %v3018, %v3259
    %v3297 = vsub.f32 %v3019, %v3264
    %v3298 = vsub.f32 %v3020, %v3269
    %v3299 = vsub.f32 %v3021, %v3274
    %v3300 = vsub.f32 %v3022, %v3279
    %v3301 = vsub.f32 %v3023, %v3284
    %v3302 = vmul.f32 %v3286, %v3286
    %v3303 = vmul.f32 %v3287, %v3287
    %v3304 = vmul.f32 %v3288, %v3288
    %v3305 = vmul.f32 %v3289, %v3289
    %v3306 = vmul.f32 %v3290, %v3290
    %v3307 = vmul.f32 %v3291, %v3291
    %v3308 = vmul.f32 %v3292, %v3292
    %v3309 = vmul.f32 %v3293, %v3293
    %v3310 = vmul.f32 %v3294, %v3294
    %v3311 = vmul.f32 %v3295, %v3295
    %v3312 = vmul.f32 %v3296, %v3296
    %v3313 = vmul.f32 %v3297, %v3297
    %v3314 = vmul.f32 %v3298, %v3298
    %v3315 = vmul.f32 %v3299, %v3299
    %v3316 = vmul.f32 %v3300, %v3300
    %v3317 = vmul.f32 %v3301, %v3301
    %3318 = vadd.xlane.f32.xlu0 %v3302
    %v3319 = vpop.xlane.xlu0 %3318
    %3320 = vadd.xlane.f32.xlu0 %v3303
    %v3321 = vpop.xlane.xlu0 %3320
    %3322 = vadd.xlane.f32.xlu0 %v3304
    %v3323 = vpop.xlane.xlu0 %3322
    %3324 = vadd.xlane.f32.xlu0 %v3305
    %v3325 = vpop.xlane.xlu0 %3324
    %3326 = vadd.xlane.f32.xlu0 %v3306
    %v3327 = vpop.xlane.xlu0 %3326
    %3328 = vadd.xlane.f32.xlu0 %v3307
    %v3329 = vpop.xlane.xlu0 %3328
    %3330 = vadd.xlane.f32.xlu0 %v3308
    %v3331 = vpop.xlane.xlu0 %3330
    %3332 = vadd.xlane.f32.xlu0 %v3309
    %v3333 = vpop.xlane.xlu0 %3332
    %3334 = vadd.xlane.f32.xlu0 %v3310
    %v3335 = vpop.xlane.xlu0 %3334
    %3336 = vadd.xlane.f32.xlu0 %v3311
    %v3337 = vpop.xlane.xlu0 %3336
    %3338 = vadd.xlane.f32.xlu0 %v3312
    %v3339 = vpop.xlane.xlu0 %3338
    %3340 = vadd.xlane.f32.xlu0 %v3313
    %v3341 = vpop.xlane.xlu0 %3340
    %3342 = vadd.xlane.f32.xlu0 %v3314
    %v3343 = vpop.xlane.xlu0 %3342
    %3344 = vadd.xlane.f32.xlu0 %v3315
    %v3345 = vpop.xlane.xlu0 %3344
    %3346 = vadd.xlane.f32.xlu0 %v3316
    %v3347 = vpop.xlane.xlu0 %3346
    %3348 = vadd.xlane.f32.xlu0 %v3317
    %v3349 = vpop.xlane.xlu0 %3348
    %3350 = vmatpush.msra.mxu0 %v3349
    %3351 = vmatpush.msra.mxu0 %v3347
    %3352 = vmatpush.msra.mxu0 %v3345
    %3353 = vmatpush.msra.mxu0 %v3343
    %3354 = vmatpush.msra.mxu0 %v3341
    %3355 = vmatpush.msra.mxu0 %v3339
    %3356 = vmatpush.msra.mxu0 %v3337
    %3357 = vmatpush.msra.mxu0 %v3335
    %3358 = vmatpush.msra.mxu0 %v3333
    %3359 = vmatpush.msra.mxu0 %v3331
    %3360 = vmatpush.msra.mxu0 %v3329
    %3361 = vmatpush.msra.mxu0 %v3327
    %3362 = vmatpush.msra.mxu0 %v3325
    %3363 = vmatpush.msra.mxu0 %v3323
    %3364 = vmatpush.msra.mxu0 %v3321
    %3365 = vmatpush.msra.mxu0 %v3319
    %3366 = vmatmul.f32.gmra.mxu0 %v3072
    %v3367 = vpop.f32.mrf.mxu0
    %v3368 = vadd.f32 0.0, %v3367
    %3369 = vdwg.mxu0
    %3370 = vmatpush.msra.mxu0 0.0
    %3371 = vmatpush.msra.mxu0 0.0
    %3372 = vmatpush.msra.mxu0 0.0
    %3373 = vmatpush.msra.mxu0 0.0
    %3374 = vmatpush.msra.mxu0 0.0
    %3375 = vmatpush.msra.mxu0 0.0
    %3376 = vmatpush.msra.mxu0 0.0
    %3377 = vmatpush.msra.mxu0 0.0
    %3378 = vmatpush.msra.mxu0 0.0
    %3379 = vmatpush.msra.mxu0 0.0
    %3380 = vmatpush.msra.mxu0 0.0
    %3381 = vmatpush.msra.mxu0 0.0
    %3382 = vmatpush.msra.mxu0 0.0
    %3383 = vmatpush.msra.mxu0 0.0
    %3384 = vmatpush.msra.mxu0 0.0
    %3385 = vmatpush.msra.mxu0 %v3368
    %3386 = vmatmul.f32.gmra.mxu0 %v3094
    %v3387 = vpop.f32.mrf.mxu0
    %v3388 = vadd.f32 1e-05, %v3387
    %3389 = vmatmul.f32.gmra.mxu0 %v3097
    %v3390 = vpop.f32.mrf.mxu0
    %v3391 = vadd.f32 1e-05, %v3390
    %3392 = vmatmul.f32.gmra.mxu0 %v3100
    %v3393 = vpop.f32.mrf.mxu0
    %v3394 = vadd.f32 1e-05, %v3393
    %3395 = vmatmul.f32.gmra.mxu0 %v3103
    %v3396 = vpop.f32.mrf.mxu0
    %v3397 = vadd.f32 1e-05, %v3396
    %3398 = vmatmul.f32.gmra.mxu0 %v3106
    %v3399 = vpop.f32.mrf.mxu0
    %v3400 = vadd.f32 1e-05, %v3399
    %3401 = vmatmul.f32.gmra.mxu0 %v3109
    %v3402 = vpop.f32.mrf.mxu0
    %v3403 = vadd.f32 1e-05, %v3402
    %3404 = vmatmul.f32.gmra.mxu0 %v3112
    %v3405 = vpop.f32.mrf.mxu0
    %v3406 = vadd.f32 1e-05, %v3405
    %3407 = vmatmul.f32.gmra.mxu0 %v3115
    %v3408 = vpop.f32.mrf.mxu0
    %v3409 = vadd.f32 1e-05, %v3408
    %3410 = vmatmul.f32.gmra.mxu0 %v3118
    %v3411 = vpop.f32.mrf.mxu0
    %v3412 = vadd.f32 1e-05, %v3411
    %3413 = vmatmul.f32.gmra.mxu0 %v3121
    %v3414 = vpop.f32.mrf.mxu0
    %v3415 = vadd.f32 1e-05, %v3414
    %3416 = vmatmul.f32.gmra.mxu0 %v3124
    %v3417 = vpop.f32.mrf.mxu0
    %v3418 = vadd.f32 1e-05, %v3417
    %3419 = vmatmul.f32.gmra.mxu0 %v3127
    %v3420 = vpop.f32.mrf.mxu0
    %v3421 = vadd.f32 1e-05, %v3420
    %3422 = vmatmul.f32.gmra.mxu0 %v3130
    %v3423 = vpop.f32.mrf.mxu0
    %v3424 = vadd.f32 1e-05, %v3423
    %3425 = vmatmul.f32.gmra.mxu0 %v3133
    %v3426 = vpop.f32.mrf.mxu0
    %v3427 = vadd.f32 1e-05, %v3426
    %3428 = vmatmul.f32.gmra.mxu0 %v3136
    %v3429 = vpop.f32.mrf.mxu0
    %v3430 = vadd.f32 1e-05, %v3429
    %3431 = vmatmul.f32.gmra.mxu0 %v3139
    %v3432 = vpop.f32.mrf.mxu0
    %v3433 = vadd.f32 1e-05, %v3432
    %3434 = vdwg.mxu0
    %v3435 = vrsqrt.pop %v3388
    %v3436 = vmul.f32 %v3435, %v3388
    %v3437 = vmul.f32 %v3436, %v3435
    %v3438 = vmul.f32 0.5, %v3437
    %v3439 = vsub.f32 1.5, %v3438
    %v3440 = vmul.f32 %v3435, %v3439
    %vm3441 = vweird.f32 %v3388
    %vm3442 = vweird.f32 %v3435
    %vm3443 = vmor %vm3441, %vm3442
    %v3444 = vsel %vm3443, %v3435, %v3440
    %v3445 = vrsqrt.pop %v3391
    %v3446 = vmul.f32 %v3445, %v3391
    %v3447 = vmul.f32 %v3446, %v3445
    %v3448 = vmul.f32 0.5, %v3447
    %v3449 = vsub.f32 1.5, %v3448
    %v3450 = vmul.f32 %v3445, %v3449
    %vm3451 = vweird.f32 %v3391
    %vm3452 = vweird.f32 %v3445
    %vm3453 = vmor %vm3451, %vm3452
    %v3454 = vsel %vm3453, %v3445, %v3450
    %v3455 = vrsqrt.pop %v3394
    %v3456 = vmul.f32 %v3455, %v3394
    %v3457 = vmul.f32 %v3456, %v3455
    %v3458 = vmul.f32 0.5, %v3457
    %v3459 = vsub.f32 1.5, %v3458
    %v3460 = vmul.f32 %v3455, %v3459
    %vm3461 = vweird.f32 %v3394
    %vm3462 = vweird.f32 %v3455
    %vm3463 = vmor %vm3461, %vm3462
    %v3464 = vsel %vm3463, %v3455, %v3460
    %v3465 = vrsqrt.pop %v3397
    %v3466 = vmul.f32 %v3465, %v3397
    %v3467 = vmul.f32 %v3466, %v3465
    %v3468 = vmul.f32 0.5, %v3467
    %v3469 = vsub.f32 1.5, %v3468
    %v3470 = vmul.f32 %v3465, %v3469
    %vm3471 = vweird.f32 %v3397
    %vm3472 = vweird.f32 %v3465
    %vm3473 = vmor %vm3471, %vm3472
    %v3474 = vsel %vm3473, %v3465, %v3470
    %v3475 = vrsqrt.pop %v3400
    %v3476 = vmul.f32 %v3475, %v3400
    %v3477 = vmul.f32 %v3476, %v3475
    %v3478 = vmul.f32 0.5, %v3477
    %v3479 = vsub.f32 1.5, %v3478
    %v3480 = vmul.f32 %v3475, %v3479
    %vm3481 = vweird.f32 %v3400
    %vm3482 = vweird.f32 %v3475
    %vm3483 = vmor %vm3481, %vm3482
    %v3484 = vsel %vm3483, %v3475, %v3480
    %v3485 = vrsqrt.pop %v3403
    %v3486 = vmul.f32 %v3485, %v3403
    %v3487 = vmul.f32 %v3486, %v3485
    %v3488 = vmul.f32 0.5, %v3487
    %v3489 = vsub.f32 1.5, %v3488
    %v3490 = vmul.f32 %v3485, %v3489
    %vm3491 = vweird.f32 %v3403
    %vm3492 = vweird.f32 %v3485
    %vm3493 = vmor %vm3491, %vm3492
    %v3494 = vsel %vm3493, %v3485, %v3490
    %v3495 = vrsqrt.pop %v3406
    %v3496 = vmul.f32 %v3495, %v3406
    %v3497 = vmul.f32 %v3496, %v3495
    %v3498 = vmul.f32 0.5, %v3497
    %v3499 = vsub.f32 1.5, %v3498
    %v3500 = vmul.f32 %v3495, %v3499
    %vm3501 = vweird.f32 %v3406
    %vm3502 = vweird.f32 %v3495
    %vm3503 = vmor %vm3501, %vm3502
    %v3504 = vsel %vm3503, %v3495, %v3500
    %v3505 = vrsqrt.pop %v3409
    %v3506 = vmul.f32 %v3505, %v3409
    %v3507 = vmul.f32 %v3506, %v3505
    %v3508 = vmul.f32 0.5, %v3507
    %v3509 = vsub.f32 1.5, %v3508
    %v3510 = vmul.f32 %v3505, %v3509
    %vm3511 = vweird.f32 %v3409
    %vm3512 = vweird.f32 %v3505
    %vm3513 = vmor %vm3511, %vm3512
    %v3514 = vsel %vm3513, %v3505, %v3510
    %v3515 = vrsqrt.pop %v3412
    %v3516 = vmul.f32 %v3515, %v3412
    %v3517 = vmul.f32 %v3516, %v3515
    %v3518 = vmul.f32 0.5, %v3517
    %v3519 = vsub.f32 1.5, %v3518
    %v3520 = vmul.f32 %v3515, %v3519
    %vm3521 = vweird.f32 %v3412
    %vm3522 = vweird.f32 %v3515
    %vm3523 = vmor %vm3521, %vm3522
    %v3524 = vsel %vm3523, %v3515, %v3520
    %v3525 = vrsqrt.pop %v3415
    %v3526 = vmul.f32 %v3525, %v3415
    %v3527 = vmul.f32 %v3526, %v3525
    %v3528 = vmul.f32 0.5, %v3527
    %v3529 = vsub.f32 1.5, %v3528
    %v3530 = vmul.f32 %v3525, %v3529
    %vm3531 = vweird.f32 %v3415
    %vm3532 = vweird.f32 %v3525
    %vm3533 = vmor %vm3531, %vm3532
    %v3534 = vsel %vm3533, %v3525, %v3530
    %v3535 = vrsqrt.pop %v3418
    %v3536 = vmul.f32 %v3535, %v3418
    %v3537 = vmul.f32 %v3536, %v3535
    %v3538 = vmul.f32 0.5, %v3537
    %v3539 = vsub.f32 1.5, %v3538
    %v3540 = vmul.f32 %v3535, %v3539
    %vm3541 = vweird.f32 %v3418
    %vm3542 = vweird.f32 %v3535
    %vm3543 = vmor %vm3541, %vm3542
    %v3544 = vsel %vm3543, %v3535, %v3540
    %v3545 = vrsqrt.pop %v3421
    %v3546 = vmul.f32 %v3545, %v3421
    %v3547 = vmul.f32 %v3546, %v3545
    %v3548 = vmul.f32 0.5, %v3547
    %v3549 = vsub.f32 1.5, %v3548
    %v3550 = vmul.f32 %v3545, %v3549
    %vm3551 = vweird.f32 %v3421
    %vm3552 = vweird.f32 %v3545
    %vm3553 = vmor %vm3551, %vm3552
    %v3554 = vsel %vm3553, %v3545, %v3550
    %v3555 = vrsqrt.pop %v3424
    %v3556 = vmul.f32 %v3555, %v3424
    %v3557 = vmul.f32 %v3556, %v3555
    %v3558 = vmul.f32 0.5, %v3557
    %v3559 = vsub.f32 1.5, %v3558
    %v3560 = vmul.f32 %v3555, %v3559
    %vm3561 = vweird.f32 %v3424
    %vm3562 = vweird.f32 %v3555
    %vm3563 = vmor %vm3561, %vm3562
    %v3564 = vsel %vm3563, %v3555, %v3560
    %v3565 = vrsqrt.pop %v3427
    %v3566 = vmul.f32 %v3565, %v3427
    %v3567 = vmul.f32 %v3566, %v3565
    %v3568 = vmul.f32 0.5, %v3567
    %v3569 = vsub.f32 1.5, %v3568
    %v3570 = vmul.f32 %v3565, %v3569
    %vm3571 = vweird.f32 %v3427
    %vm3572 = vweird.f32 %v3565
    %vm3573 = vmor %vm3571, %vm3572
    %v3574 = vsel %vm3573, %v3565, %v3570
    %v3575 = vrsqrt.pop %v3430
    %v3576 = vmul.f32 %v3575, %v3430
    %v3577 = vmul.f32 %v3576, %v3575
    %v3578 = vmul.f32 0.5, %v3577
    %v3579 = vsub.f32 1.5, %v3578
    %v3580 = vmul.f32 %v3575, %v3579
    %vm3581 = vweird.f32 %v3430
    %vm3582 = vweird.f32 %v3575
    %vm3583 = vmor %vm3581, %vm3582
    %v3584 = vsel %vm3583, %v3575, %v3580
    %v3585 = vrsqrt.pop %v3433
    %v3586 = vmul.f32 %v3585, %v3433
    %v3587 = vmul.f32 %v3586, %v3585
    %v3588 = vmul.f32 0.5, %v3587
    %v3589 = vsub.f32 1.5, %v3588
    %v3590 = vmul.f32 %v3585, %v3589
    %vm3591 = vweird.f32 %v3433
    %vm3592 = vweird.f32 %v3585
    %vm3593 = vmor %vm3591, %vm3592
    %v3594 = vsel %vm3593, %v3585, %v3590
    %3596 = vset.pattern.permute.xlu0 0
    %3597 = vperm.xlu0 %3596, %v3444
    %v3598 = vpop.permute.xlu0 %3597
    %3601 = vset.pattern.permute.xlu0 0
    %3602 = vperm.xlu0 %3601, %v3454
    %v3603 = vpop.permute.xlu0 %3602
    %3606 = vset.pattern.permute.xlu0 0
    %3607 = vperm.xlu0 %3606, %v3464
    %v3608 = vpop.permute.xlu0 %3607
    %3611 = vset.pattern.permute.xlu0 0
    %3612 = vperm.xlu0 %3611, %v3474
    %v3613 = vpop.permute.xlu0 %3612
    %3616 = vset.pattern.permute.xlu0 0
    %3617 = vperm.xlu0 %3616, %v3484
    %v3618 = vpop.permute.xlu0 %3617
    %3621 = vset.pattern.permute.xlu0 0
    %3622 = vperm.xlu0 %3621, %v3494
    %v3623 = vpop.permute.xlu0 %3622
    %3626 = vset.pattern.permute.xlu0 0
    %3627 = vperm.xlu0 %3626, %v3504
    %v3628 = vpop.permute.xlu0 %3627
    %3631 = vset.pattern.permute.xlu0 0
    %3632 = vperm.xlu0 %3631, %v3514
    %v3633 = vpop.permute.xlu0 %3632
    %3636 = vset.pattern.permute.xlu0 0
    %3637 = vperm.xlu0 %3636, %v3524
    %v3638 = vpop.permute.xlu0 %3637
    %3641 = vset.pattern.permute.xlu0 0
    %3642 = vperm.xlu0 %3641, %v3534
    %v3643 = vpop.permute.xlu0 %3642
    %3646 = vset.pattern.permute.xlu0 0
    %3647 = vperm.xlu0 %3646, %v3544
    %v3648 = vpop.permute.xlu0 %3647
    %3651 = vset.pattern.permute.xlu0 0
    %3652 = vperm.xlu0 %3651, %v3554
    %v3653 = vpop.permute.xlu0 %3652
    %3656 = vset.pattern.permute.xlu0 0
    %3657 = vperm.xlu0 %3656, %v3564
    %v3658 = vpop.permute.xlu0 %3657
    %3661 = vset.pattern.permute.xlu0 0
    %3662 = vperm.xlu0 %3661, %v3574
    %v3663 = vpop.permute.xlu0 %3662
    %3666 = vset.pattern.permute.xlu0 0
    %3667 = vperm.xlu0 %3666, %v3584
    %v3668 = vpop.permute.xlu0 %3667
    %3671 = vset.pattern.permute.xlu0 0
    %3672 = vperm.xlu0 %3671, %v3594
    %v3673 = vpop.permute.xlu0 %3672
    %v3675 = vmul.f32 %v3286, %v3598
    %v3676 = vmul.f32 %v3287, %v3603
    %v3677 = vmul.f32 %v3288, %v3608
    %v3678 = vmul.f32 %v3289, %v3613
    %v3679 = vmul.f32 %v3290, %v3618
    %v3680 = vmul.f32 %v3291, %v3623
    %v3681 = vmul.f32 %v3292, %v3628
    %v3682 = vmul.f32 %v3293, %v3633
    %v3683 = vmul.f32 %v3294, %v3638
    %v3684 = vmul.f32 %v3295, %v3643
    %v3685 = vmul.f32 %v3296, %v3648
    %v3686 = vmul.f32 %v3297, %v3653
    %v3687 = vmul.f32 %v3298, %v3658
    %v3688 = vmul.f32 %v3299, %v3663
    %v3689 = vmul.f32 %v3300, %v3668
    %v3690 = vmul.f32 %v3301, %v3673
    %v3691 = vld [vmem:[%s18] sm:$0xff]
    %v3692 = vld [vmem:[%s18 + $0x8] sm:$0xff]
    %v3693 = vld [vmem:[%s18 + $0x10] sm:$0xff]
    %v3694 = vld [vmem:[%s18 + $0x18] sm:$0xff]
    %v3695 = vld [vmem:[%s18 + $0x20] sm:$0xff]
    %v3696 = vld [vmem:[%s18 + $0x28] sm:$0xff]
    %v3697 = vld [vmem:[%s18 + $0x30] sm:$0xff]
    %v3698 = vld [vmem:[%s18 + $0x38] sm:$0xff]
    %v3699 = vld [vmem:[%s18 + $0x40] sm:$0xff]
    %v3700 = vld [vmem:[%s18 + $0x48] sm:$0xff]
    %v3701 = vld [vmem:[%s18 + $0x50] sm:$0xff]
    %v3702 = vld [vmem:[%s18 + $0x58] sm:$0xff]
    %v3703 = vld [vmem:[%s18 + $0x60] sm:$0xff]
    %v3704 = vld [vmem:[%s18 + $0x68] sm:$0xff]
    %v3705 = vld [vmem:[%s18 + $0x70] sm:$0xff]
    %v3706 = vld [vmem:[%s18 + $0x78] sm:$0xff]
    %3708 = vset.pattern.permute.xlu0 0
    %3709 = vperm.xlu0 %3708, %v3691
    %v3710 = vpop.permute.xlu0 %3709
    %3713 = vset.pattern.permute.xlu0 0
    %3714 = vperm.xlu0 %3713, %v3692
    %v3715 = vpop.permute.xlu0 %3714
    %3718 = vset.pattern.permute.xlu0 0
    %3719 = vperm.xlu0 %3718, %v3693
    %v3720 = vpop.permute.xlu0 %3719
    %3723 = vset.pattern.permute.xlu0 0
    %3724 = vperm.xlu0 %3723, %v3694
    %v3725 = vpop.permute.xlu0 %3724
    %3728 = vset.pattern.permute.xlu0 0
    %3729 = vperm.xlu0 %3728, %v3695
    %v3730 = vpop.permute.xlu0 %3729
    %3733 = vset.pattern.permute.xlu0 0
    %3734 = vperm.xlu0 %3733, %v3696
    %v3735 = vpop.permute.xlu0 %3734
    %3738 = vset.pattern.permute.xlu0 0
    %3739 = vperm.xlu0 %3738, %v3697
    %v3740 = vpop.permute.xlu0 %3739
    %3743 = vset.pattern.permute.xlu0 0
    %3744 = vperm.xlu0 %3743, %v3698
    %v3745 = vpop.permute.xlu0 %3744
    %3748 = vset.pattern.permute.xlu0 0
    %3749 = vperm.xlu0 %3748, %v3699
    %v3750 = vpop.permute.xlu0 %3749
    %3753 = vset.pattern.permute.xlu0 0
    %3754 = vperm.xlu0 %3753, %v3700
    %v3755 = vpop.permute.xlu0 %3754
    %3758 = vset.pattern.permute.xlu0 0
    %3759 = vperm.xlu0 %3758, %v3701
    %v3760 = vpop.permute.xlu0 %3759
    %3763 = vset.pattern.permute.xlu0 0
    %3764 = vperm.xlu0 %3763, %v3702
    %v3765 = vpop.permute.xlu0 %3764
    %3768 = vset.pattern.permute.xlu0 0
    %3769 = vperm.xlu0 %3768, %v3703
    %v3770 = vpop.permute.xlu0 %3769
    %3773 = vset.pattern.permute.xlu0 0
    %3774 = vperm.xlu0 %3773, %v3704
    %v3775 = vpop.permute.xlu0 %3774
    %3778 = vset.pattern.permute.xlu0 0
    %3779 = vperm.xlu0 %3778, %v3705
    %v3780 = vpop.permute.xlu0 %3779
    %3783 = vset.pattern.permute.xlu0 0
    %3784 = vperm.xlu0 %3783, %v3706
    %v3785 = vpop.permute.xlu0 %3784
    %v3787 = vmul.f32 %v3675, %v3710
    %v3788 = vmul.f32 %v3676, %v3715
    %v3789 = vmul.f32 %v3677, %v3720
    %v3790 = vmul.f32 %v3678, %v3725
    %v3791 = vmul.f32 %v3679, %v3730
    %v3792 = vmul.f32 %v3680, %v3735
    %v3793 = vmul.f32 %v3681, %v3740
    %v3794 = vmul.f32 %v3682, %v3745
    %v3795 = vmul.f32 %v3683, %v3750
    %v3796 = vmul.f32 %v3684, %v3755
    %v3797 = vmul.f32 %v3685, %v3760
    %v3798 = vmul.f32 %v3686, %v3765
    %v3799 = vmul.f32 %v3687, %v3770
    %v3800 = vmul.f32 %v3688, %v3775
    %v3801 = vmul.f32 %v3689, %v3780
    %v3802 = vmul.f32 %v3690, %v3785
    %s3803 = scalar_lea.vmem %s18, 128
    %v3804 = vld [vmem:[%s3803] sm:$0xff]
    %v3805 = vld [vmem:[%s3803 + $0x8] sm:$0xff]
    %v3806 = vld [vmem:[%s3803 + $0x10] sm:$0xff]
    %v3807 = vld [vmem:[%s3803 + $0x18] sm:$0xff]
    %v3808 = vld [vmem:[%s3803 + $0x20] sm:$0xff]
    %v3809 = vld [vmem:[%s3803 + $0x28] sm:$0xff]
    %v3810 = vld [vmem:[%s3803 + $0x30] sm:$0xff]
    %v3811 = vld [vmem:[%s3803 + $0x38] sm:$0xff]
    %v3812 = vld [vmem:[%s3803 + $0x40] sm:$0xff]
    %v3813 = vld [vmem:[%s3803 + $0x48] sm:$0xff]
    %v3814 = vld [vmem:[%s3803 + $0x50] sm:$0xff]
    %v3815 = vld [vmem:[%s3803 + $0x58] sm:$0xff]
    %v3816 = vld [vmem:[%s3803 + $0x60] sm:$0xff]
    %v3817 = vld [vmem:[%s3803 + $0x68] sm:$0xff]
    %v3818 = vld [vmem:[%s3803 + $0x70] sm:$0xff]
    %v3819 = vld [vmem:[%s3803 + $0x78] sm:$0xff]
    %3821 = vset.pattern.permute.xlu0 0
    %3822 = vperm.xlu0 %3821, %v3804
    %v3823 = vpop.permute.xlu0 %3822
    %3826 = vset.pattern.permute.xlu0 0
    %3827 = vperm.xlu0 %3826, %v3805
    %v3828 = vpop.permute.xlu0 %3827
    %3831 = vset.pattern.permute.xlu0 0
    %3832 = vperm.xlu0 %3831, %v3806
    %v3833 = vpop.permute.xlu0 %3832
    %3836 = vset.pattern.permute.xlu0 0
    %3837 = vperm.xlu0 %3836, %v3807
    %v3838 = vpop.permute.xlu0 %3837
    %3841 = vset.pattern.permute.xlu0 0
    %3842 = vperm.xlu0 %3841, %v3808
    %v3843 = vpop.permute.xlu0 %3842
    %3846 = vset.pattern.permute.xlu0 0
    %3847 = vperm.xlu0 %3846, %v3809
    %v3848 = vpop.permute.xlu0 %3847
    %3851 = vset.pattern.permute.xlu0 0
    %3852 = vperm.xlu0 %3851, %v3810
    %v3853 = vpop.permute.xlu0 %3852
    %3856 = vset.pattern.permute.xlu0 0
    %3857 = vperm.xlu0 %3856, %v3811
    %v3858 = vpop.permute.xlu0 %3857
    %3861 = vset.pattern.permute.xlu0 0
    %3862 = vperm.xlu0 %3861, %v3812
    %v3863 = vpop.permute.xlu0 %3862
    %3866 = vset.pattern.permute.xlu0 0
    %3867 = vperm.xlu0 %3866, %v3813
    %v3868 = vpop.permute.xlu0 %3867
    %3871 = vset.pattern.permute.xlu0 0
    %3872 = vperm.xlu0 %3871, %v3814
    %v3873 = vpop.permute.xlu0 %3872
    %3876 = vset.pattern.permute.xlu0 0
    %3877 = vperm.xlu0 %3876, %v3815
    %v3878 = vpop.permute.xlu0 %3877
    %3881 = vset.pattern.permute.xlu0 0
    %3882 = vperm.xlu0 %3881, %v3816
    %v3883 = vpop.permute.xlu0 %3882
    %3886 = vset.pattern.permute.xlu0 0
    %3887 = vperm.xlu0 %3886, %v3817
    %v3888 = vpop.permute.xlu0 %3887
    %3891 = vset.pattern.permute.xlu0 0
    %3892 = vperm.xlu0 %3891, %v3818
    %v3893 = vpop.permute.xlu0 %3892
    %3896 = vset.pattern.permute.xlu0 0
    %3897 = vperm.xlu0 %3896, %v3819
    %v3898 = vpop.permute.xlu0 %3897
    %v3900 = vadd.f32 %v3787, %v3823
    %v3901 = vadd.f32 %v3788, %v3828
    %v3902 = vadd.f32 %v3789, %v3833
    %v3903 = vadd.f32 %v3790, %v3838
    %v3904 = vadd.f32 %v3791, %v3843
    %v3905 = vadd.f32 %v3792, %v3848
    %v3906 = vadd.f32 %v3793, %v3853
    %v3907 = vadd.f32 %v3794, %v3858
    %v3908 = vadd.f32 %v3795, %v3863
    %v3909 = vadd.f32 %v3796, %v3868
    %v3910 = vadd.f32 %v3797, %v3873
    %v3911 = vadd.f32 %v3798, %v3878
    %v3912 = vadd.f32 %v3799, %v3883
    %v3913 = vadd.f32 %v3800, %v3888
    %v3914 = vadd.f32 %v3801, %v3893
    %v3915 = vadd.f32 %v3802, %v3898
    %vm3916 = vcmp.ge.f32.partialorder %v3900, 0.0
    %vm3917 = vcmp.ge.f32.partialorder %v3901, 0.0
    %vm3918 = vcmp.ge.f32.partialorder %v3902, 0.0
    %vm3919 = vcmp.ge.f32.partialorder %v3903, 0.0
    %vm3920 = vcmp.ge.f32.partialorder %v3904, 0.0
    %vm3921 = vcmp.ge.f32.partialorder %v3905, 0.0
    %vm3922 = vcmp.ge.f32.partialorder %v3906, 0.0
    %vm3923 = vcmp.ge.f32.partialorder %v3907, 0.0
    %vm3924 = vcmp.ge.f32.partialorder %v3908, 0.0
    %vm3925 = vcmp.ge.f32.partialorder %v3909, 0.0
    %vm3926 = vcmp.ge.f32.partialorder %v3910, 0.0
    %vm3927 = vcmp.ge.f32.partialorder %v3911, 0.0
    %vm3928 = vcmp.ge.f32.partialorder %v3912, 0.0
    %vm3929 = vcmp.ge.f32.partialorder %v3913, 0.0
    %vm3930 = vcmp.ge.f32.partialorder %v3914, 0.0
    %vm3931 = vcmp.ge.f32.partialorder %v3915, 0.0
    %v3932 = vmul.f32 %v3900, 0.01
    %v3933 = vmul.f32 %v3901, 0.01
    %v3934 = vmul.f32 %v3902, 0.01
    %v3935 = vmul.f32 %v3903, 0.01
    %v3936 = vmul.f32 %v3904, 0.01
    %v3937 = vmul.f32 %v3905, 0.01
    %v3938 = vmul.f32 %v3906, 0.01
    %v3939 = vmul.f32 %v3907, 0.01
    %v3940 = vmul.f32 %v3908, 0.01
    %v3941 = vmul.f32 %v3909, 0.01
    %v3942 = vmul.f32 %v3910, 0.01
    %v3943 = vmul.f32 %v3911, 0.01
    %v3944 = vmul.f32 %v3912, 0.01
    %v3945 = vmul.f32 %v3913, 0.01
    %v3946 = vmul.f32 %v3914, 0.01
    %v3947 = vmul.f32 %v3915, 0.01
    %v3948 = vsel %vm3916, %v3900, %v3932
    %v3949 = vsel %vm3917, %v3901, %v3933
    %v3950 = vsel %vm3918, %v3902, %v3934
    %v3951 = vsel %vm3919, %v3903, %v3935
    %v3952 = vsel %vm3920, %v3904, %v3936
    %v3953 = vsel %vm3921, %v3905, %v3937
    %v3954 = vsel %vm3922, %v3906, %v3938
    %v3955 = vsel %vm3923, %v3907, %v3939
    %v3956 = vsel %vm3924, %v3908, %v3940
    %v3957 = vsel %vm3925, %v3909, %v3941
    %v3958 = vsel %vm3926, %v3910, %v3942
    %v3959 = vsel %vm3927, %v3911, %v3943
    %v3960 = vsel %vm3928, %v3912, %v3944
    %v3961 = vsel %vm3929, %v3913, %v3945
    %v3962 = vsel %vm3930, %v3914, %v3946
    %v3963 = vsel %vm3931, %v3915, %v3947
    %v3964 = vld [vmem:[%s19] sm:$0xf]
    %v3965 = vld [vmem:[%s19 + $0x4] sm:$0xf]
    %v3966 = vld [vmem:[%s19 + $0x8] sm:$0xf]
    %v3967 = vld [vmem:[%s19 + $0xc] sm:$0xf]
    %v3968 = vld [vmem:[%s19 + $0x10] sm:$0xf]
    %v3969 = vld [vmem:[%s19 + $0x14] sm:$0xf]
    %v3970 = vld [vmem:[%s19 + $0x18] sm:$0xf]
    %v3971 = vld [vmem:[%s19 + $0x1c] sm:$0xf]
    %v3972 = vld [vmem:[%s19 + $0x20] sm:$0xf]
    %v3973 = vld [vmem:[%s19 + $0x24] sm:$0xf]
    %v3974 = vld [vmem:[%s19 + $0x28] sm:$0xf]
    %v3975 = vld [vmem:[%s19 + $0x2c] sm:$0xf]
    %v3976 = vld [vmem:[%s19 + $0x30] sm:$0xf]
    %v3977 = vld [vmem:[%s19 + $0x34] sm:$0xf]
    %v3978 = vld [vmem:[%s19 + $0x38] sm:$0xf]
    %v3979 = vld [vmem:[%s19 + $0x3c] sm:$0xf]
    %v3980 = vld [vmem:[%s19 + $0x40] sm:$0xf]
    %v3981 = vld [vmem:[%s19 + $0x44] sm:$0xf]
    %v3982 = vld [vmem:[%s19 + $0x48] sm:$0xf]
    %v3983 = vld [vmem:[%s19 + $0x4c] sm:$0xf]
    %v3984 = vld [vmem:[%s19 + $0x50] sm:$0xf]
    %v3985 = vld [vmem:[%s19 + $0x54] sm:$0xf]
    %v3986 = vld [vmem:[%s19 + $0x58] sm:$0xf]
    %v3987 = vld [vmem:[%s19 + $0x5c] sm:$0xf]
    %v3988 = vld [vmem:[%s19 + $0x60] sm:$0xf]
    %v3989 = vld [vmem:[%s19 + $0x64] sm:$0xf]
    %v3990 = vld [vmem:[%s19 + $0x68] sm:$0xf]
    %v3991 = vld [vmem:[%s19 + $0x6c] sm:$0xf]
    %v3992 = vld [vmem:[%s19 + $0x70] sm:$0xf]
    %v3993 = vld [vmem:[%s19 + $0x74] sm:$0xf]
    %v3994 = vld [vmem:[%s19 + $0x78] sm:$0xf]
    %v3995 = vld [vmem:[%s19 + $0x7c] sm:$0xf]
    %v3996 = vpack.c.bf16 %v3949, %v3948
    %v3997 = vpack.c.bf16 %v3951, %v3950
    %v3998 = vpack.c.bf16 %v3953, %v3952
    %v3999 = vpack.c.bf16 %v3955, %v3954
    %v4000 = vpack.c.bf16 %v3957, %v3956
    %v4001 = vpack.c.bf16 %v3959, %v3958
    %v4002 = vpack.c.bf16 %v3961, %v3960
    %v4003 = vpack.c.bf16 %v3963, %v3962
    %v4036 = vunpack.c.l.b16 %v3964
    %v4037 = vunpack.c.l.b16 %v3965
    %v4038 = vunpack.c.l.b16 %v3966
    %v4039 = vunpack.c.l.b16 %v3967
    %v4040 = vunpack.c.l.b16 %v3968
    %v4041 = vunpack.c.l.b16 %v3969
    %v4042 = vunpack.c.l.b16 %v3970
    %v4043 = vunpack.c.l.b16 %v3971
    %v4044 = vunpack.c.l.b16 %v3972
    %v4045 = vunpack.c.l.b16 %v3973
    %v4046 = vunpack.c.l.b16 %v3974
    %v4047 = vunpack.c.l.b16 %v3975
    %v4048 = vunpack.c.l.b16 %v3976
    %v4049 = vunpack.c.l.b16 %v3977
    %v4050 = vunpack.c.l.b16 %v3978
    %v4051 = vunpack.c.l.b16 %v3979
    %v4052 = vunpack.c.l.b16 %v3980
    %v4053 = vunpack.c.l.b16 %v3981
    %v4054 = vunpack.c.l.b16 %v3982
    %v4055 = vunpack.c.l.b16 %v3983
    %v4056 = vunpack.c.l.b16 %v3984
    %v4057 = vunpack.c.l.b16 %v3985
    %v4058 = vunpack.c.l.b16 %v3986
    %v4059 = vunpack.c.l.b16 %v3987
    %v4060 = vunpack.c.l.b16 %v3988
    %v4061 = vunpack.c.l.b16 %v3989
    %v4062 = vunpack.c.l.b16 %v3990
    %v4063 = vunpack.c.l.b16 %v3991
    %v4064 = vunpack.c.l.b16 %v3992
    %v4065 = vunpack.c.l.b16 %v3993
    %v4066 = vunpack.c.l.b16 %v3994
    %v4067 = vunpack.c.l.b16 %v3995
    %v4068 = vpack.c.b16 %v4037, %v4036
    %v4069 = vpack.c.b16 %v4039, %v4038
    %v4070 = vpack.c.b16 %v4041, %v4040
    %v4071 = vpack.c.b16 %v4043, %v4042
    %v4072 = vpack.c.b16 %v4045, %v4044
    %v4073 = vpack.c.b16 %v4047, %v4046
    %v4074 = vpack.c.b16 %v4049, %v4048
    %v4075 = vpack.c.b16 %v4051, %v4050
    %v4076 = vpack.c.b16 %v4053, %v4052
    %v4077 = vpack.c.b16 %v4055, %v4054
    %v4078 = vpack.c.b16 %v4057, %v4056
    %v4079 = vpack.c.b16 %v4059, %v4058
    %v4080 = vpack.c.b16 %v4061, %v4060
    %v4081 = vpack.c.b16 %v4063, %v4062
    %v4082 = vpack.c.b16 %v4065, %v4064
    %v4083 = vpack.c.b16 %v4067, %v4066
    %4100 = vmatpush.bf16.msra.mxu0 %v4003
    %4101 = vmatpush.bf16.msra.mxu0 %v4002
    %4102 = vmatpush.bf16.msra.mxu0 %v4001
    %4103 = vmatpush.bf16.msra.mxu0 %v4000
    %4104 = vmatpush.bf16.msra.mxu0 %v3999
    %4105 = vmatpush.bf16.msra.mxu0 %v3998
    %4106 = vmatpush.bf16.msra.mxu0 %v3997
    %4107 = vmatpush.bf16.msra.mxu0 %v3996
    %4108 = vmatmul.bf16.gmra.mxu0 %v4068
    %v4109 = vpop.f32.mrf.mxu0
    %v4110 = vadd.f32 0.0, %v4109
    %v4111 = vpop.f32.mrf.mxu0
    %v4112 = vadd.f32 0.0, %v4111
    %4113 = vmatmul.bf16.gmra.mxu0 %v4069
    %v4114 = vpop.f32.mrf.mxu0
    %v4115 = vadd.f32 0.0, %v4114
    %v4116 = vpop.f32.mrf.mxu0
    %v4117 = vadd.f32 0.0, %v4116
    %4118 = vmatmul.bf16.gmra.mxu0 %v4070
    %v4119 = vpop.f32.mrf.mxu0
    %v4120 = vadd.f32 0.0, %v4119
    %v4121 = vpop.f32.mrf.mxu0
    %v4122 = vadd.f32 0.0, %v4121
    %4123 = vmatmul.bf16.gmra.mxu0 %v4071
    %v4124 = vpop.f32.mrf.mxu0
    %v4125 = vadd.f32 0.0, %v4124
    %v4126 = vpop.f32.mrf.mxu0
    %v4127 = vadd.f32 0.0, %v4126
    %4128 = vmatmul.bf16.gmra.mxu0 %v4072
    %v4129 = vpop.f32.mrf.mxu0
    %v4130 = vadd.f32 0.0, %v4129
    %v4131 = vpop.f32.mrf.mxu0
    %v4132 = vadd.f32 0.0, %v4131
    %4133 = vmatmul.bf16.gmra.mxu0 %v4073
    %v4134 = vpop.f32.mrf.mxu0
    %v4135 = vadd.f32 0.0, %v4134
    %v4136 = vpop.f32.mrf.mxu0
    %v4137 = vadd.f32 0.0, %v4136
    %4138 = vmatmul.bf16.gmra.mxu0 %v4074
    %v4139 = vpop.f32.mrf.mxu0
    %v4140 = vadd.f32 0.0, %v4139
    %v4141 = vpop.f32.mrf.mxu0
    %v4142 = vadd.f32 0.0, %v4141
    %4143 = vmatmul.bf16.gmra.mxu0 %v4075
    %v4144 = vpop.f32.mrf.mxu0
    %v4145 = vadd.f32 0.0, %v4144
    %v4146 = vpop.f32.mrf.mxu0
    %v4147 = vadd.f32 0.0, %v4146
    %4148 = vmatmul.bf16.gmra.mxu0 %v4076
    %v4149 = vpop.f32.mrf.mxu0
    %v4150 = vadd.f32 0.0, %v4149
    %v4151 = vpop.f32.mrf.mxu0
    %v4152 = vadd.f32 0.0, %v4151
    %4153 = vmatmul.bf16.gmra.mxu0 %v4077
    %v4154 = vpop.f32.mrf.mxu0
    %v4155 = vadd.f32 0.0, %v4154
    %v4156 = vpop.f32.mrf.mxu0
    %v4157 = vadd.f32 0.0, %v4156
    %4158 = vmatmul.bf16.gmra.mxu0 %v4078
    %v4159 = vpop.f32.mrf.mxu0
    %v4160 = vadd.f32 0.0, %v4159
    %v4161 = vpop.f32.mrf.mxu0
    %v4162 = vadd.f32 0.0, %v4161
    %4163 = vmatmul.bf16.gmra.mxu0 %v4079
    %v4164 = vpop.f32.mrf.mxu0
    %v4165 = vadd.f32 0.0, %v4164
    %v4166 = vpop.f32.mrf.mxu0
    %v4167 = vadd.f32 0.0, %v4166
    %4168 = vmatmul.bf16.gmra.mxu0 %v4080
    %v4169 = vpop.f32.mrf.mxu0
    %v4170 = vadd.f32 0.0, %v4169
    %v4171 = vpop.f32.mrf.mxu0
    %v4172 = vadd.f32 0.0, %v4171
    %4173 = vmatmul.bf16.gmra.mxu0 %v4081
    %v4174 = vpop.f32.mrf.mxu0
    %v4175 = vadd.f32 0.0, %v4174
    %v4176 = vpop.f32.mrf.mxu0
    %v4177 = vadd.f32 0.0, %v4176
    %4178 = vmatmul.bf16.gmra.mxu0 %v4082
    %v4179 = vpop.f32.mrf.mxu0
    %v4180 = vadd.f32 0.0, %v4179
    %v4181 = vpop.f32.mrf.mxu0
    %v4182 = vadd.f32 0.0, %v4181
    %4183 = vmatmul.bf16.gmra.mxu0 %v4083
    %v4184 = vpop.f32.mrf.mxu0
    %v4185 = vadd.f32 0.0, %v4184
    %v4186 = vpop.f32.mrf.mxu0
    %v4187 = vadd.f32 0.0, %v4186
    %4188 = vdwg.mxu0
    %v4189 = vld [vmem:[%s20] sm:$0xff]
    %v4190 = vld [vmem:[%s20 + $0x8] sm:$0xff]
    %v4191 = vld [vmem:[%s20 + $0x10] sm:$0xff]
    %v4192 = vld [vmem:[%s20 + $0x18] sm:$0xff]
    %v4193 = vld [vmem:[%s20 + $0x20] sm:$0xff]
    %v4194 = vld [vmem:[%s20 + $0x28] sm:$0xff]
    %v4195 = vld [vmem:[%s20 + $0x30] sm:$0xff]
    %v4196 = vld [vmem:[%s20 + $0x38] sm:$0xff]
    %v4197 = vld [vmem:[%s20 + $0x40] sm:$0xff]
    %v4198 = vld [vmem:[%s20 + $0x48] sm:$0xff]
    %v4199 = vld [vmem:[%s20 + $0x50] sm:$0xff]
    %v4200 = vld [vmem:[%s20 + $0x58] sm:$0xff]
    %v4201 = vld [vmem:[%s20 + $0x60] sm:$0xff]
    %v4202 = vld [vmem:[%s20 + $0x68] sm:$0xff]
    %v4203 = vld [vmem:[%s20 + $0x70] sm:$0xff]
    %v4204 = vld [vmem:[%s20 + $0x78] sm:$0xff]
    %v4205 = vpack.c.bf16 %v4112, %v4110
    %v4206 = vpack.c.bf16 %v4117, %v4115
    %v4207 = vpack.c.bf16 %v4122, %v4120
    %v4208 = vpack.c.bf16 %v4127, %v4125
    %v4209 = vpack.c.bf16 %v4132, %v4130
    %v4210 = vpack.c.bf16 %v4137, %v4135
    %v4211 = vpack.c.bf16 %v4142, %v4140
    %v4212 = vpack.c.bf16 %v4147, %v4145
    %v4213 = vpack.c.bf16 %v4152, %v4150
    %v4214 = vpack.c.bf16 %v4157, %v4155
    %v4215 = vpack.c.bf16 %v4162, %v4160
    %v4216 = vpack.c.bf16 %v4167, %v4165
    %v4217 = vpack.c.bf16 %v4172, %v4170
    %v4218 = vpack.c.bf16 %v4177, %v4175
    %v4219 = vpack.c.bf16 %v4182, %v4180
    %v4220 = vpack.c.bf16 %v4187, %v4185
    %s4221 = scalar_lea.vmem %s19, 128
    %v4222 = vld [vmem:[%s4221] sm:$0xf]
    %v4223 = vld [vmem:[%s4221 + $0x4] sm:$0xf]
    %v4224 = vld [vmem:[%s4221 + $0x8] sm:$0xf]
    %v4225 = vld [vmem:[%s4221 + $0xc] sm:$0xf]
    %v4226 = vld [vmem:[%s4221 + $0x10] sm:$0xf]
    %v4227 = vld [vmem:[%s4221 + $0x14] sm:$0xf]
    %v4228 = vld [vmem:[%s4221 + $0x18] sm:$0xf]
    %v4229 = vld [vmem:[%s4221 + $0x1c] sm:$0xf]
    %v4230 = vld [vmem:[%s4221 + $0x20] sm:$0xf]
    %v4231 = vld [vmem:[%s4221 + $0x24] sm:$0xf]
    %v4232 = vld [vmem:[%s4221 + $0x28] sm:$0xf]
    %v4233 = vld [vmem:[%s4221 + $0x2c] sm:$0xf]
    %v4234 = vld [vmem:[%s4221 + $0x30] sm:$0xf]
    %v4235 = vld [vmem:[%s4221 + $0x34] sm:$0xf]
    %v4236 = vld [vmem:[%s4221 + $0x38] sm:$0xf]
    %v4237 = vld [vmem:[%s4221 + $0x3c] sm:$0xf]
    %v4238 = vld [vmem:[%s4221 + $0x40] sm:$0xf]
    %v4239 = vld [vmem:[%s4221 + $0x44] sm:$0xf]
    %v4240 = vld [vmem:[%s4221 + $0x48] sm:$0xf]
    %v4241 = vld [vmem:[%s4221 + $0x4c] sm:$0xf]
    %v4242 = vld [vmem:[%s4221 + $0x50] sm:$0xf]
    %v4243 = vld [vmem:[%s4221 + $0x54] sm:$0xf]
    %v4244 = vld [vmem:[%s4221 + $0x58] sm:$0xf]
    %v4245 = vld [vmem:[%s4221 + $0x5c] sm:$0xf]
    %v4246 = vld [vmem:[%s4221 + $0x60] sm:$0xf]
    %v4247 = vld [vmem:[%s4221 + $0x64] sm:$0xf]
    %v4248 = vld [vmem:[%s4221 + $0x68] sm:$0xf]
    %v4249 = vld [vmem:[%s4221 + $0x6c] sm:$0xf]
    %v4250 = vld [vmem:[%s4221 + $0x70] sm:$0xf]
    %v4251 = vld [vmem:[%s4221 + $0x74] sm:$0xf]
    %v4252 = vld [vmem:[%s4221 + $0x78] sm:$0xf]
    %v4253 = vld [vmem:[%s4221 + $0x7c] sm:$0xf]
    %v4286 = vunpack.c.l.b16 %v4222
    %v4287 = vunpack.c.l.b16 %v4223
    %v4288 = vunpack.c.l.b16 %v4224
    %v4289 = vunpack.c.l.b16 %v4225
    %v4290 = vunpack.c.l.b16 %v4226
    %v4291 = vunpack.c.l.b16 %v4227
    %v4292 = vunpack.c.l.b16 %v4228
    %v4293 = vunpack.c.l.b16 %v4229
    %v4294 = vunpack.c.l.b16 %v4230
    %v4295 = vunpack.c.l.b16 %v4231
    %v4296 = vunpack.c.l.b16 %v4232
    %v4297 = vunpack.c.l.b16 %v4233
    %v4298 = vunpack.c.l.b16 %v4234
    %v4299 = vunpack.c.l.b16 %v4235
    %v4300 = vunpack.c.l.b16 %v4236
    %v4301 = vunpack.c.l.b16 %v4237
    %v4302 = vunpack.c.l.b16 %v4238
    %v4303 = vunpack.c.l.b16 %v4239
    %v4304 = vunpack.c.l.b16 %v4240
    %v4305 = vunpack.c.l.b16 %v4241
    %v4306 = vunpack.c.l.b16 %v4242
    %v4307 = vunpack.c.l.b16 %v4243
    %v4308 = vunpack.c.l.b16 %v4244
    %v4309 = vunpack.c.l.b16 %v4245
    %v4310 = vunpack.c.l.b16 %v4246
    %v4311 = vunpack.c.l.b16 %v4247
    %v4312 = vunpack.c.l.b16 %v4248
    %v4313 = vunpack.c.l.b16 %v4249
    %v4314 = vunpack.c.l.b16 %v4250
    %v4315 = vunpack.c.l.b16 %v4251
    %v4316 = vunpack.c.l.b16 %v4252
    %v4317 = vunpack.c.l.b16 %v4253
    %v4318 = vpack.c.b16 %v4287, %v4286
    %v4319 = vpack.c.b16 %v4289, %v4288
    %v4320 = vpack.c.b16 %v4291, %v4290
    %v4321 = vpack.c.b16 %v4293, %v4292
    %v4322 = vpack.c.b16 %v4295, %v4294
    %v4323 = vpack.c.b16 %v4297, %v4296
    %v4324 = vpack.c.b16 %v4299, %v4298
    %v4325 = vpack.c.b16 %v4301, %v4300
    %v4326 = vpack.c.b16 %v4303, %v4302
    %v4327 = vpack.c.b16 %v4305, %v4304
    %v4328 = vpack.c.b16 %v4307, %v4306
    %v4329 = vpack.c.b16 %v4309, %v4308
    %v4330 = vpack.c.b16 %v4311, %v4310
    %v4331 = vpack.c.b16 %v4313, %v4312
    %v4332 = vpack.c.b16 %v4315, %v4314
    %v4333 = vpack.c.b16 %v4317, %v4316
    %4350 = vmatpush.bf16.msra.mxu0 %v4003
    %4351 = vmatpush.bf16.msra.mxu0 %v4002
    %4352 = vmatpush.bf16.msra.mxu0 %v4001
    %4353 = vmatpush.bf16.msra.mxu0 %v4000
    %4354 = vmatpush.bf16.msra.mxu0 %v3999
    %4355 = vmatpush.bf16.msra.mxu0 %v3998
    %4356 = vmatpush.bf16.msra.mxu0 %v3997
    %4357 = vmatpush.bf16.msra.mxu0 %v3996
    %4358 = vmatmul.bf16.gmra.mxu0 %v4318
    %v4359 = vpop.f32.mrf.mxu0
    %v4360 = vadd.f32 0.0, %v4359
    %v4361 = vpop.f32.mrf.mxu0
    %v4362 = vadd.f32 0.0, %v4361
    %4363 = vmatmul.bf16.gmra.mxu0 %v4319
    %v4364 = vpop.f32.mrf.mxu0
    %v4365 = vadd.f32 0.0, %v4364
    %v4366 = vpop.f32.mrf.mxu0
    %v4367 = vadd.f32 0.0, %v4366
    %4368 = vmatmul.bf16.gmra.mxu0 %v4320
    %v4369 = vpop.f32.mrf.mxu0
    %v4370 = vadd.f32 0.0, %v4369
    %v4371 = vpop.f32.mrf.mxu0
    %v4372 = vadd.f32 0.0, %v4371
    %4373 = vmatmul.bf16.gmra.mxu0 %v4321
    %v4374 = vpop.f32.mrf.mxu0
    %v4375 = vadd.f32 0.0, %v4374
    %v4376 = vpop.f32.mrf.mxu0
    %v4377 = vadd.f32 0.0, %v4376
    %4378 = vmatmul.bf16.gmra.mxu0 %v4322
    %v4379 = vpop.f32.mrf.mxu0
    %v4380 = vadd.f32 0.0, %v4379
    %v4381 = vpop.f32.mrf.mxu0
    %v4382 = vadd.f32 0.0, %v4381
    %4383 = vmatmul.bf16.gmra.mxu0 %v4323
    %v4384 = vpop.f32.mrf.mxu0
    %v4385 = vadd.f32 0.0, %v4384
    %v4386 = vpop.f32.mrf.mxu0
    %v4387 = vadd.f32 0.0, %v4386
    %4388 = vmatmul.bf16.gmra.mxu0 %v4324
    %v4389 = vpop.f32.mrf.mxu0
    %v4390 = vadd.f32 0.0, %v4389
    %v4391 = vpop.f32.mrf.mxu0
    %v4392 = vadd.f32 0.0, %v4391
    %4393 = vmatmul.bf16.gmra.mxu0 %v4325
    %v4394 = vpop.f32.mrf.mxu0
    %v4395 = vadd.f32 0.0, %v4394
    %v4396 = vpop.f32.mrf.mxu0
    %v4397 = vadd.f32 0.0, %v4396
    %4398 = vmatmul.bf16.gmra.mxu0 %v4326
    %v4399 = vpop.f32.mrf.mxu0
    %v4400 = vadd.f32 0.0, %v4399
    %v4401 = vpop.f32.mrf.mxu0
    %v4402 = vadd.f32 0.0, %v4401
    %4403 = vmatmul.bf16.gmra.mxu0 %v4327
    %v4404 = vpop.f32.mrf.mxu0
    %v4405 = vadd.f32 0.0, %v4404
    %v4406 = vpop.f32.mrf.mxu0
    %v4407 = vadd.f32 0.0, %v4406
    %4408 = vmatmul.bf16.gmra.mxu0 %v4328
    %v4409 = vpop.f32.mrf.mxu0
    %v4410 = vadd.f32 0.0, %v4409
    %v4411 = vpop.f32.mrf.mxu0
    %v4412 = vadd.f32 0.0, %v4411
    %4413 = vmatmul.bf16.gmra.mxu0 %v4329
    %v4414 = vpop.f32.mrf.mxu0
    %v4415 = vadd.f32 0.0, %v4414
    %v4416 = vpop.f32.mrf.mxu0
    %v4417 = vadd.f32 0.0, %v4416
    %4418 = vmatmul.bf16.gmra.mxu0 %v4330
    %v4419 = vpop.f32.mrf.mxu0
    %v4420 = vadd.f32 0.0, %v4419
    %v4421 = vpop.f32.mrf.mxu0
    %v4422 = vadd.f32 0.0, %v4421
    %4423 = vmatmul.bf16.gmra.mxu0 %v4331
    %v4424 = vpop.f32.mrf.mxu0
    %v4425 = vadd.f32 0.0, %v4424
    %v4426 = vpop.f32.mrf.mxu0
    %v4427 = vadd.f32 0.0, %v4426
    %4428 = vmatmul.bf16.gmra.mxu0 %v4332
    %v4429 = vpop.f32.mrf.mxu0
    %v4430 = vadd.f32 0.0, %v4429
    %v4431 = vpop.f32.mrf.mxu0
    %v4432 = vadd.f32 0.0, %v4431
    %4433 = vmatmul.bf16.gmra.mxu0 %v4333
    %v4434 = vpop.f32.mrf.mxu0
    %v4435 = vadd.f32 0.0, %v4434
    %v4436 = vpop.f32.mrf.mxu0
    %v4437 = vadd.f32 0.0, %v4436
    %4438 = vdwg.mxu0
    %s4439 = scalar_lea.vmem %s20, 128
    %v4440 = vld [vmem:[%s4439] sm:$0xff]
    %v4441 = vld [vmem:[%s4439 + $0x8] sm:$0xff]
    %v4442 = vld [vmem:[%s4439 + $0x10] sm:$0xff]
    %v4443 = vld [vmem:[%s4439 + $0x18] sm:$0xff]
    %v4444 = vld [vmem:[%s4439 + $0x20] sm:$0xff]
    %v4445 = vld [vmem:[%s4439 + $0x28] sm:$0xff]
    %v4446 = vld [vmem:[%s4439 + $0x30] sm:$0xff]
    %v4447 = vld [vmem:[%s4439 + $0x38] sm:$0xff]
    %v4448 = vld [vmem:[%s4439 + $0x40] sm:$0xff]
    %v4449 = vld [vmem:[%s4439 + $0x48] sm:$0xff]
    %v4450 = vld [vmem:[%s4439 + $0x50] sm:$0xff]
    %v4451 = vld [vmem:[%s4439 + $0x58] sm:$0xff]
    %v4452 = vld [vmem:[%s4439 + $0x60] sm:$0xff]
    %v4453 = vld [vmem:[%s4439 + $0x68] sm:$0xff]
    %v4454 = vld [vmem:[%s4439 + $0x70] sm:$0xff]
    %v4455 = vld [vmem:[%s4439 + $0x78] sm:$0xff]
    %v4456 = vpack.c.bf16 %v4362, %v4360
    %v4457 = vpack.c.bf16 %v4367, %v4365
    %v4458 = vpack.c.bf16 %v4372, %v4370
    %v4459 = vpack.c.bf16 %v4377, %v4375
    %v4460 = vpack.c.bf16 %v4382, %v4380
    %v4461 = vpack.c.bf16 %v4387, %v4385
    %v4462 = vpack.c.bf16 %v4392, %v4390
    %v4463 = vpack.c.bf16 %v4397, %v4395
    %v4464 = vpack.c.bf16 %v4402, %v4400
    %v4465 = vpack.c.bf16 %v4407, %v4405
    %v4466 = vpack.c.bf16 %v4412, %v4410
    %v4467 = vpack.c.bf16 %v4417, %v4415
    %v4468 = vpack.c.bf16 %v4422, %v4420
    %v4469 = vpack.c.bf16 %v4427, %v4425
    %v4470 = vpack.c.bf16 %v4432, %v4430
    %v4471 = vpack.c.bf16 %v4437, %v4435
    %v4488 = vunpack.c.l.b16 %v4440
    %v4489 = vunpack.c.h.b16 %v4440
    %v4490 = vunpack.c.l.b16 %v4441
    %v4491 = vunpack.c.h.b16 %v4441
    %v4492 = vunpack.c.l.b16 %v4442
    %v4493 = vunpack.c.h.b16 %v4442
    %v4494 = vunpack.c.l.b16 %v4443
    %v4495 = vunpack.c.h.b16 %v4443
    %v4496 = vunpack.c.l.b16 %v4444
    %v4497 = vunpack.c.h.b16 %v4444
    %v4498 = vunpack.c.l.b16 %v4445
    %v4499 = vunpack.c.h.b16 %v4445
    %v4500 = vunpack.c.l.b16 %v4446
    %v4501 = vunpack.c.h.b16 %v4446
    %v4502 = vunpack.c.l.b16 %v4447
    %v4503 = vunpack.c.h.b16 %v4447
    %v4504 = vunpack.c.l.b16 %v4448
    %v4505 = vunpack.c.h.b16 %v4448
    %v4506 = vunpack.c.l.b16 %v4449
    %v4507 = vunpack.c.h.b16 %v4449
    %v4508 = vunpack.c.l.b16 %v4450
    %v4509 = vunpack.c.h.b16 %v4450
    %v4510 = vunpack.c.l.b16 %v4451
    %v4511 = vunpack.c.h.b16 %v4451
    %v4512 = vunpack.c.l.b16 %v4452
    %v4513 = vunpack.c.h.b16 %v4452
    %v4514 = vunpack.c.l.b16 %v4453
    %v4515 = vunpack.c.h.b16 %v4453
    %v4516 = vunpack.c.l.b16 %v4454
    %v4517 = vunpack.c.h.b16 %v4454
    %v4518 = vunpack.c.l.b16 %v4455
    %v4519 = vunpack.c.h.b16 %v4455
    %v4520 = vpack.c.b16 %v4490, %v4488
    %v4521 = vpack.c.b16 %v4491, %v4489
    %v4522 = vpack.c.b16 %v4494, %v4492
    %v4523 = vpack.c.b16 %v4495, %v4493
    %v4524 = vpack.c.b16 %v4498, %v4496
    %v4525 = vpack.c.b16 %v4499, %v4497
    %v4526 = vpack.c.b16 %v4502, %v4500
    %v4527 = vpack.c.b16 %v4503, %v4501
    %v4528 = vpack.c.b16 %v4506, %v4504
    %v4529 = vpack.c.b16 %v4507, %v4505
    %v4530 = vpack.c.b16 %v4510, %v4508
    %v4531 = vpack.c.b16 %v4511, %v4509
    %v4532 = vpack.c.b16 %v4514, %v4512
    %v4533 = vpack.c.b16 %v4515, %v4513
    %v4534 = vpack.c.b16 %v4518, %v4516
    %v4535 = vpack.c.b16 %v4519, %v4517
    %4552 = vmatpush.bf16.msra.mxu0 %v4534
    %4553 = vmatpush.bf16.msra.mxu0 %v4532
    %4554 = vmatpush.bf16.msra.mxu0 %v4530
    %4555 = vmatpush.bf16.msra.mxu0 %v4528
    %4556 = vmatpush.bf16.msra.mxu0 %v4526
    %4557 = vmatpush.bf16.msra.mxu0 %v4524
    %4558 = vmatpush.bf16.msra.mxu0 %v4522
    %4559 = vmatpush.bf16.msra.mxu0 %v4520
    %4560 = vmatmul.bf16.gmra.mxu0 %v4456
    %v4561 = vpop.f32.mrf.mxu0
    %v4562 = vadd.f32 0.0, %v4561
    %v4563 = vpop.f32.mrf.mxu0
    %v4564 = vadd.f32 0.0, %v4563
    %4565 = vmatmul.bf16.gmra.mxu0 %v4457
    %v4566 = vpop.f32.mrf.mxu0
    %v4567 = vadd.f32 0.0, %v4566
    %v4568 = vpop.f32.mrf.mxu0
    %v4569 = vadd.f32 0.0, %v4568
    %4570 = vmatmul.bf16.gmra.mxu0 %v4458
    %v4571 = vpop.f32.mrf.mxu0
    %v4572 = vadd.f32 0.0, %v4571
    %v4573 = vpop.f32.mrf.mxu0
    %v4574 = vadd.f32 0.0, %v4573
    %4575 = vmatmul.bf16.gmra.mxu0 %v4459
    %v4576 = vpop.f32.mrf.mxu0
    %v4577 = vadd.f32 0.0, %v4576
    %v4578 = vpop.f32.mrf.mxu0
    %v4579 = vadd.f32 0.0, %v4578
    %4580 = vmatmul.bf16.gmra.mxu0 %v4460
    %v4581 = vpop.f32.mrf.mxu0
    %v4582 = vadd.f32 0.0, %v4581
    %v4583 = vpop.f32.mrf.mxu0
    %v4584 = vadd.f32 0.0, %v4583
    %4585 = vmatmul.bf16.gmra.mxu0 %v4461
    %v4586 = vpop.f32.mrf.mxu0
    %v4587 = vadd.f32 0.0, %v4586
    %v4588 = vpop.f32.mrf.mxu0
    %v4589 = vadd.f32 0.0, %v4588
    %4590 = vmatmul.bf16.gmra.mxu0 %v4462
    %v4591 = vpop.f32.mrf.mxu0
    %v4592 = vadd.f32 0.0, %v4591
    %v4593 = vpop.f32.mrf.mxu0
    %v4594 = vadd.f32 0.0, %v4593
    %4595 = vmatmul.bf16.gmra.mxu0 %v4463
    %v4596 = vpop.f32.mrf.mxu0
    %v4597 = vadd.f32 0.0, %v4596
    %v4598 = vpop.f32.mrf.mxu0
    %v4599 = vadd.f32 0.0, %v4598
    %4600 = vmatmul.bf16.gmra.mxu0 %v4464
    %v4601 = vpop.f32.mrf.mxu0
    %v4602 = vadd.f32 0.0, %v4601
    %v4603 = vpop.f32.mrf.mxu0
    %v4604 = vadd.f32 0.0, %v4603
    %4605 = vmatmul.bf16.gmra.mxu0 %v4465
    %v4606 = vpop.f32.mrf.mxu0
    %v4607 = vadd.f32 0.0, %v4606
    %v4608 = vpop.f32.mrf.mxu0
    %v4609 = vadd.f32 0.0, %v4608
    %4610 = vmatmul.bf16.gmra.mxu0 %v4466
    %v4611 = vpop.f32.mrf.mxu0
    %v4612 = vadd.f32 0.0, %v4611
    %v4613 = vpop.f32.mrf.mxu0
    %v4614 = vadd.f32 0.0, %v4613
    %4615 = vmatmul.bf16.gmra.mxu0 %v4467
    %v4616 = vpop.f32.mrf.mxu0
    %v4617 = vadd.f32 0.0, %v4616
    %v4618 = vpop.f32.mrf.mxu0
    %v4619 = vadd.f32 0.0, %v4618
    %4620 = vmatmul.bf16.gmra.mxu0 %v4468
    %v4621 = vpop.f32.mrf.mxu0
    %v4622 = vadd.f32 0.0, %v4621
    %v4623 = vpop.f32.mrf.mxu0
    %v4624 = vadd.f32 0.0, %v4623
    %4625 = vmatmul.bf16.gmra.mxu0 %v4469
    %v4626 = vpop.f32.mrf.mxu0
    %v4627 = vadd.f32 0.0, %v4626
    %v4628 = vpop.f32.mrf.mxu0
    %v4629 = vadd.f32 0.0, %v4628
    %4630 = vmatmul.bf16.gmra.mxu0 %v4470
    %v4631 = vpop.f32.mrf.mxu0
    %v4632 = vadd.f32 0.0, %v4631
    %v4633 = vpop.f32.mrf.mxu0
    %v4634 = vadd.f32 0.0, %v4633
    %4635 = vmatmul.bf16.gmra.mxu0 %v4471
    %v4636 = vpop.f32.mrf.mxu0
    %v4637 = vadd.f32 0.0, %v4636
    %v4638 = vpop.f32.mrf.mxu0
    %v4639 = vadd.f32 0.0, %v4638
    %4640 = vdwg.mxu0
    %4641 = vmatpush.bf16.msra.mxu0 %v4535
    %4642 = vmatpush.bf16.msra.mxu0 %v4533
    %4643 = vmatpush.bf16.msra.mxu0 %v4531
    %4644 = vmatpush.bf16.msra.mxu0 %v4529
    %4645 = vmatpush.bf16.msra.mxu0 %v4527
    %4646 = vmatpush.bf16.msra.mxu0 %v4525
    %4647 = vmatpush.bf16.msra.mxu0 %v4523
    %4648 = vmatpush.bf16.msra.mxu0 %v4521
    %4649 = vmatmul.bf16.gmra.mxu0 %v4456
    %v4650 = vpop.f32.mrf.mxu0
    %v4651 = vadd.f32 0.0, %v4650
    %v4652 = vpop.f32.mrf.mxu0
    %v4653 = vadd.f32 0.0, %v4652
    %4654 = vmatmul.bf16.gmra.mxu0 %v4457
    %v4655 = vpop.f32.mrf.mxu0
    %v4656 = vadd.f32 0.0, %v4655
    %v4657 = vpop.f32.mrf.mxu0
    %v4658 = vadd.f32 0.0, %v4657
    %4659 = vmatmul.bf16.gmra.mxu0 %v4458
    %v4660 = vpop.f32.mrf.mxu0
    %v4661 = vadd.f32 0.0, %v4660
    %v4662 = vpop.f32.mrf.mxu0
    %v4663 = vadd.f32 0.0, %v4662
    %4664 = vmatmul.bf16.gmra.mxu0 %v4459
    %v4665 = vpop.f32.mrf.mxu0
    %v4666 = vadd.f32 0.0, %v4665
    %v4667 = vpop.f32.mrf.mxu0
    %v4668 = vadd.f32 0.0, %v4667
    %4669 = vmatmul.bf16.gmra.mxu0 %v4460
    %v4670 = vpop.f32.mrf.mxu0
    %v4671 = vadd.f32 0.0, %v4670
    %v4672 = vpop.f32.mrf.mxu0
    %v4673 = vadd.f32 0.0, %v4672
    %4674 = vmatmul.bf16.gmra.mxu0 %v4461
    %v4675 = vpop.f32.mrf.mxu0
    %v4676 = vadd.f32 0.0, %v4675
    %v4677 = vpop.f32.mrf.mxu0
    %v4678 = vadd.f32 0.0, %v4677
    %4679 = vmatmul.bf16.gmra.mxu0 %v4462
    %v4680 = vpop.f32.mrf.mxu0
    %v4681 = vadd.f32 0.0, %v4680
    %v4682 = vpop.f32.mrf.mxu0
    %v4683 = vadd.f32 0.0, %v4682
    %4684 = vmatmul.bf16.gmra.mxu0 %v4463
    %v4685 = vpop.f32.mrf.mxu0
    %v4686 = vadd.f32 0.0, %v4685
    %v4687 = vpop.f32.mrf.mxu0
    %v4688 = vadd.f32 0.0, %v4687
    %4689 = vmatmul.bf16.gmra.mxu0 %v4464
    %v4690 = vpop.f32.mrf.mxu0
    %v4691 = vadd.f32 0.0, %v4690
    %v4692 = vpop.f32.mrf.mxu0
    %v4693 = vadd.f32 0.0, %v4692
    %4694 = vmatmul.bf16.gmra.mxu0 %v4465
    %v4695 = vpop.f32.mrf.mxu0
    %v4696 = vadd.f32 0.0, %v4695
    %v4697 = vpop.f32.mrf.mxu0
    %v4698 = vadd.f32 0.0, %v4697
    %4699 = vmatmul.bf16.gmra.mxu0 %v4466
    %v4700 = vpop.f32.mrf.mxu0
    %v4701 = vadd.f32 0.0, %v4700
    %v4702 = vpop.f32.mrf.mxu0
    %v4703 = vadd.f32 0.0, %v4702
    %4704 = vmatmul.bf16.gmra.mxu0 %v4467
    %v4705 = vpop.f32.mrf.mxu0
    %v4706 = vadd.f32 0.0, %v4705
    %v4707 = vpop.f32.mrf.mxu0
    %v4708 = vadd.f32 0.0, %v4707
    %4709 = vmatmul.bf16.gmra.mxu0 %v4468
    %v4710 = vpop.f32.mrf.mxu0
    %v4711 = vadd.f32 0.0, %v4710
    %v4712 = vpop.f32.mrf.mxu0
    %v4713 = vadd.f32 0.0, %v4712
    %4714 = vmatmul.bf16.gmra.mxu0 %v4469
    %v4715 = vpop.f32.mrf.mxu0
    %v4716 = vadd.f32 0.0, %v4715
    %v4717 = vpop.f32.mrf.mxu0
    %v4718 = vadd.f32 0.0, %v4717
    %4719 = vmatmul.bf16.gmra.mxu0 %v4470
    %v4720 = vpop.f32.mrf.mxu0
    %v4721 = vadd.f32 0.0, %v4720
    %v4722 = vpop.f32.mrf.mxu0
    %v4723 = vadd.f32 0.0, %v4722
    %4724 = vmatmul.bf16.gmra.mxu0 %v4471
    %v4725 = vpop.f32.mrf.mxu0
    %v4726 = vadd.f32 0.0, %v4725
    %v4727 = vpop.f32.mrf.mxu0
    %v4728 = vadd.f32 0.0, %v4727
    %4729 = vdwg.mxu0
    %v4746 = vunpack.c.l.b16 %v4189
    %v4747 = vunpack.c.h.b16 %v4189
    %v4748 = vunpack.c.l.b16 %v4190
    %v4749 = vunpack.c.h.b16 %v4190
    %v4750 = vunpack.c.l.b16 %v4191
    %v4751 = vunpack.c.h.b16 %v4191
    %v4752 = vunpack.c.l.b16 %v4192
    %v4753 = vunpack.c.h.b16 %v4192
    %v4754 = vunpack.c.l.b16 %v4193
    %v4755 = vunpack.c.h.b16 %v4193
    %v4756 = vunpack.c.l.b16 %v4194
    %v4757 = vunpack.c.h.b16 %v4194
    %v4758 = vunpack.c.l.b16 %v4195
    %v4759 = vunpack.c.h.b16 %v4195
    %v4760 = vunpack.c.l.b16 %v4196
    %v4761 = vunpack.c.h.b16 %v4196
    %v4762 = vunpack.c.l.b16 %v4197
    %v4763 = vunpack.c.h.b16 %v4197
    %v4764 = vunpack.c.l.b16 %v4198
    %v4765 = vunpack.c.h.b16 %v4198
    %v4766 = vunpack.c.l.b16 %v4199
    %v4767 = vunpack.c.h.b16 %v4199
    %v4768 = vunpack.c.l.b16 %v4200
    %v4769 = vunpack.c.h.b16 %v4200
    %v4770 = vunpack.c.l.b16 %v4201
    %v4771 = vunpack.c.h.b16 %v4201
    %v4772 = vunpack.c.l.b16 %v4202
    %v4773 = vunpack.c.h.b16 %v4202
    %v4774 = vunpack.c.l.b16 %v4203
    %v4775 = vunpack.c.h.b16 %v4203
    %v4776 = vunpack.c.l.b16 %v4204
    %v4777 = vunpack.c.h.b16 %v4204
    %v4778 = vpack.c.b16 %v4748, %v4746
    %v4779 = vpack.c.b16 %v4749, %v4747
    %v4780 = vpack.c.b16 %v4752, %v4750
    %v4781 = vpack.c.b16 %v4753, %v4751
    %v4782 = vpack.c.b16 %v4756, %v4754
    %v4783 = vpack.c.b16 %v4757, %v4755
    %v4784 = vpack.c.b16 %v4760, %v4758
    %v4785 = vpack.c.b16 %v4761, %v4759
    %v4786 = vpack.c.b16 %v4764, %v4762
    %v4787 = vpack.c.b16 %v4765, %v4763
    %v4788 = vpack.c.b16 %v4768, %v4766
    %v4789 = vpack.c.b16 %v4769, %v4767
    %v4790 = vpack.c.b16 %v4772, %v4770
    %v4791 = vpack.c.b16 %v4773, %v4771
    %v4792 = vpack.c.b16 %v4776, %v4774
    %v4793 = vpack.c.b16 %v4777, %v4775
    %4810 = vmatpush.bf16.msra.mxu0 %v4792
    %4811 = vmatpush.bf16.msra.mxu0 %v4790
    %4812 = vmatpush.bf16.msra.mxu0 %v4788
    %4813 = vmatpush.bf16.msra.mxu0 %v4786
    %4814 = vmatpush.bf16.msra.mxu0 %v4784
    %4815 = vmatpush.bf16.msra.mxu0 %v4782
    %4816 = vmatpush.bf16.msra.mxu0 %v4780
    %4817 = vmatpush.bf16.msra.mxu0 %v4778
    %4818 = vmatmul.bf16.gmra.mxu0 %v4205
    %v4819 = vpop.f32.mrf.mxu0
    %v4820 = vadd.f32 %v4562, %v4819
    %v4821 = vpop.f32.mrf.mxu0
    %v4822 = vadd.f32 %v4564, %v4821
    %4823 = vmatmul.bf16.gmra.mxu0 %v4206
    %v4824 = vpop.f32.mrf.mxu0
    %v4825 = vadd.f32 %v4567, %v4824
    %v4826 = vpop.f32.mrf.mxu0
    %v4827 = vadd.f32 %v4569, %v4826
    %4828 = vmatmul.bf16.gmra.mxu0 %v4207
    %v4829 = vpop.f32.mrf.mxu0
    %v4830 = vadd.f32 %v4572, %v4829
    %v4831 = vpop.f32.mrf.mxu0
    %v4832 = vadd.f32 %v4574, %v4831
    %4833 = vmatmul.bf16.gmra.mxu0 %v4208
    %v4834 = vpop.f32.mrf.mxu0
    %v4835 = vadd.f32 %v4577, %v4834
    %v4836 = vpop.f32.mrf.mxu0
    %v4837 = vadd.f32 %v4579, %v4836
    %4838 = vmatmul.bf16.gmra.mxu0 %v4209
    %v4839 = vpop.f32.mrf.mxu0
    %v4840 = vadd.f32 %v4582, %v4839
    %v4841 = vpop.f32.mrf.mxu0
    %v4842 = vadd.f32 %v4584, %v4841
    %4843 = vmatmul.bf16.gmra.mxu0 %v4210
    %v4844 = vpop.f32.mrf.mxu0
    %v4845 = vadd.f32 %v4587, %v4844
    %v4846 = vpop.f32.mrf.mxu0
    %v4847 = vadd.f32 %v4589, %v4846
    %4848 = vmatmul.bf16.gmra.mxu0 %v4211
    %v4849 = vpop.f32.mrf.mxu0
    %v4850 = vadd.f32 %v4592, %v4849
    %v4851 = vpop.f32.mrf.mxu0
    %v4852 = vadd.f32 %v4594, %v4851
    %4853 = vmatmul.bf16.gmra.mxu0 %v4212
    %v4854 = vpop.f32.mrf.mxu0
    %v4855 = vadd.f32 %v4597, %v4854
    %v4856 = vpop.f32.mrf.mxu0
    %v4857 = vadd.f32 %v4599, %v4856
    %4858 = vmatmul.bf16.gmra.mxu0 %v4213
    %v4859 = vpop.f32.mrf.mxu0
    %v4860 = vadd.f32 %v4602, %v4859
    %v4861 = vpop.f32.mrf.mxu0
    %v4862 = vadd.f32 %v4604, %v4861
    %4863 = vmatmul.bf16.gmra.mxu0 %v4214
    %v4864 = vpop.f32.mrf.mxu0
    %v4865 = vadd.f32 %v4607, %v4864
    %v4866 = vpop.f32.mrf.mxu0
    %v4867 = vadd.f32 %v4609, %v4866
    %4868 = vmatmul.bf16.gmra.mxu0 %v4215
    %v4869 = vpop.f32.mrf.mxu0
    %v4870 = vadd.f32 %v4612, %v4869
    %v4871 = vpop.f32.mrf.mxu0
    %v4872 = vadd.f32 %v4614, %v4871
    %4873 = vmatmul.bf16.gmra.mxu0 %v4216
    %v4874 = vpop.f32.mrf.mxu0
    %v4875 = vadd.f32 %v4617, %v4874
    %v4876 = vpop.f32.mrf.mxu0
    %v4877 = vadd.f32 %v4619, %v4876
    %4878 = vmatmul.bf16.gmra.mxu0 %v4217
    %v4879 = vpop.f32.mrf.mxu0
    %v4880 = vadd.f32 %v4622, %v4879
    %v4881 = vpop.f32.mrf.mxu0
    %v4882 = vadd.f32 %v4624, %v4881
    %4883 = vmatmul.bf16.gmra.mxu0 %v4218
    %v4884 = vpop.f32.mrf.mxu0
    %v4885 = vadd.f32 %v4627, %v4884
    %v4886 = vpop.f32.mrf.mxu0
    %v4887 = vadd.f32 %v4629, %v4886
    %4888 = vmatmul.bf16.gmra.mxu0 %v4219
    %v4889 = vpop.f32.mrf.mxu0
    %v4890 = vadd.f32 %v4632, %v4889
    %v4891 = vpop.f32.mrf.mxu0
    %v4892 = vadd.f32 %v4634, %v4891
    %4893 = vmatmul.bf16.gmra.mxu0 %v4220
    %v4894 = vpop.f32.mrf.mxu0
    %v4895 = vadd.f32 %v4637, %v4894
    %v4896 = vpop.f32.mrf.mxu0
    %v4897 = vadd.f32 %v4639, %v4896
    %4898 = vdwg.mxu0
    %4899 = vmatpush.bf16.msra.mxu0 %v4793
    %4900 = vmatpush.bf16.msra.mxu0 %v4791
    %4901 = vmatpush.bf16.msra.mxu0 %v4789
    %4902 = vmatpush.bf16.msra.mxu0 %v4787
    %4903 = vmatpush.bf16.msra.mxu0 %v4785
    %4904 = vmatpush.bf16.msra.mxu0 %v4783
    %4905 = vmatpush.bf16.msra.mxu0 %v4781
    %4906 = vmatpush.bf16.msra.mxu0 %v4779
    %4907 = vmatmul.bf16.gmra.mxu0 %v4205
    %v4908 = vpop.f32.mrf.mxu0
    %v4909 = vadd.f32 %v4651, %v4908
    %v4910 = vpop.f32.mrf.mxu0
    %v4911 = vadd.f32 %v4653, %v4910
    %4912 = vmatmul.bf16.gmra.mxu0 %v4206
    %v4913 = vpop.f32.mrf.mxu0
    %v4914 = vadd.f32 %v4656, %v4913
    %v4915 = vpop.f32.mrf.mxu0
    %v4916 = vadd.f32 %v4658, %v4915
    %4917 = vmatmul.bf16.gmra.mxu0 %v4207
    %v4918 = vpop.f32.mrf.mxu0
    %v4919 = vadd.f32 %v4661, %v4918
    %v4920 = vpop.f32.mrf.mxu0
    %v4921 = vadd.f32 %v4663, %v4920
    %4922 = vmatmul.bf16.gmra.mxu0 %v4208
    %v4923 = vpop.f32.mrf.mxu0
    %v4924 = vadd.f32 %v4666, %v4923
    %v4925 = vpop.f32.mrf.mxu0
    %v4926 = vadd.f32 %v4668, %v4925
    %4927 = vmatmul.bf16.gmra.mxu0 %v4209
    %v4928 = vpop.f32.mrf.mxu0
    %v4929 = vadd.f32 %v4671, %v4928
    %v4930 = vpop.f32.mrf.mxu0
    %v4931 = vadd.f32 %v4673, %v4930
    %4932 = vmatmul.bf16.gmra.mxu0 %v4210
    %v4933 = vpop.f32.mrf.mxu0
    %v4934 = vadd.f32 %v4676, %v4933
    %v4935 = vpop.f32.mrf.mxu0
    %v4936 = vadd.f32 %v4678, %v4935
    %4937 = vmatmul.bf16.gmra.mxu0 %v4211
    %v4938 = vpop.f32.mrf.mxu0
    %v4939 = vadd.f32 %v4681, %v4938
    %v4940 = vpop.f32.mrf.mxu0
    %v4941 = vadd.f32 %v4683, %v4940
    %4942 = vmatmul.bf16.gmra.mxu0 %v4212
    %v4943 = vpop.f32.mrf.mxu0
    %v4944 = vadd.f32 %v4686, %v4943
    %v4945 = vpop.f32.mrf.mxu0
    %v4946 = vadd.f32 %v4688, %v4945
    %4947 = vmatmul.bf16.gmra.mxu0 %v4213
    %v4948 = vpop.f32.mrf.mxu0
    %v4949 = vadd.f32 %v4691, %v4948
    %v4950 = vpop.f32.mrf.mxu0
    %v4951 = vadd.f32 %v4693, %v4950
    %4952 = vmatmul.bf16.gmra.mxu0 %v4214
    %v4953 = vpop.f32.mrf.mxu0
    %v4954 = vadd.f32 %v4696, %v4953
    %v4955 = vpop.f32.mrf.mxu0
    %v4956 = vadd.f32 %v4698, %v4955
    %4957 = vmatmul.bf16.gmra.mxu0 %v4215
    %v4958 = vpop.f32.mrf.mxu0
    %v4959 = vadd.f32 %v4701, %v4958
    %v4960 = vpop.f32.mrf.mxu0
    %v4961 = vadd.f32 %v4703, %v4960
    %4962 = vmatmul.bf16.gmra.mxu0 %v4216
    %v4963 = vpop.f32.mrf.mxu0
    %v4964 = vadd.f32 %v4706, %v4963
    %v4965 = vpop.f32.mrf.mxu0
    %v4966 = vadd.f32 %v4708, %v4965
    %4967 = vmatmul.bf16.gmra.mxu0 %v4217
    %v4968 = vpop.f32.mrf.mxu0
    %v4969 = vadd.f32 %v4711, %v4968
    %v4970 = vpop.f32.mrf.mxu0
    %v4971 = vadd.f32 %v4713, %v4970
    %4972 = vmatmul.bf16.gmra.mxu0 %v4218
    %v4973 = vpop.f32.mrf.mxu0
    %v4974 = vadd.f32 %v4716, %v4973
    %v4975 = vpop.f32.mrf.mxu0
    %v4976 = vadd.f32 %v4718, %v4975
    %4977 = vmatmul.bf16.gmra.mxu0 %v4219
    %v4978 = vpop.f32.mrf.mxu0
    %v4979 = vadd.f32 %v4721, %v4978
    %v4980 = vpop.f32.mrf.mxu0
    %v4981 = vadd.f32 %v4723, %v4980
    %4982 = vmatmul.bf16.gmra.mxu0 %v4220
    %v4983 = vpop.f32.mrf.mxu0
    %v4984 = vadd.f32 %v4726, %v4983
    %v4985 = vpop.f32.mrf.mxu0
    %v4986 = vadd.f32 %v4728, %v4985
    %4987 = vdwg.mxu0
    %s4988 = scalar_lea.vmem %s19, 256
    %v4989 = vld [vmem:[%s4988] sm:$0xf]
    %v4990 = vld [vmem:[%s4988 + $0x4] sm:$0xf]
    %v4991 = vld [vmem:[%s4988 + $0x8] sm:$0xf]
    %v4992 = vld [vmem:[%s4988 + $0xc] sm:$0xf]
    %v4993 = vld [vmem:[%s4988 + $0x10] sm:$0xf]
    %v4994 = vld [vmem:[%s4988 + $0x14] sm:$0xf]
    %v4995 = vld [vmem:[%s4988 + $0x18] sm:$0xf]
    %v4996 = vld [vmem:[%s4988 + $0x1c] sm:$0xf]
    %v4997 = vld [vmem:[%s4988 + $0x20] sm:$0xf]
    %v4998 = vld [vmem:[%s4988 + $0x24] sm:$0xf]
    %v4999 = vld [vmem:[%s4988 + $0x28] sm:$0xf]
    %v5000 = vld [vmem:[%s4988 + $0x2c] sm:$0xf]
    %v5001 = vld [vmem:[%s4988 + $0x30] sm:$0xf]
    %v5002 = vld [vmem:[%s4988 + $0x34] sm:$0xf]
    %v5003 = vld [vmem:[%s4988 + $0x38] sm:$0xf]
    %v5004 = vld [vmem:[%s4988 + $0x3c] sm:$0xf]
    %v5005 = vld [vmem:[%s4988 + $0x40] sm:$0xf]
    %v5006 = vld [vmem:[%s4988 + $0x44] sm:$0xf]
    %v5007 = vld [vmem:[%s4988 + $0x48] sm:$0xf]
    %v5008 = vld [vmem:[%s4988 + $0x4c] sm:$0xf]
    %v5009 = vld [vmem:[%s4988 + $0x50] sm:$0xf]
    %v5010 = vld [vmem:[%s4988 + $0x54] sm:$0xf]
    %v5011 = vld [vmem:[%s4988 + $0x58] sm:$0xf]
    %v5012 = vld [vmem:[%s4988 + $0x5c] sm:$0xf]
    %v5013 = vld [vmem:[%s4988 + $0x60] sm:$0xf]
    %v5014 = vld [vmem:[%s4988 + $0x64] sm:$0xf]
    %v5015 = vld [vmem:[%s4988 + $0x68] sm:$0xf]
    %v5016 = vld [vmem:[%s4988 + $0x6c] sm:$0xf]
    %v5017 = vld [vmem:[%s4988 + $0x70] sm:$0xf]
    %v5018 = vld [vmem:[%s4988 + $0x74] sm:$0xf]
    %v5019 = vld [vmem:[%s4988 + $0x78] sm:$0xf]
    %v5020 = vld [vmem:[%s4988 + $0x7c] sm:$0xf]
    %v5053 = vunpack.c.l.b16 %v4989
    %v5054 = vunpack.c.l.b16 %v4990
    %v5055 = vunpack.c.l.b16 %v4991
    %v5056 = vunpack.c.l.b16 %v4992
    %v5057 = vunpack.c.l.b16 %v4993
    %v5058 = vunpack.c.l.b16 %v4994
    %v5059 = vunpack.c.l.b16 %v4995
    %v5060 = vunpack.c.l.b16 %v4996
    %v5061 = vunpack.c.l.b16 %v4997
    %v5062 = vunpack.c.l.b16 %v4998
    %v5063 = vunpack.c.l.b16 %v4999
    %v5064 = vunpack.c.l.b16 %v5000
    %v5065 = vunpack.c.l.b16 %v5001
    %v5066 = vunpack.c.l.b16 %v5002
    %v5067 = vunpack.c.l.b16 %v5003
    %v5068 = vunpack.c.l.b16 %v5004
    %v5069 = vunpack.c.l.b16 %v5005
    %v5070 = vunpack.c.l.b16 %v5006
    %v5071 = vunpack.c.l.b16 %v5007
    %v5072 = vunpack.c.l.b16 %v5008
    %v5073 = vunpack.c.l.b16 %v5009
    %v5074 = vunpack.c.l.b16 %v5010
    %v5075 = vunpack.c.l.b16 %v5011
    %v5076 = vunpack.c.l.b16 %v5012
    %v5077 = vunpack.c.l.b16 %v5013
    %v5078 = vunpack.c.l.b16 %v5014
    %v5079 = vunpack.c.l.b16 %v5015
    %v5080 = vunpack.c.l.b16 %v5016
    %v5081 = vunpack.c.l.b16 %v5017
    %v5082 = vunpack.c.l.b16 %v5018
    %v5083 = vunpack.c.l.b16 %v5019
    %v5084 = vunpack.c.l.b16 %v5020
    %v5085 = vpack.c.b16 %v5054, %v5053
    %v5086 = vpack.c.b16 %v5056, %v5055
    %v5087 = vpack.c.b16 %v5058, %v5057
    %v5088 = vpack.c.b16 %v5060, %v5059
    %v5089 = vpack.c.b16 %v5062, %v5061
    %v5090 = vpack.c.b16 %v5064, %v5063
    %v5091 = vpack.c.b16 %v5066, %v5065
    %v5092 = vpack.c.b16 %v5068, %v5067
    %v5093 = vpack.c.b16 %v5070, %v5069
    %v5094 = vpack.c.b16 %v5072, %v5071
    %v5095 = vpack.c.b16 %v5074, %v5073
    %v5096 = vpack.c.b16 %v5076, %v5075
    %v5097 = vpack.c.b16 %v5078, %v5077
    %v5098 = vpack.c.b16 %v5080, %v5079
    %v5099 = vpack.c.b16 %v5082, %v5081
    %v5100 = vpack.c.b16 %v5084, %v5083
    %5117 = vmatpush.bf16.msra.mxu0 %v4003
    %5118 = vmatpush.bf16.msra.mxu0 %v4002
    %5119 = vmatpush.bf16.msra.mxu0 %v4001
    %5120 = vmatpush.bf16.msra.mxu0 %v4000
    %5121 = vmatpush.bf16.msra.mxu0 %v3999
    %5122 = vmatpush.bf16.msra.mxu0 %v3998
    %5123 = vmatpush.bf16.msra.mxu0 %v3997
    %5124 = vmatpush.bf16.msra.mxu0 %v3996
    %5125 = vmatmul.bf16.gmra.mxu0 %v5085
    %v5126 = vpop.f32.mrf.mxu0
    %v5127 = vadd.f32 0.0, %v5126
    %v5128 = vpop.f32.mrf.mxu0
    %v5129 = vadd.f32 0.0, %v5128
    %5130 = vmatmul.bf16.gmra.mxu0 %v5086
    %v5131 = vpop.f32.mrf.mxu0
    %v5132 = vadd.f32 0.0, %v5131
    %v5133 = vpop.f32.mrf.mxu0
    %v5134 = vadd.f32 0.0, %v5133
    %5135 = vmatmul.bf16.gmra.mxu0 %v5087
    %v5136 = vpop.f32.mrf.mxu0
    %v5137 = vadd.f32 0.0, %v5136
    %v5138 = vpop.f32.mrf.mxu0
    %v5139 = vadd.f32 0.0, %v5138
    %5140 = vmatmul.bf16.gmra.mxu0 %v5088
    %v5141 = vpop.f32.mrf.mxu0
    %v5142 = vadd.f32 0.0, %v5141
    %v5143 = vpop.f32.mrf.mxu0
    %v5144 = vadd.f32 0.0, %v5143
    %5145 = vmatmul.bf16.gmra.mxu0 %v5089
    %v5146 = vpop.f32.mrf.mxu0
    %v5147 = vadd.f32 0.0, %v5146
    %v5148 = vpop.f32.mrf.mxu0
    %v5149 = vadd.f32 0.0, %v5148
    %5150 = vmatmul.bf16.gmra.mxu0 %v5090
    %v5151 = vpop.f32.mrf.mxu0
    %v5152 = vadd.f32 0.0, %v5151
    %v5153 = vpop.f32.mrf.mxu0
    %v5154 = vadd.f32 0.0, %v5153
    %5155 = vmatmul.bf16.gmra.mxu0 %v5091
    %v5156 = vpop.f32.mrf.mxu0
    %v5157 = vadd.f32 0.0, %v5156
    %v5158 = vpop.f32.mrf.mxu0
    %v5159 = vadd.f32 0.0, %v5158
    %5160 = vmatmul.bf16.gmra.mxu0 %v5092
    %v5161 = vpop.f32.mrf.mxu0
    %v5162 = vadd.f32 0.0, %v5161
    %v5163 = vpop.f32.mrf.mxu0
    %v5164 = vadd.f32 0.0, %v5163
    %5165 = vmatmul.bf16.gmra.mxu0 %v5093
    %v5166 = vpop.f32.mrf.mxu0
    %v5167 = vadd.f32 0.0, %v5166
    %v5168 = vpop.f32.mrf.mxu0
    %v5169 = vadd.f32 0.0, %v5168
    %5170 = vmatmul.bf16.gmra.mxu0 %v5094
    %v5171 = vpop.f32.mrf.mxu0
    %v5172 = vadd.f32 0.0, %v5171
    %v5173 = vpop.f32.mrf.mxu0
    %v5174 = vadd.f32 0.0, %v5173
    %5175 = vmatmul.bf16.gmra.mxu0 %v5095
    %v5176 = vpop.f32.mrf.mxu0
    %v5177 = vadd.f32 0.0, %v5176
    %v5178 = vpop.f32.mrf.mxu0
    %v5179 = vadd.f32 0.0, %v5178
    %5180 = vmatmul.bf16.gmra.mxu0 %v5096
    %v5181 = vpop.f32.mrf.mxu0
    %v5182 = vadd.f32 0.0, %v5181
    %v5183 = vpop.f32.mrf.mxu0
    %v5184 = vadd.f32 0.0, %v5183
    %5185 = vmatmul.bf16.gmra.mxu0 %v5097
    %v5186 = vpop.f32.mrf.mxu0
    %v5187 = vadd.f32 0.0, %v5186
    %v5188 = vpop.f32.mrf.mxu0
    %v5189 = vadd.f32 0.0, %v5188
    %5190 = vmatmul.bf16.gmra.mxu0 %v5098
    %v5191 = vpop.f32.mrf.mxu0
    %v5192 = vadd.f32 0.0, %v5191
    %v5193 = vpop.f32.mrf.mxu0
    %v5194 = vadd.f32 0.0, %v5193
    %5195 = vmatmul.bf16.gmra.mxu0 %v5099
    %v5196 = vpop.f32.mrf.mxu0
    %v5197 = vadd.f32 0.0, %v5196
    %v5198 = vpop.f32.mrf.mxu0
    %v5199 = vadd.f32 0.0, %v5198
    %5200 = vmatmul.bf16.gmra.mxu0 %v5100
    %v5201 = vpop.f32.mrf.mxu0
    %v5202 = vadd.f32 0.0, %v5201
    %v5203 = vpop.f32.mrf.mxu0
    %v5204 = vadd.f32 0.0, %v5203
    %5205 = vdwg.mxu0
    %s5206 = scalar_lea.vmem %s20, 256
    %v5207 = vld [vmem:[%s5206] sm:$0xff]
    %v5208 = vld [vmem:[%s5206 + $0x8] sm:$0xff]
    %v5209 = vld [vmem:[%s5206 + $0x10] sm:$0xff]
    %v5210 = vld [vmem:[%s5206 + $0x18] sm:$0xff]
    %v5211 = vld [vmem:[%s5206 + $0x20] sm:$0xff]
    %v5212 = vld [vmem:[%s5206 + $0x28] sm:$0xff]
    %v5213 = vld [vmem:[%s5206 + $0x30] sm:$0xff]
    %v5214 = vld [vmem:[%s5206 + $0x38] sm:$0xff]
    %v5215 = vld [vmem:[%s5206 + $0x40] sm:$0xff]
    %v5216 = vld [vmem:[%s5206 + $0x48] sm:$0xff]
    %v5217 = vld [vmem:[%s5206 + $0x50] sm:$0xff]
    %v5218 = vld [vmem:[%s5206 + $0x58] sm:$0xff]
    %v5219 = vld [vmem:[%s5206 + $0x60] sm:$0xff]
    %v5220 = vld [vmem:[%s5206 + $0x68] sm:$0xff]
    %v5221 = vld [vmem:[%s5206 + $0x70] sm:$0xff]
    %v5222 = vld [vmem:[%s5206 + $0x78] sm:$0xff]
    %v5223 = vpack.c.bf16 %v5129, %v5127
    %v5224 = vpack.c.bf16 %v5134, %v5132
    %v5225 = vpack.c.bf16 %v5139, %v5137
    %v5226 = vpack.c.bf16 %v5144, %v5142
    %v5227 = vpack.c.bf16 %v5149, %v5147
    %v5228 = vpack.c.bf16 %v5154, %v5152
    %v5229 = vpack.c.bf16 %v5159, %v5157
    %v5230 = vpack.c.bf16 %v5164, %v5162
    %v5231 = vpack.c.bf16 %v5169, %v5167
    %v5232 = vpack.c.bf16 %v5174, %v5172
    %v5233 = vpack.c.bf16 %v5179, %v5177
    %v5234 = vpack.c.bf16 %v5184, %v5182
    %v5235 = vpack.c.bf16 %v5189, %v5187
    %v5236 = vpack.c.bf16 %v5194, %v5192
    %v5237 = vpack.c.bf16 %v5199, %v5197
    %v5238 = vpack.c.bf16 %v5204, %v5202
    %v5255 = vunpack.c.l.b16 %v5207
    %v5256 = vunpack.c.h.b16 %v5207
    %v5257 = vunpack.c.l.b16 %v5208
    %v5258 = vunpack.c.h.b16 %v5208
    %v5259 = vunpack.c.l.b16 %v5209
    %v5260 = vunpack.c.h.b16 %v5209
    %v5261 = vunpack.c.l.b16 %v5210
    %v5262 = vunpack.c.h.b16 %v5210
    %v5263 = vunpack.c.l.b16 %v5211
    %v5264 = vunpack.c.h.b16 %v5211
    %v5265 = vunpack.c.l.b16 %v5212
    %v5266 = vunpack.c.h.b16 %v5212
    %v5267 = vunpack.c.l.b16 %v5213
    %v5268 = vunpack.c.h.b16 %v5213
    %v5269 = vunpack.c.l.b16 %v5214
    %v5270 = vunpack.c.h.b16 %v5214
    %v5271 = vunpack.c.l.b16 %v5215
    %v5272 = vunpack.c.h.b16 %v5215
    %v5273 = vunpack.c.l.b16 %v5216
    %v5274 = vunpack.c.h.b16 %v5216
    %v5275 = vunpack.c.l.b16 %v5217
    %v5276 = vunpack.c.h.b16 %v5217
    %v5277 = vunpack.c.l.b16 %v5218
    %v5278 = vunpack.c.h.b16 %v5218
    %v5279 = vunpack.c.l.b16 %v5219
    %v5280 = vunpack.c.h.b16 %v5219
    %v5281 = vunpack.c.l.b16 %v5220
    %v5282 = vunpack.c.h.b16 %v5220
    %v5283 = vunpack.c.l.b16 %v5221
    %v5284 = vunpack.c.h.b16 %v5221
    %v5285 = vunpack.c.l.b16 %v5222
    %v5286 = vunpack.c.h.b16 %v5222
    %v5287 = vpack.c.b16 %v5257, %v5255
    %v5288 = vpack.c.b16 %v5258, %v5256
    %v5289 = vpack.c.b16 %v5261, %v5259
    %v5290 = vpack.c.b16 %v5262, %v5260
    %v5291 = vpack.c.b16 %v5265, %v5263
    %v5292 = vpack.c.b16 %v5266, %v5264
    %v5293 = vpack.c.b16 %v5269, %v5267
    %v5294 = vpack.c.b16 %v5270, %v5268
    %v5295 = vpack.c.b16 %v5273, %v5271
    %v5296 = vpack.c.b16 %v5274, %v5272
    %v5297 = vpack.c.b16 %v5277, %v5275
    %v5298 = vpack.c.b16 %v5278, %v5276
    %v5299 = vpack.c.b16 %v5281, %v5279
    %v5300 = vpack.c.b16 %v5282, %v5280
    %v5301 = vpack.c.b16 %v5285, %v5283
    %v5302 = vpack.c.b16 %v5286, %v5284
    %5319 = vmatpush.bf16.msra.mxu0 %v5301
    %5320 = vmatpush.bf16.msra.mxu0 %v5299
    %5321 = vmatpush.bf16.msra.mxu0 %v5297
    %5322 = vmatpush.bf16.msra.mxu0 %v5295
    %5323 = vmatpush.bf16.msra.mxu0 %v5293
    %5324 = vmatpush.bf16.msra.mxu0 %v5291
    %5325 = vmatpush.bf16.msra.mxu0 %v5289
    %5326 = vmatpush.bf16.msra.mxu0 %v5287
    %5327 = vmatmul.bf16.gmra.mxu0 %v5223
    %v5328 = vpop.f32.mrf.mxu0
    %v5329 = vadd.f32 0.0, %v5328
    %v5330 = vpop.f32.mrf.mxu0
    %v5331 = vadd.f32 0.0, %v5330
    %5332 = vmatmul.bf16.gmra.mxu0 %v5224
    %v5333 = vpop.f32.mrf.mxu0
    %v5334 = vadd.f32 0.0, %v5333
    %v5335 = vpop.f32.mrf.mxu0
    %v5336 = vadd.f32 0.0, %v5335
    %5337 = vmatmul.bf16.gmra.mxu0 %v5225
    %v5338 = vpop.f32.mrf.mxu0
    %v5339 = vadd.f32 0.0, %v5338
    %v5340 = vpop.f32.mrf.mxu0
    %v5341 = vadd.f32 0.0, %v5340
    %5342 = vmatmul.bf16.gmra.mxu0 %v5226
    %v5343 = vpop.f32.mrf.mxu0
    %v5344 = vadd.f32 0.0, %v5343
    %v5345 = vpop.f32.mrf.mxu0
    %v5346 = vadd.f32 0.0, %v5345
    %5347 = vmatmul.bf16.gmra.mxu0 %v5227
    %v5348 = vpop.f32.mrf.mxu0
    %v5349 = vadd.f32 0.0, %v5348
    %v5350 = vpop.f32.mrf.mxu0
    %v5351 = vadd.f32 0.0, %v5350
    %5352 = vmatmul.bf16.gmra.mxu0 %v5228
    %v5353 = vpop.f32.mrf.mxu0
    %v5354 = vadd.f32 0.0, %v5353
    %v5355 = vpop.f32.mrf.mxu0
    %v5356 = vadd.f32 0.0, %v5355
    %5357 = vmatmul.bf16.gmra.mxu0 %v5229
    %v5358 = vpop.f32.mrf.mxu0
    %v5359 = vadd.f32 0.0, %v5358
    %v5360 = vpop.f32.mrf.mxu0
    %v5361 = vadd.f32 0.0, %v5360
    %5362 = vmatmul.bf16.gmra.mxu0 %v5230
    %v5363 = vpop.f32.mrf.mxu0
    %v5364 = vadd.f32 0.0, %v5363
    %v5365 = vpop.f32.mrf.mxu0
    %v5366 = vadd.f32 0.0, %v5365
    %5367 = vmatmul.bf16.gmra.mxu0 %v5231
    %v5368 = vpop.f32.mrf.mxu0
    %v5369 = vadd.f32 0.0, %v5368
    %v5370 = vpop.f32.mrf.mxu0
    %v5371 = vadd.f32 0.0, %v5370
    %5372 = vmatmul.bf16.gmra.mxu0 %v5232
    %v5373 = vpop.f32.mrf.mxu0
    %v5374 = vadd.f32 0.0, %v5373
    %v5375 = vpop.f32.mrf.mxu0
    %v5376 = vadd.f32 0.0, %v5375
    %5377 = vmatmul.bf16.gmra.mxu0 %v5233
    %v5378 = vpop.f32.mrf.mxu0
    %v5379 = vadd.f32 0.0, %v5378
    %v5380 = vpop.f32.mrf.mxu0
    %v5381 = vadd.f32 0.0, %v5380
    %5382 = vmatmul.bf16.gmra.mxu0 %v5234
    %v5383 = vpop.f32.mrf.mxu0
    %v5384 = vadd.f32 0.0, %v5383
    %v5385 = vpop.f32.mrf.mxu0
    %v5386 = vadd.f32 0.0, %v5385
    %5387 = vmatmul.bf16.gmra.mxu0 %v5235
    %v5388 = vpop.f32.mrf.mxu0
    %v5389 = vadd.f32 0.0, %v5388
    %v5390 = vpop.f32.mrf.mxu0
    %v5391 = vadd.f32 0.0, %v5390
    %5392 = vmatmul.bf16.gmra.mxu0 %v5236
    %v5393 = vpop.f32.mrf.mxu0
    %v5394 = vadd.f32 0.0, %v5393
    %v5395 = vpop.f32.mrf.mxu0
    %v5396 = vadd.f32 0.0, %v5395
    %5397 = vmatmul.bf16.gmra.mxu0 %v5237
    %v5398 = vpop.f32.mrf.mxu0
    %v5399 = vadd.f32 0.0, %v5398
    %v5400 = vpop.f32.mrf.mxu0
    %v5401 = vadd.f32 0.0, %v5400
    %5402 = vmatmul.bf16.gmra.mxu0 %v5238
    %v5403 = vpop.f32.mrf.mxu0
    %v5404 = vadd.f32 0.0, %v5403
    %v5405 = vpop.f32.mrf.mxu0
    %v5406 = vadd.f32 0.0, %v5405
    %5407 = vdwg.mxu0
    %5408 = vmatpush.bf16.msra.mxu0 %v5302
    %5409 = vmatpush.bf16.msra.mxu0 %v5300
    %5410 = vmatpush.bf16.msra.mxu0 %v5298
    %5411 = vmatpush.bf16.msra.mxu0 %v5296
    %5412 = vmatpush.bf16.msra.mxu0 %v5294
    %5413 = vmatpush.bf16.msra.mxu0 %v5292
    %5414 = vmatpush.bf16.msra.mxu0 %v5290
    %5415 = vmatpush.bf16.msra.mxu0 %v5288
    %5416 = vmatmul.bf16.gmra.mxu0 %v5223
    %v5417 = vpop.f32.mrf.mxu0
    %v5418 = vadd.f32 0.0, %v5417
    %v5419 = vpop.f32.mrf.mxu0
    %v5420 = vadd.f32 0.0, %v5419
    %5421 = vmatmul.bf16.gmra.mxu0 %v5224
    %v5422 = vpop.f32.mrf.mxu0
    %v5423 = vadd.f32 0.0, %v5422
    %v5424 = vpop.f32.mrf.mxu0
    %v5425 = vadd.f32 0.0, %v5424
    %5426 = vmatmul.bf16.gmra.mxu0 %v5225
    %v5427 = vpop.f32.mrf.mxu0
    %v5428 = vadd.f32 0.0, %v5427
    %v5429 = vpop.f32.mrf.mxu0
    %v5430 = vadd.f32 0.0, %v5429
    %5431 = vmatmul.bf16.gmra.mxu0 %v5226
    %v5432 = vpop.f32.mrf.mxu0
    %v5433 = vadd.f32 0.0, %v5432
    %v5434 = vpop.f32.mrf.mxu0
    %v5435 = vadd.f32 0.0, %v5434
    %5436 = vmatmul.bf16.gmra.mxu0 %v5227
    %v5437 = vpop.f32.mrf.mxu0
    %v5438 = vadd.f32 0.0, %v5437
    %v5439 = vpop.f32.mrf.mxu0
    %v5440 = vadd.f32 0.0, %v5439
    %5441 = vmatmul.bf16.gmra.mxu0 %v5228
    %v5442 = vpop.f32.mrf.mxu0
    %v5443 = vadd.f32 0.0, %v5442
    %v5444 = vpop.f32.mrf.mxu0
    %v5445 = vadd.f32 0.0, %v5444
    %5446 = vmatmul.bf16.gmra.mxu0 %v5229
    %v5447 = vpop.f32.mrf.mxu0
    %v5448 = vadd.f32 0.0, %v5447
    %v5449 = vpop.f32.mrf.mxu0
    %v5450 = vadd.f32 0.0, %v5449
    %5451 = vmatmul.bf16.gmra.mxu0 %v5230
    %v5452 = vpop.f32.mrf.mxu0
    %v5453 = vadd.f32 0.0, %v5452
    %v5454 = vpop.f32.mrf.mxu0
    %v5455 = vadd.f32 0.0, %v5454
    %5456 = vmatmul.bf16.gmra.mxu0 %v5231
    %v5457 = vpop.f32.mrf.mxu0
    %v5458 = vadd.f32 0.0, %v5457
    %v5459 = vpop.f32.mrf.mxu0
    %v5460 = vadd.f32 0.0, %v5459
    %5461 = vmatmul.bf16.gmra.mxu0 %v5232
    %v5462 = vpop.f32.mrf.mxu0
    %v5463 = vadd.f32 0.0, %v5462
    %v5464 = vpop.f32.mrf.mxu0
    %v5465 = vadd.f32 0.0, %v5464
    %5466 = vmatmul.bf16.gmra.mxu0 %v5233
    %v5467 = vpop.f32.mrf.mxu0
    %v5468 = vadd.f32 0.0, %v5467
    %v5469 = vpop.f32.mrf.mxu0
    %v5470 = vadd.f32 0.0, %v5469
    %5471 = vmatmul.bf16.gmra.mxu0 %v5234
    %v5472 = vpop.f32.mrf.mxu0
    %v5473 = vadd.f32 0.0, %v5472
    %v5474 = vpop.f32.mrf.mxu0
    %v5475 = vadd.f32 0.0, %v5474
    %5476 = vmatmul.bf16.gmra.mxu0 %v5235
    %v5477 = vpop.f32.mrf.mxu0
    %v5478 = vadd.f32 0.0, %v5477
    %v5479 = vpop.f32.mrf.mxu0
    %v5480 = vadd.f32 0.0, %v5479
    %5481 = vmatmul.bf16.gmra.mxu0 %v5236
    %v5482 = vpop.f32.mrf.mxu0
    %v5483 = vadd.f32 0.0, %v5482
    %v5484 = vpop.f32.mrf.mxu0
    %v5485 = vadd.f32 0.0, %v5484
    %5486 = vmatmul.bf16.gmra.mxu0 %v5237
    %v5487 = vpop.f32.mrf.mxu0
    %v5488 = vadd.f32 0.0, %v5487
    %v5489 = vpop.f32.mrf.mxu0
    %v5490 = vadd.f32 0.0, %v5489
    %5491 = vmatmul.bf16.gmra.mxu0 %v5238
    %v5492 = vpop.f32.mrf.mxu0
    %v5493 = vadd.f32 0.0, %v5492
    %v5494 = vpop.f32.mrf.mxu0
    %v5495 = vadd.f32 0.0, %v5494
    %5496 = vdwg.mxu0
    %v5497 = vadd.f32 %v4820, %v5329
    %v5498 = vadd.f32 %v4909, %v5418
    %v5499 = vadd.f32 %v4822, %v5331
    %v5500 = vadd.f32 %v4911, %v5420
    %v5501 = vadd.f32 %v4825, %v5334
    %v5502 = vadd.f32 %v4914, %v5423
    %v5503 = vadd.f32 %v4827, %v5336
    %v5504 = vadd.f32 %v4916, %v5425
    %v5505 = vadd.f32 %v4830, %v5339
    %v5506 = vadd.f32 %v4919, %v5428
    %v5507 = vadd.f32 %v4832, %v5341
    %v5508 = vadd.f32 %v4921, %v5430
    %v5509 = vadd.f32 %v4835, %v5344
    %v5510 = vadd.f32 %v4924, %v5433
    %v5511 = vadd.f32 %v4837, %v5346
    %v5512 = vadd.f32 %v4926, %v5435
    %v5513 = vadd.f32 %v4840, %v5349
    %v5514 = vadd.f32 %v4929, %v5438
    %v5515 = vadd.f32 %v4842, %v5351
    %v5516 = vadd.f32 %v4931, %v5440
    %v5517 = vadd.f32 %v4845, %v5354
    %v5518 = vadd.f32 %v4934, %v5443
    %v5519 = vadd.f32 %v4847, %v5356
    %v5520 = vadd.f32 %v4936, %v5445
    %v5521 = vadd.f32 %v4850, %v5359
    %v5522 = vadd.f32 %v4939, %v5448
    %v5523 = vadd.f32 %v4852, %v5361
    %v5524 = vadd.f32 %v4941, %v5450
    %v5525 = vadd.f32 %v4855, %v5364
    %v5526 = vadd.f32 %v4944, %v5453
    %v5527 = vadd.f32 %v4857, %v5366
    %v5528 = vadd.f32 %v4946, %v5455
    %v5529 = vadd.f32 %v4860, %v5369
    %v5530 = vadd.f32 %v4949, %v5458
    %v5531 = vadd.f32 %v4862, %v5371
    %v5532 = vadd.f32 %v4951, %v5460
    %v5533 = vadd.f32 %v4865, %v5374
    %v5534 = vadd.f32 %v4954, %v5463
    %v5535 = vadd.f32 %v4867, %v5376
    %v5536 = vadd.f32 %v4956, %v5465
    %v5537 = vadd.f32 %v4870, %v5379
    %v5538 = vadd.f32 %v4959, %v5468
    %v5539 = vadd.f32 %v4872, %v5381
    %v5540 = vadd.f32 %v4961, %v5470
    %v5541 = vadd.f32 %v4875, %v5384
    %v5542 = vadd.f32 %v4964, %v5473
    %v5543 = vadd.f32 %v4877, %v5386
    %v5544 = vadd.f32 %v4966, %v5475
    %v5545 = vadd.f32 %v4880, %v5389
    %v5546 = vadd.f32 %v4969, %v5478
    %v5547 = vadd.f32 %v4882, %v5391
    %v5548 = vadd.f32 %v4971, %v5480
    %v5549 = vadd.f32 %v4885, %v5394
    %v5550 = vadd.f32 %v4974, %v5483
    %v5551 = vadd.f32 %v4887, %v5396
    %v5552 = vadd.f32 %v4976, %v5485
    %v5553 = vadd.f32 %v4890, %v5399
    %v5554 = vadd.f32 %v4979, %v5488
    %v5555 = vadd.f32 %v4892, %v5401
    %v5556 = vadd.f32 %v4981, %v5490
    %v5557 = vadd.f32 %v4895, %v5404
    %v5558 = vadd.f32 %v4984, %v5493
    %v5559 = vadd.f32 %v4897, %v5406
    %v5560 = vadd.f32 %v4986, %v5495
    %v5561 = vadd.f32 %v5497, %v5498
    %5562 = vadd.xlane.f32.xlu0 %v5561
    %v5563 = vpop.xlane.xlu0 %5562
    %v5564 = vadd.f32 %v5499, %v5500
    %5565 = vadd.xlane.f32.xlu0 %v5564
    %v5566 = vpop.xlane.xlu0 %5565
    %v5567 = vadd.f32 %v5501, %v5502
    %5568 = vadd.xlane.f32.xlu0 %v5567
    %v5569 = vpop.xlane.xlu0 %5568
    %v5570 = vadd.f32 %v5503, %v5504
    %5571 = vadd.xlane.f32.xlu0 %v5570
    %v5572 = vpop.xlane.xlu0 %5571
    %v5573 = vadd.f32 %v5505, %v5506
    %5574 = vadd.xlane.f32.xlu0 %v5573
    %v5575 = vpop.xlane.xlu0 %5574
    %v5576 = vadd.f32 %v5507, %v5508
    %5577 = vadd.xlane.f32.xlu0 %v5576
    %v5578 = vpop.xlane.xlu0 %5577
    %v5579 = vadd.f32 %v5509, %v5510
    %5580 = vadd.xlane.f32.xlu0 %v5579
    %v5581 = vpop.xlane.xlu0 %5580
    %v5582 = vadd.f32 %v5511, %v5512
    %5583 = vadd.xlane.f32.xlu0 %v5582
    %v5584 = vpop.xlane.xlu0 %5583
    %v5585 = vadd.f32 %v5513, %v5514
    %5586 = vadd.xlane.f32.xlu0 %v5585
    %v5587 = vpop.xlane.xlu0 %5586
    %v5588 = vadd.f32 %v5515, %v5516
    %5589 = vadd.xlane.f32.xlu0 %v5588
    %v5590 = vpop.xlane.xlu0 %5589
    %v5591 = vadd.f32 %v5517, %v5518
    %5592 = vadd.xlane.f32.xlu0 %v5591
    %v5593 = vpop.xlane.xlu0 %5592
    %v5594 = vadd.f32 %v5519, %v5520
    %5595 = vadd.xlane.f32.xlu0 %v5594
    %v5596 = vpop.xlane.xlu0 %5595
    %v5597 = vadd.f32 %v5521, %v5522
    %5598 = vadd.xlane.f32.xlu0 %v5597
    %v5599 = vpop.xlane.xlu0 %5598
    %v5600 = vadd.f32 %v5523, %v5524
    %5601 = vadd.xlane.f32.xlu0 %v5600
    %v5602 = vpop.xlane.xlu0 %5601
    %v5603 = vadd.f32 %v5525, %v5526
    %5604 = vadd.xlane.f32.xlu0 %v5603
    %v5605 = vpop.xlane.xlu0 %5604
    %v5606 = vadd.f32 %v5527, %v5528
    %5607 = vadd.xlane.f32.xlu0 %v5606
    %v5608 = vpop.xlane.xlu0 %5607
    %v5609 = vadd.f32 %v5529, %v5530
    %5610 = vadd.xlane.f32.xlu0 %v5609
    %v5611 = vpop.xlane.xlu0 %5610
    %v5612 = vadd.f32 %v5531, %v5532
    %5613 = vadd.xlane.f32.xlu0 %v5612
    %v5614 = vpop.xlane.xlu0 %5613
    %v5615 = vadd.f32 %v5533, %v5534
    %5616 = vadd.xlane.f32.xlu0 %v5615
    %v5617 = vpop.xlane.xlu0 %5616
    %v5618 = vadd.f32 %v5535, %v5536
    %5619 = vadd.xlane.f32.xlu0 %v5618
    %v5620 = vpop.xlane.xlu0 %5619
    %v5621 = vadd.f32 %v5537, %v5538
    %5622 = vadd.xlane.f32.xlu0 %v5621
    %v5623 = vpop.xlane.xlu0 %5622
    %v5624 = vadd.f32 %v5539, %v5540
    %5625 = vadd.xlane.f32.xlu0 %v5624
    %v5626 = vpop.xlane.xlu0 %5625
    %v5627 = vadd.f32 %v5541, %v5542
    %5628 = vadd.xlane.f32.xlu0 %v5627
    %v5629 = vpop.xlane.xlu0 %5628
    %v5630 = vadd.f32 %v5543, %v5544
    %5631 = vadd.xlane.f32.xlu0 %v5630
    %v5632 = vpop.xlane.xlu0 %5631
    %v5633 = vadd.f32 %v5545, %v5546
    %5634 = vadd.xlane.f32.xlu0 %v5633
    %v5635 = vpop.xlane.xlu0 %5634
    %v5636 = vadd.f32 %v5547, %v5548
    %5637 = vadd.xlane.f32.xlu0 %v5636
    %v5638 = vpop.xlane.xlu0 %5637
    %v5639 = vadd.f32 %v5549, %v5550
    %5640 = vadd.xlane.f32.xlu0 %v5639
    %v5641 = vpop.xlane.xlu0 %5640
    %v5642 = vadd.f32 %v5551, %v5552
    %5643 = vadd.xlane.f32.xlu0 %v5642
    %v5644 = vpop.xlane.xlu0 %5643
    %v5645 = vadd.f32 %v5553, %v5554
    %5646 = vadd.xlane.f32.xlu0 %v5645
    %v5647 = vpop.xlane.xlu0 %5646
    %v5648 = vadd.f32 %v5555, %v5556
    %5649 = vadd.xlane.f32.xlu0 %v5648
    %v5650 = vpop.xlane.xlu0 %5649
    %v5651 = vadd.f32 %v5557, %v5558
    %5652 = vadd.xlane.f32.xlu0 %v5651
    %v5653 = vpop.xlane.xlu0 %5652
    %v5654 = vadd.f32 %v5559, %v5560
    %5655 = vadd.xlane.f32.xlu0 %v5654
    %v5656 = vpop.xlane.xlu0 %5655
    %v5657 = vld [vmem:[%s22] sm:$0xff]
    %v5658 = vld [vmem:[%s22 + $0x8] sm:$0xff]
    %v5659 = vld [vmem:[%s22 + $0x10] sm:$0xff]
    %v5660 = vld [vmem:[%s22 + $0x18] sm:$0xff]
    %v5661 = vld [vmem:[%s22 + $0x20] sm:$0xff]
    %v5662 = vld [vmem:[%s22 + $0x28] sm:$0xff]
    %v5663 = vld [vmem:[%s22 + $0x30] sm:$0xff]
    %v5664 = vld [vmem:[%s22 + $0x38] sm:$0xff]
    %v5665 = vld [vmem:[%s22 + $0x40] sm:$0xff]
    %v5666 = vld [vmem:[%s22 + $0x48] sm:$0xff]
    %v5667 = vld [vmem:[%s22 + $0x50] sm:$0xff]
    %v5668 = vld [vmem:[%s22 + $0x58] sm:$0xff]
    %v5669 = vld [vmem:[%s22 + $0x60] sm:$0xff]
    %v5670 = vld [vmem:[%s22 + $0x68] sm:$0xff]
    %v5671 = vld [vmem:[%s22 + $0x70] sm:$0xff]
    %v5672 = vld [vmem:[%s22 + $0x78] sm:$0xff]
    %v5673 = vld [vmem:[%s22 + $0x80] sm:$0xff]
    %v5674 = vld [vmem:[%s22 + $0x88] sm:$0xff]
    %v5675 = vld [vmem:[%s22 + $0x90] sm:$0xff]
    %v5676 = vld [vmem:[%s22 + $0x98] sm:$0xff]
    %v5677 = vld [vmem:[%s22 + $0xa0] sm:$0xff]
    %v5678 = vld [vmem:[%s22 + $0xa8] sm:$0xff]
    %v5679 = vld [vmem:[%s22 + $0xb0] sm:$0xff]
    %v5680 = vld [vmem:[%s22 + $0xb8] sm:$0xff]
    %v5681 = vld [vmem:[%s22 + $0xc0] sm:$0xff]
    %v5682 = vld [vmem:[%s22 + $0xc8] sm:$0xff]
    %v5683 = vld [vmem:[%s22 + $0xd0] sm:$0xff]
    %v5684 = vld [vmem:[%s22 + $0xd8] sm:$0xff]
    %v5685 = vld [vmem:[%s22 + $0xe0] sm:$0xff]
    %v5686 = vld [vmem:[%s22 + $0xe8] sm:$0xff]
    %v5687 = vld [vmem:[%s22 + $0xf0] sm:$0xff]
    %v5688 = vld [vmem:[%s22 + $0xf8] sm:$0xff]
    %v5689 = vld [vmem:[#allocation13] sm:$0xff]
    %v5690 = vld [vmem:[#allocation13 + $0x8] sm:$0xff]
    %5691 = vmatpush.msra.mxu0 %v5608
    %5692 = vmatpush.msra.mxu0 %v5605
    %5693 = vmatpush.msra.mxu0 %v5602
    %5694 = vmatpush.msra.mxu0 %v5599
    %5695 = vmatpush.msra.mxu0 %v5596
    %5696 = vmatpush.msra.mxu0 %v5593
    %5697 = vmatpush.msra.mxu0 %v5590
    %5698 = vmatpush.msra.mxu0 %v5587
    %5699 = vmatpush.msra.mxu0 %v5584
    %5700 = vmatpush.msra.mxu0 %v5581
    %5701 = vmatpush.msra.mxu0 %v5578
    %5702 = vmatpush.msra.mxu0 %v5575
    %5703 = vmatpush.msra.mxu0 %v5572
    %5704 = vmatpush.msra.mxu0 %v5569
    %5705 = vmatpush.msra.mxu0 %v5566
    %5706 = vmatpush.msra.mxu0 %v5563
    %5707 = vmatmul.f32.gmra.mxu0 %v5689
    %v5708 = vpop.f32.mrf.mxu0
    %v5709 = vadd.f32 0.0, %v5708
    %5710 = vdwg.mxu0
    %5711 = vmatpush.msra.mxu0 %v5656
    %5712 = vmatpush.msra.mxu0 %v5653
    %5713 = vmatpush.msra.mxu0 %v5650
    %5714 = vmatpush.msra.mxu0 %v5647
    %5715 = vmatpush.msra.mxu0 %v5644
    %5716 = vmatpush.msra.mxu0 %v5641
    %5717 = vmatpush.msra.mxu0 %v5638
    %5718 = vmatpush.msra.mxu0 %v5635
    %5719 = vmatpush.msra.mxu0 %v5632
    %5720 = vmatpush.msra.mxu0 %v5629
    %5721 = vmatpush.msra.mxu0 %v5626
    %5722 = vmatpush.msra.mxu0 %v5623
    %5723 = vmatpush.msra.mxu0 %v5620
    %5724 = vmatpush.msra.mxu0 %v5617
    %5725 = vmatpush.msra.mxu0 %v5614
    %5726 = vmatpush.msra.mxu0 %v5611
    %5727 = vmatmul.f32.gmra.mxu0 %v5690
    %v5728 = vpop.f32.mrf.mxu0
    %v5729 = vadd.f32 %v5709, %v5728
    %5730 = vdwg.mxu0
    %v5732 = vsel %vm364, %v5657, 0
    %v5735 = vsel %vm364, %v5658, 0
    %v5738 = vsel %vm364, %v5659, 0
    %v5741 = vsel %vm364, %v5660, 0
    %v5744 = vsel %vm364, %v5661, 0
    %v5747 = vsel %vm364, %v5662, 0
    %v5750 = vsel %vm364, %v5663, 0
    %v5753 = vsel %vm364, %v5664, 0
    %v5756 = vsel %vm364, %v5665, 0
    %v5759 = vsel %vm364, %v5666, 0
    %v5762 = vsel %vm364, %v5667, 0
    %v5765 = vsel %vm364, %v5668, 0
    %v5768 = vsel %vm364, %v5669, 0
    %v5771 = vsel %vm364, %v5670, 0
    %v5774 = vsel %vm364, %v5671, 0
    %v5777 = vsel %vm364, %v5672, 0
    %v5780 = vsel %vm364, %v5673, 0
    %v5783 = vsel %vm364, %v5674, 0
    %v5786 = vsel %vm364, %v5675, 0
    %v5789 = vsel %vm364, %v5676, 0
    %v5792 = vsel %vm364, %v5677, 0
    %v5795 = vsel %vm364, %v5678, 0
    %v5798 = vsel %vm364, %v5679, 0
    %v5801 = vsel %vm364, %v5680, 0
    %v5804 = vsel %vm364, %v5681, 0
    %v5807 = vsel %vm364, %v5682, 0
    %v5810 = vsel %vm364, %v5683, 0
    %v5813 = vsel %vm364, %v5684, 0
    %v5816 = vsel %vm364, %v5685, 0
    %v5819 = vsel %vm364, %v5686, 0
    %v5822 = vsel %vm364, %v5687, 0
    %v5825 = vsel %vm364, %v5688, 0
    %5827 = vmatpush.msra.mxu0 0.0
    %5828 = vmatpush.msra.mxu0 0.0
    %5829 = vmatpush.msra.mxu0 0.0
    %5830 = vmatpush.msra.mxu0 0.0
    %5831 = vmatpush.msra.mxu0 0.0
    %5832 = vmatpush.msra.mxu0 0.0
    %5833 = vmatpush.msra.mxu0 0.0
    %5834 = vmatpush.msra.mxu0 0.0
    %5835 = vmatpush.msra.mxu0 0.0
    %5836 = vmatpush.msra.mxu0 0.0
    %5837 = vmatpush.msra.mxu0 0.0
    %5838 = vmatpush.msra.mxu0 0.0
    %5839 = vmatpush.msra.mxu0 0.0
    %5840 = vmatpush.msra.mxu0 0.0
    %5841 = vmatpush.msra.mxu0 0.0
    %5842 = vmatpush.msra.mxu0 %v5729
    %5843 = vmatmul.f32.gmra.mxu0 %v5732
    %v5844 = vpop.f32.mrf.mxu0
    %v5845 = vadd.f32 0.0, %v5844
    %5846 = vmatmul.f32.gmra.mxu0 %v5735
    %v5847 = vpop.f32.mrf.mxu0
    %v5848 = vadd.f32 0.0, %v5847
    %5849 = vmatmul.f32.gmra.mxu0 %v5738
    %v5850 = vpop.f32.mrf.mxu0
    %v5851 = vadd.f32 0.0, %v5850
    %5852 = vmatmul.f32.gmra.mxu0 %v5741
    %v5853 = vpop.f32.mrf.mxu0
    %v5854 = vadd.f32 0.0, %v5853
    %5855 = vmatmul.f32.gmra.mxu0 %v5744
    %v5856 = vpop.f32.mrf.mxu0
    %v5857 = vadd.f32 0.0, %v5856
    %5858 = vmatmul.f32.gmra.mxu0 %v5747
    %v5859 = vpop.f32.mrf.mxu0
    %v5860 = vadd.f32 0.0, %v5859
    %5861 = vmatmul.f32.gmra.mxu0 %v5750
    %v5862 = vpop.f32.mrf.mxu0
    %v5863 = vadd.f32 0.0, %v5862
    %5864 = vmatmul.f32.gmra.mxu0 %v5753
    %v5865 = vpop.f32.mrf.mxu0
    %v5866 = vadd.f32 0.0, %v5865
    %5867 = vmatmul.f32.gmra.mxu0 %v5756
    %v5868 = vpop.f32.mrf.mxu0
    %v5869 = vadd.f32 0.0, %v5868
    %5870 = vmatmul.f32.gmra.mxu0 %v5759
    %v5871 = vpop.f32.mrf.mxu0
    %v5872 = vadd.f32 0.0, %v5871
    %5873 = vmatmul.f32.gmra.mxu0 %v5762
    %v5874 = vpop.f32.mrf.mxu0
    %v5875 = vadd.f32 0.0, %v5874
    %5876 = vmatmul.f32.gmra.mxu0 %v5765
    %v5877 = vpop.f32.mrf.mxu0
    %v5878 = vadd.f32 0.0, %v5877
    %5879 = vmatmul.f32.gmra.mxu0 %v5768
    %v5880 = vpop.f32.mrf.mxu0
    %v5881 = vadd.f32 0.0, %v5880
    %5882 = vmatmul.f32.gmra.mxu0 %v5771
    %v5883 = vpop.f32.mrf.mxu0
    %v5884 = vadd.f32 0.0, %v5883
    %5885 = vmatmul.f32.gmra.mxu0 %v5774
    %v5886 = vpop.f32.mrf.mxu0
    %v5887 = vadd.f32 0.0, %v5886
    %5888 = vmatmul.f32.gmra.mxu0 %v5777
    %v5889 = vpop.f32.mrf.mxu0
    %v5890 = vadd.f32 0.0, %v5889
    %5891 = vmatmul.f32.gmra.mxu0 %v5780
    %v5892 = vpop.f32.mrf.mxu0
    %v5893 = vadd.f32 0.0, %v5892
    %5894 = vmatmul.f32.gmra.mxu0 %v5783
    %v5895 = vpop.f32.mrf.mxu0
    %v5896 = vadd.f32 0.0, %v5895
    %5897 = vmatmul.f32.gmra.mxu0 %v5786
    %v5898 = vpop.f32.mrf.mxu0
    %v5899 = vadd.f32 0.0, %v5898
    %5900 = vmatmul.f32.gmra.mxu0 %v5789
    %v5901 = vpop.f32.mrf.mxu0
    %v5902 = vadd.f32 0.0, %v5901
    %5903 = vmatmul.f32.gmra.mxu0 %v5792
    %v5904 = vpop.f32.mrf.mxu0
    %v5905 = vadd.f32 0.0, %v5904
    %5906 = vmatmul.f32.gmra.mxu0 %v5795
    %v5907 = vpop.f32.mrf.mxu0
    %v5908 = vadd.f32 0.0, %v5907
    %5909 = vmatmul.f32.gmra.mxu0 %v5798
    %v5910 = vpop.f32.mrf.mxu0
    %v5911 = vadd.f32 0.0, %v5910
    %5912 = vmatmul.f32.gmra.mxu0 %v5801
    %v5913 = vpop.f32.mrf.mxu0
    %v5914 = vadd.f32 0.0, %v5913
    %5915 = vmatmul.f32.gmra.mxu0 %v5804
    %v5916 = vpop.f32.mrf.mxu0
    %v5917 = vadd.f32 0.0, %v5916
    %5918 = vmatmul.f32.gmra.mxu0 %v5807
    %v5919 = vpop.f32.mrf.mxu0
    %v5920 = vadd.f32 0.0, %v5919
    %5921 = vmatmul.f32.gmra.mxu0 %v5810
    %v5922 = vpop.f32.mrf.mxu0
    %v5923 = vadd.f32 0.0, %v5922
    %5924 = vmatmul.f32.gmra.mxu0 %v5813
    %v5925 = vpop.f32.mrf.mxu0
    %v5926 = vadd.f32 0.0, %v5925
    %5927 = vmatmul.f32.gmra.mxu0 %v5816
    %v5928 = vpop.f32.mrf.mxu0
    %v5929 = vadd.f32 0.0, %v5928
    %5930 = vmatmul.f32.gmra.mxu0 %v5819
    %v5931 = vpop.f32.mrf.mxu0
    %v5932 = vadd.f32 0.0, %v5931
    %5933 = vmatmul.f32.gmra.mxu0 %v5822
    %v5934 = vpop.f32.mrf.mxu0
    %v5935 = vadd.f32 0.0, %v5934
    %5936 = vmatmul.f32.gmra.mxu0 %v5825
    %v5937 = vpop.f32.mrf.mxu0
    %v5938 = vadd.f32 0.0, %v5937
    %5939 = vdwg.mxu0
    %5941 = vset.pattern.permute.xlu0 0
    %5942 = vperm.xlu0 %5941, %v5845
    %v5943 = vpop.permute.xlu0 %5942
    %5946 = vset.pattern.permute.xlu0 0
    %5947 = vperm.xlu0 %5946, %v5848
    %v5948 = vpop.permute.xlu0 %5947
    %5951 = vset.pattern.permute.xlu0 0
    %5952 = vperm.xlu0 %5951, %v5851
    %v5953 = vpop.permute.xlu0 %5952
    %5956 = vset.pattern.permute.xlu0 0
    %5957 = vperm.xlu0 %5956, %v5854
    %v5958 = vpop.permute.xlu0 %5957
    %5961 = vset.pattern.permute.xlu0 0
    %5962 = vperm.xlu0 %5961, %v5857
    %v5963 = vpop.permute.xlu0 %5962
    %5966 = vset.pattern.permute.xlu0 0
    %5967 = vperm.xlu0 %5966, %v5860
    %v5968 = vpop.permute.xlu0 %5967
    %5971 = vset.pattern.permute.xlu0 0
    %5972 = vperm.xlu0 %5971, %v5863
    %v5973 = vpop.permute.xlu0 %5972
    %5976 = vset.pattern.permute.xlu0 0
    %5977 = vperm.xlu0 %5976, %v5866
    %v5978 = vpop.permute.xlu0 %5977
    %5981 = vset.pattern.permute.xlu0 0
    %5982 = vperm.xlu0 %5981, %v5869
    %v5983 = vpop.permute.xlu0 %5982
    %5986 = vset.pattern.permute.xlu0 0
    %5987 = vperm.xlu0 %5986, %v5872
    %v5988 = vpop.permute.xlu0 %5987
    %5991 = vset.pattern.permute.xlu0 0
    %5992 = vperm.xlu0 %5991, %v5875
    %v5993 = vpop.permute.xlu0 %5992
    %5996 = vset.pattern.permute.xlu0 0
    %5997 = vperm.xlu0 %5996, %v5878
    %v5998 = vpop.permute.xlu0 %5997
    %6001 = vset.pattern.permute.xlu0 0
    %6002 = vperm.xlu0 %6001, %v5881
    %v6003 = vpop.permute.xlu0 %6002
    %6006 = vset.pattern.permute.xlu0 0
    %6007 = vperm.xlu0 %6006, %v5884
    %v6008 = vpop.permute.xlu0 %6007
    %6011 = vset.pattern.permute.xlu0 0
    %6012 = vperm.xlu0 %6011, %v5887
    %v6013 = vpop.permute.xlu0 %6012
    %6016 = vset.pattern.permute.xlu0 0
    %6017 = vperm.xlu0 %6016, %v5890
    %v6018 = vpop.permute.xlu0 %6017
    %6021 = vset.pattern.permute.xlu0 0
    %6022 = vperm.xlu0 %6021, %v5893
    %v6023 = vpop.permute.xlu0 %6022
    %6026 = vset.pattern.permute.xlu0 0
    %6027 = vperm.xlu0 %6026, %v5896
    %v6028 = vpop.permute.xlu0 %6027
    %6031 = vset.pattern.permute.xlu0 0
    %6032 = vperm.xlu0 %6031, %v5899
    %v6033 = vpop.permute.xlu0 %6032
    %6036 = vset.pattern.permute.xlu0 0
    %6037 = vperm.xlu0 %6036, %v5902
    %v6038 = vpop.permute.xlu0 %6037
    %6041 = vset.pattern.permute.xlu0 0
    %6042 = vperm.xlu0 %6041, %v5905
    %v6043 = vpop.permute.xlu0 %6042
    %6046 = vset.pattern.permute.xlu0 0
    %6047 = vperm.xlu0 %6046, %v5908
    %v6048 = vpop.permute.xlu0 %6047
    %6051 = vset.pattern.permute.xlu0 0
    %6052 = vperm.xlu0 %6051, %v5911
    %v6053 = vpop.permute.xlu0 %6052
    %6056 = vset.pattern.permute.xlu0 0
    %6057 = vperm.xlu0 %6056, %v5914
    %v6058 = vpop.permute.xlu0 %6057
    %6061 = vset.pattern.permute.xlu0 0
    %6062 = vperm.xlu0 %6061, %v5917
    %v6063 = vpop.permute.xlu0 %6062
    %6066 = vset.pattern.permute.xlu0 0
    %6067 = vperm.xlu0 %6066, %v5920
    %v6068 = vpop.permute.xlu0 %6067
    %6071 = vset.pattern.permute.xlu0 0
    %6072 = vperm.xlu0 %6071, %v5923
    %v6073 = vpop.permute.xlu0 %6072
    %6076 = vset.pattern.permute.xlu0 0
    %6077 = vperm.xlu0 %6076, %v5926
    %v6078 = vpop.permute.xlu0 %6077
    %6081 = vset.pattern.permute.xlu0 0
    %6082 = vperm.xlu0 %6081, %v5929
    %v6083 = vpop.permute.xlu0 %6082
    %6086 = vset.pattern.permute.xlu0 0
    %6087 = vperm.xlu0 %6086, %v5932
    %v6088 = vpop.permute.xlu0 %6087
    %6091 = vset.pattern.permute.xlu0 0
    %6092 = vperm.xlu0 %6091, %v5935
    %v6093 = vpop.permute.xlu0 %6092
    %6096 = vset.pattern.permute.xlu0 0
    %6097 = vperm.xlu0 %6096, %v5938
    %v6098 = vpop.permute.xlu0 %6097
    %v6100 = vsub.f32 %v5497, %v5943
    %v6101 = vsub.f32 %v5498, %v5943
    %v6102 = vsub.f32 %v5499, %v5948
    %v6103 = vsub.f32 %v5500, %v5948
    %v6104 = vsub.f32 %v5501, %v5953
    %v6105 = vsub.f32 %v5502, %v5953
    %v6106 = vsub.f32 %v5503, %v5958
    %v6107 = vsub.f32 %v5504, %v5958
    %v6108 = vsub.f32 %v5505, %v5963
    %v6109 = vsub.f32 %v5506, %v5963
    %v6110 = vsub.f32 %v5507, %v5968
    %v6111 = vsub.f32 %v5508, %v5968
    %v6112 = vsub.f32 %v5509, %v5973
    %v6113 = vsub.f32 %v5510, %v5973
    %v6114 = vsub.f32 %v5511, %v5978
    %v6115 = vsub.f32 %v5512, %v5978
    %v6116 = vsub.f32 %v5513, %v5983
    %v6117 = vsub.f32 %v5514, %v5983
    %v6118 = vsub.f32 %v5515, %v5988
    %v6119 = vsub.f32 %v5516, %v5988
    %v6120 = vsub.f32 %v5517, %v5993
    %v6121 = vsub.f32 %v5518, %v5993
    %v6122 = vsub.f32 %v5519, %v5998
    %v6123 = vsub.f32 %v5520, %v5998
    %v6124 = vsub.f32 %v5521, %v6003
    %v6125 = vsub.f32 %v5522, %v6003
    %v6126 = vsub.f32 %v5523, %v6008
    %v6127 = vsub.f32 %v5524, %v6008
    %v6128 = vsub.f32 %v5525, %v6013
    %v6129 = vsub.f32 %v5526, %v6013
    %v6130 = vsub.f32 %v5527, %v6018
    %v6131 = vsub.f32 %v5528, %v6018
    %v6132 = vsub.f32 %v5529, %v6023
    %v6133 = vsub.f32 %v5530, %v6023
    %v6134 = vsub.f32 %v5531, %v6028
    %v6135 = vsub.f32 %v5532, %v6028
    %v6136 = vsub.f32 %v5533, %v6033
    %v6137 = vsub.f32 %v5534, %v6033
    %v6138 = vsub.f32 %v5535, %v6038
    %v6139 = vsub.f32 %v5536, %v6038
    %v6140 = vsub.f32 %v5537, %v6043
    %v6141 = vsub.f32 %v5538, %v6043
    %v6142 = vsub.f32 %v5539, %v6048
    %v6143 = vsub.f32 %v5540, %v6048
    %v6144 = vsub.f32 %v5541, %v6053
    %v6145 = vsub.f32 %v5542, %v6053
    %v6146 = vsub.f32 %v5543, %v6058
    %v6147 = vsub.f32 %v5544, %v6058
    %v6148 = vsub.f32 %v5545, %v6063
    %v6149 = vsub.f32 %v5546, %v6063
    %v6150 = vsub.f32 %v5547, %v6068
    %v6151 = vsub.f32 %v5548, %v6068
    %v6152 = vsub.f32 %v5549, %v6073
    %v6153 = vsub.f32 %v5550, %v6073
    %v6154 = vsub.f32 %v5551, %v6078
    %v6155 = vsub.f32 %v5552, %v6078
    %v6156 = vsub.f32 %v5553, %v6083
    %v6157 = vsub.f32 %v5554, %v6083
    %v6158 = vsub.f32 %v5555, %v6088
    %v6159 = vsub.f32 %v5556, %v6088
    %v6160 = vsub.f32 %v5557, %v6093
    %v6161 = vsub.f32 %v5558, %v6093
    %v6162 = vsub.f32 %v5559, %v6098
    %v6163 = vsub.f32 %v5560, %v6098
    %v6164 = vmul.f32 %v6100, %v6100
    %v6165 = vmul.f32 %v6101, %v6101
    %v6166 = vmul.f32 %v6102, %v6102
    %v6167 = vmul.f32 %v6103, %v6103
    %v6168 = vmul.f32 %v6104, %v6104
    %v6169 = vmul.f32 %v6105, %v6105
    %v6170 = vmul.f32 %v6106, %v6106
    %v6171 = vmul.f32 %v6107, %v6107
    %v6172 = vmul.f32 %v6108, %v6108
    %v6173 = vmul.f32 %v6109, %v6109
    %v6174 = vmul.f32 %v6110, %v6110
    %v6175 = vmul.f32 %v6111, %v6111
    %v6176 = vmul.f32 %v6112, %v6112
    %v6177 = vmul.f32 %v6113, %v6113
    %v6178 = vmul.f32 %v6114, %v6114
    %v6179 = vmul.f32 %v6115, %v6115
    %v6180 = vmul.f32 %v6116, %v6116
    %v6181 = vmul.f32 %v6117, %v6117
    %v6182 = vmul.f32 %v6118, %v6118
    %v6183 = vmul.f32 %v6119, %v6119
    %v6184 = vmul.f32 %v6120, %v6120
    %v6185 = vmul.f32 %v6121, %v6121
    %v6186 = vmul.f32 %v6122, %v6122
    %v6187 = vmul.f32 %v6123, %v6123
    %v6188 = vmul.f32 %v6124, %v6124
    %v6189 = vmul.f32 %v6125, %v6125
    %v6190 = vmul.f32 %v6126, %v6126
    %v6191 = vmul.f32 %v6127, %v6127
    %v6192 = vmul.f32 %v6128, %v6128
    %v6193 = vmul.f32 %v6129, %v6129
    %v6194 = vmul.f32 %v6130, %v6130
    %v6195 = vmul.f32 %v6131, %v6131
    %v6196 = vmul.f32 %v6132, %v6132
    %v6197 = vmul.f32 %v6133, %v6133
    %v6198 = vmul.f32 %v6134, %v6134
    %v6199 = vmul.f32 %v6135, %v6135
    %v6200 = vmul.f32 %v6136, %v6136
    %v6201 = vmul.f32 %v6137, %v6137
    %v6202 = vmul.f32 %v6138, %v6138
    %v6203 = vmul.f32 %v6139, %v6139
    %v6204 = vmul.f32 %v6140, %v6140
    %v6205 = vmul.f32 %v6141, %v6141
    %v6206 = vmul.f32 %v6142, %v6142
    %v6207 = vmul.f32 %v6143, %v6143
    %v6208 = vmul.f32 %v6144, %v6144
    %v6209 = vmul.f32 %v6145, %v6145
    %v6210 = vmul.f32 %v6146, %v6146
    %v6211 = vmul.f32 %v6147, %v6147
    %v6212 = vmul.f32 %v6148, %v6148
    %v6213 = vmul.f32 %v6149, %v6149
    %v6214 = vmul.f32 %v6150, %v6150
    %v6215 = vmul.f32 %v6151, %v6151
    %v6216 = vmul.f32 %v6152, %v6152
    %v6217 = vmul.f32 %v6153, %v6153
    %v6218 = vmul.f32 %v6154, %v6154
    %v6219 = vmul.f32 %v6155, %v6155
    %v6220 = vmul.f32 %v6156, %v6156
    %v6221 = vmul.f32 %v6157, %v6157
    %v6222 = vmul.f32 %v6158, %v6158
    %v6223 = vmul.f32 %v6159, %v6159
    %v6224 = vmul.f32 %v6160, %v6160
    %v6225 = vmul.f32 %v6161, %v6161
    %v6226 = vmul.f32 %v6162, %v6162
    %v6227 = vmul.f32 %v6163, %v6163
    %v6228 = vadd.f32 %v6164, %v6165
    %6229 = vadd.xlane.f32.xlu0 %v6228
    %v6230 = vpop.xlane.xlu0 %6229
    %v6231 = vadd.f32 %v6166, %v6167
    %6232 = vadd.xlane.f32.xlu0 %v6231
    %v6233 = vpop.xlane.xlu0 %6232
    %v6234 = vadd.f32 %v6168, %v6169
    %6235 = vadd.xlane.f32.xlu0 %v6234
    %v6236 = vpop.xlane.xlu0 %6235
    %v6237 = vadd.f32 %v6170, %v6171
    %6238 = vadd.xlane.f32.xlu0 %v6237
    %v6239 = vpop.xlane.xlu0 %6238
    %v6240 = vadd.f32 %v6172, %v6173
    %6241 = vadd.xlane.f32.xlu0 %v6240
    %v6242 = vpop.xlane.xlu0 %6241
    %v6243 = vadd.f32 %v6174, %v6175
    %6244 = vadd.xlane.f32.xlu0 %v6243
    %v6245 = vpop.xlane.xlu0 %6244
    %v6246 = vadd.f32 %v6176, %v6177
    %6247 = vadd.xlane.f32.xlu0 %v6246
    %v6248 = vpop.xlane.xlu0 %6247
    %v6249 = vadd.f32 %v6178, %v6179
    %6250 = vadd.xlane.f32.xlu0 %v6249
    %v6251 = vpop.xlane.xlu0 %6250
    %v6252 = vadd.f32 %v6180, %v6181
    %6253 = vadd.xlane.f32.xlu0 %v6252
    %v6254 = vpop.xlane.xlu0 %6253
    %v6255 = vadd.f32 %v6182, %v6183
    %6256 = vadd.xlane.f32.xlu0 %v6255
    %v6257 = vpop.xlane.xlu0 %6256
    %v6258 = vadd.f32 %v6184, %v6185
    %6259 = vadd.xlane.f32.xlu0 %v6258
    %v6260 = vpop.xlane.xlu0 %6259
    %v6261 = vadd.f32 %v6186, %v6187
    %6262 = vadd.xlane.f32.xlu0 %v6261
    %v6263 = vpop.xlane.xlu0 %6262
    %v6264 = vadd.f32 %v6188, %v6189
    %6265 = vadd.xlane.f32.xlu0 %v6264
    %v6266 = vpop.xlane.xlu0 %6265
    %v6267 = vadd.f32 %v6190, %v6191
    %6268 = vadd.xlane.f32.xlu0 %v6267
    %v6269 = vpop.xlane.xlu0 %6268
    %v6270 = vadd.f32 %v6192, %v6193
    %6271 = vadd.xlane.f32.xlu0 %v6270
    %v6272 = vpop.xlane.xlu0 %6271
    %v6273 = vadd.f32 %v6194, %v6195
    %6274 = vadd.xlane.f32.xlu0 %v6273
    %v6275 = vpop.xlane.xlu0 %6274
    %v6276 = vadd.f32 %v6196, %v6197
    %6277 = vadd.xlane.f32.xlu0 %v6276
    %v6278 = vpop.xlane.xlu0 %6277
    %v6279 = vadd.f32 %v6198, %v6199
    %6280 = vadd.xlane.f32.xlu0 %v6279
    %v6281 = vpop.xlane.xlu0 %6280
    %v6282 = vadd.f32 %v6200, %v6201
    %6283 = vadd.xlane.f32.xlu0 %v6282
    %v6284 = vpop.xlane.xlu0 %6283
    %v6285 = vadd.f32 %v6202, %v6203
    %6286 = vadd.xlane.f32.xlu0 %v6285
    %v6287 = vpop.xlane.xlu0 %6286
    %v6288 = vadd.f32 %v6204, %v6205
    %6289 = vadd.xlane.f32.xlu0 %v6288
    %v6290 = vpop.xlane.xlu0 %6289
    %v6291 = vadd.f32 %v6206, %v6207
    %6292 = vadd.xlane.f32.xlu0 %v6291
    %v6293 = vpop.xlane.xlu0 %6292
    %v6294 = vadd.f32 %v6208, %v6209
    %6295 = vadd.xlane.f32.xlu0 %v6294
    %v6296 = vpop.xlane.xlu0 %6295
    %v6297 = vadd.f32 %v6210, %v6211
    %6298 = vadd.xlane.f32.xlu0 %v6297
    %v6299 = vpop.xlane.xlu0 %6298
    %v6300 = vadd.f32 %v6212, %v6213
    %6301 = vadd.xlane.f32.xlu0 %v6300
    %v6302 = vpop.xlane.xlu0 %6301
    %v6303 = vadd.f32 %v6214, %v6215
    %6304 = vadd.xlane.f32.xlu0 %v6303
    %v6305 = vpop.xlane.xlu0 %6304
    %v6306 = vadd.f32 %v6216, %v6217
    %6307 = vadd.xlane.f32.xlu0 %v6306
    %v6308 = vpop.xlane.xlu0 %6307
    %v6309 = vadd.f32 %v6218, %v6219
    %6310 = vadd.xlane.f32.xlu0 %v6309
    %v6311 = vpop.xlane.xlu0 %6310
    %v6312 = vadd.f32 %v6220, %v6221
    %6313 = vadd.xlane.f32.xlu0 %v6312
    %v6314 = vpop.xlane.xlu0 %6313
    %v6315 = vadd.f32 %v6222, %v6223
    %6316 = vadd.xlane.f32.xlu0 %v6315
    %v6317 = vpop.xlane.xlu0 %6316
    %v6318 = vadd.f32 %v6224, %v6225
    %6319 = vadd.xlane.f32.xlu0 %v6318
    %v6320 = vpop.xlane.xlu0 %6319
    %v6321 = vadd.f32 %v6226, %v6227
    %6322 = vadd.xlane.f32.xlu0 %v6321
    %v6323 = vpop.xlane.xlu0 %6322
    %6324 = vmatpush.msra.mxu0 %v6275
    %6325 = vmatpush.msra.mxu0 %v6272
    %6326 = vmatpush.msra.mxu0 %v6269
    %6327 = vmatpush.msra.mxu0 %v6266
    %6328 = vmatpush.msra.mxu0 %v6263
    %6329 = vmatpush.msra.mxu0 %v6260
    %6330 = vmatpush.msra.mxu0 %v6257
    %6331 = vmatpush.msra.mxu0 %v6254
    %6332 = vmatpush.msra.mxu0 %v6251
    %6333 = vmatpush.msra.mxu0 %v6248
    %6334 = vmatpush.msra.mxu0 %v6245
    %6335 = vmatpush.msra.mxu0 %v6242
    %6336 = vmatpush.msra.mxu0 %v6239
    %6337 = vmatpush.msra.mxu0 %v6236
    %6338 = vmatpush.msra.mxu0 %v6233
    %6339 = vmatpush.msra.mxu0 %v6230
    %6340 = vmatmul.f32.gmra.mxu0 %v5689
    %v6341 = vpop.f32.mrf.mxu0
    %v6342 = vadd.f32 0.0, %v6341
    %6343 = vdwg.mxu0
    %6344 = vmatpush.msra.mxu0 %v6323
    %6345 = vmatpush.msra.mxu0 %v6320
    %6346 = vmatpush.msra.mxu0 %v6317
    %6347 = vmatpush.msra.mxu0 %v6314
    %6348 = vmatpush.msra.mxu0 %v6311
    %6349 = vmatpush.msra.mxu0 %v6308
    %6350 = vmatpush.msra.mxu0 %v6305
    %6351 = vmatpush.msra.mxu0 %v6302
    %6352 = vmatpush.msra.mxu0 %v6299
    %6353 = vmatpush.msra.mxu0 %v6296
    %6354 = vmatpush.msra.mxu0 %v6293
    %6355 = vmatpush.msra.mxu0 %v6290
    %6356 = vmatpush.msra.mxu0 %v6287
    %6357 = vmatpush.msra.mxu0 %v6284
    %6358 = vmatpush.msra.mxu0 %v6281
    %6359 = vmatpush.msra.mxu0 %v6278
    %6360 = vmatmul.f32.gmra.mxu0 %v5690
    %v6361 = vpop.f32.mrf.mxu0
    %v6362 = vadd.f32 %v6342, %v6361
    %6363 = vdwg.mxu0
    %6364 = vmatpush.msra.mxu0 0.0
    %6365 = vmatpush.msra.mxu0 0.0
    %6366 = vmatpush.msra.mxu0 0.0
    %6367 = vmatpush.msra.mxu0 0.0
    %6368 = vmatpush.msra.mxu0 0.0
    %6369 = vmatpush.msra.mxu0 0.0
    %6370 = vmatpush.msra.mxu0 0.0
    %6371 = vmatpush.msra.mxu0 0.0
    %6372 = vmatpush.msra.mxu0 0.0
    %6373 = vmatpush.msra.mxu0 0.0
    %6374 = vmatpush.msra.mxu0 0.0
    %6375 = vmatpush.msra.mxu0 0.0
    %6376 = vmatpush.msra.mxu0 0.0
    %6377 = vmatpush.msra.mxu0 0.0
    %6378 = vmatpush.msra.mxu0 0.0
    %6379 = vmatpush.msra.mxu0 %v6362
    %6380 = vmatmul.f32.gmra.mxu0 %v5732
    %v6381 = vpop.f32.mrf.mxu0
    %v6382 = vadd.f32 1e-05, %v6381
    %6383 = vmatmul.f32.gmra.mxu0 %v5735
    %v6384 = vpop.f32.mrf.mxu0
    %v6385 = vadd.f32 1e-05, %v6384
    %6386 = vmatmul.f32.gmra.mxu0 %v5738
    %v6387 = vpop.f32.mrf.mxu0
    %v6388 = vadd.f32 1e-05, %v6387
    %6389 = vmatmul.f32.gmra.mxu0 %v5741
    %v6390 = vpop.f32.mrf.mxu0
    %v6391 = vadd.f32 1e-05, %v6390
    %6392 = vmatmul.f32.gmra.mxu0 %v5744
    %v6393 = vpop.f32.mrf.mxu0
    %v6394 = vadd.f32 1e-05, %v6393
    %6395 = vmatmul.f32.gmra.mxu0 %v5747
    %v6396 = vpop.f32.mrf.mxu0
    %v6397 = vadd.f32 1e-05, %v6396
    %6398 = vmatmul.f32.gmra.mxu0 %v5750
    %v6399 = vpop.f32.mrf.mxu0
    %v6400 = vadd.f32 1e-05, %v6399
    %6401 = vmatmul.f32.gmra.mxu0 %v5753
    %v6402 = vpop.f32.mrf.mxu0
    %v6403 = vadd.f32 1e-05, %v6402
    %6404 = vmatmul.f32.gmra.mxu0 %v5756
    %v6405 = vpop.f32.mrf.mxu0
    %v6406 = vadd.f32 1e-05, %v6405
    %6407 = vmatmul.f32.gmra.mxu0 %v5759
    %v6408 = vpop.f32.mrf.mxu0
    %v6409 = vadd.f32 1e-05, %v6408
    %6410 = vmatmul.f32.gmra.mxu0 %v5762
    %v6411 = vpop.f32.mrf.mxu0
    %v6412 = vadd.f32 1e-05, %v6411
    %6413 = vmatmul.f32.gmra.mxu0 %v5765
    %v6414 = vpop.f32.mrf.mxu0
    %v6415 = vadd.f32 1e-05, %v6414
    %6416 = vmatmul.f32.gmra.mxu0 %v5768
    %v6417 = vpop.f32.mrf.mxu0
    %v6418 = vadd.f32 1e-05, %v6417
    %6419 = vmatmul.f32.gmra.mxu0 %v5771
    %v6420 = vpop.f32.mrf.mxu0
    %v6421 = vadd.f32 1e-05, %v6420
    %6422 = vmatmul.f32.gmra.mxu0 %v5774
    %v6423 = vpop.f32.mrf.mxu0
    %v6424 = vadd.f32 1e-05, %v6423
    %6425 = vmatmul.f32.gmra.mxu0 %v5777
    %v6426 = vpop.f32.mrf.mxu0
    %v6427 = vadd.f32 1e-05, %v6426
    %6428 = vmatmul.f32.gmra.mxu0 %v5780
    %v6429 = vpop.f32.mrf.mxu0
    %v6430 = vadd.f32 1e-05, %v6429
    %6431 = vmatmul.f32.gmra.mxu0 %v5783
    %v6432 = vpop.f32.mrf.mxu0
    %v6433 = vadd.f32 1e-05, %v6432
    %6434 = vmatmul.f32.gmra.mxu0 %v5786
    %v6435 = vpop.f32.mrf.mxu0
    %v6436 = vadd.f32 1e-05, %v6435
    %6437 = vmatmul.f32.gmra.mxu0 %v5789
    %v6438 = vpop.f32.mrf.mxu0
    %v6439 = vadd.f32 1e-05, %v6438
    %6440 = vmatmul.f32.gmra.mxu0 %v5792
    %v6441 = vpop.f32.mrf.mxu0
    %v6442 = vadd.f32 1e-05, %v6441
    %6443 = vmatmul.f32.gmra.mxu0 %v5795
    %v6444 = vpop.f32.mrf.mxu0
    %v6445 = vadd.f32 1e-05, %v6444
    %6446 = vmatmul.f32.gmra.mxu0 %v5798
    %v6447 = vpop.f32.mrf.mxu0
    %v6448 = vadd.f32 1e-05, %v6447
    %6449 = vmatmul.f32.gmra.mxu0 %v5801
    %v6450 = vpop.f32.mrf.mxu0
    %v6451 = vadd.f32 1e-05, %v6450
    %6452 = vmatmul.f32.gmra.mxu0 %v5804
    %v6453 = vpop.f32.mrf.mxu0
    %v6454 = vadd.f32 1e-05, %v6453
    %6455 = vmatmul.f32.gmra.mxu0 %v5807
    %v6456 = vpop.f32.mrf.mxu0
    %v6457 = vadd.f32 1e-05, %v6456
    %6458 = vmatmul.f32.gmra.mxu0 %v5810
    %v6459 = vpop.f32.mrf.mxu0
    %v6460 = vadd.f32 1e-05, %v6459
    %6461 = vmatmul.f32.gmra.mxu0 %v5813
    %v6462 = vpop.f32.mrf.mxu0
    %v6463 = vadd.f32 1e-05, %v6462
    %6464 = vmatmul.f32.gmra.mxu0 %v5816
    %v6465 = vpop.f32.mrf.mxu0
    %v6466 = vadd.f32 1e-05, %v6465
    %6467 = vmatmul.f32.gmra.mxu0 %v5819
    %v6468 = vpop.f32.mrf.mxu0
    %v6469 = vadd.f32 1e-05, %v6468
    %6470 = vmatmul.f32.gmra.mxu0 %v5822
    %v6471 = vpop.f32.mrf.mxu0
    %v6472 = vadd.f32 1e-05, %v6471
    %6473 = vmatmul.f32.gmra.mxu0 %v5825
    %v6474 = vpop.f32.mrf.mxu0
    %v6475 = vadd.f32 1e-05, %v6474
    %6476 = vdwg.mxu0
    %v6477 = vrsqrt.pop %v6382
    %v6478 = vmul.f32 %v6477, %v6382
    %v6479 = vmul.f32 %v6478, %v6477
    %v6480 = vmul.f32 0.5, %v6479
    %v6481 = vsub.f32 1.5, %v6480
    %v6482 = vmul.f32 %v6477, %v6481
    %vm6483 = vweird.f32 %v6382
    %vm6484 = vweird.f32 %v6477
    %vm6485 = vmor %vm6483, %vm6484
    %v6486 = vsel %vm6485, %v6477, %v6482
    %v6487 = vrsqrt.pop %v6385
    %v6488 = vmul.f32 %v6487, %v6385
    %v6489 = vmul.f32 %v6488, %v6487
    %v6490 = vmul.f32 0.5, %v6489
    %v6491 = vsub.f32 1.5, %v6490
    %v6492 = vmul.f32 %v6487, %v6491
    %vm6493 = vweird.f32 %v6385
    %vm6494 = vweird.f32 %v6487
    %vm6495 = vmor %vm6493, %vm6494
    %v6496 = vsel %vm6495, %v6487, %v6492
    %v6497 = vrsqrt.pop %v6388
    %v6498 = vmul.f32 %v6497, %v6388
    %v6499 = vmul.f32 %v6498, %v6497
    %v6500 = vmul.f32 0.5, %v6499
    %v6501 = vsub.f32 1.5, %v6500
    %v6502 = vmul.f32 %v6497, %v6501
    %vm6503 = vweird.f32 %v6388
    %vm6504 = vweird.f32 %v6497
    %vm6505 = vmor %vm6503, %vm6504
    %v6506 = vsel %vm6505, %v6497, %v6502
    %v6507 = vrsqrt.pop %v6391
    %v6508 = vmul.f32 %v6507, %v6391
    %v6509 = vmul.f32 %v6508, %v6507
    %v6510 = vmul.f32 0.5, %v6509
    %v6511 = vsub.f32 1.5, %v6510
    %v6512 = vmul.f32 %v6507, %v6511
    %vm6513 = vweird.f32 %v6391
    %vm6514 = vweird.f32 %v6507
    %vm6515 = vmor %vm6513, %vm6514
    %v6516 = vsel %vm6515, %v6507, %v6512
    %v6517 = vrsqrt.pop %v6394
    %v6518 = vmul.f32 %v6517, %v6394
    %v6519 = vmul.f32 %v6518, %v6517
    %v6520 = vmul.f32 0.5, %v6519
    %v6521 = vsub.f32 1.5, %v6520
    %v6522 = vmul.f32 %v6517, %v6521
    %vm6523 = vweird.f32 %v6394
    %vm6524 = vweird.f32 %v6517
    %vm6525 = vmor %vm6523, %vm6524
    %v6526 = vsel %vm6525, %v6517, %v6522
    %v6527 = vrsqrt.pop %v6397
    %v6528 = vmul.f32 %v6527, %v6397
    %v6529 = vmul.f32 %v6528, %v6527
    %v6530 = vmul.f32 0.5, %v6529
    %v6531 = vsub.f32 1.5, %v6530
    %v6532 = vmul.f32 %v6527, %v6531
    %vm6533 = vweird.f32 %v6397
    %vm6534 = vweird.f32 %v6527
    %vm6535 = vmor %vm6533, %vm6534
    %v6536 = vsel %vm6535, %v6527, %v6532
    %v6537 = vrsqrt.pop %v6400
    %v6538 = vmul.f32 %v6537, %v6400
    %v6539 = vmul.f32 %v6538, %v6537
    %v6540 = vmul.f32 0.5, %v6539
    %v6541 = vsub.f32 1.5, %v6540
    %v6542 = vmul.f32 %v6537, %v6541
    %vm6543 = vweird.f32 %v6400
    %vm6544 = vweird.f32 %v6537
    %vm6545 = vmor %vm6543, %vm6544
    %v6546 = vsel %vm6545, %v6537, %v6542
    %v6547 = vrsqrt.pop %v6403
    %v6548 = vmul.f32 %v6547, %v6403
    %v6549 = vmul.f32 %v6548, %v6547
    %v6550 = vmul.f32 0.5, %v6549
    %v6551 = vsub.f32 1.5, %v6550
    %v6552 = vmul.f32 %v6547, %v6551
    %vm6553 = vweird.f32 %v6403
    %vm6554 = vweird.f32 %v6547
    %vm6555 = vmor %vm6553, %vm6554
    %v6556 = vsel %vm6555, %v6547, %v6552
    %v6557 = vrsqrt.pop %v6406
    %v6558 = vmul.f32 %v6557, %v6406
    %v6559 = vmul.f32 %v6558, %v6557
    %v6560 = vmul.f32 0.5, %v6559
    %v6561 = vsub.f32 1.5, %v6560
    %v6562 = vmul.f32 %v6557, %v6561
    %vm6563 = vweird.f32 %v6406
    %vm6564 = vweird.f32 %v6557
    %vm6565 = vmor %vm6563, %vm6564
    %v6566 = vsel %vm6565, %v6557, %v6562
    %v6567 = vrsqrt.pop %v6409
    %v6568 = vmul.f32 %v6567, %v6409
    %v6569 = vmul.f32 %v6568, %v6567
    %v6570 = vmul.f32 0.5, %v6569
    %v6571 = vsub.f32 1.5, %v6570
    %v6572 = vmul.f32 %v6567, %v6571
    %vm6573 = vweird.f32 %v6409
    %vm6574 = vweird.f32 %v6567
    %vm6575 = vmor %vm6573, %vm6574
    %v6576 = vsel %vm6575, %v6567, %v6572
    %v6577 = vrsqrt.pop %v6412
    %v6578 = vmul.f32 %v6577, %v6412
    %v6579 = vmul.f32 %v6578, %v6577
    %v6580 = vmul.f32 0.5, %v6579
    %v6581 = vsub.f32 1.5, %v6580
    %v6582 = vmul.f32 %v6577, %v6581
    %vm6583 = vweird.f32 %v6412
    %vm6584 = vweird.f32 %v6577
    %vm6585 = vmor %vm6583, %vm6584
    %v6586 = vsel %vm6585, %v6577, %v6582
    %v6587 = vrsqrt.pop %v6415
    %v6588 = vmul.f32 %v6587, %v6415
    %v6589 = vmul.f32 %v6588, %v6587
    %v6590 = vmul.f32 0.5, %v6589
    %v6591 = vsub.f32 1.5, %v6590
    %v6592 = vmul.f32 %v6587, %v6591
    %vm6593 = vweird.f32 %v6415
    %vm6594 = vweird.f32 %v6587
    %vm6595 = vmor %vm6593, %vm6594
    %v6596 = vsel %vm6595, %v6587, %v6592
    %v6597 = vrsqrt.pop %v6418
    %v6598 = vmul.f32 %v6597, %v6418
    %v6599 = vmul.f32 %v6598, %v6597
    %v6600 = vmul.f32 0.5, %v6599
    %v6601 = vsub.f32 1.5, %v6600
    %v6602 = vmul.f32 %v6597, %v6601
    %vm6603 = vweird.f32 %v6418
    %vm6604 = vweird.f32 %v6597
    %vm6605 = vmor %vm6603, %vm6604
    %v6606 = vsel %vm6605, %v6597, %v6602
    %v6607 = vrsqrt.pop %v6421
    %v6608 = vmul.f32 %v6607, %v6421
    %v6609 = vmul.f32 %v6608, %v6607
    %v6610 = vmul.f32 0.5, %v6609
    %v6611 = vsub.f32 1.5, %v6610
    %v6612 = vmul.f32 %v6607, %v6611
    %vm6613 = vweird.f32 %v6421
    %vm6614 = vweird.f32 %v6607
    %vm6615 = vmor %vm6613, %vm6614
    %v6616 = vsel %vm6615, %v6607, %v6612
    %v6617 = vrsqrt.pop %v6424
    %v6618 = vmul.f32 %v6617, %v6424
    %v6619 = vmul.f32 %v6618, %v6617
    %v6620 = vmul.f32 0.5, %v6619
    %v6621 = vsub.f32 1.5, %v6620
    %v6622 = vmul.f32 %v6617, %v6621
    %vm6623 = vweird.f32 %v6424
    %vm6624 = vweird.f32 %v6617
    %vm6625 = vmor %vm6623, %vm6624
    %v6626 = vsel %vm6625, %v6617, %v6622
    %v6627 = vrsqrt.pop %v6427
    %v6628 = vmul.f32 %v6627, %v6427
    %v6629 = vmul.f32 %v6628, %v6627
    %v6630 = vmul.f32 0.5, %v6629
    %v6631 = vsub.f32 1.5, %v6630
    %v6632 = vmul.f32 %v6627, %v6631
    %vm6633 = vweird.f32 %v6427
    %vm6634 = vweird.f32 %v6627
    %vm6635 = vmor %vm6633, %vm6634
    %v6636 = vsel %vm6635, %v6627, %v6632
    %v6637 = vrsqrt.pop %v6430
    %v6638 = vmul.f32 %v6637, %v6430
    %v6639 = vmul.f32 %v6638, %v6637
    %v6640 = vmul.f32 0.5, %v6639
    %v6641 = vsub.f32 1.5, %v6640
    %v6642 = vmul.f32 %v6637, %v6641
    %vm6643 = vweird.f32 %v6430
    %vm6644 = vweird.f32 %v6637
    %vm6645 = vmor %vm6643, %vm6644
    %v6646 = vsel %vm6645, %v6637, %v6642
    %v6647 = vrsqrt.pop %v6433
    %v6648 = vmul.f32 %v6647, %v6433
    %v6649 = vmul.f32 %v6648, %v6647
    %v6650 = vmul.f32 0.5, %v6649
    %v6651 = vsub.f32 1.5, %v6650
    %v6652 = vmul.f32 %v6647, %v6651
    %vm6653 = vweird.f32 %v6433
    %vm6654 = vweird.f32 %v6647
    %vm6655 = vmor %vm6653, %vm6654
    %v6656 = vsel %vm6655, %v6647, %v6652
    %v6657 = vrsqrt.pop %v6436
    %v6658 = vmul.f32 %v6657, %v6436
    %v6659 = vmul.f32 %v6658, %v6657
    %v6660 = vmul.f32 0.5, %v6659
    %v6661 = vsub.f32 1.5, %v6660
    %v6662 = vmul.f32 %v6657, %v6661
    %vm6663 = vweird.f32 %v6436
    %vm6664 = vweird.f32 %v6657
    %vm6665 = vmor %vm6663, %vm6664
    %v6666 = vsel %vm6665, %v6657, %v6662
    %v6667 = vrsqrt.pop %v6439
    %v6668 = vmul.f32 %v6667, %v6439
    %v6669 = vmul.f32 %v6668, %v6667
    %v6670 = vmul.f32 0.5, %v6669
    %v6671 = vsub.f32 1.5, %v6670
    %v6672 = vmul.f32 %v6667, %v6671
    %vm6673 = vweird.f32 %v6439
    %vm6674 = vweird.f32 %v6667
    %vm6675 = vmor %vm6673, %vm6674
    %v6676 = vsel %vm6675, %v6667, %v6672
    %v6677 = vrsqrt.pop %v6442
    %v6678 = vmul.f32 %v6677, %v6442
    %v6679 = vmul.f32 %v6678, %v6677
    %v6680 = vmul.f32 0.5, %v6679
    %v6681 = vsub.f32 1.5, %v6680
    %v6682 = vmul.f32 %v6677, %v6681
    %vm6683 = vweird.f32 %v6442
    %vm6684 = vweird.f32 %v6677
    %vm6685 = vmor %vm6683, %vm6684
    %v6686 = vsel %vm6685, %v6677, %v6682
    %v6687 = vrsqrt.pop %v6445
    %v6688 = vmul.f32 %v6687, %v6445
    %v6689 = vmul.f32 %v6688, %v6687
    %v6690 = vmul.f32 0.5, %v6689
    %v6691 = vsub.f32 1.5, %v6690
    %v6692 = vmul.f32 %v6687, %v6691
    %vm6693 = vweird.f32 %v6445
    %vm6694 = vweird.f32 %v6687
    %vm6695 = vmor %vm6693, %vm6694
    %v6696 = vsel %vm6695, %v6687, %v6692
    %v6697 = vrsqrt.pop %v6448
    %v6698 = vmul.f32 %v6697, %v6448
    %v6699 = vmul.f32 %v6698, %v6697
    %v6700 = vmul.f32 0.5, %v6699
    %v6701 = vsub.f32 1.5, %v6700
    %v6702 = vmul.f32 %v6697, %v6701
    %vm6703 = vweird.f32 %v6448
    %vm6704 = vweird.f32 %v6697
    %vm6705 = vmor %vm6703, %vm6704
    %v6706 = vsel %vm6705, %v6697, %v6702
    %v6707 = vrsqrt.pop %v6451
    %v6708 = vmul.f32 %v6707, %v6451
    %v6709 = vmul.f32 %v6708, %v6707
    %v6710 = vmul.f32 0.5, %v6709
    %v6711 = vsub.f32 1.5, %v6710
    %v6712 = vmul.f32 %v6707, %v6711
    %vm6713 = vweird.f32 %v6451
    %vm6714 = vweird.f32 %v6707
    %vm6715 = vmor %vm6713, %vm6714
    %v6716 = vsel %vm6715, %v6707, %v6712
    %v6717 = vrsqrt.pop %v6454
    %v6718 = vmul.f32 %v6717, %v6454
    %v6719 = vmul.f32 %v6718, %v6717
    %v6720 = vmul.f32 0.5, %v6719
    %v6721 = vsub.f32 1.5, %v6720
    %v6722 = vmul.f32 %v6717, %v6721
    %vm6723 = vweird.f32 %v6454
    %vm6724 = vweird.f32 %v6717
    %vm6725 = vmor %vm6723, %vm6724
    %v6726 = vsel %vm6725, %v6717, %v6722
    %v6727 = vrsqrt.pop %v6457
    %v6728 = vmul.f32 %v6727, %v6457
    %v6729 = vmul.f32 %v6728, %v6727
    %v6730 = vmul.f32 0.5, %v6729
    %v6731 = vsub.f32 1.5, %v6730
    %v6732 = vmul.f32 %v6727, %v6731
    %vm6733 = vweird.f32 %v6457
    %vm6734 = vweird.f32 %v6727
    %vm6735 = vmor %vm6733, %vm6734
    %v6736 = vsel %vm6735, %v6727, %v6732
    %v6737 = vrsqrt.pop %v6460
    %v6738 = vmul.f32 %v6737, %v6460
    %v6739 = vmul.f32 %v6738, %v6737
    %v6740 = vmul.f32 0.5, %v6739
    %v6741 = vsub.f32 1.5, %v6740
    %v6742 = vmul.f32 %v6737, %v6741
    %vm6743 = vweird.f32 %v6460
    %vm6744 = vweird.f32 %v6737
    %vm6745 = vmor %vm6743, %vm6744
    %v6746 = vsel %vm6745, %v6737, %v6742
    %v6747 = vrsqrt.pop %v6463
    %v6748 = vmul.f32 %v6747, %v6463
    %v6749 = vmul.f32 %v6748, %v6747
    %v6750 = vmul.f32 0.5, %v6749
    %v6751 = vsub.f32 1.5, %v6750
    %v6752 = vmul.f32 %v6747, %v6751
    %vm6753 = vweird.f32 %v6463
    %vm6754 = vweird.f32 %v6747
    %vm6755 = vmor %vm6753, %vm6754
    %v6756 = vsel %vm6755, %v6747, %v6752
    %v6757 = vrsqrt.pop %v6466
    %v6758 = vmul.f32 %v6757, %v6466
    %v6759 = vmul.f32 %v6758, %v6757
    %v6760 = vmul.f32 0.5, %v6759
    %v6761 = vsub.f32 1.5, %v6760
    %v6762 = vmul.f32 %v6757, %v6761
    %vm6763 = vweird.f32 %v6466
    %vm6764 = vweird.f32 %v6757
    %vm6765 = vmor %vm6763, %vm6764
    %v6766 = vsel %vm6765, %v6757, %v6762
    %v6767 = vrsqrt.pop %v6469
    %v6768 = vmul.f32 %v6767, %v6469
    %v6769 = vmul.f32 %v6768, %v6767
    %v6770 = vmul.f32 0.5, %v6769
    %v6771 = vsub.f32 1.5, %v6770
    %v6772 = vmul.f32 %v6767, %v6771
    %vm6773 = vweird.f32 %v6469
    %vm6774 = vweird.f32 %v6767
    %vm6775 = vmor %vm6773, %vm6774
    %v6776 = vsel %vm6775, %v6767, %v6772
    %v6777 = vrsqrt.pop %v6472
    %v6778 = vmul.f32 %v6777, %v6472
    %v6779 = vmul.f32 %v6778, %v6777
    %v6780 = vmul.f32 0.5, %v6779
    %v6781 = vsub.f32 1.5, %v6780
    %v6782 = vmul.f32 %v6777, %v6781
    %vm6783 = vweird.f32 %v6472
    %vm6784 = vweird.f32 %v6777
    %vm6785 = vmor %vm6783, %vm6784
    %v6786 = vsel %vm6785, %v6777, %v6782
    %v6787 = vrsqrt.pop %v6475
    %v6788 = vmul.f32 %v6787, %v6475
    %v6789 = vmul.f32 %v6788, %v6787
    %v6790 = vmul.f32 0.5, %v6789
    %v6791 = vsub.f32 1.5, %v6790
    %v6792 = vmul.f32 %v6787, %v6791
    %vm6793 = vweird.f32 %v6475
    %vm6794 = vweird.f32 %v6787
    %vm6795 = vmor %vm6793, %vm6794
    %v6796 = vsel %vm6795, %v6787, %v6792
    %6798 = vset.pattern.permute.xlu0 0
    %6799 = vperm.xlu0 %6798, %v6486
    %v6800 = vpop.permute.xlu0 %6799
    %6803 = vset.pattern.permute.xlu0 0
    %6804 = vperm.xlu0 %6803, %v6496
    %v6805 = vpop.permute.xlu0 %6804
    %6808 = vset.pattern.permute.xlu0 0
    %6809 = vperm.xlu0 %6808, %v6506
    %v6810 = vpop.permute.xlu0 %6809
    %6813 = vset.pattern.permute.xlu0 0
    %6814 = vperm.xlu0 %6813, %v6516
    %v6815 = vpop.permute.xlu0 %6814
    %6818 = vset.pattern.permute.xlu0 0
    %6819 = vperm.xlu0 %6818, %v6526
    %v6820 = vpop.permute.xlu0 %6819
    %6823 = vset.pattern.permute.xlu0 0
    %6824 = vperm.xlu0 %6823, %v6536
    %v6825 = vpop.permute.xlu0 %6824
    %6828 = vset.pattern.permute.xlu0 0
    %6829 = vperm.xlu0 %6828, %v6546
    %v6830 = vpop.permute.xlu0 %6829
    %6833 = vset.pattern.permute.xlu0 0
    %6834 = vperm.xlu0 %6833, %v6556
    %v6835 = vpop.permute.xlu0 %6834
    %6838 = vset.pattern.permute.xlu0 0
    %6839 = vperm.xlu0 %6838, %v6566
    %v6840 = vpop.permute.xlu0 %6839
    %6843 = vset.pattern.permute.xlu0 0
    %6844 = vperm.xlu0 %6843, %v6576
    %v6845 = vpop.permute.xlu0 %6844
    %6848 = vset.pattern.permute.xlu0 0
    %6849 = vperm.xlu0 %6848, %v6586
    %v6850 = vpop.permute.xlu0 %6849
    %6853 = vset.pattern.permute.xlu0 0
    %6854 = vperm.xlu0 %6853, %v6596
    %v6855 = vpop.permute.xlu0 %6854
    %6858 = vset.pattern.permute.xlu0 0
    %6859 = vperm.xlu0 %6858, %v6606
    %v6860 = vpop.permute.xlu0 %6859
    %6863 = vset.pattern.permute.xlu0 0
    %6864 = vperm.xlu0 %6863, %v6616
    %v6865 = vpop.permute.xlu0 %6864
    %6868 = vset.pattern.permute.xlu0 0
    %6869 = vperm.xlu0 %6868, %v6626
    %v6870 = vpop.permute.xlu0 %6869
    %6873 = vset.pattern.permute.xlu0 0
    %6874 = vperm.xlu0 %6873, %v6636
    %v6875 = vpop.permute.xlu0 %6874
    %6878 = vset.pattern.permute.xlu0 0
    %6879 = vperm.xlu0 %6878, %v6646
    %v6880 = vpop.permute.xlu0 %6879
    %6883 = vset.pattern.permute.xlu0 0
    %6884 = vperm.xlu0 %6883, %v6656
    %v6885 = vpop.permute.xlu0 %6884
    %6888 = vset.pattern.permute.xlu0 0
    %6889 = vperm.xlu0 %6888, %v6666
    %v6890 = vpop.permute.xlu0 %6889
    %6893 = vset.pattern.permute.xlu0 0
    %6894 = vperm.xlu0 %6893, %v6676
    %v6895 = vpop.permute.xlu0 %6894
    %6898 = vset.pattern.permute.xlu0 0
    %6899 = vperm.xlu0 %6898, %v6686
    %v6900 = vpop.permute.xlu0 %6899
    %6903 = vset.pattern.permute.xlu0 0
    %6904 = vperm.xlu0 %6903, %v6696
    %v6905 = vpop.permute.xlu0 %6904
    %6908 = vset.pattern.permute.xlu0 0
    %6909 = vperm.xlu0 %6908, %v6706
    %v6910 = vpop.permute.xlu0 %6909
    %6913 = vset.pattern.permute.xlu0 0
    %6914 = vperm.xlu0 %6913, %v6716
    %v6915 = vpop.permute.xlu0 %6914
    %6918 = vset.pattern.permute.xlu0 0
    %6919 = vperm.xlu0 %6918, %v6726
    %v6920 = vpop.permute.xlu0 %6919
    %6923 = vset.pattern.permute.xlu0 0
    %6924 = vperm.xlu0 %6923, %v6736
    %v6925 = vpop.permute.xlu0 %6924
    %6928 = vset.pattern.permute.xlu0 0
    %6929 = vperm.xlu0 %6928, %v6746
    %v6930 = vpop.permute.xlu0 %6929
    %6933 = vset.pattern.permute.xlu0 0
    %6934 = vperm.xlu0 %6933, %v6756
    %v6935 = vpop.permute.xlu0 %6934
    %6938 = vset.pattern.permute.xlu0 0
    %6939 = vperm.xlu0 %6938, %v6766
    %v6940 = vpop.permute.xlu0 %6939
    %6943 = vset.pattern.permute.xlu0 0
    %6944 = vperm.xlu0 %6943, %v6776
    %v6945 = vpop.permute.xlu0 %6944
    %6948 = vset.pattern.permute.xlu0 0
    %6949 = vperm.xlu0 %6948, %v6786
    %v6950 = vpop.permute.xlu0 %6949
    %6953 = vset.pattern.permute.xlu0 0
    %6954 = vperm.xlu0 %6953, %v6796
    %v6955 = vpop.permute.xlu0 %6954
    %v6957 = vmul.f32 %v6100, %v6800
    %v6958 = vmul.f32 %v6101, %v6800
    %v6959 = vmul.f32 %v6102, %v6805
    %v6960 = vmul.f32 %v6103, %v6805
    %v6961 = vmul.f32 %v6104, %v6810
    %v6962 = vmul.f32 %v6105, %v6810
    %v6963 = vmul.f32 %v6106, %v6815
    %v6964 = vmul.f32 %v6107, %v6815
    %v6965 = vmul.f32 %v6108, %v6820
    %v6966 = vmul.f32 %v6109, %v6820
    %v6967 = vmul.f32 %v6110, %v6825
    %v6968 = vmul.f32 %v6111, %v6825
    %v6969 = vmul.f32 %v6112, %v6830
    %v6970 = vmul.f32 %v6113, %v6830
    %v6971 = vmul.f32 %v6114, %v6835
    %v6972 = vmul.f32 %v6115, %v6835
    %v6973 = vmul.f32 %v6116, %v6840
    %v6974 = vmul.f32 %v6117, %v6840
    %v6975 = vmul.f32 %v6118, %v6845
    %v6976 = vmul.f32 %v6119, %v6845
    %v6977 = vmul.f32 %v6120, %v6850
    %v6978 = vmul.f32 %v6121, %v6850
    %v6979 = vmul.f32 %v6122, %v6855
    %v6980 = vmul.f32 %v6123, %v6855
    %v6981 = vmul.f32 %v6124, %v6860
    %v6982 = vmul.f32 %v6125, %v6860
    %v6983 = vmul.f32 %v6126, %v6865
    %v6984 = vmul.f32 %v6127, %v6865
    %v6985 = vmul.f32 %v6128, %v6870
    %v6986 = vmul.f32 %v6129, %v6870
    %v6987 = vmul.f32 %v6130, %v6875
    %v6988 = vmul.f32 %v6131, %v6875
    %v6989 = vmul.f32 %v6132, %v6880
    %v6990 = vmul.f32 %v6133, %v6880
    %v6991 = vmul.f32 %v6134, %v6885
    %v6992 = vmul.f32 %v6135, %v6885
    %v6993 = vmul.f32 %v6136, %v6890
    %v6994 = vmul.f32 %v6137, %v6890
    %v6995 = vmul.f32 %v6138, %v6895
    %v6996 = vmul.f32 %v6139, %v6895
    %v6997 = vmul.f32 %v6140, %v6900
    %v6998 = vmul.f32 %v6141, %v6900
    %v6999 = vmul.f32 %v6142, %v6905
    %v7000 = vmul.f32 %v6143, %v6905
    %v7001 = vmul.f32 %v6144, %v6910
    %v7002 = vmul.f32 %v6145, %v6910
    %v7003 = vmul.f32 %v6146, %v6915
    %v7004 = vmul.f32 %v6147, %v6915
    %v7005 = vmul.f32 %v6148, %v6920
    %v7006 = vmul.f32 %v6149, %v6920
    %v7007 = vmul.f32 %v6150, %v6925
    %v7008 = vmul.f32 %v6151, %v6925
    %v7009 = vmul.f32 %v6152, %v6930
    %v7010 = vmul.f32 %v6153, %v6930
    %v7011 = vmul.f32 %v6154, %v6935
    %v7012 = vmul.f32 %v6155, %v6935
    %v7013 = vmul.f32 %v6156, %v6940
    %v7014 = vmul.f32 %v6157, %v6940
    %v7015 = vmul.f32 %v6158, %v6945
    %v7016 = vmul.f32 %v6159, %v6945
    %v7017 = vmul.f32 %v6160, %v6950
    %v7018 = vmul.f32 %v6161, %v6950
    %v7019 = vmul.f32 %v6162, %v6955
    %v7020 = vmul.f32 %v6163, %v6955
    %v7021 = vld [vmem:[%s23] sm:$0xff]
    %v7022 = vld [vmem:[%s23 + $0x8] sm:$0xff]
    %v7023 = vld [vmem:[%s23 + $0x10] sm:$0xff]
    %v7024 = vld [vmem:[%s23 + $0x18] sm:$0xff]
    %v7025 = vld [vmem:[%s23 + $0x20] sm:$0xff]
    %v7026 = vld [vmem:[%s23 + $0x28] sm:$0xff]
    %v7027 = vld [vmem:[%s23 + $0x30] sm:$0xff]
    %v7028 = vld [vmem:[%s23 + $0x38] sm:$0xff]
    %v7029 = vld [vmem:[%s23 + $0x40] sm:$0xff]
    %v7030 = vld [vmem:[%s23 + $0x48] sm:$0xff]
    %v7031 = vld [vmem:[%s23 + $0x50] sm:$0xff]
    %v7032 = vld [vmem:[%s23 + $0x58] sm:$0xff]
    %v7033 = vld [vmem:[%s23 + $0x60] sm:$0xff]
    %v7034 = vld [vmem:[%s23 + $0x68] sm:$0xff]
    %v7035 = vld [vmem:[%s23 + $0x70] sm:$0xff]
    %v7036 = vld [vmem:[%s23 + $0x78] sm:$0xff]
    %v7037 = vld [vmem:[%s23 + $0x80] sm:$0xff]
    %v7038 = vld [vmem:[%s23 + $0x88] sm:$0xff]
    %v7039 = vld [vmem:[%s23 + $0x90] sm:$0xff]
    %v7040 = vld [vmem:[%s23 + $0x98] sm:$0xff]
    %v7041 = vld [vmem:[%s23 + $0xa0] sm:$0xff]
    %v7042 = vld [vmem:[%s23 + $0xa8] sm:$0xff]
    %v7043 = vld [vmem:[%s23 + $0xb0] sm:$0xff]
    %v7044 = vld [vmem:[%s23 + $0xb8] sm:$0xff]
    %v7045 = vld [vmem:[%s23 + $0xc0] sm:$0xff]
    %v7046 = vld [vmem:[%s23 + $0xc8] sm:$0xff]
    %v7047 = vld [vmem:[%s23 + $0xd0] sm:$0xff]
    %v7048 = vld [vmem:[%s23 + $0xd8] sm:$0xff]
    %v7049 = vld [vmem:[%s23 + $0xe0] sm:$0xff]
    %v7050 = vld [vmem:[%s23 + $0xe8] sm:$0xff]
    %v7051 = vld [vmem:[%s23 + $0xf0] sm:$0xff]
    %v7052 = vld [vmem:[%s23 + $0xf8] sm:$0xff]
    %7054 = vset.pattern.permute.xlu0 0
    %7055 = vperm.xlu0 %7054, %v7021
    %v7056 = vpop.permute.xlu0 %7055
    %7059 = vset.pattern.permute.xlu0 0
    %7060 = vperm.xlu0 %7059, %v7022
    %v7061 = vpop.permute.xlu0 %7060
    %7064 = vset.pattern.permute.xlu0 0
    %7065 = vperm.xlu0 %7064, %v7023
    %v7066 = vpop.permute.xlu0 %7065
    %7069 = vset.pattern.permute.xlu0 0
    %7070 = vperm.xlu0 %7069, %v7024
    %v7071 = vpop.permute.xlu0 %7070
    %7074 = vset.pattern.permute.xlu0 0
    %7075 = vperm.xlu0 %7074, %v7025
    %v7076 = vpop.permute.xlu0 %7075
    %7079 = vset.pattern.permute.xlu0 0
    %7080 = vperm.xlu0 %7079, %v7026
    %v7081 = vpop.permute.xlu0 %7080
    %7084 = vset.pattern.permute.xlu0 0
    %7085 = vperm.xlu0 %7084, %v7027
    %v7086 = vpop.permute.xlu0 %7085
    %7089 = vset.pattern.permute.xlu0 0
    %7090 = vperm.xlu0 %7089, %v7028
    %v7091 = vpop.permute.xlu0 %7090
    %7094 = vset.pattern.permute.xlu0 0
    %7095 = vperm.xlu0 %7094, %v7029
    %v7096 = vpop.permute.xlu0 %7095
    %7099 = vset.pattern.permute.xlu0 0
    %7100 = vperm.xlu0 %7099, %v7030
    %v7101 = vpop.permute.xlu0 %7100
    %7104 = vset.pattern.permute.xlu0 0
    %7105 = vperm.xlu0 %7104, %v7031
    %v7106 = vpop.permute.xlu0 %7105
    %7109 = vset.pattern.permute.xlu0 0
    %7110 = vperm.xlu0 %7109, %v7032
    %v7111 = vpop.permute.xlu0 %7110
    %7114 = vset.pattern.permute.xlu0 0
    %7115 = vperm.xlu0 %7114, %v7033
    %v7116 = vpop.permute.xlu0 %7115
    %7119 = vset.pattern.permute.xlu0 0
    %7120 = vperm.xlu0 %7119, %v7034
    %v7121 = vpop.permute.xlu0 %7120
    %7124 = vset.pattern.permute.xlu0 0
    %7125 = vperm.xlu0 %7124, %v7035
    %v7126 = vpop.permute.xlu0 %7125
    %7129 = vset.pattern.permute.xlu0 0
    %7130 = vperm.xlu0 %7129, %v7036
    %v7131 = vpop.permute.xlu0 %7130
    %7134 = vset.pattern.permute.xlu0 0
    %7135 = vperm.xlu0 %7134, %v7037
    %v7136 = vpop.permute.xlu0 %7135
    %7139 = vset.pattern.permute.xlu0 0
    %7140 = vperm.xlu0 %7139, %v7038
    %v7141 = vpop.permute.xlu0 %7140
    %7144 = vset.pattern.permute.xlu0 0
    %7145 = vperm.xlu0 %7144, %v7039
    %v7146 = vpop.permute.xlu0 %7145
    %7149 = vset.pattern.permute.xlu0 0
    %7150 = vperm.xlu0 %7149, %v7040
    %v7151 = vpop.permute.xlu0 %7150
    %7154 = vset.pattern.permute.xlu0 0
    %7155 = vperm.xlu0 %7154, %v7041
    %v7156 = vpop.permute.xlu0 %7155
    %7159 = vset.pattern.permute.xlu0 0
    %7160 = vperm.xlu0 %7159, %v7042
    %v7161 = vpop.permute.xlu0 %7160
    %7164 = vset.pattern.permute.xlu0 0
    %7165 = vperm.xlu0 %7164, %v7043
    %v7166 = vpop.permute.xlu0 %7165
    %7169 = vset.pattern.permute.xlu0 0
    %7170 = vperm.xlu0 %7169, %v7044
    %v7171 = vpop.permute.xlu0 %7170
    %7174 = vset.pattern.permute.xlu0 0
    %7175 = vperm.xlu0 %7174, %v7045
    %v7176 = vpop.permute.xlu0 %7175
    %7179 = vset.pattern.permute.xlu0 0
    %7180 = vperm.xlu0 %7179, %v7046
    %v7181 = vpop.permute.xlu0 %7180
    %7184 = vset.pattern.permute.xlu0 0
    %7185 = vperm.xlu0 %7184, %v7047
    %v7186 = vpop.permute.xlu0 %7185
    %7189 = vset.pattern.permute.xlu0 0
    %7190 = vperm.xlu0 %7189, %v7048
    %v7191 = vpop.permute.xlu0 %7190
    %7194 = vset.pattern.permute.xlu0 0
    %7195 = vperm.xlu0 %7194, %v7049
    %v7196 = vpop.permute.xlu0 %7195
    %7199 = vset.pattern.permute.xlu0 0
    %7200 = vperm.xlu0 %7199, %v7050
    %v7201 = vpop.permute.xlu0 %7200
    %7204 = vset.pattern.permute.xlu0 0
    %7205 = vperm.xlu0 %7204, %v7051
    %v7206 = vpop.permute.xlu0 %7205
    %7209 = vset.pattern.permute.xlu0 0
    %7210 = vperm.xlu0 %7209, %v7052
    %v7211 = vpop.permute.xlu0 %7210
    %v7213 = vmul.f32 %v6957, %v7056
    %v7214 = vmul.f32 %v6958, %v7056
    %v7215 = vmul.f32 %v6959, %v7061
    %v7216 = vmul.f32 %v6960, %v7061
    %v7217 = vmul.f32 %v6961, %v7066
    %v7218 = vmul.f32 %v6962, %v7066
    %v7219 = vmul.f32 %v6963, %v7071
    %v7220 = vmul.f32 %v6964, %v7071
    %v7221 = vmul.f32 %v6965, %v7076
    %v7222 = vmul.f32 %v6966, %v7076
    %v7223 = vmul.f32 %v6967, %v7081
    %v7224 = vmul.f32 %v6968, %v7081
    %v7225 = vmul.f32 %v6969, %v7086
    %v7226 = vmul.f32 %v6970, %v7086
    %v7227 = vmul.f32 %v6971, %v7091
    %v7228 = vmul.f32 %v6972, %v7091
    %v7229 = vmul.f32 %v6973, %v7096
    %v7230 = vmul.f32 %v6974, %v7096
    %v7231 = vmul.f32 %v6975, %v7101
    %v7232 = vmul.f32 %v6976, %v7101
    %v7233 = vmul.f32 %v6977, %v7106
    %v7234 = vmul.f32 %v6978, %v7106
    %v7235 = vmul.f32 %v6979, %v7111
    %v7236 = vmul.f32 %v6980, %v7111
    %v7237 = vmul.f32 %v6981, %v7116
    %v7238 = vmul.f32 %v6982, %v7116
    %v7239 = vmul.f32 %v6983, %v7121
    %v7240 = vmul.f32 %v6984, %v7121
    %v7241 = vmul.f32 %v6985, %v7126
    %v7242 = vmul.f32 %v6986, %v7126
    %v7243 = vmul.f32 %v6987, %v7131
    %v7244 = vmul.f32 %v6988, %v7131
    %v7245 = vmul.f32 %v6989, %v7136
    %v7246 = vmul.f32 %v6990, %v7136
    %v7247 = vmul.f32 %v6991, %v7141
    %v7248 = vmul.f32 %v6992, %v7141
    %v7249 = vmul.f32 %v6993, %v7146
    %v7250 = vmul.f32 %v6994, %v7146
    %v7251 = vmul.f32 %v6995, %v7151
    %v7252 = vmul.f32 %v6996, %v7151
    %v7253 = vmul.f32 %v6997, %v7156
    %v7254 = vmul.f32 %v6998, %v7156
    %v7255 = vmul.f32 %v6999, %v7161
    %v7256 = vmul.f32 %v7000, %v7161
    %v7257 = vmul.f32 %v7001, %v7166
    %v7258 = vmul.f32 %v7002, %v7166
    %v7259 = vmul.f32 %v7003, %v7171
    %v7260 = vmul.f32 %v7004, %v7171
    %v7261 = vmul.f32 %v7005, %v7176
    %v7262 = vmul.f32 %v7006, %v7176
    %v7263 = vmul.f32 %v7007, %v7181
    %v7264 = vmul.f32 %v7008, %v7181
    %v7265 = vmul.f32 %v7009, %v7186
    %v7266 = vmul.f32 %v7010, %v7186
    %v7267 = vmul.f32 %v7011, %v7191
    %v7268 = vmul.f32 %v7012, %v7191
    %v7269 = vmul.f32 %v7013, %v7196
    %v7270 = vmul.f32 %v7014, %v7196
    %v7271 = vmul.f32 %v7015, %v7201
    %v7272 = vmul.f32 %v7016, %v7201
    %v7273 = vmul.f32 %v7017, %v7206
    %v7274 = vmul.f32 %v7018, %v7206
    %v7275 = vmul.f32 %v7019, %v7211
    %v7276 = vmul.f32 %v7020, %v7211
    %s7277 = scalar_lea.vmem %s23, 256
    %v7278 = vld [vmem:[%s7277] sm:$0xff]
    %v7279 = vld [vmem:[%s7277 + $0x8] sm:$0xff]
    %v7280 = vld [vmem:[%s7277 + $0x10] sm:$0xff]
    %v7281 = vld [vmem:[%s7277 + $0x18] sm:$0xff]
    %v7282 = vld [vmem:[%s7277 + $0x20] sm:$0xff]
    %v7283 = vld [vmem:[%s7277 + $0x28] sm:$0xff]
    %v7284 = vld [vmem:[%s7277 + $0x30] sm:$0xff]
    %v7285 = vld [vmem:[%s7277 + $0x38] sm:$0xff]
    %v7286 = vld [vmem:[%s7277 + $0x40] sm:$0xff]
    %v7287 = vld [vmem:[%s7277 + $0x48] sm:$0xff]
    %v7288 = vld [vmem:[%s7277 + $0x50] sm:$0xff]
    %v7289 = vld [vmem:[%s7277 + $0x58] sm:$0xff]
    %v7290 = vld [vmem:[%s7277 + $0x60] sm:$0xff]
    %v7291 = vld [vmem:[%s7277 + $0x68] sm:$0xff]
    %v7292 = vld [vmem:[%s7277 + $0x70] sm:$0xff]
    %v7293 = vld [vmem:[%s7277 + $0x78] sm:$0xff]
    %v7294 = vld [vmem:[%s7277 + $0x80] sm:$0xff]
    %v7295 = vld [vmem:[%s7277 + $0x88] sm:$0xff]
    %v7296 = vld [vmem:[%s7277 + $0x90] sm:$0xff]
    %v7297 = vld [vmem:[%s7277 + $0x98] sm:$0xff]
    %v7298 = vld [vmem:[%s7277 + $0xa0] sm:$0xff]
    %v7299 = vld [vmem:[%s7277 + $0xa8] sm:$0xff]
    %v7300 = vld [vmem:[%s7277 + $0xb0] sm:$0xff]
    %v7301 = vld [vmem:[%s7277 + $0xb8] sm:$0xff]
    %v7302 = vld [vmem:[%s7277 + $0xc0] sm:$0xff]
    %v7303 = vld [vmem:[%s7277 + $0xc8] sm:$0xff]
    %v7304 = vld [vmem:[%s7277 + $0xd0] sm:$0xff]
    %v7305 = vld [vmem:[%s7277 + $0xd8] sm:$0xff]
    %v7306 = vld [vmem:[%s7277 + $0xe0] sm:$0xff]
    %v7307 = vld [vmem:[%s7277 + $0xe8] sm:$0xff]
    %v7308 = vld [vmem:[%s7277 + $0xf0] sm:$0xff]
    %v7309 = vld [vmem:[%s7277 + $0xf8] sm:$0xff]
    %7311 = vset.pattern.permute.xlu0 0
    %7312 = vperm.xlu0 %7311, %v7278
    %v7313 = vpop.permute.xlu0 %7312
    %7316 = vset.pattern.permute.xlu0 0
    %7317 = vperm.xlu0 %7316, %v7279
    %v7318 = vpop.permute.xlu0 %7317
    %7321 = vset.pattern.permute.xlu0 0
    %7322 = vperm.xlu0 %7321, %v7280
    %v7323 = vpop.permute.xlu0 %7322
    %7326 = vset.pattern.permute.xlu0 0
    %7327 = vperm.xlu0 %7326, %v7281
    %v7328 = vpop.permute.xlu0 %7327
    %7331 = vset.pattern.permute.xlu0 0
    %7332 = vperm.xlu0 %7331, %v7282
    %v7333 = vpop.permute.xlu0 %7332
    %7336 = vset.pattern.permute.xlu0 0
    %7337 = vperm.xlu0 %7336, %v7283
    %v7338 = vpop.permute.xlu0 %7337
    %7341 = vset.pattern.permute.xlu0 0
    %7342 = vperm.xlu0 %7341, %v7284
    %v7343 = vpop.permute.xlu0 %7342
    %7346 = vset.pattern.permute.xlu0 0
    %7347 = vperm.xlu0 %7346, %v7285
    %v7348 = vpop.permute.xlu0 %7347
    %7351 = vset.pattern.permute.xlu0 0
    %7352 = vperm.xlu0 %7351, %v7286
    %v7353 = vpop.permute.xlu0 %7352
    %7356 = vset.pattern.permute.xlu0 0
    %7357 = vperm.xlu0 %7356, %v7287
    %v7358 = vpop.permute.xlu0 %7357
    %7361 = vset.pattern.permute.xlu0 0
    %7362 = vperm.xlu0 %7361, %v7288
    %v7363 = vpop.permute.xlu0 %7362
    %7366 = vset.pattern.permute.xlu0 0
    %7367 = vperm.xlu0 %7366, %v7289
    %v7368 = vpop.permute.xlu0 %7367
    %7371 = vset.pattern.permute.xlu0 0
    %7372 = vperm.xlu0 %7371, %v7290
    %v7373 = vpop.permute.xlu0 %7372
    %7376 = vset.pattern.permute.xlu0 0
    %7377 = vperm.xlu0 %7376, %v7291
    %v7378 = vpop.permute.xlu0 %7377
    %7381 = vset.pattern.permute.xlu0 0
    %7382 = vperm.xlu0 %7381, %v7292
    %v7383 = vpop.permute.xlu0 %7382
    %7386 = vset.pattern.permute.xlu0 0
    %7387 = vperm.xlu0 %7386, %v7293
    %v7388 = vpop.permute.xlu0 %7387
    %7391 = vset.pattern.permute.xlu0 0
    %7392 = vperm.xlu0 %7391, %v7294
    %v7393 = vpop.permute.xlu0 %7392
    %7396 = vset.pattern.permute.xlu0 0
    %7397 = vperm.xlu0 %7396, %v7295
    %v7398 = vpop.permute.xlu0 %7397
    %7401 = vset.pattern.permute.xlu0 0
    %7402 = vperm.xlu0 %7401, %v7296
    %v7403 = vpop.permute.xlu0 %7402
    %7406 = vset.pattern.permute.xlu0 0
    %7407 = vperm.xlu0 %7406, %v7297
    %v7408 = vpop.permute.xlu0 %7407
    %7411 = vset.pattern.permute.xlu0 0
    %7412 = vperm.xlu0 %7411, %v7298
    %v7413 = vpop.permute.xlu0 %7412
    %7416 = vset.pattern.permute.xlu0 0
    %7417 = vperm.xlu0 %7416, %v7299
    %v7418 = vpop.permute.xlu0 %7417
    %7421 = vset.pattern.permute.xlu0 0
    %7422 = vperm.xlu0 %7421, %v7300
    %v7423 = vpop.permute.xlu0 %7422
    %7426 = vset.pattern.permute.xlu0 0
    %7427 = vperm.xlu0 %7426, %v7301
    %v7428 = vpop.permute.xlu0 %7427
    %7431 = vset.pattern.permute.xlu0 0
    %7432 = vperm.xlu0 %7431, %v7302
    %v7433 = vpop.permute.xlu0 %7432
    %7436 = vset.pattern.permute.xlu0 0
    %7437 = vperm.xlu0 %7436, %v7303
    %v7438 = vpop.permute.xlu0 %7437
    %7441 = vset.pattern.permute.xlu0 0
    %7442 = vperm.xlu0 %7441, %v7304
    %v7443 = vpop.permute.xlu0 %7442
    %7446 = vset.pattern.permute.xlu0 0
    %7447 = vperm.xlu0 %7446, %v7305
    %v7448 = vpop.permute.xlu0 %7447
    %7451 = vset.pattern.permute.xlu0 0
    %7452 = vperm.xlu0 %7451, %v7306
    %v7453 = vpop.permute.xlu0 %7452
    %7456 = vset.pattern.permute.xlu0 0
    %7457 = vperm.xlu0 %7456, %v7307
    %v7458 = vpop.permute.xlu0 %7457
    %7461 = vset.pattern.permute.xlu0 0
    %7462 = vperm.xlu0 %7461, %v7308
    %v7463 = vpop.permute.xlu0 %7462
    %7466 = vset.pattern.permute.xlu0 0
    %7467 = vperm.xlu0 %7466, %v7309
    %v7468 = vpop.permute.xlu0 %7467
    %v7470 = vadd.f32 %v7213, %v7313
    %v7471 = vadd.f32 %v7214, %v7313
    %v7472 = vadd.f32 %v7215, %v7318
    %v7473 = vadd.f32 %v7216, %v7318
    %v7474 = vadd.f32 %v7217, %v7323
    %v7475 = vadd.f32 %v7218, %v7323
    %v7476 = vadd.f32 %v7219, %v7328
    %v7477 = vadd.f32 %v7220, %v7328
    %v7478 = vadd.f32 %v7221, %v7333
    %v7479 = vadd.f32 %v7222, %v7333
    %v7480 = vadd.f32 %v7223, %v7338
    %v7481 = vadd.f32 %v7224, %v7338
    %v7482 = vadd.f32 %v7225, %v7343
    %v7483 = vadd.f32 %v7226, %v7343
    %v7484 = vadd.f32 %v7227, %v7348
    %v7485 = vadd.f32 %v7228, %v7348
    %v7486 = vadd.f32 %v7229, %v7353
    %v7487 = vadd.f32 %v7230, %v7353
    %v7488 = vadd.f32 %v7231, %v7358
    %v7489 = vadd.f32 %v7232, %v7358
    %v7490 = vadd.f32 %v7233, %v7363
    %v7491 = vadd.f32 %v7234, %v7363
    %v7492 = vadd.f32 %v7235, %v7368
    %v7493 = vadd.f32 %v7236, %v7368
    %v7494 = vadd.f32 %v7237, %v7373
    %v7495 = vadd.f32 %v7238, %v7373
    %v7496 = vadd.f32 %v7239, %v7378
    %v7497 = vadd.f32 %v7240, %v7378
    %v7498 = vadd.f32 %v7241, %v7383
    %v7499 = vadd.f32 %v7242, %v7383
    %v7500 = vadd.f32 %v7243, %v7388
    %v7501 = vadd.f32 %v7244, %v7388
    %v7502 = vadd.f32 %v7245, %v7393
    %v7503 = vadd.f32 %v7246, %v7393
    %v7504 = vadd.f32 %v7247, %v7398
    %v7505 = vadd.f32 %v7248, %v7398
    %v7506 = vadd.f32 %v7249, %v7403
    %v7507 = vadd.f32 %v7250, %v7403
    %v7508 = vadd.f32 %v7251, %v7408
    %v7509 = vadd.f32 %v7252, %v7408
    %v7510 = vadd.f32 %v7253, %v7413
    %v7511 = vadd.f32 %v7254, %v7413
    %v7512 = vadd.f32 %v7255, %v7418
    %v7513 = vadd.f32 %v7256, %v7418
    %v7514 = vadd.f32 %v7257, %v7423
    %v7515 = vadd.f32 %v7258, %v7423
    %v7516 = vadd.f32 %v7259, %v7428
    %v7517 = vadd.f32 %v7260, %v7428
    %v7518 = vadd.f32 %v7261, %v7433
    %v7519 = vadd.f32 %v7262, %v7433
    %v7520 = vadd.f32 %v7263, %v7438
    %v7521 = vadd.f32 %v7264, %v7438
    %v7522 = vadd.f32 %v7265, %v7443
    %v7523 = vadd.f32 %v7266, %v7443
    %v7524 = vadd.f32 %v7267, %v7448
    %v7525 = vadd.f32 %v7268, %v7448
    %v7526 = vadd.f32 %v7269, %v7453
    %v7527 = vadd.f32 %v7270, %v7453
    %v7528 = vadd.f32 %v7271, %v7458
    %v7529 = vadd.f32 %v7272, %v7458
    %v7530 = vadd.f32 %v7273, %v7463
    %v7531 = vadd.f32 %v7274, %v7463
    %v7532 = vadd.f32 %v7275, %v7468
    %v7533 = vadd.f32 %v7276, %v7468
    %vm7534 = vcmp.ge.f32.partialorder %v7470, 0.0
    %vm7535 = vcmp.ge.f32.partialorder %v7471, 0.0
    %vm7536 = vcmp.ge.f32.partialorder %v7472, 0.0
    %vm7537 = vcmp.ge.f32.partialorder %v7473, 0.0
    %vm7538 = vcmp.ge.f32.partialorder %v7474, 0.0
    %vm7539 = vcmp.ge.f32.partialorder %v7475, 0.0
    %vm7540 = vcmp.ge.f32.partialorder %v7476, 0.0
    %vm7541 = vcmp.ge.f32.partialorder %v7477, 0.0
    %vm7542 = vcmp.ge.f32.partialorder %v7478, 0.0
    %vm7543 = vcmp.ge.f32.partialorder %v7479, 0.0
    %vm7544 = vcmp.ge.f32.partialorder %v7480, 0.0
    %vm7545 = vcmp.ge.f32.partialorder %v7481, 0.0
    %vm7546 = vcmp.ge.f32.partialorder %v7482, 0.0
    %vm7547 = vcmp.ge.f32.partialorder %v7483, 0.0
    %vm7548 = vcmp.ge.f32.partialorder %v7484, 0.0
    %vm7549 = vcmp.ge.f32.partialorder %v7485, 0.0
    %vm7550 = vcmp.ge.f32.partialorder %v7486, 0.0
    %vm7551 = vcmp.ge.f32.partialorder %v7487, 0.0
    %vm7552 = vcmp.ge.f32.partialorder %v7488, 0.0
    %vm7553 = vcmp.ge.f32.partialorder %v7489, 0.0
    %vm7554 = vcmp.ge.f32.partialorder %v7490, 0.0
    %vm7555 = vcmp.ge.f32.partialorder %v7491, 0.0
    %vm7556 = vcmp.ge.f32.partialorder %v7492, 0.0
    %vm7557 = vcmp.ge.f32.partialorder %v7493, 0.0
    %vm7558 = vcmp.ge.f32.partialorder %v7494, 0.0
    %vm7559 = vcmp.ge.f32.partialorder %v7495, 0.0
    %vm7560 = vcmp.ge.f32.partialorder %v7496, 0.0
    %vm7561 = vcmp.ge.f32.partialorder %v7497, 0.0
    %vm7562 = vcmp.ge.f32.partialorder %v7498, 0.0
    %vm7563 = vcmp.ge.f32.partialorder %v7499, 0.0
    %vm7564 = vcmp.ge.f32.partialorder %v7500, 0.0
    %vm7565 = vcmp.ge.f32.partialorder %v7501, 0.0
    %vm7566 = vcmp.ge.f32.partialorder %v7502, 0.0
    %vm7567 = vcmp.ge.f32.partialorder %v7503, 0.0
    %vm7568 = vcmp.ge.f32.partialorder %v7504, 0.0
    %vm7569 = vcmp.ge.f32.partialorder %v7505, 0.0
    %vm7570 = vcmp.ge.f32.partialorder %v7506, 0.0
    %vm7571 = vcmp.ge.f32.partialorder %v7507, 0.0
    %vm7572 = vcmp.ge.f32.partialorder %v7508, 0.0
    %vm7573 = vcmp.ge.f32.partialorder %v7509, 0.0
    %vm7574 = vcmp.ge.f32.partialorder %v7510, 0.0
    %vm7575 = vcmp.ge.f32.partialorder %v7511, 0.0
    %vm7576 = vcmp.ge.f32.partialorder %v7512, 0.0
    %vm7577 = vcmp.ge.f32.partialorder %v7513, 0.0
    %vm7578 = vcmp.ge.f32.partialorder %v7514, 0.0
    %vm7579 = vcmp.ge.f32.partialorder %v7515, 0.0
    %vm7580 = vcmp.ge.f32.partialorder %v7516, 0.0
    %vm7581 = vcmp.ge.f32.partialorder %v7517, 0.0
    %vm7582 = vcmp.ge.f32.partialorder %v7518, 0.0
    %vm7583 = vcmp.ge.f32.partialorder %v7519, 0.0
    %vm7584 = vcmp.ge.f32.partialorder %v7520, 0.0
    %vm7585 = vcmp.ge.f32.partialorder %v7521, 0.0
    %vm7586 = vcmp.ge.f32.partialorder %v7522, 0.0
    %vm7587 = vcmp.ge.f32.partialorder %v7523, 0.0
    %vm7588 = vcmp.ge.f32.partialorder %v7524, 0.0
    %vm7589 = vcmp.ge.f32.partialorder %v7525, 0.0
    %vm7590 = vcmp.ge.f32.partialorder %v7526, 0.0
    %vm7591 = vcmp.ge.f32.partialorder %v7527, 0.0
    %vm7592 = vcmp.ge.f32.partialorder %v7528, 0.0
    %vm7593 = vcmp.ge.f32.partialorder %v7529, 0.0
    %vm7594 = vcmp.ge.f32.partialorder %v7530, 0.0
    %vm7595 = vcmp.ge.f32.partialorder %v7531, 0.0
    %vm7596 = vcmp.ge.f32.partialorder %v7532, 0.0
    %vm7597 = vcmp.ge.f32.partialorder %v7533, 0.0
    %v7598 = vmul.f32 %v7470, 0.01
    %v7599 = vmul.f32 %v7471, 0.01
    %v7600 = vmul.f32 %v7472, 0.01
    %v7601 = vmul.f32 %v7473, 0.01
    %v7602 = vmul.f32 %v7474, 0.01
    %v7603 = vmul.f32 %v7475, 0.01
    %v7604 = vmul.f32 %v7476, 0.01
    %v7605 = vmul.f32 %v7477, 0.01
    %v7606 = vmul.f32 %v7478, 0.01
    %v7607 = vmul.f32 %v7479, 0.01
    %v7608 = vmul.f32 %v7480, 0.01
    %v7609 = vmul.f32 %v7481, 0.01
    %v7610 = vmul.f32 %v7482, 0.01
    %v7611 = vmul.f32 %v7483, 0.01
    %v7612 = vmul.f32 %v7484, 0.01
    %v7613 = vmul.f32 %v7485, 0.01
    %v7614 = vmul.f32 %v7486, 0.01
    %v7615 = vmul.f32 %v7487, 0.01
    %v7616 = vmul.f32 %v7488, 0.01
    %v7617 = vmul.f32 %v7489, 0.01
    %v7618 = vmul.f32 %v7490, 0.01
    %v7619 = vmul.f32 %v7491, 0.01
    %v7620 = vmul.f32 %v7492, 0.01
    %v7621 = vmul.f32 %v7493, 0.01
    %v7622 = vmul.f32 %v7494, 0.01
    %v7623 = vmul.f32 %v7495, 0.01
    %v7624 = vmul.f32 %v7496, 0.01
    %v7625 = vmul.f32 %v7497, 0.01
    %v7626 = vmul.f32 %v7498, 0.01
    %v7627 = vmul.f32 %v7499, 0.01
    %v7628 = vmul.f32 %v7500, 0.01
    %v7629 = vmul.f32 %v7501, 0.01
    %v7630 = vmul.f32 %v7502, 0.01
    %v7631 = vmul.f32 %v7503, 0.01
    %v7632 = vmul.f32 %v7504, 0.01
    %v7633 = vmul.f32 %v7505, 0.01
    %v7634 = vmul.f32 %v7506, 0.01
    %v7635 = vmul.f32 %v7507, 0.01
    %v7636 = vmul.f32 %v7508, 0.01
    %v7637 = vmul.f32 %v7509, 0.01
    %v7638 = vmul.f32 %v7510, 0.01
    %v7639 = vmul.f32 %v7511, 0.01
    %v7640 = vmul.f32 %v7512, 0.01
    %v7641 = vmul.f32 %v7513, 0.01
    %v7642 = vmul.f32 %v7514, 0.01
    %v7643 = vmul.f32 %v7515, 0.01
    %v7644 = vmul.f32 %v7516, 0.01
    %v7645 = vmul.f32 %v7517, 0.01
    %v7646 = vmul.f32 %v7518, 0.01
    %v7647 = vmul.f32 %v7519, 0.01
    %v7648 = vmul.f32 %v7520, 0.01
    %v7649 = vmul.f32 %v7521, 0.01
    %v7650 = vmul.f32 %v7522, 0.01
    %v7651 = vmul.f32 %v7523, 0.01
    %v7652 = vmul.f32 %v7524, 0.01
    %v7653 = vmul.f32 %v7525, 0.01
    %v7654 = vmul.f32 %v7526, 0.01
    %v7655 = vmul.f32 %v7527, 0.01
    %v7656 = vmul.f32 %v7528, 0.01
    %v7657 = vmul.f32 %v7529, 0.01
    %v7658 = vmul.f32 %v7530, 0.01
    %v7659 = vmul.f32 %v7531, 0.01
    %v7660 = vmul.f32 %v7532, 0.01
    %v7661 = vmul.f32 %v7533, 0.01
    %v7662 = vsel %vm7534, %v7470, %v7598
    %v7663 = vsel %vm7535, %v7471, %v7599
    %v7664 = vsel %vm7536, %v7472, %v7600
    %v7665 = vsel %vm7537, %v7473, %v7601
    %v7666 = vsel %vm7538, %v7474, %v7602
    %v7667 = vsel %vm7539, %v7475, %v7603
    %v7668 = vsel %vm7540, %v7476, %v7604
    %v7669 = vsel %vm7541, %v7477, %v7605
    %v7670 = vsel %vm7542, %v7478, %v7606
    %v7671 = vsel %vm7543, %v7479, %v7607
    %v7672 = vsel %vm7544, %v7480, %v7608
    %v7673 = vsel %vm7545, %v7481, %v7609
    %v7674 = vsel %vm7546, %v7482, %v7610
    %v7675 = vsel %vm7547, %v7483, %v7611
    %v7676 = vsel %vm7548, %v7484, %v7612
    %v7677 = vsel %vm7549, %v7485, %v7613
    %v7678 = vsel %vm7550, %v7486, %v7614
    %v7679 = vsel %vm7551, %v7487, %v7615
    %v7680 = vsel %vm7552, %v7488, %v7616
    %v7681 = vsel %vm7553, %v7489, %v7617
    %v7682 = vsel %vm7554, %v7490, %v7618
    %v7683 = vsel %vm7555, %v7491, %v7619
    %v7684 = vsel %vm7556, %v7492, %v7620
    %v7685 = vsel %vm7557, %v7493, %v7621
    %v7686 = vsel %vm7558, %v7494, %v7622
    %v7687 = vsel %vm7559, %v7495, %v7623
    %v7688 = vsel %vm7560, %v7496, %v7624
    %v7689 = vsel %vm7561, %v7497, %v7625
    %v7690 = vsel %vm7562, %v7498, %v7626
    %v7691 = vsel %vm7563, %v7499, %v7627
    %v7692 = vsel %vm7564, %v7500, %v7628
    %v7693 = vsel %vm7565, %v7501, %v7629
    %v7694 = vsel %vm7566, %v7502, %v7630
    %v7695 = vsel %vm7567, %v7503, %v7631
    %v7696 = vsel %vm7568, %v7504, %v7632
    %v7697 = vsel %vm7569, %v7505, %v7633
    %v7698 = vsel %vm7570, %v7506, %v7634
    %v7699 = vsel %vm7571, %v7507, %v7635
    %v7700 = vsel %vm7572, %v7508, %v7636
    %v7701 = vsel %vm7573, %v7509, %v7637
    %v7702 = vsel %vm7574, %v7510, %v7638
    %v7703 = vsel %vm7575, %v7511, %v7639
    %v7704 = vsel %vm7576, %v7512, %v7640
    %v7705 = vsel %vm7577, %v7513, %v7641
    %v7706 = vsel %vm7578, %v7514, %v7642
    %v7707 = vsel %vm7579, %v7515, %v7643
    %v7708 = vsel %vm7580, %v7516, %v7644
    %v7709 = vsel %vm7581, %v7517, %v7645
    %v7710 = vsel %vm7582, %v7518, %v7646
    %v7711 = vsel %vm7583, %v7519, %v7647
    %v7712 = vsel %vm7584, %v7520, %v7648
    %v7713 = vsel %vm7585, %v7521, %v7649
    %v7714 = vsel %vm7586, %v7522, %v7650
    %v7715 = vsel %vm7587, %v7523, %v7651
    %v7716 = vsel %vm7588, %v7524, %v7652
    %v7717 = vsel %vm7589, %v7525, %v7653
    %v7718 = vsel %vm7590, %v7526, %v7654
    %v7719 = vsel %vm7591, %v7527, %v7655
    %v7720 = vsel %vm7592, %v7528, %v7656
    %v7721 = vsel %vm7593, %v7529, %v7657
    %v7722 = vsel %vm7594, %v7530, %v7658
    %v7723 = vsel %vm7595, %v7531, %v7659
    %v7724 = vsel %vm7596, %v7532, %v7660
    %v7725 = vsel %vm7597, %v7533, %v7661
    %v7726 = vld [vmem:[#allocation14] sm:$0xff]
    %v7727 = vld [vmem:[#allocation14 + $0x8] sm:$0xff]
    %v7728 = vld [vmem:[#allocation14 + $0x10] sm:$0xff]
    %v7729 = vld [vmem:[#allocation14 + $0x18] sm:$0xff]
    %v7730 = vpack.c.bf16 %v7664, %v7662
    %v7731 = vpack.c.bf16 %v7665, %v7663
    %v7732 = vpack.c.bf16 %v7668, %v7666
    %v7733 = vpack.c.bf16 %v7669, %v7667
    %v7734 = vpack.c.bf16 %v7672, %v7670
    %v7735 = vpack.c.bf16 %v7673, %v7671
    %v7736 = vpack.c.bf16 %v7676, %v7674
    %v7737 = vpack.c.bf16 %v7677, %v7675
    %v7738 = vpack.c.bf16 %v7680, %v7678
    %v7739 = vpack.c.bf16 %v7681, %v7679
    %v7740 = vpack.c.bf16 %v7684, %v7682
    %v7741 = vpack.c.bf16 %v7685, %v7683
    %v7742 = vpack.c.bf16 %v7688, %v7686
    %v7743 = vpack.c.bf16 %v7689, %v7687
    %v7744 = vpack.c.bf16 %v7692, %v7690
    %v7745 = vpack.c.bf16 %v7693, %v7691
    %v7746 = vpack.c.bf16 %v7696, %v7694
    %v7747 = vpack.c.bf16 %v7697, %v7695
    %v7748 = vpack.c.bf16 %v7700, %v7698
    %v7749 = vpack.c.bf16 %v7701, %v7699
    %v7750 = vpack.c.bf16 %v7704, %v7702
    %v7751 = vpack.c.bf16 %v7705, %v7703
    %v7752 = vpack.c.bf16 %v7708, %v7706
    %v7753 = vpack.c.bf16 %v7709, %v7707
    %v7754 = vpack.c.bf16 %v7712, %v7710
    %v7755 = vpack.c.bf16 %v7713, %v7711
    %v7756 = vpack.c.bf16 %v7716, %v7714
    %v7757 = vpack.c.bf16 %v7717, %v7715
    %v7758 = vpack.c.bf16 %v7720, %v7718
    %v7759 = vpack.c.bf16 %v7721, %v7719
    %v7760 = vpack.c.bf16 %v7724, %v7722
    %v7761 = vpack.c.bf16 %v7725, %v7723
    %v7766 = vunpack.c.l.b16 %v7726
    %v7767 = vunpack.c.h.b16 %v7726
    %v7768 = vunpack.c.l.b16 %v7727
    %v7769 = vunpack.c.h.b16 %v7727
    %v7770 = vunpack.c.l.b16 %v7728
    %v7771 = vunpack.c.h.b16 %v7728
    %v7772 = vunpack.c.l.b16 %v7729
    %v7773 = vunpack.c.h.b16 %v7729
    %v7774 = vpack.c.b16 %v7768, %v7766
    %v7775 = vpack.c.b16 %v7769, %v7767
    %v7776 = vpack.c.b16 %v7772, %v7770
    %v7777 = vpack.c.b16 %v7773, %v7771
    %7782 = vmatpush.bf16.msra.mxu0 %v7744
    %7783 = vmatpush.bf16.msra.mxu0 %v7742
    %7784 = vmatpush.bf16.msra.mxu0 %v7740
    %7785 = vmatpush.bf16.msra.mxu0 %v7738
    %7786 = vmatpush.bf16.msra.mxu0 %v7736
    %7787 = vmatpush.bf16.msra.mxu0 %v7734
    %7788 = vmatpush.bf16.msra.mxu0 %v7732
    %7789 = vmatpush.bf16.msra.mxu0 %v7730
    %7790 = vmatmul.bf16.gmra.mxu0 %v7774
    %v7791 = vpop.f32.mrf.mxu0
    %v7792 = vadd.f32 0.0, %v7791
    %v7793 = vpop.f32.mrf.mxu0
    %v7794 = vadd.f32 0.0, %v7793
    %7795 = vmatmul.bf16.gmra.mxu0 %v7776
    %v7796 = vpop.f32.mrf.mxu0
    %v7797 = vadd.f32 0.0, %v7796
    %v7798 = vpop.f32.mrf.mxu0
    %v7799 = vadd.f32 0.0, %v7798
    %7800 = vdwg.mxu0
    %7801 = vmatpush.bf16.msra.mxu0 %v7760
    %7802 = vmatpush.bf16.msra.mxu0 %v7758
    %7803 = vmatpush.bf16.msra.mxu0 %v7756
    %7804 = vmatpush.bf16.msra.mxu0 %v7754
    %7805 = vmatpush.bf16.msra.mxu0 %v7752
    %7806 = vmatpush.bf16.msra.mxu0 %v7750
    %7807 = vmatpush.bf16.msra.mxu0 %v7748
    %7808 = vmatpush.bf16.msra.mxu0 %v7746
    %7809 = vmatmul.bf16.gmra.mxu0 %v7775
    %v7810 = vpop.f32.mrf.mxu0
    %v7811 = vadd.f32 %v7792, %v7810
    %v7812 = vpop.f32.mrf.mxu0
    %v7813 = vadd.f32 %v7794, %v7812
    %7814 = vmatmul.bf16.gmra.mxu0 %v7777
    %v7815 = vpop.f32.mrf.mxu0
    %v7816 = vadd.f32 %v7797, %v7815
    %v7817 = vpop.f32.mrf.mxu0
    %v7818 = vadd.f32 %v7799, %v7817
    %7819 = vdwg.mxu0
    %7820 = vmatpush.bf16.msra.mxu0 %v7745
    %7821 = vmatpush.bf16.msra.mxu0 %v7743
    %7822 = vmatpush.bf16.msra.mxu0 %v7741
    %7823 = vmatpush.bf16.msra.mxu0 %v7739
    %7824 = vmatpush.bf16.msra.mxu0 %v7737
    %7825 = vmatpush.bf16.msra.mxu0 %v7735
    %7826 = vmatpush.bf16.msra.mxu0 %v7733
    %7827 = vmatpush.bf16.msra.mxu0 %v7731
    %7828 = vmatmul.bf16.gmra.mxu0 %v7774
    %v7829 = vpop.f32.mrf.mxu0
    %v7830 = vadd.f32 0.0, %v7829
    %v7831 = vpop.f32.mrf.mxu0
    %v7832 = vadd.f32 0.0, %v7831
    %7833 = vmatmul.bf16.gmra.mxu0 %v7776
    %v7834 = vpop.f32.mrf.mxu0
    %v7835 = vadd.f32 0.0, %v7834
    %v7836 = vpop.f32.mrf.mxu0
    %v7837 = vadd.f32 0.0, %v7836
    %7838 = vdwg.mxu0
    %7839 = vmatpush.bf16.msra.mxu0 %v7761
    %7840 = vmatpush.bf16.msra.mxu0 %v7759
    %7841 = vmatpush.bf16.msra.mxu0 %v7757
    %7842 = vmatpush.bf16.msra.mxu0 %v7755
    %7843 = vmatpush.bf16.msra.mxu0 %v7753
    %7844 = vmatpush.bf16.msra.mxu0 %v7751
    %7845 = vmatpush.bf16.msra.mxu0 %v7749
    %7846 = vmatpush.bf16.msra.mxu0 %v7747
    %7847 = vmatmul.bf16.gmra.mxu0 %v7775
    %v7848 = vpop.f32.mrf.mxu0
    %v7849 = vadd.f32 %v7830, %v7848
    %v7850 = vpop.f32.mrf.mxu0
    %v7851 = vadd.f32 %v7832, %v7850
    %7852 = vmatmul.bf16.gmra.mxu0 %v7777
    %v7853 = vpop.f32.mrf.mxu0
    %v7854 = vadd.f32 %v7835, %v7853
    %v7855 = vpop.f32.mrf.mxu0
    %v7856 = vadd.f32 %v7837, %v7855
    %7857 = vdwg.mxu0
    %v7858 = vld [vmem:[%s25] sm:$0xff]
    %v7859 = vld [vmem:[%s25 + $0x8] sm:$0xff]
    %v7860 = vld [vmem:[%s25 + $0x10] sm:$0xff]
    %v7861 = vld [vmem:[%s25 + $0x18] sm:$0xff]
    %v7862 = vld [vmem:[%s25 + $0x20] sm:$0xff]
    %v7863 = vld [vmem:[%s25 + $0x28] sm:$0xff]
    %v7864 = vld [vmem:[%s25 + $0x30] sm:$0xff]
    %v7865 = vld [vmem:[%s25 + $0x38] sm:$0xff]
    %v7866 = vld [vmem:[%s25 + $0x40] sm:$0xff]
    %v7867 = vld [vmem:[%s25 + $0x48] sm:$0xff]
    %v7868 = vld [vmem:[%s25 + $0x50] sm:$0xff]
    %v7869 = vld [vmem:[%s25 + $0x58] sm:$0xff]
    %v7870 = vld [vmem:[%s25 + $0x60] sm:$0xff]
    %v7871 = vld [vmem:[%s25 + $0x68] sm:$0xff]
    %v7872 = vld [vmem:[%s25 + $0x70] sm:$0xff]
    %v7873 = vld [vmem:[%s25 + $0x78] sm:$0xff]
    %v7874 = vld [vmem:[%s25 + $0x80] sm:$0xff]
    %v7875 = vld [vmem:[%s25 + $0x88] sm:$0xff]
    %v7876 = vld [vmem:[%s25 + $0x90] sm:$0xff]
    %v7877 = vld [vmem:[%s25 + $0x98] sm:$0xff]
    %v7878 = vld [vmem:[%s25 + $0xa0] sm:$0xff]
    %v7879 = vld [vmem:[%s25 + $0xa8] sm:$0xff]
    %v7880 = vld [vmem:[%s25 + $0xb0] sm:$0xff]
    %v7881 = vld [vmem:[%s25 + $0xb8] sm:$0xff]
    %v7882 = vld [vmem:[%s25 + $0xc0] sm:$0xff]
    %v7883 = vld [vmem:[%s25 + $0xc8] sm:$0xff]
    %v7884 = vld [vmem:[%s25 + $0xd0] sm:$0xff]
    %v7885 = vld [vmem:[%s25 + $0xd8] sm:$0xff]
    %v7886 = vld [vmem:[%s25 + $0xe0] sm:$0xff]
    %v7887 = vld [vmem:[%s25 + $0xe8] sm:$0xff]
    %v7888 = vld [vmem:[%s25 + $0xf0] sm:$0xff]
    %v7889 = vld [vmem:[%s25 + $0xf8] sm:$0xff]
    %v7890 = vpack.c.bf16 %v7813, %v7811
    %v7891 = vpack.c.bf16 %v7851, %v7849
    %v7892 = vpack.c.bf16 %v7818, %v7816
    %v7893 = vpack.c.bf16 %v7856, %v7854
    %s7894 = scalar_lea.vmem [#allocation14], 32
    %v7895 = vld [vmem:[%s7894] sm:$0xff]
    %v7896 = vld [vmem:[%s7894 + $0x8] sm:$0xff]
    %v7897 = vld [vmem:[%s7894 + $0x10] sm:$0xff]
    %v7898 = vld [vmem:[%s7894 + $0x18] sm:$0xff]
    %v7903 = vunpack.c.l.b16 %v7895
    %v7904 = vunpack.c.h.b16 %v7895
    %v7905 = vunpack.c.l.b16 %v7896
    %v7906 = vunpack.c.h.b16 %v7896
    %v7907 = vunpack.c.l.b16 %v7897
    %v7908 = vunpack.c.h.b16 %v7897
    %v7909 = vunpack.c.l.b16 %v7898
    %v7910 = vunpack.c.h.b16 %v7898
    %v7911 = vpack.c.b16 %v7905, %v7903
    %v7912 = vpack.c.b16 %v7906, %v7904
    %v7913 = vpack.c.b16 %v7909, %v7907
    %v7914 = vpack.c.b16 %v7910, %v7908
    %7919 = vmatpush.bf16.msra.mxu0 %v7744
    %7920 = vmatpush.bf16.msra.mxu0 %v7742
    %7921 = vmatpush.bf16.msra.mxu0 %v7740
    %7922 = vmatpush.bf16.msra.mxu0 %v7738
    %7923 = vmatpush.bf16.msra.mxu0 %v7736
    %7924 = vmatpush.bf16.msra.mxu0 %v7734
    %7925 = vmatpush.bf16.msra.mxu0 %v7732
    %7926 = vmatpush.bf16.msra.mxu0 %v7730
    %7927 = vmatmul.bf16.gmra.mxu0 %v7911
    %v7928 = vpop.f32.mrf.mxu0
    %v7929 = vadd.f32 0.0, %v7928
    %v7930 = vpop.f32.mrf.mxu0
    %v7931 = vadd.f32 0.0, %v7930
    %7932 = vmatmul.bf16.gmra.mxu0 %v7913
    %v7933 = vpop.f32.mrf.mxu0
    %v7934 = vadd.f32 0.0, %v7933
    %v7935 = vpop.f32.mrf.mxu0
    %v7936 = vadd.f32 0.0, %v7935
    %7937 = vdwg.mxu0
    %7938 = vmatpush.bf16.msra.mxu0 %v7760
    %7939 = vmatpush.bf16.msra.mxu0 %v7758
    %7940 = vmatpush.bf16.msra.mxu0 %v7756
    %7941 = vmatpush.bf16.msra.mxu0 %v7754
    %7942 = vmatpush.bf16.msra.mxu0 %v7752
    %7943 = vmatpush.bf16.msra.mxu0 %v7750
    %7944 = vmatpush.bf16.msra.mxu0 %v7748
    %7945 = vmatpush.bf16.msra.mxu0 %v7746
    %7946 = vmatmul.bf16.gmra.mxu0 %v7912
    %v7947 = vpop.f32.mrf.mxu0
    %v7948 = vadd.f32 %v7929, %v7947
    %v7949 = vpop.f32.mrf.mxu0
    %v7950 = vadd.f32 %v7931, %v7949
    %7951 = vmatmul.bf16.gmra.mxu0 %v7914
    %v7952 = vpop.f32.mrf.mxu0
    %v7953 = vadd.f32 %v7934, %v7952
    %v7954 = vpop.f32.mrf.mxu0
    %v7955 = vadd.f32 %v7936, %v7954
    %7956 = vdwg.mxu0
    %7957 = vmatpush.bf16.msra.mxu0 %v7745
    %7958 = vmatpush.bf16.msra.mxu0 %v7743
    %7959 = vmatpush.bf16.msra.mxu0 %v7741
    %7960 = vmatpush.bf16.msra.mxu0 %v7739
    %7961 = vmatpush.bf16.msra.mxu0 %v7737
    %7962 = vmatpush.bf16.msra.mxu0 %v7735
    %7963 = vmatpush.bf16.msra.mxu0 %v7733
    %7964 = vmatpush.bf16.msra.mxu0 %v7731
    %7965 = vmatmul.bf16.gmra.mxu0 %v7911
    %v7966 = vpop.f32.mrf.mxu0
    %v7967 = vadd.f32 0.0, %v7966
    %v7968 = vpop.f32.mrf.mxu0
    %v7969 = vadd.f32 0.0, %v7968
    %7970 = vmatmul.bf16.gmra.mxu0 %v7913
    %v7971 = vpop.f32.mrf.mxu0
    %v7972 = vadd.f32 0.0, %v7971
    %v7973 = vpop.f32.mrf.mxu0
    %v7974 = vadd.f32 0.0, %v7973
    %7975 = vdwg.mxu0
    %7976 = vmatpush.bf16.msra.mxu0 %v7761
    %7977 = vmatpush.bf16.msra.mxu0 %v7759
    %7978 = vmatpush.bf16.msra.mxu0 %v7757
    %7979 = vmatpush.bf16.msra.mxu0 %v7755
    %7980 = vmatpush.bf16.msra.mxu0 %v7753
    %7981 = vmatpush.bf16.msra.mxu0 %v7751
    %7982 = vmatpush.bf16.msra.mxu0 %v7749
    %7983 = vmatpush.bf16.msra.mxu0 %v7747
    %7984 = vmatmul.bf16.gmra.mxu0 %v7912
    %v7985 = vpop.f32.mrf.mxu0
    %v7986 = vadd.f32 %v7967, %v7985
    %v7987 = vpop.f32.mrf.mxu0
    %v7988 = vadd.f32 %v7969, %v7987
    %7989 = vmatmul.bf16.gmra.mxu0 %v7914
    %v7990 = vpop.f32.mrf.mxu0
    %v7991 = vadd.f32 %v7972, %v7990
    %v7992 = vpop.f32.mrf.mxu0
    %v7993 = vadd.f32 %v7974, %v7992
    %7994 = vdwg.mxu0
    %s7995 = scalar_lea.vmem %s25, 256
    %v7996 = vld [vmem:[%s7995] sm:$0xff]
    %v7997 = vld [vmem:[%s7995 + $0x8] sm:$0xff]
    %v7998 = vld [vmem:[%s7995 + $0x10] sm:$0xff]
    %v7999 = vld [vmem:[%s7995 + $0x18] sm:$0xff]
    %v8000 = vld [vmem:[%s7995 + $0x20] sm:$0xff]
    %v8001 = vld [vmem:[%s7995 + $0x28] sm:$0xff]
    %v8002 = vld [vmem:[%s7995 + $0x30] sm:$0xff]
    %v8003 = vld [vmem:[%s7995 + $0x38] sm:$0xff]
    %v8004 = vld [vmem:[%s7995 + $0x40] sm:$0xff]
    %v8005 = vld [vmem:[%s7995 + $0x48] sm:$0xff]
    %v8006 = vld [vmem:[%s7995 + $0x50] sm:$0xff]
    %v8007 = vld [vmem:[%s7995 + $0x58] sm:$0xff]
    %v8008 = vld [vmem:[%s7995 + $0x60] sm:$0xff]
    %v8009 = vld [vmem:[%s7995 + $0x68] sm:$0xff]
    %v8010 = vld [vmem:[%s7995 + $0x70] sm:$0xff]
    %v8011 = vld [vmem:[%s7995 + $0x78] sm:$0xff]
    %v8012 = vld [vmem:[%s7995 + $0x80] sm:$0xff]
    %v8013 = vld [vmem:[%s7995 + $0x88] sm:$0xff]
    %v8014 = vld [vmem:[%s7995 + $0x90] sm:$0xff]
    %v8015 = vld [vmem:[%s7995 + $0x98] sm:$0xff]
    %v8016 = vld [vmem:[%s7995 + $0xa0] sm:$0xff]
    %v8017 = vld [vmem:[%s7995 + $0xa8] sm:$0xff]
    %v8018 = vld [vmem:[%s7995 + $0xb0] sm:$0xff]
    %v8019 = vld [vmem:[%s7995 + $0xb8] sm:$0xff]
    %v8020 = vld [vmem:[%s7995 + $0xc0] sm:$0xff]
    %v8021 = vld [vmem:[%s7995 + $0xc8] sm:$0xff]
    %v8022 = vld [vmem:[%s7995 + $0xd0] sm:$0xff]
    %v8023 = vld [vmem:[%s7995 + $0xd8] sm:$0xff]
    %v8024 = vld [vmem:[%s7995 + $0xe0] sm:$0xff]
    %v8025 = vld [vmem:[%s7995 + $0xe8] sm:$0xff]
    %v8026 = vld [vmem:[%s7995 + $0xf0] sm:$0xff]
    %v8027 = vld [vmem:[%s7995 + $0xf8] sm:$0xff]
    %v8028 = vpack.c.bf16 %v7950, %v7948
    %v8029 = vpack.c.bf16 %v7988, %v7986
    %v8030 = vpack.c.bf16 %v7955, %v7953
    %v8031 = vpack.c.bf16 %v7993, %v7991
    %v8064 = vunpack.c.l.b16 %v7996
    %v8065 = vunpack.c.h.b16 %v7996
    %v8066 = vunpack.c.l.b16 %v7997
    %v8067 = vunpack.c.h.b16 %v7997
    %v8068 = vunpack.c.l.b16 %v7998
    %v8069 = vunpack.c.h.b16 %v7998
    %v8070 = vunpack.c.l.b16 %v7999
    %v8071 = vunpack.c.h.b16 %v7999
    %v8072 = vunpack.c.l.b16 %v8000
    %v8073 = vunpack.c.h.b16 %v8000
    %v8074 = vunpack.c.l.b16 %v8001
    %v8075 = vunpack.c.h.b16 %v8001
    %v8076 = vunpack.c.l.b16 %v8002
    %v8077 = vunpack.c.h.b16 %v8002
    %v8078 = vunpack.c.l.b16 %v8003
    %v8079 = vunpack.c.h.b16 %v8003
    %v8080 = vunpack.c.l.b16 %v8004
    %v8081 = vunpack.c.h.b16 %v8004
    %v8082 = vunpack.c.l.b16 %v8005
    %v8083 = vunpack.c.h.b16 %v8005
    %v8084 = vunpack.c.l.b16 %v8006
    %v8085 = vunpack.c.h.b16 %v8006
    %v8086 = vunpack.c.l.b16 %v8007
    %v8087 = vunpack.c.h.b16 %v8007
    %v8088 = vunpack.c.l.b16 %v8008
    %v8089 = vunpack.c.h.b16 %v8008
    %v8090 = vunpack.c.l.b16 %v8009
    %v8091 = vunpack.c.h.b16 %v8009
    %v8092 = vunpack.c.l.b16 %v8010
    %v8093 = vunpack.c.h.b16 %v8010
    %v8094 = vunpack.c.l.b16 %v8011
    %v8095 = vunpack.c.h.b16 %v8011
    %v8096 = vunpack.c.l.b16 %v8012
    %v8097 = vunpack.c.h.b16 %v8012
    %v8098 = vunpack.c.l.b16 %v8013
    %v8099 = vunpack.c.h.b16 %v8013
    %v8100 = vunpack.c.l.b16 %v8014
    %v8101 = vunpack.c.h.b16 %v8014
    %v8102 = vunpack.c.l.b16 %v8015
    %v8103 = vunpack.c.h.b16 %v8015
    %v8104 = vunpack.c.l.b16 %v8016
    %v8105 = vunpack.c.h.b16 %v8016
    %v8106 = vunpack.c.l.b16 %v8017
    %v8107 = vunpack.c.h.b16 %v8017
    %v8108 = vunpack.c.l.b16 %v8018
    %v8109 = vunpack.c.h.b16 %v8018
    %v8110 = vunpack.c.l.b16 %v8019
    %v8111 = vunpack.c.h.b16 %v8019
    %v8112 = vunpack.c.l.b16 %v8020
    %v8113 = vunpack.c.h.b16 %v8020
    %v8114 = vunpack.c.l.b16 %v8021
    %v8115 = vunpack.c.h.b16 %v8021
    %v8116 = vunpack.c.l.b16 %v8022
    %v8117 = vunpack.c.h.b16 %v8022
    %v8118 = vunpack.c.l.b16 %v8023
    %v8119 = vunpack.c.h.b16 %v8023
    %v8120 = vunpack.c.l.b16 %v8024
    %v8121 = vunpack.c.h.b16 %v8024
    %v8122 = vunpack.c.l.b16 %v8025
    %v8123 = vunpack.c.h.b16 %v8025
    %v8124 = vunpack.c.l.b16 %v8026
    %v8125 = vunpack.c.h.b16 %v8026
    %v8126 = vunpack.c.l.b16 %v8027
    %v8127 = vunpack.c.h.b16 %v8027
    %v8128 = vpack.c.b16 %v8066, %v8064
    %v8129 = vpack.c.b16 %v8067, %v8065
    %v8130 = vpack.c.b16 %v8070, %v8068
    %v8131 = vpack.c.b16 %v8071, %v8069
    %v8132 = vpack.c.b16 %v8074, %v8072
    %v8133 = vpack.c.b16 %v8075, %v8073
    %v8134 = vpack.c.b16 %v8078, %v8076
    %v8135 = vpack.c.b16 %v8079, %v8077
    %v8136 = vpack.c.b16 %v8082, %v8080
    %v8137 = vpack.c.b16 %v8083, %v8081
    %v8138 = vpack.c.b16 %v8086, %v8084
    %v8139 = vpack.c.b16 %v8087, %v8085
    %v8140 = vpack.c.b16 %v8090, %v8088
    %v8141 = vpack.c.b16 %v8091, %v8089
    %v8142 = vpack.c.b16 %v8094, %v8092
    %v8143 = vpack.c.b16 %v8095, %v8093
    %v8144 = vpack.c.b16 %v8098, %v8096
    %v8145 = vpack.c.b16 %v8099, %v8097
    %v8146 = vpack.c.b16 %v8102, %v8100
    %v8147 = vpack.c.b16 %v8103, %v8101
    %v8148 = vpack.c.b16 %v8106, %v8104
    %v8149 = vpack.c.b16 %v8107, %v8105
    %v8150 = vpack.c.b16 %v8110, %v8108
    %v8151 = vpack.c.b16 %v8111, %v8109
    %v8152 = vpack.c.b16 %v8114, %v8112
    %v8153 = vpack.c.b16 %v8115, %v8113
    %v8154 = vpack.c.b16 %v8118, %v8116
    %v8155 = vpack.c.b16 %v8119, %v8117
    %v8156 = vpack.c.b16 %v8122, %v8120
    %v8157 = vpack.c.b16 %v8123, %v8121
    %v8158 = vpack.c.b16 %v8126, %v8124
    %v8159 = vpack.c.b16 %v8127, %v8125
    %8192 = vmatpush.bf16.msra.mxu0 %v8142
    %8193 = vmatpush.bf16.msra.mxu0 %v8140
    %8194 = vmatpush.bf16.msra.mxu0 %v8138
    %8195 = vmatpush.bf16.msra.mxu0 %v8136
    %8196 = vmatpush.bf16.msra.mxu0 %v8134
    %8197 = vmatpush.bf16.msra.mxu0 %v8132
    %8198 = vmatpush.bf16.msra.mxu0 %v8130
    %8199 = vmatpush.bf16.msra.mxu0 %v8128
    %8200 = vmatmul.bf16.gmra.mxu0 %v8028
    %v8201 = vpop.f32.mrf.mxu0
    %v8202 = vadd.f32 0.0, %v8201
    %v8203 = vpop.f32.mrf.mxu0
    %v8204 = vadd.f32 0.0, %v8203
    %8205 = vmatmul.bf16.gmra.mxu0 %v8030
    %v8206 = vpop.f32.mrf.mxu0
    %v8207 = vadd.f32 0.0, %v8206
    %v8208 = vpop.f32.mrf.mxu0
    %v8209 = vadd.f32 0.0, %v8208
    %8210 = vdwg.mxu0
    %8211 = vmatpush.bf16.msra.mxu0 %v8158
    %8212 = vmatpush.bf16.msra.mxu0 %v8156
    %8213 = vmatpush.bf16.msra.mxu0 %v8154
    %8214 = vmatpush.bf16.msra.mxu0 %v8152
    %8215 = vmatpush.bf16.msra.mxu0 %v8150
    %8216 = vmatpush.bf16.msra.mxu0 %v8148
    %8217 = vmatpush.bf16.msra.mxu0 %v8146
    %8218 = vmatpush.bf16.msra.mxu0 %v8144
    %8219 = vmatmul.bf16.gmra.mxu0 %v8029
    %v8220 = vpop.f32.mrf.mxu0
    %v8221 = vadd.f32 %v8202, %v8220
    %v8222 = vpop.f32.mrf.mxu0
    %v8223 = vadd.f32 %v8204, %v8222
    %8224 = vmatmul.bf16.gmra.mxu0 %v8031
    %v8225 = vpop.f32.mrf.mxu0
    %v8226 = vadd.f32 %v8207, %v8225
    %v8227 = vpop.f32.mrf.mxu0
    %v8228 = vadd.f32 %v8209, %v8227
    %8229 = vdwg.mxu0
    %8230 = vmatpush.bf16.msra.mxu0 %v8143
    %8231 = vmatpush.bf16.msra.mxu0 %v8141
    %8232 = vmatpush.bf16.msra.mxu0 %v8139
    %8233 = vmatpush.bf16.msra.mxu0 %v8137
    %8234 = vmatpush.bf16.msra.mxu0 %v8135
    %8235 = vmatpush.bf16.msra.mxu0 %v8133
    %8236 = vmatpush.bf16.msra.mxu0 %v8131
    %8237 = vmatpush.bf16.msra.mxu0 %v8129
    %8238 = vmatmul.bf16.gmra.mxu0 %v8028
    %v8239 = vpop.f32.mrf.mxu0
    %v8240 = vadd.f32 0.0, %v8239
    %v8241 = vpop.f32.mrf.mxu0
    %v8242 = vadd.f32 0.0, %v8241
    %8243 = vmatmul.bf16.gmra.mxu0 %v8030
    %v8244 = vpop.f32.mrf.mxu0
    %v8245 = vadd.f32 0.0, %v8244
    %v8246 = vpop.f32.mrf.mxu0
    %v8247 = vadd.f32 0.0, %v8246
    %8248 = vdwg.mxu0
    %8249 = vmatpush.bf16.msra.mxu0 %v8159
    %8250 = vmatpush.bf16.msra.mxu0 %v8157
    %8251 = vmatpush.bf16.msra.mxu0 %v8155
    %8252 = vmatpush.bf16.msra.mxu0 %v8153
    %8253 = vmatpush.bf16.msra.mxu0 %v8151
    %8254 = vmatpush.bf16.msra.mxu0 %v8149
    %8255 = vmatpush.bf16.msra.mxu0 %v8147
    %8256 = vmatpush.bf16.msra.mxu0 %v8145
    %8257 = vmatmul.bf16.gmra.mxu0 %v8029
    %v8258 = vpop.f32.mrf.mxu0
    %v8259 = vadd.f32 %v8240, %v8258
    %v8260 = vpop.f32.mrf.mxu0
    %v8261 = vadd.f32 %v8242, %v8260
    %8262 = vmatmul.bf16.gmra.mxu0 %v8031
    %v8263 = vpop.f32.mrf.mxu0
    %v8264 = vadd.f32 %v8245, %v8263
    %v8265 = vpop.f32.mrf.mxu0
    %v8266 = vadd.f32 %v8247, %v8265
    %8267 = vdwg.mxu0
    %v8300 = vunpack.c.l.b16 %v7858
    %v8301 = vunpack.c.h.b16 %v7858
    %v8302 = vunpack.c.l.b16 %v7859
    %v8303 = vunpack.c.h.b16 %v7859
    %v8304 = vunpack.c.l.b16 %v7860
    %v8305 = vunpack.c.h.b16 %v7860
    %v8306 = vunpack.c.l.b16 %v7861
    %v8307 = vunpack.c.h.b16 %v7861
    %v8308 = vunpack.c.l.b16 %v7862
    %v8309 = vunpack.c.h.b16 %v7862
    %v8310 = vunpack.c.l.b16 %v7863
    %v8311 = vunpack.c.h.b16 %v7863
    %v8312 = vunpack.c.l.b16 %v7864
    %v8313 = vunpack.c.h.b16 %v7864
    %v8314 = vunpack.c.l.b16 %v7865
    %v8315 = vunpack.c.h.b16 %v7865
    %v8316 = vunpack.c.l.b16 %v7866
    %v8317 = vunpack.c.h.b16 %v7866
    %v8318 = vunpack.c.l.b16 %v7867
    %v8319 = vunpack.c.h.b16 %v7867
    %v8320 = vunpack.c.l.b16 %v7868
    %v8321 = vunpack.c.h.b16 %v7868
    %v8322 = vunpack.c.l.b16 %v7869
    %v8323 = vunpack.c.h.b16 %v7869
    %v8324 = vunpack.c.l.b16 %v7870
    %v8325 = vunpack.c.h.b16 %v7870
    %v8326 = vunpack.c.l.b16 %v7871
    %v8327 = vunpack.c.h.b16 %v7871
    %v8328 = vunpack.c.l.b16 %v7872
    %v8329 = vunpack.c.h.b16 %v7872
    %v8330 = vunpack.c.l.b16 %v7873
    %v8331 = vunpack.c.h.b16 %v7873
    %v8332 = vunpack.c.l.b16 %v7874
    %v8333 = vunpack.c.h.b16 %v7874
    %v8334 = vunpack.c.l.b16 %v7875
    %v8335 = vunpack.c.h.b16 %v7875
    %v8336 = vunpack.c.l.b16 %v7876
    %v8337 = vunpack.c.h.b16 %v7876
    %v8338 = vunpack.c.l.b16 %v7877
    %v8339 = vunpack.c.h.b16 %v7877
    %v8340 = vunpack.c.l.b16 %v7878
    %v8341 = vunpack.c.h.b16 %v7878
    %v8342 = vunpack.c.l.b16 %v7879
    %v8343 = vunpack.c.h.b16 %v7879
    %v8344 = vunpack.c.l.b16 %v7880
    %v8345 = vunpack.c.h.b16 %v7880
    %v8346 = vunpack.c.l.b16 %v7881
    %v8347 = vunpack.c.h.b16 %v7881
    %v8348 = vunpack.c.l.b16 %v7882
    %v8349 = vunpack.c.h.b16 %v7882
    %v8350 = vunpack.c.l.b16 %v7883
    %v8351 = vunpack.c.h.b16 %v7883
    %v8352 = vunpack.c.l.b16 %v7884
    %v8353 = vunpack.c.h.b16 %v7884
    %v8354 = vunpack.c.l.b16 %v7885
    %v8355 = vunpack.c.h.b16 %v7885
    %v8356 = vunpack.c.l.b16 %v7886
    %v8357 = vunpack.c.h.b16 %v7886
    %v8358 = vunpack.c.l.b16 %v7887
    %v8359 = vunpack.c.h.b16 %v7887
    %v8360 = vunpack.c.l.b16 %v7888
    %v8361 = vunpack.c.h.b16 %v7888
    %v8362 = vunpack.c.l.b16 %v7889
    %v8363 = vunpack.c.h.b16 %v7889
    %v8364 = vpack.c.b16 %v8302, %v8300
    %v8365 = vpack.c.b16 %v8303, %v8301
    %v8366 = vpack.c.b16 %v8306, %v8304
    %v8367 = vpack.c.b16 %v8307, %v8305
    %v8368 = vpack.c.b16 %v8310, %v8308
    %v8369 = vpack.c.b16 %v8311, %v8309
    %v8370 = vpack.c.b16 %v8314, %v8312
    %v8371 = vpack.c.b16 %v8315, %v8313
    %v8372 = vpack.c.b16 %v8318, %v8316
    %v8373 = vpack.c.b16 %v8319, %v8317
    %v8374 = vpack.c.b16 %v8322, %v8320
    %v8375 = vpack.c.b16 %v8323, %v8321
    %v8376 = vpack.c.b16 %v8326, %v8324
    %v8377 = vpack.c.b16 %v8327, %v8325
    %v8378 = vpack.c.b16 %v8330, %v8328
    %v8379 = vpack.c.b16 %v8331, %v8329
    %v8380 = vpack.c.b16 %v8334, %v8332
    %v8381 = vpack.c.b16 %v8335, %v8333
    %v8382 = vpack.c.b16 %v8338, %v8336
    %v8383 = vpack.c.b16 %v8339, %v8337
    %v8384 = vpack.c.b16 %v8342, %v8340
    %v8385 = vpack.c.b16 %v8343, %v8341
    %v8386 = vpack.c.b16 %v8346, %v8344
    %v8387 = vpack.c.b16 %v8347, %v8345
    %v8388 = vpack.c.b16 %v8350, %v8348
    %v8389 = vpack.c.b16 %v8351, %v8349
    %v8390 = vpack.c.b16 %v8354, %v8352
    %v8391 = vpack.c.b16 %v8355, %v8353
    %v8392 = vpack.c.b16 %v8358, %v8356
    %v8393 = vpack.c.b16 %v8359, %v8357
    %v8394 = vpack.c.b16 %v8362, %v8360
    %v8395 = vpack.c.b16 %v8363, %v8361
    %8428 = vmatpush.bf16.msra.mxu0 %v8378
    %8429 = vmatpush.bf16.msra.mxu0 %v8376
    %8430 = vmatpush.bf16.msra.mxu0 %v8374
    %8431 = vmatpush.bf16.msra.mxu0 %v8372
    %8432 = vmatpush.bf16.msra.mxu0 %v8370
    %8433 = vmatpush.bf16.msra.mxu0 %v8368
    %8434 = vmatpush.bf16.msra.mxu0 %v8366
    %8435 = vmatpush.bf16.msra.mxu0 %v8364
    %8436 = vmatmul.bf16.gmra.mxu0 %v7890
    %v8437 = vpop.f32.mrf.mxu0
    %v8438 = vadd.f32 %v8221, %v8437
    %v8439 = vpop.f32.mrf.mxu0
    %v8440 = vadd.f32 %v8223, %v8439
    %8441 = vmatmul.bf16.gmra.mxu0 %v7892
    %v8442 = vpop.f32.mrf.mxu0
    %v8443 = vadd.f32 %v8226, %v8442
    %v8444 = vpop.f32.mrf.mxu0
    %v8445 = vadd.f32 %v8228, %v8444
    %8446 = vdwg.mxu0
    %8447 = vmatpush.bf16.msra.mxu0 %v8394
    %8448 = vmatpush.bf16.msra.mxu0 %v8392
    %8449 = vmatpush.bf16.msra.mxu0 %v8390
    %8450 = vmatpush.bf16.msra.mxu0 %v8388
    %8451 = vmatpush.bf16.msra.mxu0 %v8386
    %8452 = vmatpush.bf16.msra.mxu0 %v8384
    %8453 = vmatpush.bf16.msra.mxu0 %v8382
    %8454 = vmatpush.bf16.msra.mxu0 %v8380
    %8455 = vmatmul.bf16.gmra.mxu0 %v7891
    %v8456 = vpop.f32.mrf.mxu0
    %v8457 = vadd.f32 %v8438, %v8456
    %v8458 = vpop.f32.mrf.mxu0
    %v8459 = vadd.f32 %v8440, %v8458
    %8460 = vmatmul.bf16.gmra.mxu0 %v7893
    %v8461 = vpop.f32.mrf.mxu0
    %v8462 = vadd.f32 %v8443, %v8461
    %v8463 = vpop.f32.mrf.mxu0
    %v8464 = vadd.f32 %v8445, %v8463
    %8465 = vdwg.mxu0
    %8466 = vmatpush.bf16.msra.mxu0 %v8379
    %8467 = vmatpush.bf16.msra.mxu0 %v8377
    %8468 = vmatpush.bf16.msra.mxu0 %v8375
    %8469 = vmatpush.bf16.msra.mxu0 %v8373
    %8470 = vmatpush.bf16.msra.mxu0 %v8371
    %8471 = vmatpush.bf16.msra.mxu0 %v8369
    %8472 = vmatpush.bf16.msra.mxu0 %v8367
    %8473 = vmatpush.bf16.msra.mxu0 %v8365
    %8474 = vmatmul.bf16.gmra.mxu0 %v7890
    %v8475 = vpop.f32.mrf.mxu0
    %v8476 = vadd.f32 %v8259, %v8475
    %v8477 = vpop.f32.mrf.mxu0
    %v8478 = vadd.f32 %v8261, %v8477
    %8479 = vmatmul.bf16.gmra.mxu0 %v7892
    %v8480 = vpop.f32.mrf.mxu0
    %v8481 = vadd.f32 %v8264, %v8480
    %v8482 = vpop.f32.mrf.mxu0
    %v8483 = vadd.f32 %v8266, %v8482
    %8484 = vdwg.mxu0
    %8485 = vmatpush.bf16.msra.mxu0 %v8395
    %8486 = vmatpush.bf16.msra.mxu0 %v8393
    %8487 = vmatpush.bf16.msra.mxu0 %v8391
    %8488 = vmatpush.bf16.msra.mxu0 %v8389
    %8489 = vmatpush.bf16.msra.mxu0 %v8387
    %8490 = vmatpush.bf16.msra.mxu0 %v8385
    %8491 = vmatpush.bf16.msra.mxu0 %v8383
    %8492 = vmatpush.bf16.msra.mxu0 %v8381
    %8493 = vmatmul.bf16.gmra.mxu0 %v7891
    %v8494 = vpop.f32.mrf.mxu0
    %v8495 = vadd.f32 %v8476, %v8494
    %v8496 = vpop.f32.mrf.mxu0
    %v8497 = vadd.f32 %v8478, %v8496
    %8498 = vmatmul.bf16.gmra.mxu0 %v7893
    %v8499 = vpop.f32.mrf.mxu0
    %v8500 = vadd.f32 %v8481, %v8499
    %v8501 = vpop.f32.mrf.mxu0
    %v8502 = vadd.f32 %v8483, %v8501
    %8503 = vdwg.mxu0
    %s8504 = scalar_lea.vmem [#allocation14], 64
    %v8505 = vld [vmem:[%s8504] sm:$0xff]
    %v8506 = vld [vmem:[%s8504 + $0x8] sm:$0xff]
    %v8507 = vld [vmem:[%s8504 + $0x10] sm:$0xff]
    %v8508 = vld [vmem:[%s8504 + $0x18] sm:$0xff]
    %v8513 = vunpack.c.l.b16 %v8505
    %v8514 = vunpack.c.h.b16 %v8505
    %v8515 = vunpack.c.l.b16 %v8506
    %v8516 = vunpack.c.h.b16 %v8506
    %v8517 = vunpack.c.l.b16 %v8507
    %v8518 = vunpack.c.h.b16 %v8507
    %v8519 = vunpack.c.l.b16 %v8508
    %v8520 = vunpack.c.h.b16 %v8508
    %v8521 = vpack.c.b16 %v8515, %v8513
    %v8522 = vpack.c.b16 %v8516, %v8514
    %v8523 = vpack.c.b16 %v8519, %v8517
    %v8524 = vpack.c.b16 %v8520, %v8518
    %8529 = vmatpush.bf16.msra.mxu0 %v7744
    %8530 = vmatpush.bf16.msra.mxu0 %v7742
    %8531 = vmatpush.bf16.msra.mxu0 %v7740
    %8532 = vmatpush.bf16.msra.mxu0 %v7738
    %8533 = vmatpush.bf16.msra.mxu0 %v7736
    %8534 = vmatpush.bf16.msra.mxu0 %v7734
    %8535 = vmatpush.bf16.msra.mxu0 %v7732
    %8536 = vmatpush.bf16.msra.mxu0 %v7730
    %8537 = vmatmul.bf16.gmra.mxu0 %v8521
    %v8538 = vpop.f32.mrf.mxu0
    %v8539 = vadd.f32 0.0, %v8538
    %v8540 = vpop.f32.mrf.mxu0
    %v8541 = vadd.f32 0.0, %v8540
    %8542 = vmatmul.bf16.gmra.mxu0 %v8523
    %v8543 = vpop.f32.mrf.mxu0
    %v8544 = vadd.f32 0.0, %v8543
    %v8545 = vpop.f32.mrf.mxu0
    %v8546 = vadd.f32 0.0, %v8545
    %8547 = vdwg.mxu0
    %8548 = vmatpush.bf16.msra.mxu0 %v7760
    %8549 = vmatpush.bf16.msra.mxu0 %v7758
    %8550 = vmatpush.bf16.msra.mxu0 %v7756
    %8551 = vmatpush.bf16.msra.mxu0 %v7754
    %8552 = vmatpush.bf16.msra.mxu0 %v7752
    %8553 = vmatpush.bf16.msra.mxu0 %v7750
    %8554 = vmatpush.bf16.msra.mxu0 %v7748
    %8555 = vmatpush.bf16.msra.mxu0 %v7746
    %8556 = vmatmul.bf16.gmra.mxu0 %v8522
    %v8557 = vpop.f32.mrf.mxu0
    %v8558 = vadd.f32 %v8539, %v8557
    %v8559 = vpop.f32.mrf.mxu0
    %v8560 = vadd.f32 %v8541, %v8559
    %8561 = vmatmul.bf16.gmra.mxu0 %v8524
    %v8562 = vpop.f32.mrf.mxu0
    %v8563 = vadd.f32 %v8544, %v8562
    %v8564 = vpop.f32.mrf.mxu0
    %v8565 = vadd.f32 %v8546, %v8564
    %8566 = vdwg.mxu0
    %8567 = vmatpush.bf16.msra.mxu0 %v7745
    %8568 = vmatpush.bf16.msra.mxu0 %v7743
    %8569 = vmatpush.bf16.msra.mxu0 %v7741
    %8570 = vmatpush.bf16.msra.mxu0 %v7739
    %8571 = vmatpush.bf16.msra.mxu0 %v7737
    %8572 = vmatpush.bf16.msra.mxu0 %v7735
    %8573 = vmatpush.bf16.msra.mxu0 %v7733
    %8574 = vmatpush.bf16.msra.mxu0 %v7731
    %8575 = vmatmul.bf16.gmra.mxu0 %v8521
    %v8576 = vpop.f32.mrf.mxu0
    %v8577 = vadd.f32 0.0, %v8576
    %v8578 = vpop.f32.mrf.mxu0
    %v8579 = vadd.f32 0.0, %v8578
    %8580 = vmatmul.bf16.gmra.mxu0 %v8523
    %v8581 = vpop.f32.mrf.mxu0
    %v8582 = vadd.f32 0.0, %v8581
    %v8583 = vpop.f32.mrf.mxu0
    %v8584 = vadd.f32 0.0, %v8583
    %8585 = vdwg.mxu0
    %8586 = vmatpush.bf16.msra.mxu0 %v7761
    %8587 = vmatpush.bf16.msra.mxu0 %v7759
    %8588 = vmatpush.bf16.msra.mxu0 %v7757
    %8589 = vmatpush.bf16.msra.mxu0 %v7755
    %8590 = vmatpush.bf16.msra.mxu0 %v7753
    %8591 = vmatpush.bf16.msra.mxu0 %v7751
    %8592 = vmatpush.bf16.msra.mxu0 %v7749
    %8593 = vmatpush.bf16.msra.mxu0 %v7747
    %8594 = vmatmul.bf16.gmra.mxu0 %v8522
    %v8595 = vpop.f32.mrf.mxu0
    %v8596 = vadd.f32 %v8577, %v8595
    %v8597 = vpop.f32.mrf.mxu0
    %v8598 = vadd.f32 %v8579, %v8597
    %8599 = vmatmul.bf16.gmra.mxu0 %v8524
    %v8600 = vpop.f32.mrf.mxu0
    %v8601 = vadd.f32 %v8582, %v8600
    %v8602 = vpop.f32.mrf.mxu0
    %v8603 = vadd.f32 %v8584, %v8602
    %8604 = vdwg.mxu0
    %s8605 = scalar_lea.vmem %s25, 512
    %v8606 = vld [vmem:[%s8605] sm:$0xff]
    %v8607 = vld [vmem:[%s8605 + $0x8] sm:$0xff]
    %v8608 = vld [vmem:[%s8605 + $0x10] sm:$0xff]
    %v8609 = vld [vmem:[%s8605 + $0x18] sm:$0xff]
    %v8610 = vld [vmem:[%s8605 + $0x20] sm:$0xff]
    %v8611 = vld [vmem:[%s8605 + $0x28] sm:$0xff]
    %v8612 = vld [vmem:[%s8605 + $0x30] sm:$0xff]
    %v8613 = vld [vmem:[%s8605 + $0x38] sm:$0xff]
    %v8614 = vld [vmem:[%s8605 + $0x40] sm:$0xff]
    %v8615 = vld [vmem:[%s8605 + $0x48] sm:$0xff]
    %v8616 = vld [vmem:[%s8605 + $0x50] sm:$0xff]
    %v8617 = vld [vmem:[%s8605 + $0x58] sm:$0xff]
    %v8618 = vld [vmem:[%s8605 + $0x60] sm:$0xff]
    %v8619 = vld [vmem:[%s8605 + $0x68] sm:$0xff]
    %v8620 = vld [vmem:[%s8605 + $0x70] sm:$0xff]
    %v8621 = vld [vmem:[%s8605 + $0x78] sm:$0xff]
    %v8622 = vld [vmem:[%s8605 + $0x80] sm:$0xff]
    %v8623 = vld [vmem:[%s8605 + $0x88] sm:$0xff]
    %v8624 = vld [vmem:[%s8605 + $0x90] sm:$0xff]
    %v8625 = vld [vmem:[%s8605 + $0x98] sm:$0xff]
    %v8626 = vld [vmem:[%s8605 + $0xa0] sm:$0xff]
    %v8627 = vld [vmem:[%s8605 + $0xa8] sm:$0xff]
    %v8628 = vld [vmem:[%s8605 + $0xb0] sm:$0xff]
    %v8629 = vld [vmem:[%s8605 + $0xb8] sm:$0xff]
    %v8630 = vld [vmem:[%s8605 + $0xc0] sm:$0xff]
    %v8631 = vld [vmem:[%s8605 + $0xc8] sm:$0xff]
    %v8632 = vld [vmem:[%s8605 + $0xd0] sm:$0xff]
    %v8633 = vld [vmem:[%s8605 + $0xd8] sm:$0xff]
    %v8634 = vld [vmem:[%s8605 + $0xe0] sm:$0xff]
    %v8635 = vld [vmem:[%s8605 + $0xe8] sm:$0xff]
    %v8636 = vld [vmem:[%s8605 + $0xf0] sm:$0xff]
    %v8637 = vld [vmem:[%s8605 + $0xf8] sm:$0xff]
    %v8638 = vpack.c.bf16 %v8560, %v8558
    %v8639 = vpack.c.bf16 %v8598, %v8596
    %v8640 = vpack.c.bf16 %v8565, %v8563
    %v8641 = vpack.c.bf16 %v8603, %v8601
    %v8674 = vunpack.c.l.b16 %v8606
    %v8675 = vunpack.c.h.b16 %v8606
    %v8676 = vunpack.c.l.b16 %v8607
    %v8677 = vunpack.c.h.b16 %v8607
    %v8678 = vunpack.c.l.b16 %v8608
    %v8679 = vunpack.c.h.b16 %v8608
    %v8680 = vunpack.c.l.b16 %v8609
    %v8681 = vunpack.c.h.b16 %v8609
    %v8682 = vunpack.c.l.b16 %v8610
    %v8683 = vunpack.c.h.b16 %v8610
    %v8684 = vunpack.c.l.b16 %v8611
    %v8685 = vunpack.c.h.b16 %v8611
    %v8686 = vunpack.c.l.b16 %v8612
    %v8687 = vunpack.c.h.b16 %v8612
    %v8688 = vunpack.c.l.b16 %v8613
    %v8689 = vunpack.c.h.b16 %v8613
    %v8690 = vunpack.c.l.b16 %v8614
    %v8691 = vunpack.c.h.b16 %v8614
    %v8692 = vunpack.c.l.b16 %v8615
    %v8693 = vunpack.c.h.b16 %v8615
    %v8694 = vunpack.c.l.b16 %v8616
    %v8695 = vunpack.c.h.b16 %v8616
    %v8696 = vunpack.c.l.b16 %v8617
    %v8697 = vunpack.c.h.b16 %v8617
    %v8698 = vunpack.c.l.b16 %v8618
    %v8699 = vunpack.c.h.b16 %v8618
    %v8700 = vunpack.c.l.b16 %v8619
    %v8701 = vunpack.c.h.b16 %v8619
    %v8702 = vunpack.c.l.b16 %v8620
    %v8703 = vunpack.c.h.b16 %v8620
    %v8704 = vunpack.c.l.b16 %v8621
    %v8705 = vunpack.c.h.b16 %v8621
    %v8706 = vunpack.c.l.b16 %v8622
    %v8707 = vunpack.c.h.b16 %v8622
    %v8708 = vunpack.c.l.b16 %v8623
    %v8709 = vunpack.c.h.b16 %v8623
    %v8710 = vunpack.c.l.b16 %v8624
    %v8711 = vunpack.c.h.b16 %v8624
    %v8712 = vunpack.c.l.b16 %v8625
    %v8713 = vunpack.c.h.b16 %v8625
    %v8714 = vunpack.c.l.b16 %v8626
    %v8715 = vunpack.c.h.b16 %v8626
    %v8716 = vunpack.c.l.b16 %v8627
    %v8717 = vunpack.c.h.b16 %v8627
    %v8718 = vunpack.c.l.b16 %v8628
    %v8719 = vunpack.c.h.b16 %v8628
    %v8720 = vunpack.c.l.b16 %v8629
    %v8721 = vunpack.c.h.b16 %v8629
    %v8722 = vunpack.c.l.b16 %v8630
    %v8723 = vunpack.c.h.b16 %v8630
    %v8724 = vunpack.c.l.b16 %v8631
    %v8725 = vunpack.c.h.b16 %v8631
    %v8726 = vunpack.c.l.b16 %v8632
    %v8727 = vunpack.c.h.b16 %v8632
    %v8728 = vunpack.c.l.b16 %v8633
    %v8729 = vunpack.c.h.b16 %v8633
    %v8730 = vunpack.c.l.b16 %v8634
    %v8731 = vunpack.c.h.b16 %v8634
    %v8732 = vunpack.c.l.b16 %v8635
    %v8733 = vunpack.c.h.b16 %v8635
    %v8734 = vunpack.c.l.b16 %v8636
    %v8735 = vunpack.c.h.b16 %v8636
    %v8736 = vunpack.c.l.b16 %v8637
    %v8737 = vunpack.c.h.b16 %v8637
    %v8738 = vpack.c.b16 %v8676, %v8674
    %v8739 = vpack.c.b16 %v8677, %v8675
    %v8740 = vpack.c.b16 %v8680, %v8678
    %v8741 = vpack.c.b16 %v8681, %v8679
    %v8742 = vpack.c.b16 %v8684, %v8682
    %v8743 = vpack.c.b16 %v8685, %v8683
    %v8744 = vpack.c.b16 %v8688, %v8686
    %v8745 = vpack.c.b16 %v8689, %v8687
    %v8746 = vpack.c.b16 %v8692, %v8690
    %v8747 = vpack.c.b16 %v8693, %v8691
    %v8748 = vpack.c.b16 %v8696, %v8694
    %v8749 = vpack.c.b16 %v8697, %v8695
    %v8750 = vpack.c.b16 %v8700, %v8698
    %v8751 = vpack.c.b16 %v8701, %v8699
    %v8752 = vpack.c.b16 %v8704, %v8702
    %v8753 = vpack.c.b16 %v8705, %v8703
    %v8754 = vpack.c.b16 %v8708, %v8706
    %v8755 = vpack.c.b16 %v8709, %v8707
    %v8756 = vpack.c.b16 %v8712, %v8710
    %v8757 = vpack.c.b16 %v8713, %v8711
    %v8758 = vpack.c.b16 %v8716, %v8714
    %v8759 = vpack.c.b16 %v8717, %v8715
    %v8760 = vpack.c.b16 %v8720, %v8718
    %v8761 = vpack.c.b16 %v8721, %v8719
    %v8762 = vpack.c.b16 %v8724, %v8722
    %v8763 = vpack.c.b16 %v8725, %v8723
    %v8764 = vpack.c.b16 %v8728, %v8726
    %v8765 = vpack.c.b16 %v8729, %v8727
    %v8766 = vpack.c.b16 %v8732, %v8730
    %v8767 = vpack.c.b16 %v8733, %v8731
    %v8768 = vpack.c.b16 %v8736, %v8734
    %v8769 = vpack.c.b16 %v8737, %v8735
    %8802 = vmatpush.bf16.msra.mxu0 %v8752
    %8803 = vmatpush.bf16.msra.mxu0 %v8750
    %8804 = vmatpush.bf16.msra.mxu0 %v8748
    %8805 = vmatpush.bf16.msra.mxu0 %v8746
    %8806 = vmatpush.bf16.msra.mxu0 %v8744
    %8807 = vmatpush.bf16.msra.mxu0 %v8742
    %8808 = vmatpush.bf16.msra.mxu0 %v8740
    %8809 = vmatpush.bf16.msra.mxu0 %v8738
    %8810 = vmatmul.bf16.gmra.mxu0 %v8638
    %v8811 = vpop.f32.mrf.mxu0
    %v8812 = vadd.f32 0.0, %v8811
    %v8813 = vpop.f32.mrf.mxu0
    %v8814 = vadd.f32 0.0, %v8813
    %8815 = vmatmul.bf16.gmra.mxu0 %v8640
    %v8816 = vpop.f32.mrf.mxu0
    %v8817 = vadd.f32 0.0, %v8816
    %v8818 = vpop.f32.mrf.mxu0
    %v8819 = vadd.f32 0.0, %v8818
    %8820 = vdwg.mxu0
    %8821 = vmatpush.bf16.msra.mxu0 %v8768
    %8822 = vmatpush.bf16.msra.mxu0 %v8766
    %8823 = vmatpush.bf16.msra.mxu0 %v8764
    %8824 = vmatpush.bf16.msra.mxu0 %v8762
    %8825 = vmatpush.bf16.msra.mxu0 %v8760
    %8826 = vmatpush.bf16.msra.mxu0 %v8758
    %8827 = vmatpush.bf16.msra.mxu0 %v8756
    %8828 = vmatpush.bf16.msra.mxu0 %v8754
    %8829 = vmatmul.bf16.gmra.mxu0 %v8639
    %v8830 = vpop.f32.mrf.mxu0
    %v8831 = vadd.f32 %v8812, %v8830
    %v8832 = vpop.f32.mrf.mxu0
    %v8833 = vadd.f32 %v8814, %v8832
    %8834 = vmatmul.bf16.gmra.mxu0 %v8641
    %v8835 = vpop.f32.mrf.mxu0
    %v8836 = vadd.f32 %v8817, %v8835
    %v8837 = vpop.f32.mrf.mxu0
    %v8838 = vadd.f32 %v8819, %v8837
    %8839 = vdwg.mxu0
    %8840 = vmatpush.bf16.msra.mxu0 %v8753
    %8841 = vmatpush.bf16.msra.mxu0 %v8751
    %8842 = vmatpush.bf16.msra.mxu0 %v8749
    %8843 = vmatpush.bf16.msra.mxu0 %v8747
    %8844 = vmatpush.bf16.msra.mxu0 %v8745
    %8845 = vmatpush.bf16.msra.mxu0 %v8743
    %8846 = vmatpush.bf16.msra.mxu0 %v8741
    %8847 = vmatpush.bf16.msra.mxu0 %v8739
    %8848 = vmatmul.bf16.gmra.mxu0 %v8638
    %v8849 = vpop.f32.mrf.mxu0
    %v8850 = vadd.f32 0.0, %v8849
    %v8851 = vpop.f32.mrf.mxu0
    %v8852 = vadd.f32 0.0, %v8851
    %8853 = vmatmul.bf16.gmra.mxu0 %v8640
    %v8854 = vpop.f32.mrf.mxu0
    %v8855 = vadd.f32 0.0, %v8854
    %v8856 = vpop.f32.mrf.mxu0
    %v8857 = vadd.f32 0.0, %v8856
    %8858 = vdwg.mxu0
    %8859 = vmatpush.bf16.msra.mxu0 %v8769
    %8860 = vmatpush.bf16.msra.mxu0 %v8767
    %8861 = vmatpush.bf16.msra.mxu0 %v8765
    %8862 = vmatpush.bf16.msra.mxu0 %v8763
    %8863 = vmatpush.bf16.msra.mxu0 %v8761
    %8864 = vmatpush.bf16.msra.mxu0 %v8759
    %8865 = vmatpush.bf16.msra.mxu0 %v8757
    %8866 = vmatpush.bf16.msra.mxu0 %v8755
    %8867 = vmatmul.bf16.gmra.mxu0 %v8639
    %v8868 = vpop.f32.mrf.mxu0
    %v8869 = vadd.f32 %v8850, %v8868
    %v8870 = vpop.f32.mrf.mxu0
    %v8871 = vadd.f32 %v8852, %v8870
    %8872 = vmatmul.bf16.gmra.mxu0 %v8641
    %v8873 = vpop.f32.mrf.mxu0
    %v8874 = vadd.f32 %v8855, %v8873
    %v8875 = vpop.f32.mrf.mxu0
    %v8876 = vadd.f32 %v8857, %v8875
    %8877 = vdwg.mxu0
    %v8878 = vadd.f32 %v8457, %v8831
    %v8879 = vadd.f32 %v8495, %v8869
    %v8880 = vadd.f32 %v8459, %v8833
    %v8881 = vadd.f32 %v8497, %v8871
    %v8882 = vadd.f32 %v8462, %v8836
    %v8883 = vadd.f32 %v8500, %v8874
    %v8884 = vadd.f32 %v8464, %v8838
    %v8885 = vadd.f32 %v8502, %v8876
    %s8886 = scalar_lea.vmem [#allocation14], 96
    %v8887 = vld [vmem:[%s8886] sm:$0xff]
    %v8888 = vld [vmem:[%s8886 + $0x8] sm:$0xff]
    %v8889 = vld [vmem:[%s8886 + $0x10] sm:$0xff]
    %v8890 = vld [vmem:[%s8886 + $0x18] sm:$0xff]
    %v8895 = vunpack.c.l.b16 %v8887
    %v8896 = vunpack.c.h.b16 %v8887
    %v8897 = vunpack.c.l.b16 %v8888
    %v8898 = vunpack.c.h.b16 %v8888
    %v8899 = vunpack.c.l.b16 %v8889
    %v8900 = vunpack.c.h.b16 %v8889
    %v8901 = vunpack.c.l.b16 %v8890
    %v8902 = vunpack.c.h.b16 %v8890
    %v8903 = vpack.c.b16 %v8897, %v8895
    %v8904 = vpack.c.b16 %v8898, %v8896
    %v8905 = vpack.c.b16 %v8901, %v8899
    %v8906 = vpack.c.b16 %v8902, %v8900
    %8911 = vmatpush.bf16.msra.mxu0 %v7744
    %8912 = vmatpush.bf16.msra.mxu0 %v7742
    %8913 = vmatpush.bf16.msra.mxu0 %v7740
    %8914 = vmatpush.bf16.msra.mxu0 %v7738
    %8915 = vmatpush.bf16.msra.mxu0 %v7736
    %8916 = vmatpush.bf16.msra.mxu0 %v7734
    %8917 = vmatpush.bf16.msra.mxu0 %v7732
    %8918 = vmatpush.bf16.msra.mxu0 %v7730
    %8919 = vmatmul.bf16.gmra.mxu0 %v8903
    %v8920 = vpop.f32.mrf.mxu0
    %v8921 = vadd.f32 0.0, %v8920
    %v8922 = vpop.f32.mrf.mxu0
    %v8923 = vadd.f32 0.0, %v8922
    %8924 = vmatmul.bf16.gmra.mxu0 %v8905
    %v8925 = vpop.f32.mrf.mxu0
    %v8926 = vadd.f32 0.0, %v8925
    %v8927 = vpop.f32.mrf.mxu0
    %v8928 = vadd.f32 0.0, %v8927
    %8929 = vdwg.mxu0
    %8930 = vmatpush.bf16.msra.mxu0 %v7760
    %8931 = vmatpush.bf16.msra.mxu0 %v7758
    %8932 = vmatpush.bf16.msra.mxu0 %v7756
    %8933 = vmatpush.bf16.msra.mxu0 %v7754
    %8934 = vmatpush.bf16.msra.mxu0 %v7752
    %8935 = vmatpush.bf16.msra.mxu0 %v7750
    %8936 = vmatpush.bf16.msra.mxu0 %v7748
    %8937 = vmatpush.bf16.msra.mxu0 %v7746
    %8938 = vmatmul.bf16.gmra.mxu0 %v8904
    %v8939 = vpop.f32.mrf.mxu0
    %v8940 = vadd.f32 %v8921, %v8939
    %v8941 = vpop.f32.mrf.mxu0
    %v8942 = vadd.f32 %v8923, %v8941
    %8943 = vmatmul.bf16.gmra.mxu0 %v8906
    %v8944 = vpop.f32.mrf.mxu0
    %v8945 = vadd.f32 %v8926, %v8944
    %v8946 = vpop.f32.mrf.mxu0
    %v8947 = vadd.f32 %v8928, %v8946
    %8948 = vdwg.mxu0
    %8949 = vmatpush.bf16.msra.mxu0 %v7745
    %8950 = vmatpush.bf16.msra.mxu0 %v7743
    %8951 = vmatpush.bf16.msra.mxu0 %v7741
    %8952 = vmatpush.bf16.msra.mxu0 %v7739
    %8953 = vmatpush.bf16.msra.mxu0 %v7737
    %8954 = vmatpush.bf16.msra.mxu0 %v7735
    %8955 = vmatpush.bf16.msra.mxu0 %v7733
    %8956 = vmatpush.bf16.msra.mxu0 %v7731
    %8957 = vmatmul.bf16.gmra.mxu0 %v8903
    %v8958 = vpop.f32.mrf.mxu0
    %v8959 = vadd.f32 0.0, %v8958
    %v8960 = vpop.f32.mrf.mxu0
    %v8961 = vadd.f32 0.0, %v8960
    %8962 = vmatmul.bf16.gmra.mxu0 %v8905
    %v8963 = vpop.f32.mrf.mxu0
    %v8964 = vadd.f32 0.0, %v8963
    %v8965 = vpop.f32.mrf.mxu0
    %v8966 = vadd.f32 0.0, %v8965
    %8967 = vdwg.mxu0
    %8968 = vmatpush.bf16.msra.mxu0 %v7761
    %8969 = vmatpush.bf16.msra.mxu0 %v7759
    %8970 = vmatpush.bf16.msra.mxu0 %v7757
    %8971 = vmatpush.bf16.msra.mxu0 %v7755
    %8972 = vmatpush.bf16.msra.mxu0 %v7753
    %8973 = vmatpush.bf16.msra.mxu0 %v7751
    %8974 = vmatpush.bf16.msra.mxu0 %v7749
    %8975 = vmatpush.bf16.msra.mxu0 %v7747
    %8976 = vmatmul.bf16.gmra.mxu0 %v8904
    %v8977 = vpop.f32.mrf.mxu0
    %v8978 = vadd.f32 %v8959, %v8977
    %v8979 = vpop.f32.mrf.mxu0
    %v8980 = vadd.f32 %v8961, %v8979
    %8981 = vmatmul.bf16.gmra.mxu0 %v8906
    %v8982 = vpop.f32.mrf.mxu0
    %v8983 = vadd.f32 %v8964, %v8982
    %v8984 = vpop.f32.mrf.mxu0
    %v8985 = vadd.f32 %v8966, %v8984
    %8986 = vdwg.mxu0
    %s8987 = scalar_lea.vmem %s25, 768
    %v8988 = vld [vmem:[%s8987] sm:$0xff]
    %v8989 = vld [vmem:[%s8987 + $0x8] sm:$0xff]
    %v8990 = vld [vmem:[%s8987 + $0x10] sm:$0xff]
    %v8991 = vld [vmem:[%s8987 + $0x18] sm:$0xff]
    %v8992 = vld [vmem:[%s8987 + $0x20] sm:$0xff]
    %v8993 = vld [vmem:[%s8987 + $0x28] sm:$0xff]
    %v8994 = vld [vmem:[%s8987 + $0x30] sm:$0xff]
    %v8995 = vld [vmem:[%s8987 + $0x38] sm:$0xff]
    %v8996 = vld [vmem:[%s8987 + $0x40] sm:$0xff]
    %v8997 = vld [vmem:[%s8987 + $0x48] sm:$0xff]
    %v8998 = vld [vmem:[%s8987 + $0x50] sm:$0xff]
    %v8999 = vld [vmem:[%s8987 + $0x58] sm:$0xff]
    %v9000 = vld [vmem:[%s8987 + $0x60] sm:$0xff]
    %v9001 = vld [vmem:[%s8987 + $0x68] sm:$0xff]
    %v9002 = vld [vmem:[%s8987 + $0x70] sm:$0xff]
    %v9003 = vld [vmem:[%s8987 + $0x78] sm:$0xff]
    %v9004 = vld [vmem:[%s8987 + $0x80] sm:$0xff]
    %v9005 = vld [vmem:[%s8987 + $0x88] sm:$0xff]
    %v9006 = vld [vmem:[%s8987 + $0x90] sm:$0xff]
    %v9007 = vld [vmem:[%s8987 + $0x98] sm:$0xff]
    %v9008 = vld [vmem:[%s8987 + $0xa0] sm:$0xff]
    %v9009 = vld [vmem:[%s8987 + $0xa8] sm:$0xff]
    %v9010 = vld [vmem:[%s8987 + $0xb0] sm:$0xff]
    %v9011 = vld [vmem:[%s8987 + $0xb8] sm:$0xff]
    %v9012 = vld [vmem:[%s8987 + $0xc0] sm:$0xff]
    %v9013 = vld [vmem:[%s8987 + $0xc8] sm:$0xff]
    %v9014 = vld [vmem:[%s8987 + $0xd0] sm:$0xff]
    %v9015 = vld [vmem:[%s8987 + $0xd8] sm:$0xff]
    %v9016 = vld [vmem:[%s8987 + $0xe0] sm:$0xff]
    %v9017 = vld [vmem:[%s8987 + $0xe8] sm:$0xff]
    %v9018 = vld [vmem:[%s8987 + $0xf0] sm:$0xff]
    %v9019 = vld [vmem:[%s8987 + $0xf8] sm:$0xff]
    %v9020 = vpack.c.bf16 %v8942, %v8940
    %v9021 = vpack.c.bf16 %v8980, %v8978
    %v9022 = vpack.c.bf16 %v8947, %v8945
    %v9023 = vpack.c.bf16 %v8985, %v8983
    %v9056 = vunpack.c.l.b16 %v8988
    %v9057 = vunpack.c.h.b16 %v8988
    %v9058 = vunpack.c.l.b16 %v8989
    %v9059 = vunpack.c.h.b16 %v8989
    %v9060 = vunpack.c.l.b16 %v8990
    %v9061 = vunpack.c.h.b16 %v8990
    %v9062 = vunpack.c.l.b16 %v8991
    %v9063 = vunpack.c.h.b16 %v8991
    %v9064 = vunpack.c.l.b16 %v8992
    %v9065 = vunpack.c.h.b16 %v8992
    %v9066 = vunpack.c.l.b16 %v8993
    %v9067 = vunpack.c.h.b16 %v8993
    %v9068 = vunpack.c.l.b16 %v8994
    %v9069 = vunpack.c.h.b16 %v8994
    %v9070 = vunpack.c.l.b16 %v8995
    %v9071 = vunpack.c.h.b16 %v8995
    %v9072 = vunpack.c.l.b16 %v8996
    %v9073 = vunpack.c.h.b16 %v8996
    %v9074 = vunpack.c.l.b16 %v8997
    %v9075 = vunpack.c.h.b16 %v8997
    %v9076 = vunpack.c.l.b16 %v8998
    %v9077 = vunpack.c.h.b16 %v8998
    %v9078 = vunpack.c.l.b16 %v8999
    %v9079 = vunpack.c.h.b16 %v8999
    %v9080 = vunpack.c.l.b16 %v9000
    %v9081 = vunpack.c.h.b16 %v9000
    %v9082 = vunpack.c.l.b16 %v9001
    %v9083 = vunpack.c.h.b16 %v9001
    %v9084 = vunpack.c.l.b16 %v9002
    %v9085 = vunpack.c.h.b16 %v9002
    %v9086 = vunpack.c.l.b16 %v9003
    %v9087 = vunpack.c.h.b16 %v9003
    %v9088 = vunpack.c.l.b16 %v9004
    %v9089 = vunpack.c.h.b16 %v9004
    %v9090 = vunpack.c.l.b16 %v9005
    %v9091 = vunpack.c.h.b16 %v9005
    %v9092 = vunpack.c.l.b16 %v9006
    %v9093 = vunpack.c.h.b16 %v9006
    %v9094 = vunpack.c.l.b16 %v9007
    %v9095 = vunpack.c.h.b16 %v9007
    %v9096 = vunpack.c.l.b16 %v9008
    %v9097 = vunpack.c.h.b16 %v9008
    %v9098 = vunpack.c.l.b16 %v9009
    %v9099 = vunpack.c.h.b16 %v9009
    %v9100 = vunpack.c.l.b16 %v9010
    %v9101 = vunpack.c.h.b16 %v9010
    %v9102 = vunpack.c.l.b16 %v9011
    %v9103 = vunpack.c.h.b16 %v9011
    %v9104 = vunpack.c.l.b16 %v9012
    %v9105 = vunpack.c.h.b16 %v9012
    %v9106 = vunpack.c.l.b16 %v9013
    %v9107 = vunpack.c.h.b16 %v9013
    %v9108 = vunpack.c.l.b16 %v9014
    %v9109 = vunpack.c.h.b16 %v9014
    %v9110 = vunpack.c.l.b16 %v9015
    %v9111 = vunpack.c.h.b16 %v9015
    %v9112 = vunpack.c.l.b16 %v9016
    %v9113 = vunpack.c.h.b16 %v9016
    %v9114 = vunpack.c.l.b16 %v9017
    %v9115 = vunpack.c.h.b16 %v9017
    %v9116 = vunpack.c.l.b16 %v9018
    %v9117 = vunpack.c.h.b16 %v9018
    %v9118 = vunpack.c.l.b16 %v9019
    %v9119 = vunpack.c.h.b16 %v9019
    %v9120 = vpack.c.b16 %v9058, %v9056
    %v9121 = vpack.c.b16 %v9059, %v9057
    %v9122 = vpack.c.b16 %v9062, %v9060
    %v9123 = vpack.c.b16 %v9063, %v9061
    %v9124 = vpack.c.b16 %v9066, %v9064
    %v9125 = vpack.c.b16 %v9067, %v9065
    %v9126 = vpack.c.b16 %v9070, %v9068
    %v9127 = vpack.c.b16 %v9071, %v9069
    %v9128 = vpack.c.b16 %v9074, %v9072
    %v9129 = vpack.c.b16 %v9075, %v9073
    %v9130 = vpack.c.b16 %v9078, %v9076
    %v9131 = vpack.c.b16 %v9079, %v9077
    %v9132 = vpack.c.b16 %v9082, %v9080
    %v9133 = vpack.c.b16 %v9083, %v9081
    %v9134 = vpack.c.b16 %v9086, %v9084
    %v9135 = vpack.c.b16 %v9087, %v9085
    %v9136 = vpack.c.b16 %v9090, %v9088
    %v9137 = vpack.c.b16 %v9091, %v9089
    %v9138 = vpack.c.b16 %v9094, %v9092
    %v9139 = vpack.c.b16 %v9095, %v9093
    %v9140 = vpack.c.b16 %v9098, %v9096
    %v9141 = vpack.c.b16 %v9099, %v9097
    %v9142 = vpack.c.b16 %v9102, %v9100
    %v9143 = vpack.c.b16 %v9103, %v9101
    %v9144 = vpack.c.b16 %v9106, %v9104
    %v9145 = vpack.c.b16 %v9107, %v9105
    %v9146 = vpack.c.b16 %v9110, %v9108
    %v9147 = vpack.c.b16 %v9111, %v9109
    %v9148 = vpack.c.b16 %v9114, %v9112
    %v9149 = vpack.c.b16 %v9115, %v9113
    %v9150 = vpack.c.b16 %v9118, %v9116
    %v9151 = vpack.c.b16 %v9119, %v9117
    %9184 = vmatpush.bf16.msra.mxu0 %v9134
    %9185 = vmatpush.bf16.msra.mxu0 %v9132
    %9186 = vmatpush.bf16.msra.mxu0 %v9130
    %9187 = vmatpush.bf16.msra.mxu0 %v9128
    %9188 = vmatpush.bf16.msra.mxu0 %v9126
    %9189 = vmatpush.bf16.msra.mxu0 %v9124
    %9190 = vmatpush.bf16.msra.mxu0 %v9122
    %9191 = vmatpush.bf16.msra.mxu0 %v9120
    %9192 = vmatmul.bf16.gmra.mxu0 %v9020
    %v9193 = vpop.f32.mrf.mxu0
    %v9194 = vadd.f32 0.0, %v9193
    %v9195 = vpop.f32.mrf.mxu0
    %v9196 = vadd.f32 0.0, %v9195
    %9197 = vmatmul.bf16.gmra.mxu0 %v9022
    %v9198 = vpop.f32.mrf.mxu0
    %v9199 = vadd.f32 0.0, %v9198
    %v9200 = vpop.f32.mrf.mxu0
    %v9201 = vadd.f32 0.0, %v9200
    %9202 = vdwg.mxu0
    %9203 = vmatpush.bf16.msra.mxu0 %v9150
    %9204 = vmatpush.bf16.msra.mxu0 %v9148
    %9205 = vmatpush.bf16.msra.mxu0 %v9146
    %9206 = vmatpush.bf16.msra.mxu0 %v9144
    %9207 = vmatpush.bf16.msra.mxu0 %v9142
    %9208 = vmatpush.bf16.msra.mxu0 %v9140
    %9209 = vmatpush.bf16.msra.mxu0 %v9138
    %9210 = vmatpush.bf16.msra.mxu0 %v9136
    %9211 = vmatmul.bf16.gmra.mxu0 %v9021
    %v9212 = vpop.f32.mrf.mxu0
    %v9213 = vadd.f32 %v9194, %v9212
    %v9214 = vpop.f32.mrf.mxu0
    %v9215 = vadd.f32 %v9196, %v9214
    %9216 = vmatmul.bf16.gmra.mxu0 %v9023
    %v9217 = vpop.f32.mrf.mxu0
    %v9218 = vadd.f32 %v9199, %v9217
    %v9219 = vpop.f32.mrf.mxu0
    %v9220 = vadd.f32 %v9201, %v9219
    %9221 = vdwg.mxu0
    %9222 = vmatpush.bf16.msra.mxu0 %v9135
    %9223 = vmatpush.bf16.msra.mxu0 %v9133
    %9224 = vmatpush.bf16.msra.mxu0 %v9131
    %9225 = vmatpush.bf16.msra.mxu0 %v9129
    %9226 = vmatpush.bf16.msra.mxu0 %v9127
    %9227 = vmatpush.bf16.msra.mxu0 %v9125
    %9228 = vmatpush.bf16.msra.mxu0 %v9123
    %9229 = vmatpush.bf16.msra.mxu0 %v9121
    %9230 = vmatmul.bf16.gmra.mxu0 %v9020
    %v9231 = vpop.f32.mrf.mxu0
    %v9232 = vadd.f32 0.0, %v9231
    %v9233 = vpop.f32.mrf.mxu0
    %v9234 = vadd.f32 0.0, %v9233
    %9235 = vmatmul.bf16.gmra.mxu0 %v9022
    %v9236 = vpop.f32.mrf.mxu0
    %v9237 = vadd.f32 0.0, %v9236
    %v9238 = vpop.f32.mrf.mxu0
    %v9239 = vadd.f32 0.0, %v9238
    %9240 = vdwg.mxu0
    %9241 = vmatpush.bf16.msra.mxu0 %v9151
    %9242 = vmatpush.bf16.msra.mxu0 %v9149
    %9243 = vmatpush.bf16.msra.mxu0 %v9147
    %9244 = vmatpush.bf16.msra.mxu0 %v9145
    %9245 = vmatpush.bf16.msra.mxu0 %v9143
    %9246 = vmatpush.bf16.msra.mxu0 %v9141
    %9247 = vmatpush.bf16.msra.mxu0 %v9139
    %9248 = vmatpush.bf16.msra.mxu0 %v9137
    %9249 = vmatmul.bf16.gmra.mxu0 %v9021
    %v9250 = vpop.f32.mrf.mxu0
    %v9251 = vadd.f32 %v9232, %v9250
    %v9252 = vpop.f32.mrf.mxu0
    %v9253 = vadd.f32 %v9234, %v9252
    %9254 = vmatmul.bf16.gmra.mxu0 %v9023
    %v9255 = vpop.f32.mrf.mxu0
    %v9256 = vadd.f32 %v9237, %v9255
    %v9257 = vpop.f32.mrf.mxu0
    %v9258 = vadd.f32 %v9239, %v9257
    %9259 = vdwg.mxu0
    %v9260 = vadd.f32 %v8878, %v9213
    %v9261 = vadd.f32 %v8879, %v9251
    %v9262 = vadd.f32 %v8880, %v9215
    %v9263 = vadd.f32 %v8881, %v9253
    %v9264 = vadd.f32 %v8882, %v9218
    %v9265 = vadd.f32 %v8883, %v9256
    %v9266 = vadd.f32 %v8884, %v9220
    %v9267 = vadd.f32 %v8885, %v9258
    %s9268 = scalar_lea.vmem [#allocation14], 128
    %v9269 = vld [vmem:[%s9268] sm:$0xff]
    %v9270 = vld [vmem:[%s9268 + $0x8] sm:$0xff]
    %v9271 = vld [vmem:[%s9268 + $0x10] sm:$0xff]
    %v9272 = vld [vmem:[%s9268 + $0x18] sm:$0xff]
    %v9277 = vunpack.c.l.b16 %v9269
    %v9278 = vunpack.c.h.b16 %v9269
    %v9279 = vunpack.c.l.b16 %v9270
    %v9280 = vunpack.c.h.b16 %v9270
    %v9281 = vunpack.c.l.b16 %v9271
    %v9282 = vunpack.c.h.b16 %v9271
    %v9283 = vunpack.c.l.b16 %v9272
    %v9284 = vunpack.c.h.b16 %v9272
    %v9285 = vpack.c.b16 %v9279, %v9277
    %v9286 = vpack.c.b16 %v9280, %v9278
    %v9287 = vpack.c.b16 %v9283, %v9281
    %v9288 = vpack.c.b16 %v9284, %v9282
    %9293 = vmatpush.bf16.msra.mxu0 %v7744
    %9294 = vmatpush.bf16.msra.mxu0 %v7742
    %9295 = vmatpush.bf16.msra.mxu0 %v7740
    %9296 = vmatpush.bf16.msra.mxu0 %v7738
    %9297 = vmatpush.bf16.msra.mxu0 %v7736
    %9298 = vmatpush.bf16.msra.mxu0 %v7734
    %9299 = vmatpush.bf16.msra.mxu0 %v7732
    %9300 = vmatpush.bf16.msra.mxu0 %v7730
    %9301 = vmatmul.bf16.gmra.mxu0 %v9285
    %v9302 = vpop.f32.mrf.mxu0
    %v9303 = vadd.f32 0.0, %v9302
    %v9304 = vpop.f32.mrf.mxu0
    %v9305 = vadd.f32 0.0, %v9304
    %9306 = vmatmul.bf16.gmra.mxu0 %v9287
    %v9307 = vpop.f32.mrf.mxu0
    %v9308 = vadd.f32 0.0, %v9307
    %v9309 = vpop.f32.mrf.mxu0
    %v9310 = vadd.f32 0.0, %v9309
    %9311 = vdwg.mxu0
    %9312 = vmatpush.bf16.msra.mxu0 %v7760
    %9313 = vmatpush.bf16.msra.mxu0 %v7758
    %9314 = vmatpush.bf16.msra.mxu0 %v7756
    %9315 = vmatpush.bf16.msra.mxu0 %v7754
    %9316 = vmatpush.bf16.msra.mxu0 %v7752
    %9317 = vmatpush.bf16.msra.mxu0 %v7750
    %9318 = vmatpush.bf16.msra.mxu0 %v7748
    %9319 = vmatpush.bf16.msra.mxu0 %v7746
    %9320 = vmatmul.bf16.gmra.mxu0 %v9286
    %v9321 = vpop.f32.mrf.mxu0
    %v9322 = vadd.f32 %v9303, %v9321
    %v9323 = vpop.f32.mrf.mxu0
    %v9324 = vadd.f32 %v9305, %v9323
    %9325 = vmatmul.bf16.gmra.mxu0 %v9288
    %v9326 = vpop.f32.mrf.mxu0
    %v9327 = vadd.f32 %v9308, %v9326
    %v9328 = vpop.f32.mrf.mxu0
    %v9329 = vadd.f32 %v9310, %v9328
    %9330 = vdwg.mxu0
    %9331 = vmatpush.bf16.msra.mxu0 %v7745
    %9332 = vmatpush.bf16.msra.mxu0 %v7743
    %9333 = vmatpush.bf16.msra.mxu0 %v7741
    %9334 = vmatpush.bf16.msra.mxu0 %v7739
    %9335 = vmatpush.bf16.msra.mxu0 %v7737
    %9336 = vmatpush.bf16.msra.mxu0 %v7735
    %9337 = vmatpush.bf16.msra.mxu0 %v7733
    %9338 = vmatpush.bf16.msra.mxu0 %v7731
    %9339 = vmatmul.bf16.gmra.mxu0 %v9285
    %v9340 = vpop.f32.mrf.mxu0
    %v9341 = vadd.f32 0.0, %v9340
    %v9342 = vpop.f32.mrf.mxu0
    %v9343 = vadd.f32 0.0, %v9342
    %9344 = vmatmul.bf16.gmra.mxu0 %v9287
    %v9345 = vpop.f32.mrf.mxu0
    %v9346 = vadd.f32 0.0, %v9345
    %v9347 = vpop.f32.mrf.mxu0
    %v9348 = vadd.f32 0.0, %v9347
    %9349 = vdwg.mxu0
    %9350 = vmatpush.bf16.msra.mxu0 %v7761
    %9351 = vmatpush.bf16.msra.mxu0 %v7759
    %9352 = vmatpush.bf16.msra.mxu0 %v7757
    %9353 = vmatpush.bf16.msra.mxu0 %v7755
    %9354 = vmatpush.bf16.msra.mxu0 %v7753
    %9355 = vmatpush.bf16.msra.mxu0 %v7751
    %9356 = vmatpush.bf16.msra.mxu0 %v7749
    %9357 = vmatpush.bf16.msra.mxu0 %v7747
    %9358 = vmatmul.bf16.gmra.mxu0 %v9286
    %v9359 = vpop.f32.mrf.mxu0
    %v9360 = vadd.f32 %v9341, %v9359
    %v9361 = vpop.f32.mrf.mxu0
    %v9362 = vadd.f32 %v9343, %v9361
    %9363 = vmatmul.bf16.gmra.mxu0 %v9288
    %v9364 = vpop.f32.mrf.mxu0
    %v9365 = vadd.f32 %v9346, %v9364
    %v9366 = vpop.f32.mrf.mxu0
    %v9367 = vadd.f32 %v9348, %v9366
    %9368 = vdwg.mxu0
    %s9369 = scalar_lea.vmem %s25, 1024
    %v9370 = vld [vmem:[%s9369] sm:$0xff]
    %v9371 = vld [vmem:[%s9369 + $0x8] sm:$0xff]
    %v9372 = vld [vmem:[%s9369 + $0x10] sm:$0xff]
    %v9373 = vld [vmem:[%s9369 + $0x18] sm:$0xff]
    %v9374 = vld [vmem:[%s9369 + $0x20] sm:$0xff]
    %v9375 = vld [vmem:[%s9369 + $0x28] sm:$0xff]
    %v9376 = vld [vmem:[%s9369 + $0x30] sm:$0xff]
    %v9377 = vld [vmem:[%s9369 + $0x38] sm:$0xff]
    %v9378 = vld [vmem:[%s9369 + $0x40] sm:$0xff]
    %v9379 = vld [vmem:[%s9369 + $0x48] sm:$0xff]
    %v9380 = vld [vmem:[%s9369 + $0x50] sm:$0xff]
    %v9381 = vld [vmem:[%s9369 + $0x58] sm:$0xff]
    %v9382 = vld [vmem:[%s9369 + $0x60] sm:$0xff]
    %v9383 = vld [vmem:[%s9369 + $0x68] sm:$0xff]
    %v9384 = vld [vmem:[%s9369 + $0x70] sm:$0xff]
    %v9385 = vld [vmem:[%s9369 + $0x78] sm:$0xff]
    %v9386 = vld [vmem:[%s9369 + $0x80] sm:$0xff]
    %v9387 = vld [vmem:[%s9369 + $0x88] sm:$0xff]
    %v9388 = vld [vmem:[%s9369 + $0x90] sm:$0xff]
    %v9389 = vld [vmem:[%s9369 + $0x98] sm:$0xff]
    %v9390 = vld [vmem:[%s9369 + $0xa0] sm:$0xff]
    %v9391 = vld [vmem:[%s9369 + $0xa8] sm:$0xff]
    %v9392 = vld [vmem:[%s9369 + $0xb0] sm:$0xff]
    %v9393 = vld [vmem:[%s9369 + $0xb8] sm:$0xff]
    %v9394 = vld [vmem:[%s9369 + $0xc0] sm:$0xff]
    %v9395 = vld [vmem:[%s9369 + $0xc8] sm:$0xff]
    %v9396 = vld [vmem:[%s9369 + $0xd0] sm:$0xff]
    %v9397 = vld [vmem:[%s9369 + $0xd8] sm:$0xff]
    %v9398 = vld [vmem:[%s9369 + $0xe0] sm:$0xff]
    %v9399 = vld [vmem:[%s9369 + $0xe8] sm:$0xff]
    %v9400 = vld [vmem:[%s9369 + $0xf0] sm:$0xff]
    %v9401 = vld [vmem:[%s9369 + $0xf8] sm:$0xff]
    %v9402 = vpack.c.bf16 %v9324, %v9322
    %v9403 = vpack.c.bf16 %v9362, %v9360
    %v9404 = vpack.c.bf16 %v9329, %v9327
    %v9405 = vpack.c.bf16 %v9367, %v9365
    %v9438 = vunpack.c.l.b16 %v9370
    %v9439 = vunpack.c.h.b16 %v9370
    %v9440 = vunpack.c.l.b16 %v9371
    %v9441 = vunpack.c.h.b16 %v9371
    %v9442 = vunpack.c.l.b16 %v9372
    %v9443 = vunpack.c.h.b16 %v9372
    %v9444 = vunpack.c.l.b16 %v9373
    %v9445 = vunpack.c.h.b16 %v9373
    %v9446 = vunpack.c.l.b16 %v9374
    %v9447 = vunpack.c.h.b16 %v9374
    %v9448 = vunpack.c.l.b16 %v9375
    %v9449 = vunpack.c.h.b16 %v9375
    %v9450 = vunpack.c.l.b16 %v9376
    %v9451 = vunpack.c.h.b16 %v9376
    %v9452 = vunpack.c.l.b16 %v9377
    %v9453 = vunpack.c.h.b16 %v9377
    %v9454 = vunpack.c.l.b16 %v9378
    %v9455 = vunpack.c.h.b16 %v9378
    %v9456 = vunpack.c.l.b16 %v9379
    %v9457 = vunpack.c.h.b16 %v9379
    %v9458 = vunpack.c.l.b16 %v9380
    %v9459 = vunpack.c.h.b16 %v9380
    %v9460 = vunpack.c.l.b16 %v9381
    %v9461 = vunpack.c.h.b16 %v9381
    %v9462 = vunpack.c.l.b16 %v9382
    %v9463 = vunpack.c.h.b16 %v9382
    %v9464 = vunpack.c.l.b16 %v9383
    %v9465 = vunpack.c.h.b16 %v9383
    %v9466 = vunpack.c.l.b16 %v9384
    %v9467 = vunpack.c.h.b16 %v9384
    %v9468 = vunpack.c.l.b16 %v9385
    %v9469 = vunpack.c.h.b16 %v9385
    %v9470 = vunpack.c.l.b16 %v9386
    %v9471 = vunpack.c.h.b16 %v9386
    %v9472 = vunpack.c.l.b16 %v9387
    %v9473 = vunpack.c.h.b16 %v9387
    %v9474 = vunpack.c.l.b16 %v9388
    %v9475 = vunpack.c.h.b16 %v9388
    %v9476 = vunpack.c.l.b16 %v9389
    %v9477 = vunpack.c.h.b16 %v9389
    %v9478 = vunpack.c.l.b16 %v9390
    %v9479 = vunpack.c.h.b16 %v9390
    %v9480 = vunpack.c.l.b16 %v9391
    %v9481 = vunpack.c.h.b16 %v9391
    %v9482 = vunpack.c.l.b16 %v9392
    %v9483 = vunpack.c.h.b16 %v9392
    %v9484 = vunpack.c.l.b16 %v9393
    %v9485 = vunpack.c.h.b16 %v9393
    %v9486 = vunpack.c.l.b16 %v9394
    %v9487 = vunpack.c.h.b16 %v9394
    %v9488 = vunpack.c.l.b16 %v9395
    %v9489 = vunpack.c.h.b16 %v9395
    %v9490 = vunpack.c.l.b16 %v9396
    %v9491 = vunpack.c.h.b16 %v9396
    %v9492 = vunpack.c.l.b16 %v9397
    %v9493 = vunpack.c.h.b16 %v9397
    %v9494 = vunpack.c.l.b16 %v9398
    %v9495 = vunpack.c.h.b16 %v9398
    %v9496 = vunpack.c.l.b16 %v9399
    %v9497 = vunpack.c.h.b16 %v9399
    %v9498 = vunpack.c.l.b16 %v9400
    %v9499 = vunpack.c.h.b16 %v9400
    %v9500 = vunpack.c.l.b16 %v9401
    %v9501 = vunpack.c.h.b16 %v9401
    %v9502 = vpack.c.b16 %v9440, %v9438
    %v9503 = vpack.c.b16 %v9441, %v9439
    %v9504 = vpack.c.b16 %v9444, %v9442
    %v9505 = vpack.c.b16 %v9445, %v9443
    %v9506 = vpack.c.b16 %v9448, %v9446
    %v9507 = vpack.c.b16 %v9449, %v9447
    %v9508 = vpack.c.b16 %v9452, %v9450
    %v9509 = vpack.c.b16 %v9453, %v9451
    %v9510 = vpack.c.b16 %v9456, %v9454
    %v9511 = vpack.c.b16 %v9457, %v9455
    %v9512 = vpack.c.b16 %v9460, %v9458
    %v9513 = vpack.c.b16 %v9461, %v9459
    %v9514 = vpack.c.b16 %v9464, %v9462
    %v9515 = vpack.c.b16 %v9465, %v9463
    %v9516 = vpack.c.b16 %v9468, %v9466
    %v9517 = vpack.c.b16 %v9469, %v9467
    %v9518 = vpack.c.b16 %v9472, %v9470
    %v9519 = vpack.c.b16 %v9473, %v9471
    %v9520 = vpack.c.b16 %v9476, %v9474
    %v9521 = vpack.c.b16 %v9477, %v9475
    %v9522 = vpack.c.b16 %v9480, %v9478
    %v9523 = vpack.c.b16 %v9481, %v9479
    %v9524 = vpack.c.b16 %v9484, %v9482
    %v9525 = vpack.c.b16 %v9485, %v9483
    %v9526 = vpack.c.b16 %v9488, %v9486
    %v9527 = vpack.c.b16 %v9489, %v9487
    %v9528 = vpack.c.b16 %v9492, %v9490
    %v9529 = vpack.c.b16 %v9493, %v9491
    %v9530 = vpack.c.b16 %v9496, %v9494
    %v9531 = vpack.c.b16 %v9497, %v9495
    %v9532 = vpack.c.b16 %v9500, %v9498
    %v9533 = vpack.c.b16 %v9501, %v9499
    %9566 = vmatpush.bf16.msra.mxu0 %v9516
    %9567 = vmatpush.bf16.msra.mxu0 %v9514
    %9568 = vmatpush.bf16.msra.mxu0 %v9512
    %9569 = vmatpush.bf16.msra.mxu0 %v9510
    %9570 = vmatpush.bf16.msra.mxu0 %v9508
    %9571 = vmatpush.bf16.msra.mxu0 %v9506
    %9572 = vmatpush.bf16.msra.mxu0 %v9504
    %9573 = vmatpush.bf16.msra.mxu0 %v9502
    %9574 = vmatmul.bf16.gmra.mxu0 %v9402
    %v9575 = vpop.f32.mrf.mxu0
    %v9576 = vadd.f32 0.0, %v9575
    %v9577 = vpop.f32.mrf.mxu0
    %v9578 = vadd.f32 0.0, %v9577
    %9579 = vmatmul.bf16.gmra.mxu0 %v9404
    %v9580 = vpop.f32.mrf.mxu0
    %v9581 = vadd.f32 0.0, %v9580
    %v9582 = vpop.f32.mrf.mxu0
    %v9583 = vadd.f32 0.0, %v9582
    %9584 = vdwg.mxu0
    %9585 = vmatpush.bf16.msra.mxu0 %v9532
    %9586 = vmatpush.bf16.msra.mxu0 %v9530
    %9587 = vmatpush.bf16.msra.mxu0 %v9528
    %9588 = vmatpush.bf16.msra.mxu0 %v9526
    %9589 = vmatpush.bf16.msra.mxu0 %v9524
    %9590 = vmatpush.bf16.msra.mxu0 %v9522
    %9591 = vmatpush.bf16.msra.mxu0 %v9520
    %9592 = vmatpush.bf16.msra.mxu0 %v9518
    %9593 = vmatmul.bf16.gmra.mxu0 %v9403
    %v9594 = vpop.f32.mrf.mxu0
    %v9595 = vadd.f32 %v9576, %v9594
    %v9596 = vpop.f32.mrf.mxu0
    %v9597 = vadd.f32 %v9578, %v9596
    %9598 = vmatmul.bf16.gmra.mxu0 %v9405
    %v9599 = vpop.f32.mrf.mxu0
    %v9600 = vadd.f32 %v9581, %v9599
    %v9601 = vpop.f32.mrf.mxu0
    %v9602 = vadd.f32 %v9583, %v9601
    %9603 = vdwg.mxu0
    %9604 = vmatpush.bf16.msra.mxu0 %v9517
    %9605 = vmatpush.bf16.msra.mxu0 %v9515
    %9606 = vmatpush.bf16.msra.mxu0 %v9513
    %9607 = vmatpush.bf16.msra.mxu0 %v9511
    %9608 = vmatpush.bf16.msra.mxu0 %v9509
    %9609 = vmatpush.bf16.msra.mxu0 %v9507
    %9610 = vmatpush.bf16.msra.mxu0 %v9505
    %9611 = vmatpush.bf16.msra.mxu0 %v9503
    %9612 = vmatmul.bf16.gmra.mxu0 %v9402
    %v9613 = vpop.f32.mrf.mxu0
    %v9614 = vadd.f32 0.0, %v9613
    %v9615 = vpop.f32.mrf.mxu0
    %v9616 = vadd.f32 0.0, %v9615
    %9617 = vmatmul.bf16.gmra.mxu0 %v9404
    %v9618 = vpop.f32.mrf.mxu0
    %v9619 = vadd.f32 0.0, %v9618
    %v9620 = vpop.f32.mrf.mxu0
    %v9621 = vadd.f32 0.0, %v9620
    %9622 = vdwg.mxu0
    %9623 = vmatpush.bf16.msra.mxu0 %v9533
    %9624 = vmatpush.bf16.msra.mxu0 %v9531
    %9625 = vmatpush.bf16.msra.mxu0 %v9529
    %9626 = vmatpush.bf16.msra.mxu0 %v9527
    %9627 = vmatpush.bf16.msra.mxu0 %v9525
    %9628 = vmatpush.bf16.msra.mxu0 %v9523
    %9629 = vmatpush.bf16.msra.mxu0 %v9521
    %9630 = vmatpush.bf16.msra.mxu0 %v9519
    %9631 = vmatmul.bf16.gmra.mxu0 %v9403
    %v9632 = vpop.f32.mrf.mxu0
    %v9633 = vadd.f32 %v9614, %v9632
    %v9634 = vpop.f32.mrf.mxu0
    %v9635 = vadd.f32 %v9616, %v9634
    %9636 = vmatmul.bf16.gmra.mxu0 %v9405
    %v9637 = vpop.f32.mrf.mxu0
    %v9638 = vadd.f32 %v9619, %v9637
    %v9639 = vpop.f32.mrf.mxu0
    %v9640 = vadd.f32 %v9621, %v9639
    %9641 = vdwg.mxu0
    %v9642 = vadd.f32 %v9260, %v9595
    %v9643 = vadd.f32 %v9261, %v9633
    %v9644 = vadd.f32 %v9262, %v9597
    %v9645 = vadd.f32 %v9263, %v9635
    %v9646 = vadd.f32 %v9264, %v9600
    %v9647 = vadd.f32 %v9265, %v9638
    %v9648 = vadd.f32 %v9266, %v9602
    %v9649 = vadd.f32 %v9267, %v9640
    %v9650 = vld [vmem:[#allocation2] sm:$0x1]
    %v9652 = vperm.slane %v9650, 0
    %9653 = vset.pattern.permute.xlu0 0
    %9654 = vperm.xlu0 %9653, %v9652
    %v9655 = vpop.permute.xlu0 %9654
    %v9657 = vadd.f32 %v9642, %v9655
    %v9658 = vadd.f32 %v9643, %v9655
    %v9659 = vadd.f32 %v9644, %v9655
    %v9660 = vadd.f32 %v9645, %v9655
    %v9661 = vadd.f32 %v9646, %v9655
    %v9662 = vadd.f32 %v9647, %v9655
    %v9663 = vadd.f32 %v9648, %v9655
    %v9664 = vadd.f32 %v9649, %v9655
    %v9665 = vxor.u32 %v9657, 2147483648
    %v9666 = vxor.u32 %v9658, 2147483648
    %v9667 = vxor.u32 %v9659, 2147483648
    %v9668 = vxor.u32 %v9660, 2147483648
    %v9669 = vxor.u32 %v9661, 2147483648
    %v9670 = vxor.u32 %v9662, 2147483648
    %v9671 = vxor.u32 %v9663, 2147483648
    %v9672 = vxor.u32 %v9664, 2147483648
    %v9673 = vmul.f32 %v9665, 1.442695
    %v9674 = vpow.pop %v9673
    %v9675 = vmul.f32 %v9666, 1.442695
    %v9676 = vpow.pop %v9675
    %v9677 = vmul.f32 %v9667, 1.442695
    %v9678 = vpow.pop %v9677
    %v9679 = vmul.f32 %v9668, 1.442695
    %v9680 = vpow.pop %v9679
    %v9681 = vmul.f32 %v9669, 1.442695
    %v9682 = vpow.pop %v9681
    %v9683 = vmul.f32 %v9670, 1.442695
    %v9684 = vpow.pop %v9683
    %v9685 = vmul.f32 %v9671, 1.442695
    %v9686 = vpow.pop %v9685
    %v9687 = vmul.f32 %v9672, 1.442695
    %v9688 = vpow.pop %v9687
    %v9689 = vadd.f32 %v9674, 1.0
    %v9690 = vadd.f32 %v9676, 1.0
    %v9691 = vadd.f32 %v9678, 1.0
    %v9692 = vadd.f32 %v9680, 1.0
    %v9693 = vadd.f32 %v9682, 1.0
    %v9694 = vadd.f32 %v9684, 1.0
    %v9695 = vadd.f32 %v9686, 1.0
    %v9696 = vadd.f32 %v9688, 1.0
    %v9697 = vrcp.pop %v9689
    %v9698 = vmul.f32 %v9689, %v9697
    %v9699 = vsub.f32 1.0, %v9698
    %v9700 = vmul.f32 %v9697, %v9699
    %v9701 = vadd.f32 %v9697, %v9700
    %vm9702 = vweird.f32 %v9689
    %vm9703 = vweird.f32 %v9697
    %vm9704 = vmor %vm9702, %vm9703
    %v9705 = vsel %vm9704, %v9697, %v9701
    %v9706 = vand.u32 2147483647, %v9689
    %vm9707 = vcmp.eq.f32.partialorder %v9706, 8.507059e+37
    %v9708 = vand.u32 %v9689, 2147483648
    %v9709 = vor.u32 1.1754944e-38, %v9708
    %v9710 = vsel %vm9707, %v9709, %v9705
    %v9711 = vmul.f32 1.0, %v9710
    %v9712 = vrcp.pop %v9690
    %v9713 = vmul.f32 %v9690, %v9712
    %v9714 = vsub.f32 1.0, %v9713
    %v9715 = vmul.f32 %v9712, %v9714
    %v9716 = vadd.f32 %v9712, %v9715
    %vm9717 = vweird.f32 %v9690
    %vm9718 = vweird.f32 %v9712
    %vm9719 = vmor %vm9717, %vm9718
    %v9720 = vsel %vm9719, %v9712, %v9716
    %v9721 = vand.u32 2147483647, %v9690
    %vm9722 = vcmp.eq.f32.partialorder %v9721, 8.507059e+37
    %v9723 = vand.u32 %v9690, 2147483648
    %v9724 = vor.u32 1.1754944e-38, %v9723
    %v9725 = vsel %vm9722, %v9724, %v9720
    %v9726 = vmul.f32 1.0, %v9725
    %v9727 = vrcp.pop %v9691
    %v9728 = vmul.f32 %v9691, %v9727
    %v9729 = vsub.f32 1.0, %v9728
    %v9730 = vmul.f32 %v9727, %v9729
    %v9731 = vadd.f32 %v9727, %v9730
    %vm9732 = vweird.f32 %v9691
    %vm9733 = vweird.f32 %v9727
    %vm9734 = vmor %vm9732, %vm9733
    %v9735 = vsel %vm9734, %v9727, %v9731
    %v9736 = vand.u32 2147483647, %v9691
    %vm9737 = vcmp.eq.f32.partialorder %v9736, 8.507059e+37
    %v9738 = vand.u32 %v9691, 2147483648
    %v9739 = vor.u32 1.1754944e-38, %v9738
    %v9740 = vsel %vm9737, %v9739, %v9735
    %v9741 = vmul.f32 1.0, %v9740
    %v9742 = vrcp.pop %v9692
    %v9743 = vmul.f32 %v9692, %v9742
    %v9744 = vsub.f32 1.0, %v9743
    %v9745 = vmul.f32 %v9742, %v9744
    %v9746 = vadd.f32 %v9742, %v9745
    %vm9747 = vweird.f32 %v9692
    %vm9748 = vweird.f32 %v9742
    %vm9749 = vmor %vm9747, %vm9748
    %v9750 = vsel %vm9749, %v9742, %v9746
    %v9751 = vand.u32 2147483647, %v9692
    %vm9752 = vcmp.eq.f32.partialorder %v9751, 8.507059e+37
    %v9753 = vand.u32 %v9692, 2147483648
    %v9754 = vor.u32 1.1754944e-38, %v9753
    %v9755 = vsel %vm9752, %v9754, %v9750
    %v9756 = vmul.f32 1.0, %v9755
    %v9757 = vrcp.pop %v9693
    %v9758 = vmul.f32 %v9693, %v9757
    %v9759 = vsub.f32 1.0, %v9758
    %v9760 = vmul.f32 %v9757, %v9759
    %v9761 = vadd.f32 %v9757, %v9760
    %vm9762 = vweird.f32 %v9693
    %vm9763 = vweird.f32 %v9757
    %vm9764 = vmor %vm9762, %vm9763
    %v9765 = vsel %vm9764, %v9757, %v9761
    %v9766 = vand.u32 2147483647, %v9693
    %vm9767 = vcmp.eq.f32.partialorder %v9766, 8.507059e+37
    %v9768 = vand.u32 %v9693, 2147483648
    %v9769 = vor.u32 1.1754944e-38, %v9768
    %v9770 = vsel %vm9767, %v9769, %v9765
    %v9771 = vmul.f32 1.0, %v9770
    %v9772 = vrcp.pop %v9694
    %v9773 = vmul.f32 %v9694, %v9772
    %v9774 = vsub.f32 1.0, %v9773
    %v9775 = vmul.f32 %v9772, %v9774
    %v9776 = vadd.f32 %v9772, %v9775
    %vm9777 = vweird.f32 %v9694
    %vm9778 = vweird.f32 %v9772
    %vm9779 = vmor %vm9777, %vm9778
    %v9780 = vsel %vm9779, %v9772, %v9776
    %v9781 = vand.u32 2147483647, %v9694
    %vm9782 = vcmp.eq.f32.partialorder %v9781, 8.507059e+37
    %v9783 = vand.u32 %v9694, 2147483648
    %v9784 = vor.u32 1.1754944e-38, %v9783
    %v9785 = vsel %vm9782, %v9784, %v9780
    %v9786 = vmul.f32 1.0, %v9785
    %v9787 = vrcp.pop %v9695
    %v9788 = vmul.f32 %v9695, %v9787
    %v9789 = vsub.f32 1.0, %v9788
    %v9790 = vmul.f32 %v9787, %v9789
    %v9791 = vadd.f32 %v9787, %v9790
    %vm9792 = vweird.f32 %v9695
    %vm9793 = vweird.f32 %v9787
    %vm9794 = vmor %vm9792, %vm9793
    %v9795 = vsel %vm9794, %v9787, %v9791
    %v9796 = vand.u32 2147483647, %v9695
    %vm9797 = vcmp.eq.f32.partialorder %v9796, 8.507059e+37
    %v9798 = vand.u32 %v9695, 2147483648
    %v9799 = vor.u32 1.1754944e-38, %v9798
    %v9800 = vsel %vm9797, %v9799, %v9795
    %v9801 = vmul.f32 1.0, %v9800
    %v9802 = vrcp.pop %v9696
    %v9803 = vmul.f32 %v9696, %v9802
    %v9804 = vsub.f32 1.0, %v9803
    %v9805 = vmul.f32 %v9802, %v9804
    %v9806 = vadd.f32 %v9802, %v9805
    %vm9807 = vweird.f32 %v9696
    %vm9808 = vweird.f32 %v9802
    %vm9809 = vmor %vm9807, %vm9808
    %v9810 = vsel %vm9809, %v9802, %v9806
    %v9811 = vand.u32 2147483647, %v9696
    %vm9812 = vcmp.eq.f32.partialorder %v9811, 8.507059e+37
    %v9813 = vand.u32 %v9696, 2147483648
    %v9814 = vor.u32 1.1754944e-38, %v9813
    %v9815 = vsel %vm9812, %v9814, %v9810
    %v9816 = vmul.f32 1.0, %v9815
    %9817 = vst [vmem:[%s27] sm:$0xff] %v9711
    %9818 = vst [vmem:[%s27 + $0x8] sm:$0xff] %v9726
    %9819 = vst [vmem:[%s27 + $0x10] sm:$0xff] %v9741
    %9820 = vst [vmem:[%s27 + $0x18] sm:$0xff] %v9756
    %9821 = vst [vmem:[%s27 + $0x20] sm:$0xff] %v9771
    %9822 = vst [vmem:[%s27 + $0x28] sm:$0xff] %v9786
    %9823 = vst [vmem:[%s27 + $0x30] sm:$0xff] %v9801
    %9824 = vst [vmem:[%s27 + $0x38] sm:$0xff] %v9816
    // Predicated region
    $region142: #{decoder_forward.1} parent=1 // pred_check
      _
    $region143: #{decoder_forward.1} parent=1 // pred_check_branch
      %9826 = sbr.rel (0) target = $region145
    $region144: #{decoder_forward.1} parent=1 // pred_region
      _
    $region145: #{decoder_forward.1} parent=1 // pred_fallthru
      _
    // Predicated region
    $region146: #{decoder_forward.1} parent=1 // pred_check
      _
    $region147: #{decoder_forward.1} parent=1 // pred_check_branch
      %9828 = sbr.rel (0) target = $region149
    $region148: #{decoder_forward.1} parent=1 // pred_region
      _
    $region149: #{decoder_forward.1} parent=1 // pred_fallthru
      _
    %9829 = vsyncpa [#allocation4], 1
    %9830 = vsyncpa [#allocation6], 1
    %9831 = vsyncpa [#allocation9], 1
    %9832 = vsyncpa [#allocation12], 1
    %9833 = vsyncpa [#allocation15], 1

</llo_original>
